<compile_context>
chip_gen: v7x
topology: tpu7x:2x2x1
jax: 0.10.0
libtpu: 0.0.40
codegen_flags: <defaults>
</compile_context>

<pallas_src>
import numpy as np
import jax
import jax.numpy as jnp
from jax import lax
from jax.experimental import pallas as pl
from jax.experimental.pallas import tpu as pltpu


def _bilinear_matrix(n_out: int, n_in: int) -> np.ndarray:
    """1-D bilinear interpolation matrix, PyTorch align_corners=True semantics."""
    m = np.zeros((n_out, n_in), np.float32)
    if n_in == 1 or n_out == 1:
        m[:, 0] = 1.0
        return m
    scale = (n_in - 1) / (n_out - 1)
    for o in range(n_out):
        src = o * scale
        i0 = min(int(np.floor(src)), n_in - 2)
        f = src - i0
        m[o, i0] += 1.0 - f
        m[o, i0 + 1] += f
    return m


def _bilinear_taps(n_out: int, n_in: int):
    """Per-output-column (i0, w_lo, w_hi) 2-tap weights (align_corners=True)."""
    if n_in == 1 or n_out == 1:
        return [(0, 1.0, 0.0)] * n_out
    scale = (n_in - 1) / (n_out - 1)
    taps = []
    for o in range(n_out):
        src = o * scale
        i0 = min(int(np.floor(src)), n_in - 2)
        f = src - i0
        taps.append((i0, 1.0 - f, f))
    return taps


def _zero_border(ref, top, bottom, left, right):
    """Re-zero only the thin halo strips of a 3-D (Hp, Wp, C) scratch buffer."""
    Hp, Wp, C = ref.shape
    dt = ref.dtype
    if top:
        ref[0:top, :, :] = jnp.zeros((top, Wp, C), dt)
    if bottom:
        ref[Hp - bottom:Hp, :, :] = jnp.zeros((bottom, Wp, C), dt)
    if left:
        ref[:, 0:left, :] = jnp.zeros((Hp, left, C), dt)
    if right:
        ref[:, Wp - right:Wp, :] = jnp.zeros((Hp, right, C), dt)


def _make_up_kernel(H1, W1, C1, H2, W2, C2, Cmid, Cout, py0, px0, wtaps):
    Hu, Wu = 2 * H1, 2 * W1
    Ctot = C2 + C1
    TAPS = [(ky, kx) for ky in range(3) for kx in range(3)]

    def kernel(x1_ref, x2_ref, uh_ref, w1_ref, sb1_ref, w2_ref, sb2_ref,
               out_ref, x2pad_ref, x1pad_ref, hpad_ref, slab1_ref, slab2_ref):
        # ---- re-establish only the thin zero halos (interiors are fully
        #      rewritten below); this also provides the F.pad zeros for x1.
        _zero_border(x2pad_ref, 1, 1, 1, 1)
        _zero_border(hpad_ref, 1, 1, 1, 1)
        _zero_border(x1pad_ref,
                     1 + py0, (H2 + 2) - (1 + py0 + Hu),
                     1 + px0, (W2 + 2) - (1 + px0 + Wu))

        # ---- separable bilinear upsample of x1 (align_corners=True) ----
        # H pass on the MXU: (Hu, H1) @ (H1, W1*C1).
        xh = jnp.dot(uh_ref[...], x1_ref[0],
                     preferred_element_type=jnp.float32)          # (Hu, W1*C1)
        # W pass: each output column is a static 2-tap blend of input columns,
        # written straight into the padded buffer => F.pad(x1) is fused in.
        r0 = 1 + py0
        for v in range(Wu):
            i0, a, b = wtaps[v]
            i1 = min(i0 + 1, W1 - 1)
            col = (a * xh[:, i0 * C1:(i0 + 1) * C1]
                   + b * xh[:, i1 * C1:(i1 + 1) * C1])             # (Hu, C1) f32
            x1pad_ref[r0:r0 + Hu, 1 + px0 + v, :] = col.astype(x1pad_ref.dtype)

        # ---- skip connection x2 into its padded buffer ----
        x2pad_ref[1:1 + H2, 1:1 + W2, :] = x2_ref[0].astype(x2pad_ref.dtype)

        # ---- conv1 (3x3, pad 1) over concat([x2, x1u]) as ONE im2col matmul.
        #      Slab columns per tap: [C2 x2-channels | C1 x1-channels], which
        #      is exactly the torch.cat([x2, x1], dim=1) channel order.
        for t, (ky, kx) in enumerate(TAPS):
            c0 = t * Ctot
            slab1_ref[:, c0:c0 + C2] = (
                x2pad_ref[ky:ky + H2, kx:kx + W2, :]
                .reshape(H2 * W2, C2).astype(slab1_ref.dtype))
            slab1_ref[:, c0 + C2:c0 + Ctot] = (
                x1pad_ref[ky:ky + H2, kx:kx + W2, :]
                .reshape(H2 * W2, C1).astype(slab1_ref.dtype))
        acc1 = jnp.dot(slab1_ref[...], w1_ref[...],
                       preferred_element_type=jnp.float32)         # (H2*W2, Cmid)
        h = jnp.maximum(acc1 * sb1_ref[0:1, :] + sb1_ref[1:2, :], 0.0)
        hpad_ref[1:1 + H2, 1:1 + W2, :] = (
            h.reshape(H2, W2, Cmid).astype(hpad_ref.dtype))

        # ---- conv2 (3x3, pad 1) as ONE im2col matmul (K = 9*Cmid) ----
        for t, (ky, kx) in enumerate(TAPS):
            slab2_ref[:, t * Cmid:(t + 1) * Cmid] = (
                hpad_ref[ky:ky + H2, kx:kx + W2, :]
                .reshape(H2 * W2, Cmid).astype(slab2_ref.dtype))
        acc2 = jnp.dot(slab2_ref[...], w2_ref[...],
                       preferred_element_type=jnp.float32)         # (H2*W2, Cout)
        y = jnp.maximum(acc2 * sb2_ref[0:1, :] + sb2_ref[1:2, :], 0.0)
        out_ref[0] = y.reshape(H2, W2, Cout).astype(out_ref.dtype)

    return kernel


def up_forward(x1_nchw, x2_nchw, params):
    """Pallas implementation of Up(bilinear=True).forward(x1, x2) (NCHW in/out)."""
    N, C1, H1, W1 = x1_nchw.shape
    N2, C2, H2, W2 = x2_nchw.shape
    assert N == N2
    Hu, Wu = 2 * H1, 2 * W1
    assert Hu <= H2 and Wu <= W2
    py0 = (H2 - Hu) // 2
    px0 = (W2 - Wu) // 2
    Ctot = C2 + C1

    w1p, sb1 = params["w1p"], params["sb1"]
    w2p, sb2 = params["w2p"], params["sb2"]
    Cmid = w1p.shape[-1]
    Cout = w2p.shape[-1]
    assert w1p.shape == (9 * Ctot, Cmid) and w2p.shape == (9 * Cmid, Cout)

    uh = jnp.asarray(_bilinear_matrix(Hu, H1)).astype(jnp.bfloat16)  # (Hu, H1)
    wtaps = _bilinear_taps(Wu, W1)                                   # static taps

    # NHWC, bf16 on the HBM side; x1 flattened to (N, H1, W1*C1) so the H-pass
    # matmul needs no in-kernel reshape.
    x1 = jnp.transpose(x1_nchw, (0, 2, 3, 1)).reshape(N, H1, W1 * C1)
    x1 = x1.astype(jnp.bfloat16)
    x2 = jnp.transpose(x2_nchw, (0, 2, 3, 1)).astype(jnp.bfloat16)

    kernel = _make_up_kernel(H1, W1, C1, H2, W2, C2, Cmid, Cout, py0, px0, wtaps)

    out_nhwc = pl.pallas_call(
        kernel,
        out_shape=jax.ShapeDtypeStruct((N, H2, W2, Cout), jnp.float32),
        grid_spec=pltpu.PrefetchScalarGridSpec(
            num_scalar_prefetch=0,
            grid=(N,),
            in_specs=[
                pl.BlockSpec((1, H1, W1 * C1), lambda b: (b, 0, 0)),
                pl.BlockSpec((1, H2, W2, C2), lambda b: (b, 0, 0, 0)),
                pl.BlockSpec((Hu, H1), lambda b: (0, 0)),
                pl.BlockSpec((9 * Ctot, Cmid), lambda b: (0, 0)),
                pl.BlockSpec((2, Cmid), lambda b: (0, 0)),
                pl.BlockSpec((9 * Cmid, Cout), lambda b: (0, 0)),
                pl.BlockSpec((2, Cout), lambda b: (0, 0)),
            ],
            out_specs=pl.BlockSpec((1, H2, W2, Cout), lambda b: (b, 0, 0, 0)),
            scratch_shapes=[
                pltpu.VMEM((H2 + 2, W2 + 2, C2), jnp.float32),     # x2 halo buf
                pltpu.VMEM((H2 + 2, W2 + 2, C1), jnp.float32),     # x1u halo buf
                pltpu.VMEM((H2 + 2, W2 + 2, Cmid), jnp.float32),   # h halo buf
                pltpu.VMEM((H2 * W2, 9 * Ctot), jnp.bfloat16),     # conv1 im2col
                pltpu.VMEM((H2 * W2, 9 * Cmid), jnp.bfloat16),     # conv2 im2col
            ],
        ),
        compiler_params=pltpu.CompilerParams(
            dimension_semantics=("parallel",),
            vmem_limit_bytes=32 * 1024 * 1024,
        ),
    )(x1, x2, uh, w1p, sb1, w2p, sb2)

    return jnp.transpose(out_nhwc, (0, 3, 1, 2))  # back to NCHW


def init_params(in_channels, out_channels, key):
    """Deterministic synthetic parameters for Up(in_channels, out_channels, bilinear=True)."""
    mid = in_channels // 2
    eps = 1e-5
    k = jax.random.split(key, 4)
    # conv weights/biases in PyTorch layout (Cout, Cin, kH, kW)
    w1 = jax.random.normal(k[0], (mid, in_channels, 3, 3), jnp.float32) * 0.2
    b1 = jax.random.normal(k[1], (mid,), jnp.float32) * 0.1
    w2 = jax.random.normal(k[2], (out_channels, mid, 3, 3), jnp.float32) * 0.2
    b2 = jax.random.normal(k[3], (out_channels,), jnp.float32) * 0.1
    # BatchNorm in inference mode with default running stats (mean=0, var=1)
    g1 = 1.0 + 0.1 * jnp.arange(mid, dtype=jnp.float32)
    be1 = 0.05 * jnp.arange(mid, dtype=jnp.float32)
    g2 = 1.0 + 0.1 * jnp.arange(out_channels, dtype=jnp.float32)
    be2 = -0.03 * jnp.arange(out_channels, dtype=jnp.float32)
    mean1, var1 = jnp.zeros((mid,)), jnp.ones((mid,))
    mean2, var2 = jnp.zeros((out_channels,)), jnp.ones((out_channels,))
    scale1 = g1 / jnp.sqrt(var1 + eps)
    bias1 = be1 + (b1 - mean1) * scale1
    scale2 = g2 / jnp.sqrt(var2 + eps)
    bias2 = be2 + (b2 - mean2) * scale2
    # packed kernel weights: (kH*kW*Cin, Cout), row order = (tap, cin) with the
    # within-tap channel order equal to the concat([x2, x1]) order.
    w1_hwio = jnp.transpose(w1, (2, 3, 1, 0))  # (3,3,Cin,Cmid)
    w2_hwio = jnp.transpose(w2, (2, 3, 1, 0))  # (3,3,Cmid,Cout)
    w1p = w1_hwio.reshape(9 * in_channels, mid).astype(jnp.bfloat16)
    w2p = w2_hwio.reshape(9 * mid, out_channels).astype(jnp.bfloat16)
    return {
        "w1p": w1p, "sb1": jnp.stack([scale1, bias1], axis=0),
        "w2p": w2p, "sb2": jnp.stack([scale2, bias2], axis=0),
        # reference-only copies (f32)
        "w1_hwio": w1_hwio, "w2_hwio": w2_hwio,
        "scale1": scale1, "bias1": bias1, "scale2": scale2, "bias2": bias2,
    }


def up_forward_reference(x1_nchw, x2_nchw, params):
    """Pure-JAX f32 reference (XLA convs) for correctness checking."""
    x1 = jnp.transpose(x1_nchw, (0, 2, 3, 1))
    x2 = jnp.transpose(x2_nchw, (0, 2, 3, 1))
    _, H1, W1, _ = x1.shape
    _, H2, W2, _ = x2.shape
    uh = jnp.asarray(_bilinear_matrix(2 * H1, H1))
    uw = jnp.asarray(_bilinear_matrix(2 * W1, W1))
    x1u = jnp.einsum('oh,nhwc->nowc', uh, x1)
    x1u = jnp.einsum('pw,nowc->nopc', uw, x1u)
    dY = H2 - x1u.shape[1]
    dX = W2 - x1u.shape[2]
    x1u = jnp.pad(x1u, ((0, 0), (dY // 2, dY - dY // 2),
                        (dX // 2, dX - dX // 2), (0, 0)))
    x = jnp.concatenate([x2, x1u], axis=-1)
    dn = ('NHWC', 'HWIO', 'NHWC')
    h = lax.conv_general_dilated(x, params["w1_hwio"], (1, 1), 'SAME',
                                 dimension_numbers=dn)
    h = jnp.maximum(h * params["scale1"] + params["bias1"], 0.0)
    y = lax.conv_general_dilated(h, params["w2_hwio"], (1, 1), 'SAME',
                                 dimension_numbers=dn)
    y = jnp.maximum(y * params["scale2"] + params["bias2"], 0.0)
    return jnp.transpose(y, (0, 3, 1, 2))


if __name__ == "__main__":
    key = jax.random.PRNGKey(0)
    kx1, kx2, kp = jax.random.split(key, 3)

    # x1: low-resolution feature map; x2: skip connection (2x spatial size)
    N, C1, H1, W1 = 2, 4, 8, 8
    C2, H2, W2 = 4, 16, 16
    in_channels = C1 + C2          # channels after concat -> DoubleConv input (8)
    out_channels = 8               # mid_channels = in_channels // 2 = 4

    x1 = jax.random.normal(kx1, (N, C1, H1, W1), jnp.float32)
    x2 = jax.random.normal(kx2, (N, C2, H2, W2), jnp.float32)
    params = init_params(in_channels, out_channels, kp)

    out = up_forward(x1, x2, params)
    out = jax.block_until_ready(out)

    ref = up_forward_reference(x1, x2, params)
    assert out.shape == (N, out_channels, H2, W2)
    # bf16 inputs/weights/slabs inside the kernel vs an all-f32 reference:
    # loosened tolerance (the review anticipated ~1e-2 relative error).
    if not jnp.allclose(out, ref, atol=1e-1, rtol=5e-2):
        raise AssertionError("Pallas output mismatch vs reference")
    print("KERNEL_OK")
</pallas_src>

<mosaic_0001>
module attributes {stable_mosaic.version = 11 : i64} {
  func.func @kernel(%arg0: i32, %arg1: memref<1x8x32xbf16, #tpu.memory_space<vmem>>, %arg2: memref<1x16x16x4xbf16, #tpu.memory_space<vmem>>, %arg3: memref<16x8xbf16, #tpu.memory_space<vmem>>, %arg4: memref<72x4xbf16, #tpu.memory_space<vmem>>, %arg5: memref<2x4xf32, #tpu.memory_space<vmem>>, %arg6: memref<36x8xbf16, #tpu.memory_space<vmem>>, %arg7: memref<2x8xf32, #tpu.memory_space<vmem>>, %arg8: memref<1x16x16x8xf32, #tpu.memory_space<vmem>>, %arg9: memref<18x18x4xf32, #tpu.memory_space<vmem>>, %arg10: memref<18x18x4xf32, #tpu.memory_space<vmem>>, %arg11: memref<18x18x4xf32, #tpu.memory_space<vmem>>, %arg12: memref<256x72xbf16, #tpu.memory_space<vmem>>, %arg13: memref<256x36xbf16, #tpu.memory_space<vmem>>) attributes {dimension_semantics = [#tpu.dimension_semantics<parallel>], iteration_bounds = array<i64: 2>, scalar_prefetch = 0 : i64, scratch_operands = 5 : i64, tpu.core_type = #tpu.core_type<tc>, window_params = [{transform_indices = @transform_0, window_bounds = array<i64: 1, 8, 32>}, {transform_indices = @transform_1, window_bounds = array<i64: 1, 16, 16, 4>}, {pipeline_mode = #tpu.pipeline_mode<synchronous>, transform_indices = @transform_2, window_bounds = array<i64: 16, 8>}, {pipeline_mode = #tpu.pipeline_mode<synchronous>, transform_indices = @transform_3, window_bounds = array<i64: 72, 4>}, {pipeline_mode = #tpu.pipeline_mode<synchronous>, transform_indices = @transform_4, window_bounds = array<i64: 2, 4>}, {pipeline_mode = #tpu.pipeline_mode<synchronous>, transform_indices = @transform_5, window_bounds = array<i64: 36, 8>}, {pipeline_mode = #tpu.pipeline_mode<synchronous>, transform_indices = @transform_6, window_bounds = array<i64: 2, 8>}, {transform_indices = @transform_7, window_bounds = array<i64: 1, 16, 16, 8>}]} {
    %cst = arith.constant 0.000000e+00 : f32
    %0 = vector.broadcast %cst : f32 to vector<1x18x4xf32>
    %c0 = arith.constant 0 : index
    %c0_0 = arith.constant 0 : index
    %c0_1 = arith.constant 0 : index
    %1 = vector.load %arg9[%c0, %c0_0, %c0_1] : memref<18x18x4xf32, #tpu.memory_space<vmem>>, vector<1x18x4xf32>
    tpu.vector_store %arg9[%c0, %c0_0, %c0_1], %0 {strides = array<i32>} : memref<18x18x4xf32, #tpu.memory_space<vmem>>, vector<1x18x4xf32>,
    %cst_2 = arith.constant 0.000000e+00 : f32
    %2 = vector.broadcast %cst_2 : f32 to vector<1x18x4xf32>
    %c17 = arith.constant 17 : index
    %c0_3 = arith.constant 0 : index
    %c0_4 = arith.constant 0 : index
    %3 = vector.load %arg9[%c17, %c0_3, %c0_4] : memref<18x18x4xf32, #tpu.memory_space<vmem>>, vector<1x18x4xf32>
    tpu.vector_store %arg9[%c17, %c0_3, %c0_4], %2 {strides = array<i32>} : memref<18x18x4xf32, #tpu.memory_space<vmem>>, vector<1x18x4xf32>,
    %cst_5 = arith.constant 0.000000e+00 : f32
    %4 = vector.broadcast %cst_5 : f32 to vector<18x1x4xf32>
    %c0_6 = arith.constant 0 : index
    %c0_7 = arith.constant 0 : index
    %c0_8 = arith.constant 0 : index
    %5 = vector.load %arg9[%c0_6, %c0_7, %c0_8] : memref<18x18x4xf32, #tpu.memory_space<vmem>>, vector<18x1x4xf32>
    tpu.vector_store %arg9[%c0_6, %c0_7, %c0_8], %4 {strides = array<i32>} : memref<18x18x4xf32, #tpu.memory_space<vmem>>, vector<18x1x4xf32>,
    %cst_9 = arith.constant 0.000000e+00 : f32
    %6 = vector.broadcast %cst_9 : f32 to vector<18x1x4xf32>
    %c0_10 = arith.constant 0 : index
    %c17_11 = arith.constant 17 : index
    %c0_12 = arith.constant 0 : index
    %7 = vector.load %arg9[%c0_10, %c17_11, %c0_12] : memref<18x18x4xf32, #tpu.memory_space<vmem>>, vector<18x1x4xf32>
    tpu.vector_store %arg9[%c0_10, %c17_11, %c0_12], %6 {strides = array<i32>} : memref<18x18x4xf32, #tpu.memory_space<vmem>>, vector<18x1x4xf32>,
    %cst_13 = arith.constant 0.000000e+00 : f32
    %8 = vector.broadcast %cst_13 : f32 to vector<1x18x4xf32>
    %c0_14 = arith.constant 0 : index
    %c0_15 = arith.constant 0 : index
    %c0_16 = arith.constant 0 : index
    %9 = vector.load %arg11[%c0_14, %c0_15, %c0_16] : memref<18x18x4xf32, #tpu.memory_space<vmem>>, vector<1x18x4xf32>
    tpu.vector_store %arg11[%c0_14, %c0_15, %c0_16], %8 {strides = array<i32>} : memref<18x18x4xf32, #tpu.memory_space<vmem>>, vector<1x18x4xf32>,
    %cst_17 = arith.constant 0.000000e+00 : f32
    %10 = vector.broadcast %cst_17 : f32 to vector<1x18x4xf32>
    %c17_18 = arith.constant 17 : index
    %c0_19 = arith.constant 0 : index
    %c0_20 = arith.constant 0 : index
    %11 = vector.load %arg11[%c17_18, %c0_19, %c0_20] : memref<18x18x4xf32, #tpu.memory_space<vmem>>, vector<1x18x4xf32>
    tpu.vector_store %arg11[%c17_18, %c0_19, %c0_20], %10 {strides = array<i32>} : memref<18x18x4xf32, #tpu.memory_space<vmem>>, vector<1x18x4xf32>,
    %cst_21 = arith.constant 0.000000e+00 : f32
    %12 = vector.broadcast %cst_21 : f32 to vector<18x1x4xf32>
    %c0_22 = arith.constant 0 : index
    %c0_23 = arith.constant 0 : index
    %c0_24 = arith.constant 0 : index
    %13 = vector.load %arg11[%c0_22, %c0_23, %c0_24] : memref<18x18x4xf32, #tpu.memory_space<vmem>>, vector<18x1x4xf32>
    tpu.vector_store %arg11[%c0_22, %c0_23, %c0_24], %12 {strides = array<i32>} : memref<18x18x4xf32, #tpu.memory_space<vmem>>, vector<18x1x4xf32>,
    %cst_25 = arith.constant 0.000000e+00 : f32
    %14 = vector.broadcast %cst_25 : f32 to vector<18x1x4xf32>
    %c0_26 = arith.constant 0 : index
    %c17_27 = arith.constant 17 : index
    %c0_28 = arith.constant 0 : index
    %15 = vector.load %arg11[%c0_26, %c17_27, %c0_28] : memref<18x18x4xf32, #tpu.memory_space<vmem>>, vector<18x1x4xf32>
    tpu.vector_store %arg11[%c0_26, %c17_27, %c0_28], %14 {strides = array<i32>} : memref<18x18x4xf32, #tpu.memory_space<vmem>>, vector<18x1x4xf32>,
    %cst_29 = arith.constant 0.000000e+00 : f32
    %16 = vector.broadcast %cst_29 : f32 to vector<1x18x4xf32>
    %c0_30 = arith.constant 0 : index
    %c0_31 = arith.constant 0 : index
    %c0_32 = arith.constant 0 : index
    %17 = vector.load %arg10[%c0_30, %c0_31, %c0_32] : memref<18x18x4xf32, #tpu.memory_space<vmem>>, vector<1x18x4xf32>
    tpu.vector_store %arg10[%c0_30, %c0_31, %c0_32], %16 {strides = array<i32>} : memref<18x18x4xf32, #tpu.memory_space<vmem>>, vector<1x18x4xf32>,
    %cst_33 = arith.constant 0.000000e+00 : f32
    %18 = vector.broadcast %cst_33 : f32 to vector<1x18x4xf32>
    %c17_34 = arith.constant 17 : index
    %c0_35 = arith.constant 0 : index
    %c0_36 = arith.constant 0 : index
    %19 = vector.load %arg10[%c17_34, %c0_35, %c0_36] : memref<18x18x4xf32, #tpu.memory_space<vmem>>, vector<1x18x4xf32>
    tpu.vector_store %arg10[%c17_34, %c0_35, %c0_36], %18 {strides = array<i32>} : memref<18x18x4xf32, #tpu.memory_space<vmem>>, vector<1x18x4xf32>,
    %cst_37 = arith.constant 0.000000e+00 : f32
    %20 = vector.broadcast %cst_37 : f32 to vector<18x1x4xf32>
    %c0_38 = arith.constant 0 : index
    %c0_39 = arith.constant 0 : index
    %c0_40 = arith.constant 0 : index
    %21 = vector.load %arg10[%c0_38, %c0_39, %c0_40] : memref<18x18x4xf32, #tpu.memory_space<vmem>>, vector<18x1x4xf32>
    tpu.vector_store %arg10[%c0_38, %c0_39, %c0_40], %20 {strides = array<i32>} : memref<18x18x4xf32, #tpu.memory_space<vmem>>, vector<18x1x4xf32>,
    %cst_41 = arith.constant 0.000000e+00 : f32
    %22 = vector.broadcast %cst_41 : f32 to vector<18x1x4xf32>
    %c0_42 = arith.constant 0 : index
    %c17_43 = arith.constant 17 : index
    %c0_44 = arith.constant 0 : index
    %23 = vector.load %arg10[%c0_42, %c17_43, %c0_44] : memref<18x18x4xf32, #tpu.memory_space<vmem>>, vector<18x1x4xf32>
    tpu.vector_store %arg10[%c0_42, %c17_43, %c0_44], %22 {strides = array<i32>} : memref<18x18x4xf32, #tpu.memory_space<vmem>>, vector<18x1x4xf32>,
    %c0_45 = arith.constant 0 : index
    %c0_46 = arith.constant 0 : index
    %24 = vector.load %arg3[%c0_45, %c0_46] : memref<16x8xbf16, #tpu.memory_space<vmem>>, vector<16x8xbf16>
    %c0_47 = arith.constant 0 : index
    %c0_48 = arith.constant 0 : index
    %c0_49 = arith.constant 0 : index
    %25 = vector.load %arg1[%c0_47, %c0_48, %c0_49] : memref<1x8x32xbf16, #tpu.memory_space<vmem>>, vector<1x8x32xbf16>
    %26 = vector.shape_cast %25 : vector<1x8x32xbf16> to vector<8x32xbf16>
    %cst_50 = arith.constant dense<0.000000e+00> : vector<16x32xf32>
    %27 = tpu.matmul %24, %26, %cst_50 {dimension_numbers = #tpu.dot_dimension_numbers<[1], [0], [0], [1], [0, 0, 1, 1], [], []>} : vector<16x8xbf16>, vector<8x32xbf16>, vector<16x32xf32> -> vector<16x32xf32>
    %28 = vector.extract_strided_slice %27 {offsets = [0, 0], sizes = [16, 4], strides = [1, 1]} : vector<16x32xf32> to vector<16x4xf32>
    %cst_51 = arith.constant 1.000000e+00 : f32
    %29 = vector.broadcast %cst_51 : f32 to vector<16x4xf32>
    %30 = arith.mulf %29, %28 : vector<16x4xf32>
    %31 = vector.extract_strided_slice %27 {offsets = [0, 4], sizes = [16, 4], strides = [1, 1]} : vector<16x32xf32> to vector<16x4xf32>
    %cst_52 = arith.constant 0.000000e+00 : f32
    %32 = vector.broadcast %cst_52 : f32 to vector<16x4xf32>
    %33 = arith.mulf %32, %31 : vector<16x4xf32>
    %34 = arith.addf %30, %33 : vector<16x4xf32>
    %c1 = arith.constant 1 : index
    %c1_53 = arith.constant 1 : index
    %c0_54 = arith.constant 0 : index
    %35 = vector.load %arg10[%c1, %c1_53, %c0_54] : memref<18x18x4xf32, #tpu.memory_space<vmem>>, vector<16x1x4xf32>
    %36 = vector.shape_cast %35 : vector<16x1x4xf32> to vector<16x4xf32>
    %37 = vector.shape_cast %34 : vector<16x4xf32> to vector<16x1x4xf32>
    tpu.vector_store %arg10[%c1, %c1_53, %c0_54], %37 {strides = array<i32>} : memref<18x18x4xf32, #tpu.memory_space<vmem>>, vector<16x1x4xf32>,
    %38 = vector.extract_strided_slice %27 {offsets = [0, 0], sizes = [16, 4], strides = [1, 1]} : vector<16x32xf32> to vector<16x4xf32>
    %cst_55 = arith.constant 0.533333361 : f32
    %39 = vector.broadcast %cst_55 : f32 to vector<16x4xf32>
    %40 = arith.mulf %39, %38 : vector<16x4xf32>
    %41 = vector.extract_strided_slice %27 {offsets = [0, 4], sizes = [16, 4], strides = [1, 1]} : vector<16x32xf32> to vector<16x4xf32>
    %cst_56 = arith.constant 0.466666669 : f32
    %42 = vector.broadcast %cst_56 : f32 to vector<16x4xf32>
    %43 = arith.mulf %42, %41 : vector<16x4xf32>
    %44 = arith.addf %40, %43 : vector<16x4xf32>
    %c1_57 = arith.constant 1 : index
    %c2 = arith.constant 2 : index
    %c0_58 = arith.constant 0 : index
    %45 = vector.load %arg10[%c1_57, %c2, %c0_58] : memref<18x18x4xf32, #tpu.memory_space<vmem>>, vector<16x1x4xf32>
    %46 = vector.shape_cast %45 : vector<16x1x4xf32> to vector<16x4xf32>
    %47 = vector.shape_cast %44 : vector<16x4xf32> to vector<16x1x4xf32>
    tpu.vector_store %arg10[%c1_57, %c2, %c0_58], %47 {strides = array<i32>} : memref<18x18x4xf32, #tpu.memory_space<vmem>>, vector<16x1x4xf32>,
    %48 = vector.extract_strided_slice %27 {offsets = [0, 0], sizes = [16, 4], strides = [1, 1]} : vector<16x32xf32> to vector<16x4xf32>
    %cst_59 = arith.constant 0.0666666701 : f32
    %49 = vector.broadcast %cst_59 : f32 to vector<16x4xf32>
    %50 = arith.mulf %49, %48 : vector<16x4xf32>
    %51 = vector.extract_strided_slice %27 {offsets = [0, 4], sizes = [16, 4], strides = [1, 1]} : vector<16x32xf32> to vector<16x4xf32>
    %cst_60 = arith.constant 0.933333337 : f32
    %52 = vector.broadcast %cst_60 : f32 to vector<16x4xf32>
    %53 = arith.mulf %52, %51 : vector<16x4xf32>
    %54 = arith.addf %50, %53 : vector<16x4xf32>
    %c1_61 = arith.constant 1 : index
    %c3 = arith.constant 3 : index
    %c0_62 = arith.constant 0 : index
    %55 = vector.load %arg10[%c1_61, %c3, %c0_62] : memref<18x18x4xf32, #tpu.memory_space<vmem>>, vector<16x1x4xf32>
    %56 = vector.shape_cast %55 : vector<16x1x4xf32> to vector<16x4xf32>
    %57 = vector.shape_cast %54 : vector<16x4xf32> to vector<16x1x4xf32>
    tpu.vector_store %arg10[%c1_61, %c3, %c0_62], %57 {strides = array<i32>} : memref<18x18x4xf32, #tpu.memory_space<vmem>>, vector<16x1x4xf32>,
    %58 = vector.extract_strided_slice %27 {offsets = [0, 4], sizes = [16, 4], strides = [1, 1]} : vector<16x32xf32> to vector<16x4xf32>
    %cst_63 = arith.constant 6.000000e-01 : f32
    %59 = vector.broadcast %cst_63 : f32 to vector<16x4xf32>
    %60 = arith.mulf %59, %58 : vector<16x4xf32>
    %61 = vector.extract_strided_slice %27 {offsets = [0, 8], sizes = [16, 4], strides = [1, 1]} : vector<16x32xf32> to vector<16x4xf32>
    %cst_64 = arith.constant 4.000000e-01 : f32
    %62 = vector.broadcast %cst_64 : f32 to vector<16x4xf32>
    %63 = arith.mulf %62, %61 : vector<16x4xf32>
    %64 = arith.addf %60, %63 : vector<16x4xf32>
    %c1_65 = arith.constant 1 : index
    %c4 = arith.constant 4 : index
    %c0_66 = arith.constant 0 : index
    %65 = vector.load %arg10[%c1_65, %c4, %c0_66] : memref<18x18x4xf32, #tpu.memory_space<vmem>>, vector<16x1x4xf32>
    %66 = vector.shape_cast %65 : vector<16x1x4xf32> to vector<16x4xf32>
    %67 = vector.shape_cast %64 : vector<16x4xf32> to vector<16x1x4xf32>
    tpu.vector_store %arg10[%c1_65, %c4, %c0_66], %67 {strides = array<i32>} : memref<18x18x4xf32, #tpu.memory_space<vmem>>, vector<16x1x4xf32>,
    %68 = vector.extract_strided_slice %27 {offsets = [0, 4], sizes = [16, 4], strides = [1, 1]} : vector<16x32xf32> to vector<16x4xf32>
    %cst_67 = arith.constant 0.13333334 : f32
    %69 = vector.broadcast %cst_67 : f32 to vector<16x4xf32>
    %70 = arith.mulf %69, %68 : vector<16x4xf32>
    %71 = vector.extract_strided_slice %27 {offsets = [0, 8], sizes = [16, 4], strides = [1, 1]} : vector<16x32xf32> to vector<16x4xf32>
    %cst_68 = arith.constant 0.866666674 : f32
    %72 = vector.broadcast %cst_68 : f32 to vector<16x4xf32>
    %73 = arith.mulf %72, %71 : vector<16x4xf32>
    %74 = arith.addf %70, %73 : vector<16x4xf32>
    %c1_69 = arith.constant 1 : index
    %c5 = arith.constant 5 : index
    %c0_70 = arith.constant 0 : index
    %75 = vector.load %arg10[%c1_69, %c5, %c0_70] : memref<18x18x4xf32, #tpu.memory_space<vmem>>, vector<16x1x4xf32>
    %76 = vector.shape_cast %75 : vector<16x1x4xf32> to vector<16x4xf32>
    %77 = vector.shape_cast %74 : vector<16x4xf32> to vector<16x1x4xf32>
    tpu.vector_store %arg10[%c1_69, %c5, %c0_70], %77 {strides = array<i32>} : memref<18x18x4xf32, #tpu.memory_space<vmem>>, vector<16x1x4xf32>,
    %78 = vector.extract_strided_slice %27 {offsets = [0, 8], sizes = [16, 4], strides = [1, 1]} : vector<16x32xf32> to vector<16x4xf32>
    %cst_71 = arith.constant 0.666666686 : f32
    %79 = vector.broadcast %cst_71 : f32 to vector<16x4xf32>
    %80 = arith.mulf %79, %78 : vector<16x4xf32>
    %81 = vector.extract_strided_slice %27 {offsets = [0, 12], sizes = [16, 4], strides = [1, 1]} : vector<16x32xf32> to vector<16x4xf32>
    %cst_72 = arith.constant 0.333333343 : f32
    %82 = vector.broadcast %cst_72 : f32 to vector<16x4xf32>
    %83 = arith.mulf %82, %81 : vector<16x4xf32>
    %84 = arith.addf %80, %83 : vector<16x4xf32>
    %c1_73 = arith.constant 1 : index
    %c6 = arith.constant 6 : index
    %c0_74 = arith.constant 0 : index
    %85 = vector.load %arg10[%c1_73, %c6, %c0_74] : memref<18x18x4xf32, #tpu.memory_space<vmem>>, vector<16x1x4xf32>
    %86 = vector.shape_cast %85 : vector<16x1x4xf32> to vector<16x4xf32>
    %87 = vector.shape_cast %84 : vector<16x4xf32> to vector<16x1x4xf32>
    tpu.vector_store %arg10[%c1_73, %c6, %c0_74], %87 {strides = array<i32>} : memref<18x18x4xf32, #tpu.memory_space<vmem>>, vector<16x1x4xf32>,
    %88 = vector.extract_strided_slice %27 {offsets = [0, 8], sizes = [16, 4], strides = [1, 1]} : vector<16x32xf32> to vector<16x4xf32>
    %cst_75 = arith.constant 2.000000e-01 : f32
    %89 = vector.broadcast %cst_75 : f32 to vector<16x4xf32>
    %90 = arith.mulf %89, %88 : vector<16x4xf32>
    %91 = vector.extract_strided_slice %27 {offsets = [0, 12], sizes = [16, 4], strides = [1, 1]} : vector<16x32xf32> to vector<16x4xf32>
    %cst_76 = arith.constant 8.000000e-01 : f32
    %92 = vector.broadcast %cst_76 : f32 to vector<16x4xf32>
    %93 = arith.mulf %92, %91 : vector<16x4xf32>
    %94 = arith.addf %90, %93 : vector<16x4xf32>
    %c1_77 = arith.constant 1 : index
    %c7 = arith.constant 7 : index
    %c0_78 = arith.constant 0 : index
    %95 = vector.load %arg10[%c1_77, %c7, %c0_78] : memref<18x18x4xf32, #tpu.memory_space<vmem>>, vector<16x1x4xf32>
    %96 = vector.shape_cast %95 : vector<16x1x4xf32> to vector<16x4xf32>
    %97 = vector.shape_cast %94 : vector<16x4xf32> to vector<16x1x4xf32>
    tpu.vector_store %arg10[%c1_77, %c7, %c0_78], %97 {strides = array<i32>} : memref<18x18x4xf32, #tpu.memory_space<vmem>>, vector<16x1x4xf32>,
    %98 = vector.extract_strided_slice %27 {offsets = [0, 12], sizes = [16, 4], strides = [1, 1]} : vector<16x32xf32> to vector<16x4xf32>
    %cst_79 = arith.constant 0.733333349 : f32
    %99 = vector.broadcast %cst_79 : f32 to vector<16x4xf32>
    %100 = arith.mulf %99, %98 : vector<16x4xf32>
    %101 = vector.extract_strided_slice %27 {offsets = [0, 16], sizes = [16, 4], strides = [1, 1]} : vector<16x32xf32> to vector<16x4xf32>
    %cst_80 = arith.constant 0.266666681 : f32
    %102 = vector.broadcast %cst_80 : f32 to vector<16x4xf32>
    %103 = arith.mulf %102, %101 : vector<16x4xf32>
    %104 = arith.addf %100, %103 : vector<16x4xf32>
    %c1_81 = arith.constant 1 : index
    %c8 = arith.constant 8 : index
    %c0_82 = arith.constant 0 : index
    %105 = vector.load %arg10[%c1_81, %c8, %c0_82] : memref<18x18x4xf32, #tpu.memory_space<vmem>>, vector<16x1x4xf32>
    %106 = vector.shape_cast %105 : vector<16x1x4xf32> to vector<16x4xf32>
    %107 = vector.shape_cast %104 : vector<16x4xf32> to vector<16x1x4xf32>
    tpu.vector_store %arg10[%c1_81, %c8, %c0_82], %107 {strides = array<i32>} : memref<18x18x4xf32, #tpu.memory_space<vmem>>, vector<16x1x4xf32>,
    %108 = vector.extract_strided_slice %27 {offsets = [0, 12], sizes = [16, 4], strides = [1, 1]} : vector<16x32xf32> to vector<16x4xf32>
    %cst_83 = arith.constant 0.266666681 : f32
    %109 = vector.broadcast %cst_83 : f32 to vector<16x4xf32>
    %110 = arith.mulf %109, %108 : vector<16x4xf32>
    %111 = vector.extract_strided_slice %27 {offsets = [0, 16], sizes = [16, 4], strides = [1, 1]} : vector<16x32xf32> to vector<16x4xf32>
    %cst_84 = arith.constant 0.733333349 : f32
    %112 = vector.broadcast %cst_84 : f32 to vector<16x4xf32>
    %113 = arith.mulf %112, %111 : vector<16x4xf32>
    %114 = arith.addf %110, %113 : vector<16x4xf32>
    %c1_85 = arith.constant 1 : index
    %c9 = arith.constant 9 : index
    %c0_86 = arith.constant 0 : index
    %115 = vector.load %arg10[%c1_85, %c9, %c0_86] : memref<18x18x4xf32, #tpu.memory_space<vmem>>, vector<16x1x4xf32>
    %116 = vector.shape_cast %115 : vector<16x1x4xf32> to vector<16x4xf32>
    %117 = vector.shape_cast %114 : vector<16x4xf32> to vector<16x1x4xf32>
    tpu.vector_store %arg10[%c1_85, %c9, %c0_86], %117 {strides = array<i32>} : memref<18x18x4xf32, #tpu.memory_space<vmem>>, vector<16x1x4xf32>,
    %118 = vector.extract_strided_slice %27 {offsets = [0, 16], sizes = [16, 4], strides = [1, 1]} : vector<16x32xf32> to vector<16x4xf32>
    %cst_87 = arith.constant 8.000000e-01 : f32
    %119 = vector.broadcast %cst_87 : f32 to vector<16x4xf32>
    %120 = arith.mulf %119, %118 : vector<16x4xf32>
    %121 = vector.extract_strided_slice %27 {offsets = [0, 20], sizes = [16, 4], strides = [1, 1]} : vector<16x32xf32> to vector<16x4xf32>
    %cst_88 = arith.constant 2.000000e-01 : f32
    %122 = vector.broadcast %cst_88 : f32 to vector<16x4xf32>
    %123 = arith.mulf %122, %121 : vector<16x4xf32>
    %124 = arith.addf %120, %123 : vector<16x4xf32>
    %c1_89 = arith.constant 1 : index
    %c10 = arith.constant 10 : index
    %c0_90 = arith.constant 0 : index
    %125 = vector.load %arg10[%c1_89, %c10, %c0_90] : memref<18x18x4xf32, #tpu.memory_space<vmem>>, vector<16x1x4xf32>
    %126 = vector.shape_cast %125 : vector<16x1x4xf32> to vector<16x4xf32>
    %127 = vector.shape_cast %124 : vector<16x4xf32> to vector<16x1x4xf32>
    tpu.vector_store %arg10[%c1_89, %c10, %c0_90], %127 {strides = array<i32>} : memref<18x18x4xf32, #tpu.memory_space<vmem>>, vector<16x1x4xf32>,
    %128 = vector.extract_strided_slice %27 {offsets = [0, 16], sizes = [16, 4], strides = [1, 1]} : vector<16x32xf32> to vector<16x4xf32>
    %cst_91 = arith.constant 0.333333343 : f32
    %129 = vector.broadcast %cst_91 : f32 to vector<16x4xf32>
    %130 = arith.mulf %129, %128 : vector<16x4xf32>
    %131 = vector.extract_strided_slice %27 {offsets = [0, 20], sizes = [16, 4], strides = [1, 1]} : vector<16x32xf32> to vector<16x4xf32>
    %cst_92 = arith.constant 0.666666686 : f32
    %132 = vector.broadcast %cst_92 : f32 to vector<16x4xf32>
    %133 = arith.mulf %132, %131 : vector<16x4xf32>
    %134 = arith.addf %130, %133 : vector<16x4xf32>
    %c1_93 = arith.constant 1 : index
    %c11 = arith.constant 11 : index
    %c0_94 = arith.constant 0 : index
    %135 = vector.load %arg10[%c1_93, %c11, %c0_94] : memref<18x18x4xf32, #tpu.memory_space<vmem>>, vector<16x1x4xf32>
    %136 = vector.shape_cast %135 : vector<16x1x4xf32> to vector<16x4xf32>
    %137 = vector.shape_cast %134 : vector<16x4xf32> to vector<16x1x4xf32>
    tpu.vector_store %arg10[%c1_93, %c11, %c0_94], %137 {strides = array<i32>} : memref<18x18x4xf32, #tpu.memory_space<vmem>>, vector<16x1x4xf32>,
    %138 = vector.extract_strided_slice %27 {offsets = [0, 20], sizes = [16, 4], strides = [1, 1]} : vector<16x32xf32> to vector<16x4xf32>
    %cst_95 = arith.constant 0.866666674 : f32
    %139 = vector.broadcast %cst_95 : f32 to vector<16x4xf32>
    %140 = arith.mulf %139, %138 : vector<16x4xf32>
    %141 = vector.extract_strided_slice %27 {offsets = [0, 24], sizes = [16, 4], strides = [1, 1]} : vector<16x32xf32> to vector<16x4xf32>
    %cst_96 = arith.constant 0.13333334 : f32
    %142 = vector.broadcast %cst_96 : f32 to vector<16x4xf32>
    %143 = arith.mulf %142, %141 : vector<16x4xf32>
    %144 = arith.addf %140, %143 : vector<16x4xf32>
    %c1_97 = arith.constant 1 : index
    %c12 = arith.constant 12 : index
    %c0_98 = arith.constant 0 : index
    %145 = vector.load %arg10[%c1_97, %c12, %c0_98] : memref<18x18x4xf32, #tpu.memory_space<vmem>>, vector<16x1x4xf32>
    %146 = vector.shape_cast %145 : vector<16x1x4xf32> to vector<16x4xf32>
    %147 = vector.shape_cast %144 : vector<16x4xf32> to vector<16x1x4xf32>
    tpu.vector_store %arg10[%c1_97, %c12, %c0_98], %147 {strides = array<i32>} : memref<18x18x4xf32, #tpu.memory_space<vmem>>, vector<16x1x4xf32>,
    %148 = vector.extract_strided_slice %27 {offsets = [0, 20], sizes = [16, 4], strides = [1, 1]} : vector<16x32xf32> to vector<16x4xf32>
    %cst_99 = arith.constant 4.000000e-01 : f32
    %149 = vector.broadcast %cst_99 : f32 to vector<16x4xf32>
    %150 = arith.mulf %149, %148 : vector<16x4xf32>
    %151 = vector.extract_strided_slice %27 {offsets = [0, 24], sizes = [16, 4], strides = [1, 1]} : vector<16x32xf32> to vector<16x4xf32>
    %cst_100 = arith.constant 6.000000e-01 : f32
    %152 = vector.broadcast %cst_100 : f32 to vector<16x4xf32>
    %153 = arith.mulf %152, %151 : vector<16x4xf32>
    %154 = arith.addf %150, %153 : vector<16x4xf32>
    %c1_101 = arith.constant 1 : index
    %c13 = arith.constant 13 : index
    %c0_102 = arith.constant 0 : index
    %155 = vector.load %arg10[%c1_101, %c13, %c0_102] : memref<18x18x4xf32, #tpu.memory_space<vmem>>, vector<16x1x4xf32>
    %156 = vector.shape_cast %155 : vector<16x1x4xf32> to vector<16x4xf32>
    %157 = vector.shape_cast %154 : vector<16x4xf32> to vector<16x1x4xf32>
    tpu.vector_store %arg10[%c1_101, %c13, %c0_102], %157 {strides = array<i32>} : memref<18x18x4xf32, #tpu.memory_space<vmem>>, vector<16x1x4xf32>,
    %158 = vector.extract_strided_slice %27 {offsets = [0, 24], sizes = [16, 4], strides = [1, 1]} : vector<16x32xf32> to vector<16x4xf32>
    %cst_103 = arith.constant 0.933333337 : f32
    %159 = vector.broadcast %cst_103 : f32 to vector<16x4xf32>
    %160 = arith.mulf %159, %158 : vector<16x4xf32>
    %161 = vector.extract_strided_slice %27 {offsets = [0, 28], sizes = [16, 4], strides = [1, 1]} : vector<16x32xf32> to vector<16x4xf32>
    %cst_104 = arith.constant 0.0666666701 : f32
    %162 = vector.broadcast %cst_104 : f32 to vector<16x4xf32>
    %163 = arith.mulf %162, %161 : vector<16x4xf32>
    %164 = arith.addf %160, %163 : vector<16x4xf32>
    %c1_105 = arith.constant 1 : index
    %c14 = arith.constant 14 : index
    %c0_106 = arith.constant 0 : index
    %165 = vector.load %arg10[%c1_105, %c14, %c0_106] : memref<18x18x4xf32, #tpu.memory_space<vmem>>, vector<16x1x4xf32>
    %166 = vector.shape_cast %165 : vector<16x1x4xf32> to vector<16x4xf32>
    %167 = vector.shape_cast %164 : vector<16x4xf32> to vector<16x1x4xf32>
    tpu.vector_store %arg10[%c1_105, %c14, %c0_106], %167 {strides = array<i32>} : memref<18x18x4xf32, #tpu.memory_space<vmem>>, vector<16x1x4xf32>,
    %168 = vector.extract_strided_slice %27 {offsets = [0, 24], sizes = [16, 4], strides = [1, 1]} : vector<16x32xf32> to vector<16x4xf32>
    %cst_107 = arith.constant 0.466666669 : f32
    %169 = vector.broadcast %cst_107 : f32 to vector<16x4xf32>
    %170 = arith.mulf %169, %168 : vector<16x4xf32>
    %171 = vector.extract_strided_slice %27 {offsets = [0, 28], sizes = [16, 4], strides = [1, 1]} : vector<16x32xf32> to vector<16x4xf32>
    %cst_108 = arith.constant 0.533333361 : f32
    %172 = vector.broadcast %cst_108 : f32 to vector<16x4xf32>
    %173 = arith.mulf %172, %171 : vector<16x4xf32>
    %174 = arith.addf %170, %173 : vector<16x4xf32>
    %c1_109 = arith.constant 1 : index
    %c15 = arith.constant 15 : index
    %c0_110 = arith.constant 0 : index
    %175 = vector.load %arg10[%c1_109, %c15, %c0_110] : memref<18x18x4xf32, #tpu.memory_space<vmem>>, vector<16x1x4xf32>
    %176 = vector.shape_cast %175 : vector<16x1x4xf32> to vector<16x4xf32>
    %177 = vector.shape_cast %174 : vector<16x4xf32> to vector<16x1x4xf32>
    tpu.vector_store %arg10[%c1_109, %c15, %c0_110], %177 {strides = array<i32>} : memref<18x18x4xf32, #tpu.memory_space<vmem>>, vector<16x1x4xf32>,
    %178 = vector.extract_strided_slice %27 {offsets = [0, 24], sizes = [16, 4], strides = [1, 1]} : vector<16x32xf32> to vector<16x4xf32>
    %cst_111 = arith.constant 0.000000e+00 : f32
    %179 = vector.broadcast %cst_111 : f32 to vector<16x4xf32>
    %180 = arith.mulf %179, %178 : vector<16x4xf32>
    %181 = vector.extract_strided_slice %27 {offsets = [0, 28], sizes = [16, 4], strides = [1, 1]} : vector<16x32xf32> to vector<16x4xf32>
    %cst_112 = arith.constant 1.000000e+00 : f32
    %182 = vector.broadcast %cst_112 : f32 to vector<16x4xf32>
    %183 = arith.mulf %182, %181 : vector<16x4xf32>
    %184 = arith.addf %180, %183 : vector<16x4xf32>
    %c1_113 = arith.constant 1 : index
    %c16 = arith.constant 16 : index
    %c0_114 = arith.constant 0 : index
    %185 = vector.load %arg10[%c1_113, %c16, %c0_114] : memref<18x18x4xf32, #tpu.memory_space<vmem>>, vector<16x1x4xf32>
    %186 = vector.shape_cast %185 : vector<16x1x4xf32> to vector<16x4xf32>
    %187 = vector.shape_cast %184 : vector<16x4xf32> to vector<16x1x4xf32>
    tpu.vector_store %arg10[%c1_113, %c16, %c0_114], %187 {strides = array<i32>} : memref<18x18x4xf32, #tpu.memory_space<vmem>>, vector<16x1x4xf32>,
    %c0_115 = arith.constant 0 : index
    %c0_116 = arith.constant 0 : index
    %c0_117 = arith.constant 0 : index
    %c0_118 = arith.constant 0 : index
    %188 = vector.load %arg2[%c0_115, %c0_116, %c0_117, %c0_118] : memref<1x16x16x4xbf16, #tpu.memory_space<vmem>>, vector<1x16x16x4xbf16>
    %189 = vector.shape_cast %188 : vector<1x16x16x4xbf16> to vector<16x16x4xbf16>
    %190 = arith.extf %189 : vector<16x16x4xbf16> to vector<16x16x4xf32>
    %c1_119 = arith.constant 1 : index
    %c1_120 = arith.constant 1 : index
    %c0_121 = arith.constant 0 : index
    %191 = vector.load %arg9[%c1_119, %c1_120, %c0_121] : memref<18x18x4xf32, #tpu.memory_space<vmem>>, vector<16x16x4xf32>
    tpu.vector_store %arg9[%c1_119, %c1_120, %c0_121], %190 {strides = array<i32>} : memref<18x18x4xf32, #tpu.memory_space<vmem>>, vector<16x16x4xf32>,
    %c0_122 = arith.constant 0 : index
    %c0_123 = arith.constant 0 : index
    %c0_124 = arith.constant 0 : index
    %192 = vector.load %arg9[%c0_122, %c0_123, %c0_124] : memref<18x18x4xf32, #tpu.memory_space<vmem>>, vector<16x16x4xf32>
    %193 = vector.shape_cast %192 : vector<16x16x4xf32> to vector<256x4xf32>
    %194 = arith.truncf %193 : vector<256x4xf32> to vector<256x4xbf16>
    %c0_125 = arith.constant 0 : index
    %c0_126 = arith.constant 0 : index
    %195 = vector.load %arg12[%c0_125, %c0_126] : memref<256x72xbf16, #tpu.memory_space<vmem>>, vector<256x4xbf16>
    tpu.vector_store %arg12[%c0_125, %c0_126], %194 {strides = array<i32>} : memref<256x72xbf16, #tpu.memory_space<vmem>>, vector<256x4xbf16>,
    %c0_127 = arith.constant 0 : index
    %c0_128 = arith.constant 0 : index
    %c0_129 = arith.constant 0 : index
    %196 = vector.load %arg10[%c0_127, %c0_128, %c0_129] : memref<18x18x4xf32, #tpu.memory_space<vmem>>, vector<16x16x4xf32>
    %197 = vector.shape_cast %196 : vector<16x16x4xf32> to vector<256x4xf32>
    %198 = arith.truncf %197 : vector<256x4xf32> to vector<256x4xbf16>
    %c0_130 = arith.constant 0 : index
    %c4_131 = arith.constant 4 : index
    %199 = vector.load %arg12[%c0_130, %c4_131] : memref<256x72xbf16, #tpu.memory_space<vmem>>, vector<256x4xbf16>
    tpu.vector_store %arg12[%c0_130, %c4_131], %198 {strides = array<i32>} : memref<256x72xbf16, #tpu.memory_space<vmem>>, vector<256x4xbf16>,
    %c0_132 = arith.constant 0 : index
    %c1_133 = arith.constant 1 : index
    %c0_134 = arith.constant 0 : index
    %200 = vector.load %arg9[%c0_132, %c1_133, %c0_134] : memref<18x18x4xf32, #tpu.memory_space<vmem>>, vector<16x16x4xf32>
    %201 = vector.shape_cast %200 : vector<16x16x4xf32> to vector<256x4xf32>
    %202 = arith.truncf %201 : vector<256x4xf32> to vector<256x4xbf16>
    %c0_135 = arith.constant 0 : index
    %c8_136 = arith.constant 8 : index
    %203 = vector.load %arg12[%c0_135, %c8_136] : memref<256x72xbf16, #tpu.memory_space<vmem>>, vector<256x4xbf16>
    tpu.vector_store %arg12[%c0_135, %c8_136], %202 {strides = array<i32>} : memref<256x72xbf16, #tpu.memory_space<vmem>>, vector<256x4xbf16>,
    %c0_137 = arith.constant 0 : index
    %c1_138 = arith.constant 1 : index
    %c0_139 = arith.constant 0 : index
    %204 = vector.load %arg10[%c0_137, %c1_138, %c0_139] : memref<18x18x4xf32, #tpu.memory_space<vmem>>, vector<16x16x4xf32>
    %205 = vector.shape_cast %204 : vector<16x16x4xf32> to vector<256x4xf32>
    %206 = arith.truncf %205 : vector<256x4xf32> to vector<256x4xbf16>
    %c0_140 = arith.constant 0 : index
    %c12_141 = arith.constant 12 : index
    %207 = vector.load %arg12[%c0_140, %c12_141] : memref<256x72xbf16, #tpu.memory_space<vmem>>, vector<256x4xbf16>
    tpu.vector_store %arg12[%c0_140, %c12_141], %206 {strides = array<i32>} : memref<256x72xbf16, #tpu.memory_space<vmem>>, vector<256x4xbf16>,
    %c0_142 = arith.constant 0 : index
    %c2_143 = arith.constant 2 : index
    %c0_144 = arith.constant 0 : index
    %208 = vector.load %arg9[%c0_142, %c2_143, %c0_144] : memref<18x18x4xf32, #tpu.memory_space<vmem>>, vector<16x16x4xf32>
    %209 = vector.shape_cast %208 : vector<16x16x4xf32> to vector<256x4xf32>
    %210 = arith.truncf %209 : vector<256x4xf32> to vector<256x4xbf16>
    %c0_145 = arith.constant 0 : index
    %c16_146 = arith.constant 16 : index
    %211 = vector.load %arg12[%c0_145, %c16_146] : memref<256x72xbf16, #tpu.memory_space<vmem>>, vector<256x4xbf16>
    tpu.vector_store %arg12[%c0_145, %c16_146], %210 {strides = array<i32>} : memref<256x72xbf16, #tpu.memory_space<vmem>>, vector<256x4xbf16>,
    %c0_147 = arith.constant 0 : index
    %c2_148 = arith.constant 2 : index
    %c0_149 = arith.constant 0 : index
    %212 = vector.load %arg10[%c0_147, %c2_148, %c0_149] : memref<18x18x4xf32, #tpu.memory_space<vmem>>, vector<16x16x4xf32>
    %213 = vector.shape_cast %212 : vector<16x16x4xf32> to vector<256x4xf32>
    %214 = arith.truncf %213 : vector<256x4xf32> to vector<256x4xbf16>
    %c0_150 = arith.constant 0 : index
    %c20 = arith.constant 20 : index
    %215 = vector.load %arg12[%c0_150, %c20] : memref<256x72xbf16, #tpu.memory_space<vmem>>, vector<256x4xbf16>
    tpu.vector_store %arg12[%c0_150, %c20], %214 {strides = array<i32>} : memref<256x72xbf16, #tpu.memory_space<vmem>>, vector<256x4xbf16>,
    %c1_151 = arith.constant 1 : index
    %c0_152 = arith.constant 0 : index
    %c0_153 = arith.constant 0 : index
    %216 = vector.load %arg9[%c1_151, %c0_152, %c0_153] : memref<18x18x4xf32, #tpu.memory_space<vmem>>, vector<16x16x4xf32>
    %217 = vector.shape_cast %216 : vector<16x16x4xf32> to vector<256x4xf32>
    %218 = arith.truncf %217 : vector<256x4xf32> to vector<256x4xbf16>
    %c0_154 = arith.constant 0 : index
    %c24 = arith.constant 24 : index
    %219 = vector.load %arg12[%c0_154, %c24] : memref<256x72xbf16, #tpu.memory_space<vmem>>, vector<256x4xbf16>
    tpu.vector_store %arg12[%c0_154, %c24], %218 {strides = array<i32>} : memref<256x72xbf16, #tpu.memory_space<vmem>>, vector<256x4xbf16>,
    %c1_155 = arith.constant 1 : index
    %c0_156 = arith.constant 0 : index
    %c0_157 = arith.constant 0 : index
    %220 = vector.load %arg10[%c1_155, %c0_156, %c0_157] : memref<18x18x4xf32, #tpu.memory_space<vmem>>, vector<16x16x4xf32>
    %221 = vector.shape_cast %220 : vector<16x16x4xf32> to vector<256x4xf32>
    %222 = arith.truncf %221 : vector<256x4xf32> to vector<256x4xbf16>
    %c0_158 = arith.constant 0 : index
    %c28 = arith.constant 28 : index
    %223 = vector.load %arg12[%c0_158, %c28] : memref<256x72xbf16, #tpu.memory_space<vmem>>, vector<256x4xbf16>
    tpu.vector_store %arg12[%c0_158, %c28], %222 {strides = array<i32>} : memref<256x72xbf16, #tpu.memory_space<vmem>>, vector<256x4xbf16>,
    %c1_159 = arith.constant 1 : index
    %c1_160 = arith.constant 1 : index
    %c0_161 = arith.constant 0 : index
    %224 = vector.load %arg9[%c1_159, %c1_160, %c0_161] : memref<18x18x4xf32, #tpu.memory_space<vmem>>, vector<16x16x4xf32>
    %225 = vector.shape_cast %224 : vector<16x16x4xf32> to vector<256x4xf32>
    %226 = arith.truncf %225 : vector<256x4xf32> to vector<256x4xbf16>
    %c0_162 = arith.constant 0 : index
    %c32 = arith.constant 32 : index
    %227 = vector.load %arg12[%c0_162, %c32] : memref<256x72xbf16, #tpu.memory_space<vmem>>, vector<256x4xbf16>
    tpu.vector_store %arg12[%c0_162, %c32], %226 {strides = array<i32>} : memref<256x72xbf16, #tpu.memory_space<vmem>>, vector<256x4xbf16>,
    %c1_163 = arith.constant 1 : index
    %c1_164 = arith.constant 1 : index
    %c0_165 = arith.constant 0 : index
    %228 = vector.load %arg10[%c1_163, %c1_164, %c0_165] : memref<18x18x4xf32, #tpu.memory_space<vmem>>, vector<16x16x4xf32>
    %229 = vector.shape_cast %228 : vector<16x16x4xf32> to vector<256x4xf32>
    %230 = arith.truncf %229 : vector<256x4xf32> to vector<256x4xbf16>
    %c0_166 = arith.constant 0 : index
    %c36 = arith.constant 36 : index
    %231 = vector.load %arg12[%c0_166, %c36] : memref<256x72xbf16, #tpu.memory_space<vmem>>, vector<256x4xbf16>
    tpu.vector_store %arg12[%c0_166, %c36], %230 {strides = array<i32>} : memref<256x72xbf16, #tpu.memory_space<vmem>>, vector<256x4xbf16>,
    %c1_167 = arith.constant 1 : index
    %c2_168 = arith.constant 2 : index
    %c0_169 = arith.constant 0 : index
    %232 = vector.load %arg9[%c1_167, %c2_168, %c0_169] : memref<18x18x4xf32, #tpu.memory_space<vmem>>, vector<16x16x4xf32>
    %233 = vector.shape_cast %232 : vector<16x16x4xf32> to vector<256x4xf32>
    %234 = arith.truncf %233 : vector<256x4xf32> to vector<256x4xbf16>
    %c0_170 = arith.constant 0 : index
    %c40 = arith.constant 40 : index
    %235 = vector.load %arg12[%c0_170, %c40] : memref<256x72xbf16, #tpu.memory_space<vmem>>, vector<256x4xbf16>
    tpu.vector_store %arg12[%c0_170, %c40], %234 {strides = array<i32>} : memref<256x72xbf16, #tpu.memory_space<vmem>>, vector<256x4xbf16>,
    %c1_171 = arith.constant 1 : index
    %c2_172 = arith.constant 2 : index
    %c0_173 = arith.constant 0 : index
    %236 = vector.load %arg10[%c1_171, %c2_172, %c0_173] : memref<18x18x4xf32, #tpu.memory_space<vmem>>, vector<16x16x4xf32>
    %237 = vector.shape_cast %236 : vector<16x16x4xf32> to vector<256x4xf32>
    %238 = arith.truncf %237 : vector<256x4xf32> to vector<256x4xbf16>
    %c0_174 = arith.constant 0 : index
    %c44 = arith.constant 44 : index
    %239 = vector.load %arg12[%c0_174, %c44] : memref<256x72xbf16, #tpu.memory_space<vmem>>, vector<256x4xbf16>
    tpu.vector_store %arg12[%c0_174, %c44], %238 {strides = array<i32>} : memref<256x72xbf16, #tpu.memory_space<vmem>>, vector<256x4xbf16>,
    %c2_175 = arith.constant 2 : index
    %c0_176 = arith.constant 0 : index
    %c0_177 = arith.constant 0 : index
    %240 = vector.load %arg9[%c2_175, %c0_176, %c0_177] : memref<18x18x4xf32, #tpu.memory_space<vmem>>, vector<16x16x4xf32>
    %241 = vector.shape_cast %240 : vector<16x16x4xf32> to vector<256x4xf32>
    %242 = arith.truncf %241 : vector<256x4xf32> to vector<256x4xbf16>
    %c0_178 = arith.constant 0 : index
    %c48 = arith.constant 48 : index
    %243 = vector.load %arg12[%c0_178, %c48] : memref<256x72xbf16, #tpu.memory_space<vmem>>, vector<256x4xbf16>
    tpu.vector_store %arg12[%c0_178, %c48], %242 {strides = array<i32>} : memref<256x72xbf16, #tpu.memory_space<vmem>>, vector<256x4xbf16>,
    %c2_179 = arith.constant 2 : index
    %c0_180 = arith.constant 0 : index
    %c0_181 = arith.constant 0 : index
    %244 = vector.load %arg10[%c2_179, %c0_180, %c0_181] : memref<18x18x4xf32, #tpu.memory_space<vmem>>, vector<16x16x4xf32>
    %245 = vector.shape_cast %244 : vector<16x16x4xf32> to vector<256x4xf32>
    %246 = arith.truncf %245 : vector<256x4xf32> to vector<256x4xbf16>
    %c0_182 = arith.constant 0 : index
    %c52 = arith.constant 52 : index
    %247 = vector.load %arg12[%c0_182, %c52] : memref<256x72xbf16, #tpu.memory_space<vmem>>, vector<256x4xbf16>
    tpu.vector_store %arg12[%c0_182, %c52], %246 {strides = array<i32>} : memref<256x72xbf16, #tpu.memory_space<vmem>>, vector<256x4xbf16>,
    %c2_183 = arith.constant 2 : index
    %c1_184 = arith.constant 1 : index
    %c0_185 = arith.constant 0 : index
    %248 = vector.load %arg9[%c2_183, %c1_184, %c0_185] : memref<18x18x4xf32, #tpu.memory_space<vmem>>, vector<16x16x4xf32>
    %249 = vector.shape_cast %248 : vector<16x16x4xf32> to vector<256x4xf32>
    %250 = arith.truncf %249 : vector<256x4xf32> to vector<256x4xbf16>
    %c0_186 = arith.constant 0 : index
    %c56 = arith.constant 56 : index
    %251 = vector.load %arg12[%c0_186, %c56] : memref<256x72xbf16, #tpu.memory_space<vmem>>, vector<256x4xbf16>
    tpu.vector_store %arg12[%c0_186, %c56], %250 {strides = array<i32>} : memref<256x72xbf16, #tpu.memory_space<vmem>>, vector<256x4xbf16>,
    %c2_187 = arith.constant 2 : index
    %c1_188 = arith.constant 1 : index
    %c0_189 = arith.constant 0 : index
    %252 = vector.load %arg10[%c2_187, %c1_188, %c0_189] : memref<18x18x4xf32, #tpu.memory_space<vmem>>, vector<16x16x4xf32>
    %253 = vector.shape_cast %252 : vector<16x16x4xf32> to vector<256x4xf32>
    %254 = arith.truncf %253 : vector<256x4xf32> to vector<256x4xbf16>
    %c0_190 = arith.constant 0 : index
    %c60 = arith.constant 60 : index
    %255 = vector.load %arg12[%c0_190, %c60] : memref<256x72xbf16, #tpu.memory_space<vmem>>, vector<256x4xbf16>
    tpu.vector_store %arg12[%c0_190, %c60], %254 {strides = array<i32>} : memref<256x72xbf16, #tpu.memory_space<vmem>>, vector<256x4xbf16>,
    %c2_191 = arith.constant 2 : index
    %c2_192 = arith.constant 2 : index
    %c0_193 = arith.constant 0 : index
    %256 = vector.load %arg9[%c2_191, %c2_192, %c0_193] : memref<18x18x4xf32, #tpu.memory_space<vmem>>, vector<16x16x4xf32>
    %257 = vector.shape_cast %256 : vector<16x16x4xf32> to vector<256x4xf32>
    %258 = arith.truncf %257 : vector<256x4xf32> to vector<256x4xbf16>
    %c0_194 = arith.constant 0 : index
    %c64 = arith.constant 64 : index
    %259 = vector.load %arg12[%c0_194, %c64] : memref<256x72xbf16, #tpu.memory_space<vmem>>, vector<256x4xbf16>
    tpu.vector_store %arg12[%c0_194, %c64], %258 {strides = array<i32>} : memref<256x72xbf16, #tpu.memory_space<vmem>>, vector<256x4xbf16>,
    %c2_195 = arith.constant 2 : index
    %c2_196 = arith.constant 2 : index
    %c0_197 = arith.constant 0 : index
    %260 = vector.load %arg10[%c2_195, %c2_196, %c0_197] : memref<18x18x4xf32, #tpu.memory_space<vmem>>, vector<16x16x4xf32>
    %261 = vector.shape_cast %260 : vector<16x16x4xf32> to vector<256x4xf32>
    %262 = arith.truncf %261 : vector<256x4xf32> to vector<256x4xbf16>
    %c0_198 = arith.constant 0 : index
    %c68 = arith.constant 68 : index
    %263 = vector.load %arg12[%c0_198, %c68] : memref<256x72xbf16, #tpu.memory_space<vmem>>, vector<256x4xbf16>
    tpu.vector_store %arg12[%c0_198, %c68], %262 {strides = array<i32>} : memref<256x72xbf16, #tpu.memory_space<vmem>>, vector<256x4xbf16>,
    %c0_199 = arith.constant 0 : index
    %c0_200 = arith.constant 0 : index
    %264 = vector.load %arg12[%c0_199, %c0_200] : memref<256x72xbf16, #tpu.memory_space<vmem>>, vector<256x72xbf16>
    %c0_201 = arith.constant 0 : index
    %c0_202 = arith.constant 0 : index
    %265 = vector.load %arg4[%c0_201, %c0_202] : memref<72x4xbf16, #tpu.memory_space<vmem>>, vector<72x4xbf16>
    %cst_203 = arith.constant dense<0.000000e+00> : vector<256x4xf32>
    %266 = tpu.matmul %264, %265, %cst_203 {dimension_numbers = #tpu.dot_dimension_numbers<[1], [0], [0], [1], [0, 0, 1, 1], [], []>} : vector<256x72xbf16>, vector<72x4xbf16>, vector<256x4xf32> -> vector<256x4xf32>
    %c0_204 = arith.constant 0 : index
    %c0_205 = arith.constant 0 : index
    %267 = vector.load %arg5[%c0_204, %c0_205] : memref<2x4xf32, #tpu.memory_space<vmem>>, vector<1x4xf32>
    %268 = vector.broadcast %267 : vector<1x4xf32> to vector<256x4xf32>
    %269 = arith.mulf %266, %268 : vector<256x4xf32>
    %c1_206 = arith.constant 1 : index
    %c0_207 = arith.constant 0 : index
    %270 = vector.load %arg5[%c1_206, %c0_207] : memref<2x4xf32, #tpu.memory_space<vmem>>, vector<1x4xf32>
    %271 = vector.broadcast %270 : vector<1x4xf32> to vector<256x4xf32>
    %272 = arith.addf %269, %271 : vector<256x4xf32>
    %cst_208 = arith.constant 0.000000e+00 : f32
    %273 = vector.broadcast %cst_208 : f32 to vector<256x4xf32>
    %274 = arith.maximumf %272, %273 : vector<256x4xf32>
    %275 = vector.shape_cast %274 : vector<256x4xf32> to vector<16x16x4xf32>
    %c1_209 = arith.constant 1 : index
    %c1_210 = arith.constant 1 : index
    %c0_211 = arith.constant 0 : index
    %276 = vector.load %arg11[%c1_209, %c1_210, %c0_211] : memref<18x18x4xf32, #tpu.memory_space<vmem>>, vector<16x16x4xf32>
    tpu.vector_store %arg11[%c1_209, %c1_210, %c0_211], %275 {strides = array<i32>} : memref<18x18x4xf32, #tpu.memory_space<vmem>>, vector<16x16x4xf32>,
    %c0_212 = arith.constant 0 : index
    %c0_213 = arith.constant 0 : index
    %c0_214 = arith.constant 0 : index
    %277 = vector.load %arg11[%c0_212, %c0_213, %c0_214] : memref<18x18x4xf32, #tpu.memory_space<vmem>>, vector<16x16x4xf32>
    %278 = vector.shape_cast %277 : vector<16x16x4xf32> to vector<256x4xf32>
    %279 = arith.truncf %278 : vector<256x4xf32> to vector<256x4xbf16>
    %c0_215 = arith.constant 0 : index
    %c0_216 = arith.constant 0 : index
    %280 = vector.load %arg13[%c0_215, %c0_216] : memref<256x36xbf16, #tpu.memory_space<vmem>>, vector<256x4xbf16>
    tpu.vector_store %arg13[%c0_215, %c0_216], %279 {strides = array<i32>} : memref<256x36xbf16, #tpu.memory_space<vmem>>, vector<256x4xbf16>,
    %c0_217 = arith.constant 0 : index
    %c1_218 = arith.constant 1 : index
    %c0_219 = arith.constant 0 : index
    %281 = vector.load %arg11[%c0_217, %c1_218, %c0_219] : memref<18x18x4xf32, #tpu.memory_space<vmem>>, vector<16x16x4xf32>
    %282 = vector.shape_cast %281 : vector<16x16x4xf32> to vector<256x4xf32>
    %283 = arith.truncf %282 : vector<256x4xf32> to vector<256x4xbf16>
    %c0_220 = arith.constant 0 : index
    %c4_221 = arith.constant 4 : index
    %284 = vector.load %arg13[%c0_220, %c4_221] : memref<256x36xbf16, #tpu.memory_space<vmem>>, vector<256x4xbf16>
    tpu.vector_store %arg13[%c0_220, %c4_221], %283 {strides = array<i32>} : memref<256x36xbf16, #tpu.memory_space<vmem>>, vector<256x4xbf16>,
    %c0_222 = arith.constant 0 : index
    %c2_223 = arith.constant 2 : index
    %c0_224 = arith.constant 0 : index
    %285 = vector.load %arg11[%c0_222, %c2_223, %c0_224] : memref<18x18x4xf32, #tpu.memory_space<vmem>>, vector<16x16x4xf32>
    %286 = vector.shape_cast %285 : vector<16x16x4xf32> to vector<256x4xf32>
    %287 = arith.truncf %286 : vector<256x4xf32> to vector<256x4xbf16>
    %c0_225 = arith.constant 0 : index
    %c8_226 = arith.constant 8 : index
    %288 = vector.load %arg13[%c0_225, %c8_226] : memref<256x36xbf16, #tpu.memory_space<vmem>>, vector<256x4xbf16>
    tpu.vector_store %arg13[%c0_225, %c8_226], %287 {strides = array<i32>} : memref<256x36xbf16, #tpu.memory_space<vmem>>, vector<256x4xbf16>,
    %c1_227 = arith.constant 1 : index
    %c0_228 = arith.constant 0 : index
    %c0_229 = arith.constant 0 : index
    %289 = vector.load %arg11[%c1_227, %c0_228, %c0_229] : memref<18x18x4xf32, #tpu.memory_space<vmem>>, vector<16x16x4xf32>
    %290 = vector.shape_cast %289 : vector<16x16x4xf32> to vector<256x4xf32>
    %291 = arith.truncf %290 : vector<256x4xf32> to vector<256x4xbf16>
    %c0_230 = arith.constant 0 : index
    %c12_231 = arith.constant 12 : index
    %292 = vector.load %arg13[%c0_230, %c12_231] : memref<256x36xbf16, #tpu.memory_space<vmem>>, vector<256x4xbf16>
    tpu.vector_store %arg13[%c0_230, %c12_231], %291 {strides = array<i32>} : memref<256x36xbf16, #tpu.memory_space<vmem>>, vector<256x4xbf16>,
    %c1_232 = arith.constant 1 : index
    %c1_233 = arith.constant 1 : index
    %c0_234 = arith.constant 0 : index
    %293 = vector.load %arg11[%c1_232, %c1_233, %c0_234] : memref<18x18x4xf32, #tpu.memory_space<vmem>>, vector<16x16x4xf32>
    %294 = vector.shape_cast %293 : vector<16x16x4xf32> to vector<256x4xf32>
    %295 = arith.truncf %294 : vector<256x4xf32> to vector<256x4xbf16>
    %c0_235 = arith.constant 0 : index
    %c16_236 = arith.constant 16 : index
    %296 = vector.load %arg13[%c0_235, %c16_236] : memref<256x36xbf16, #tpu.memory_space<vmem>>, vector<256x4xbf16>
    tpu.vector_store %arg13[%c0_235, %c16_236], %295 {strides = array<i32>} : memref<256x36xbf16, #tpu.memory_space<vmem>>, vector<256x4xbf16>,
    %c1_237 = arith.constant 1 : index
    %c2_238 = arith.constant 2 : index
    %c0_239 = arith.constant 0 : index
    %297 = vector.load %arg11[%c1_237, %c2_238, %c0_239] : memref<18x18x4xf32, #tpu.memory_space<vmem>>, vector<16x16x4xf32>
    %298 = vector.shape_cast %297 : vector<16x16x4xf32> to vector<256x4xf32>
    %299 = arith.truncf %298 : vector<256x4xf32> to vector<256x4xbf16>
    %c0_240 = arith.constant 0 : index
    %c20_241 = arith.constant 20 : index
    %300 = vector.load %arg13[%c0_240, %c20_241] : memref<256x36xbf16, #tpu.memory_space<vmem>>, vector<256x4xbf16>
    tpu.vector_store %arg13[%c0_240, %c20_241], %299 {strides = array<i32>} : memref<256x36xbf16, #tpu.memory_space<vmem>>, vector<256x4xbf16>,
    %c2_242 = arith.constant 2 : index
    %c0_243 = arith.constant 0 : index
    %c0_244 = arith.constant 0 : index
    %301 = vector.load %arg11[%c2_242, %c0_243, %c0_244] : memref<18x18x4xf32, #tpu.memory_space<vmem>>, vector<16x16x4xf32>
    %302 = vector.shape_cast %301 : vector<16x16x4xf32> to vector<256x4xf32>
    %303 = arith.truncf %302 : vector<256x4xf32> to vector<256x4xbf16>
    %c0_245 = arith.constant 0 : index
    %c24_246 = arith.constant 24 : index
    %304 = vector.load %arg13[%c0_245, %c24_246] : memref<256x36xbf16, #tpu.memory_space<vmem>>, vector<256x4xbf16>
    tpu.vector_store %arg13[%c0_245, %c24_246], %303 {strides = array<i32>} : memref<256x36xbf16, #tpu.memory_space<vmem>>, vector<256x4xbf16>,
    %c2_247 = arith.constant 2 : index
    %c1_248 = arith.constant 1 : index
    %c0_249 = arith.constant 0 : index
    %305 = vector.load %arg11[%c2_247, %c1_248, %c0_249] : memref<18x18x4xf32, #tpu.memory_space<vmem>>, vector<16x16x4xf32>
    %306 = vector.shape_cast %305 : vector<16x16x4xf32> to vector<256x4xf32>
    %307 = arith.truncf %306 : vector<256x4xf32> to vector<256x4xbf16>
    %c0_250 = arith.constant 0 : index
    %c28_251 = arith.constant 28 : index
    %308 = vector.load %arg13[%c0_250, %c28_251] : memref<256x36xbf16, #tpu.memory_space<vmem>>, vector<256x4xbf16>
    tpu.vector_store %arg13[%c0_250, %c28_251], %307 {strides = array<i32>} : memref<256x36xbf16, #tpu.memory_space<vmem>>, vector<256x4xbf16>,
    %c2_252 = arith.constant 2 : index
    %c2_253 = arith.constant 2 : index
    %c0_254 = arith.constant 0 : index
    %309 = vector.load %arg11[%c2_252, %c2_253, %c0_254] : memref<18x18x4xf32, #tpu.memory_space<vmem>>, vector<16x16x4xf32>
    %310 = vector.shape_cast %309 : vector<16x16x4xf32> to vector<256x4xf32>
    %311 = arith.truncf %310 : vector<256x4xf32> to vector<256x4xbf16>
    %c0_255 = arith.constant 0 : index
    %c32_256 = arith.constant 32 : index
    %312 = vector.load %arg13[%c0_255, %c32_256] : memref<256x36xbf16, #tpu.memory_space<vmem>>, vector<256x4xbf16>
    tpu.vector_store %arg13[%c0_255, %c32_256], %311 {strides = array<i32>} : memref<256x36xbf16, #tpu.memory_space<vmem>>, vector<256x4xbf16>,
    %c0_257 = arith.constant 0 : index
    %c0_258 = arith.constant 0 : index
    %313 = vector.load %arg13[%c0_257, %c0_258] : memref<256x36xbf16, #tpu.memory_space<vmem>>, vector<256x36xbf16>
    %c0_259 = arith.constant 0 : index
    %c0_260 = arith.constant 0 : index
    %314 = vector.load %arg6[%c0_259, %c0_260] : memref<36x8xbf16, #tpu.memory_space<vmem>>, vector<36x8xbf16>
    %cst_261 = arith.constant dense<0.000000e+00> : vector<256x8xf32>
    %315 = tpu.matmul %313, %314, %cst_261 {dimension_numbers = #tpu.dot_dimension_numbers<[1], [0], [0], [1], [0, 0, 1, 1], [], []>} : vector<256x36xbf16>, vector<36x8xbf16>, vector<256x8xf32> -> vector<256x8xf32>
    %c0_262 = arith.constant 0 : index
    %c0_263 = arith.constant 0 : index
    %316 = vector.load %arg7[%c0_262, %c0_263] : memref<2x8xf32, #tpu.memory_space<vmem>>, vector<1x8xf32>
    %317 = vector.broadcast %316 : vector<1x8xf32> to vector<256x8xf32>
    %318 = arith.mulf %315, %317 : vector<256x8xf32>
    %c1_264 = arith.constant 1 : index
    %c0_265 = arith.constant 0 : index
    %319 = vector.load %arg7[%c1_264, %c0_265] : memref<2x8xf32, #tpu.memory_space<vmem>>, vector<1x8xf32>
    %320 = vector.broadcast %319 : vector<1x8xf32> to vector<256x8xf32>
    %321 = arith.addf %318, %320 : vector<256x8xf32>
    %cst_266 = arith.constant 0.000000e+00 : f32
    %322 = vector.broadcast %cst_266 : f32 to vector<256x8xf32>
    %323 = arith.maximumf %321, %322 : vector<256x8xf32>
    %324 = vector.shape_cast %323 : vector<256x8xf32> to vector<16x16x8xf32>
    %c0_267 = arith.constant 0 : index
    %c0_268 = arith.constant 0 : index
    %c0_269 = arith.constant 0 : index
    %c0_270 = arith.constant 0 : index
    %325 = vector.load %arg8[%c0_267, %c0_268, %c0_269, %c0_270] : memref<1x16x16x8xf32, #tpu.memory_space<vmem>>, vector<1x16x16x8xf32>
    %326 = vector.shape_cast %325 : vector<1x16x16x8xf32> to vector<16x16x8xf32>
    %327 = vector.shape_cast %324 : vector<16x16x8xf32> to vector<1x16x16x8xf32>
    tpu.vector_store %arg8[%c0_267, %c0_268, %c0_269, %c0_270], %327 {strides = array<i32>} : memref<1x16x16x8xf32, #tpu.memory_space<vmem>>, vector<1x16x16x8xf32>,
    return
  }
  func.func @transform_0(%arg0: i32) -> (i32, i32, i32) {
    %c0_i32 = arith.constant 0 : i32
    %c0_i32_0 = arith.constant 0 : i32
    %c0_i32_1 = arith.constant 0 : i32
    return %arg0, %c0_i32, %c0_i32_0 : i32, i32, i32
  }
  func.func @transform_1(%arg0: i32) -> (i32, i32, i32, i32) {
    %c0_i32 = arith.constant 0 : i32
    %c0_i32_0 = arith.constant 0 : i32
    %c0_i32_1 = arith.constant 0 : i32
    %c0_i32_2 = arith.constant 0 : i32
    return %arg0, %c0_i32, %c0_i32_0, %c0_i32_1 : i32, i32, i32, i32
  }
  func.func @transform_2(%arg0: i32) -> (i32, i32) {
    %c0_i32 = arith.constant 0 : i32
    %c0_i32_0 = arith.constant 0 : i32
    %c0_i32_1 = arith.constant 0 : i32
    return %c0_i32, %c0_i32_0 : i32, i32
  }
  func.func @transform_3(%arg0: i32) -> (i32, i32) {
    %c0_i32 = arith.constant 0 : i32
    %c0_i32_0 = arith.constant 0 : i32
    %c0_i32_1 = arith.constant 0 : i32
    return %c0_i32, %c0_i32_0 : i32, i32
  }
  func.func @transform_4(%arg0: i32) -> (i32, i32) {
    %c0_i32 = arith.constant 0 : i32
    %c0_i32_0 = arith.constant 0 : i32
    %c0_i32_1 = arith.constant 0 : i32
    return %c0_i32, %c0_i32_0 : i32, i32
  }
  func.func @transform_5(%arg0: i32) -> (i32, i32) {
    %c0_i32 = arith.constant 0 : i32
    %c0_i32_0 = arith.constant 0 : i32
    %c0_i32_1 = arith.constant 0 : i32
    return %c0_i32, %c0_i32_0 : i32, i32
  }
  func.func @transform_6(%arg0: i32) -> (i32, i32) {
    %c0_i32 = arith.constant 0 : i32
    %c0_i32_0 = arith.constant 0 : i32
    %c0_i32_1 = arith.constant 0 : i32
    return %c0_i32, %c0_i32_0 : i32, i32
  }
  func.func @transform_7(%arg0: i32) -> (i32, i32, i32, i32) {
    %c0_i32 = arith.constant 0 : i32
    %c0_i32_0 = arith.constant 0 : i32
    %c0_i32_1 = arith.constant 0 : i32
    %c0_i32_2 = arith.constant 0 : i32
    return %arg0, %c0_i32, %c0_i32_0, %c0_i32_1 : i32, i32, i32, i32
  }
}

</mosaic_0001>

<llo_original>
// kernel: tpu_custom_call.1
$region0: #{tpu_custom_call.1}
  #allocation0 [shape = 'u32[]', space=smem, size = 0x4, offset = 0x4, fixed_abs, tag = 'smem constant byte address 0x4 - core index']
  #allocation1 [shape = 'u32[144,128]{1,0:T(1,128)}', space=vmem, size = 0x12000, scoped, tag = 'internal scratch']
  #allocation2 [shape = 'f32[18,18,4]{2,1,0:T(8,128)}', space=vmem, size = 0x36000, scoped, tag = 'scratch operand']
  #allocation3 [shape = 'f32[18,18,4]{2,1,0:T(8,128)}', space=vmem, size = 0x36000, scoped, tag = 'scratch operand']
  #allocation4 [shape = 'f32[18,18,4]{2,1,0:T(8,128)}', space=vmem, size = 0x36000, scoped, tag = 'scratch operand']
  #allocation5 [shape = 'bf16[256,72]{1,0:T(16,128)(2,1)}', space=vmem, size = 0x10000, scoped, tag = 'scratch operand']
  #allocation6 [shape = 'bf16[256,36]{1,0:T(16,128)(2,1)}', space=vmem, size = 0x10000, scoped, tag = 'scratch operand']
  %s0 = inlined_call_operand.vmem [shape: bf16[2,8,32], index: 0, kind: input, shape index: {}]
  %s1 = inlined_call_operand.vmem [shape: bf16[2,16,16,4], index: 1, kind: input, shape index: {}]
  %s2 = inlined_call_operand.vmem [shape: bf16[16,8], index: 2, kind: input, shape index: {}]
  %s3 = inlined_call_operand.vmem [shape: bf16[72,4], index: 3, kind: input, shape index: {}]
  %s4 = inlined_call_operand.vmem [shape: f32[2,4], index: 4, kind: input, shape index: {}]
  %s5 = inlined_call_operand.vmem [shape: bf16[36,8], index: 5, kind: input, shape index: {}]
  %s6 = inlined_call_operand.vmem [shape: f32[2,8], index: 6, kind: input, shape index: {}]
  %s7 = inlined_call_operand.vmem [shape: f32[2,16,16,8], index: 7, kind: output, shape index: {}]
  %s8 = sld [smem:[#allocation0]]
  $region61: #{tpu_custom_call.1} parent=0
    _
  %s10 = ssub.s32 1, %s8
  %s11 = scalar_select 0, %s10, %s8
  loop: start=0, step=1, limit=4
  $region2: #{tpu_custom_call.1} parent=0 // loop_pre_header
    _
  $region3: #{tpu_custom_call.1} parent=0 // loop_header
    %s13 = sphi 0, %s17
    %p14 = scmp.ge.s32.totalorder %s13, 4
    %s23 = sphi 0, %s25
    %s26 = sphi 0, %s23
    %s27 = sphi 0, %s26
    %s43 = sphi 0, %s27
    %s49 = sphi 0, %s51
    %s52 = sphi 0, %s49
    %s53 = sphi 0, %s52
    %s69 = sphi 0, %s53
    %s73 = sphi 0, %s73
    %s75 = sphi 0, %s73
    %s76 = sphi 0, %s75
    %s90 = sphi 0, %s76
    %s94 = sphi 0, %s94
    %s96 = sphi 0, %s94
    %s97 = sphi 0, %s96
    %s111 = sphi 0, %s97
    %s115 = sphi 0, %s115
    %s117 = sphi 0, %s115
    %s118 = sphi 0, %s117
    %s132 = sphi 0, %s118
    %s136 = sphi 0, %s136
    %s138 = sphi 0, %s136
    %s139 = sphi 0, %s138
    %s153 = sphi 0, %s139
    %s157 = sphi 0, %s157
    %s159 = sphi 0, %s157
    %s160 = sphi 0, %s159
    %s174 = sphi 0, %s160
    %s180 = sphi 0, %s182
    %s183 = sphi 0, %s180
    %s184 = sphi 0, %s183
    %s200 = sphi 0, %s184
  $region4: #{tpu_custom_call.1} parent=0 // loop_header_branch
    %16 = sbr.rel (%p14) target = $region8
  $region5: #{tpu_custom_call.1} parent=0 // loop_body
    %s18 = ssub.s32 %s13, 1
    %s19 = ssub.s32 %s13, 2
    %s20 = sadd.s32 %s13, 1
    %s21 = ssub.s32 %s13, %s20
    %p22 = scmp.eq.s32.totalorder %s21, 0
    %s24 = sadd.s32 %s23, 1
    %s25 = scalar_select %p22, %s23, %s24
    %p28 = pneg %p22
    %p29 = scmp.eq.s32.totalorder %s13, 1
    %p30 = por %p28, %p29
    %p31 = scmp.ne.s32.totalorder %s23, %s26
    %p32 = scmp.eq.s32.totalorder %s13, 0
    %p33 = por %p31, %p32
    %p34 = scmp.ne.s32.totalorder %s23, %s26
    %p35 = scmp.eq.s32.totalorder %s18, 1
    %p36 = por %p34, %p35
    %p37 = scmp.ne.s32.totalorder %s26, %s27
    %p38 = scmp.eq.s32.totalorder %s18, 0
    %p39 = por %p37, %p38
    %p40 = scmp.ne.s32.totalorder %s26, %s27
    %p41 = scmp.eq.s32.totalorder %s19, 1
    %p42 = por %p40, %p41
    %p44 = scmp.ne.s32.totalorder %s27, %s43
    %p45 = scmp.eq.s32.totalorder %s19, 0
    %p46 = por %p44, %p45
    %s47 = ssub.s32 %s13, %s20
    %p48 = scmp.eq.s32.totalorder %s47, 0
    %s50 = sadd.s32 %s49, 1
    %s51 = scalar_select %p48, %s49, %s50
    %p54 = pneg %p48
    %p55 = scmp.eq.s32.totalorder %s13, 1
    %p56 = por %p54, %p55
    %p57 = scmp.ne.s32.totalorder %s49, %s52
    %p58 = scmp.eq.s32.totalorder %s13, 0
    %p59 = por %p57, %p58
    %p60 = scmp.ne.s32.totalorder %s49, %s52
    %p61 = scmp.eq.s32.totalorder %s18, 1
    %p62 = por %p60, %p61
    %p63 = scmp.ne.s32.totalorder %s52, %s53
    %p64 = scmp.eq.s32.totalorder %s18, 0
    %p65 = por %p63, %p64
    %p66 = scmp.ne.s32.totalorder %s52, %s53
    %p67 = scmp.eq.s32.totalorder %s19, 1
    %p68 = por %p66, %p67
    %p70 = scmp.ne.s32.totalorder %s53, %s69
    %p71 = scmp.eq.s32.totalorder %s19, 0
    %p72 = por %p70, %p71
    %s74 = sadd.s32 %s73, 1
    %p77 = scmp.eq.s32.totalorder %s13, 1
    %p78 = scmp.ne.s32.totalorder %s73, %s75
    %p79 = scmp.eq.s32.totalorder %s13, 0
    %p80 = por %p78, %p79
    %p81 = scmp.ne.s32.totalorder %s73, %s75
    %p82 = scmp.eq.s32.totalorder %s18, 1
    %p83 = por %p81, %p82
    %p84 = scmp.ne.s32.totalorder %s75, %s76
    %p85 = scmp.eq.s32.totalorder %s18, 0
    %p86 = por %p84, %p85
    %p87 = scmp.ne.s32.totalorder %s75, %s76
    %p88 = scmp.eq.s32.totalorder %s19, 1
    %p89 = por %p87, %p88
    %p91 = scmp.ne.s32.totalorder %s76, %s90
    %p92 = scmp.eq.s32.totalorder %s19, 0
    %p93 = por %p91, %p92
    %s95 = sadd.s32 %s94, 1
    %p98 = scmp.eq.s32.totalorder %s13, 1
    %p99 = scmp.ne.s32.totalorder %s94, %s96
    %p100 = scmp.eq.s32.totalorder %s13, 0
    %p101 = por %p99, %p100
    %p102 = scmp.ne.s32.totalorder %s94, %s96
    %p103 = scmp.eq.s32.totalorder %s18, 1
    %p104 = por %p102, %p103
    %p105 = scmp.ne.s32.totalorder %s96, %s97
    %p106 = scmp.eq.s32.totalorder %s18, 0
    %p107 = por %p105, %p106
    %p108 = scmp.ne.s32.totalorder %s96, %s97
    %p109 = scmp.eq.s32.totalorder %s19, 1
    %p110 = por %p108, %p109
    %p112 = scmp.ne.s32.totalorder %s97, %s111
    %p113 = scmp.eq.s32.totalorder %s19, 0
    %p114 = por %p112, %p113
    %s116 = sadd.s32 %s115, 1
    %p119 = scmp.eq.s32.totalorder %s13, 1
    %p120 = scmp.ne.s32.totalorder %s115, %s117
    %p121 = scmp.eq.s32.totalorder %s13, 0
    %p122 = por %p120, %p121
    %p123 = scmp.ne.s32.totalorder %s115, %s117
    %p124 = scmp.eq.s32.totalorder %s18, 1
    %p125 = por %p123, %p124
    %p126 = scmp.ne.s32.totalorder %s117, %s118
    %p127 = scmp.eq.s32.totalorder %s18, 0
    %p128 = por %p126, %p127
    %p129 = scmp.ne.s32.totalorder %s117, %s118
    %p130 = scmp.eq.s32.totalorder %s19, 1
    %p131 = por %p129, %p130
    %p133 = scmp.ne.s32.totalorder %s118, %s132
    %p134 = scmp.eq.s32.totalorder %s19, 0
    %p135 = por %p133, %p134
    %s137 = sadd.s32 %s136, 1
    %p140 = scmp.eq.s32.totalorder %s13, 1
    %p141 = scmp.ne.s32.totalorder %s136, %s138
    %p142 = scmp.eq.s32.totalorder %s13, 0
    %p143 = por %p141, %p142
    %p144 = scmp.ne.s32.totalorder %s136, %s138
    %p145 = scmp.eq.s32.totalorder %s18, 1
    %p146 = por %p144, %p145
    %p147 = scmp.ne.s32.totalorder %s138, %s139
    %p148 = scmp.eq.s32.totalorder %s18, 0
    %p149 = por %p147, %p148
    %p150 = scmp.ne.s32.totalorder %s138, %s139
    %p151 = scmp.eq.s32.totalorder %s19, 1
    %p152 = por %p150, %p151
    %p154 = scmp.ne.s32.totalorder %s139, %s153
    %p155 = scmp.eq.s32.totalorder %s19, 0
    %p156 = por %p154, %p155
    %s158 = sadd.s32 %s157, 1
    %p161 = scmp.eq.s32.totalorder %s13, 1
    %p162 = scmp.ne.s32.totalorder %s157, %s159
    %p163 = scmp.eq.s32.totalorder %s13, 0
    %p164 = por %p162, %p163
    %p165 = scmp.ne.s32.totalorder %s157, %s159
    %p166 = scmp.eq.s32.totalorder %s18, 1
    %p167 = por %p165, %p166
    %p168 = scmp.ne.s32.totalorder %s159, %s160
    %p169 = scmp.eq.s32.totalorder %s18, 0
    %p170 = por %p168, %p169
    %p171 = scmp.ne.s32.totalorder %s159, %s160
    %p172 = scmp.eq.s32.totalorder %s19, 1
    %p173 = por %p171, %p172
    %p175 = scmp.ne.s32.totalorder %s160, %s174
    %p176 = scmp.eq.s32.totalorder %s19, 0
    %p177 = por %p175, %p176
    %s178 = ssub.s32 %s13, %s20
    %p179 = scmp.eq.s32.totalorder %s178, 0
    %s181 = sadd.s32 %s180, 1
    %s182 = scalar_select %p179, %s180, %s181
    %p185 = pneg %p179
    %p186 = scmp.eq.s32.totalorder %s13, 1
    %p187 = por %p185, %p186
    %p188 = scmp.ne.s32.totalorder %s180, %s183
    %p189 = scmp.eq.s32.totalorder %s13, 0
    %p190 = por %p188, %p189
    %p191 = scmp.ne.s32.totalorder %s180, %s183
    %p192 = scmp.eq.s32.totalorder %s18, 1
    %p193 = por %p191, %p192
    %p194 = scmp.ne.s32.totalorder %s183, %s184
    %p195 = scmp.eq.s32.totalorder %s18, 0
    %p196 = por %p194, %p195
    %p197 = scmp.ne.s32.totalorder %s183, %s184
    %p198 = scmp.eq.s32.totalorder %s19, 1
    %p199 = por %p197, %p198
    %p201 = scmp.ne.s32.totalorder %s184, %s200
    %p202 = scmp.eq.s32.totalorder %s19, 0
    %p203 = por %p201, %p202
    %p204 = scmp.le.s32.totalorder 1, %s13
    %p205 = scmp.lt.s32.totalorder %s13, 3
    %p206 = pnand %p204, %p205
    %p207 = pneg %p206
    // Predicated region
    $region9: #{tpu_custom_call.1} parent=5 // pred_check
      _
    $region10: #{tpu_custom_call.1} parent=5 // pred_check_branch
      %209 = sbr.rel (%p206) target = $region12
    $region11: #{tpu_custom_call.1} parent=5 // pred_region
      %s210 = ssub.s32 %s13, 1
      // Predicated region
      $region13: #{tpu_custom_call.1} parent=11 // pred_check
        %p211 = pneg %p86
      $region14: #{tpu_custom_call.1} parent=11 // pred_check_branch
        %213 = sbr.rel (%p211) target = $region16
      $region15: #{tpu_custom_call.1} parent=11 // pred_region
        _
      $region16: #{tpu_custom_call.1} parent=11 // pred_fallthru
        _
      // Predicated region
      $region17: #{tpu_custom_call.1} parent=11 // pred_check
        %p214 = pneg %p107
      $region18: #{tpu_custom_call.1} parent=11 // pred_check_branch
        %216 = sbr.rel (%p214) target = $region20
      $region19: #{tpu_custom_call.1} parent=11 // pred_region
        _
      $region20: #{tpu_custom_call.1} parent=11 // pred_fallthru
        _
      // Predicated region
      $region21: #{tpu_custom_call.1} parent=11 // pred_check
        %p217 = pneg %p128
      $region22: #{tpu_custom_call.1} parent=11 // pred_check_branch
        %219 = sbr.rel (%p217) target = $region24
      $region23: #{tpu_custom_call.1} parent=11 // pred_region
        _
      $region24: #{tpu_custom_call.1} parent=11 // pred_fallthru
        _
      // Predicated region
      $region25: #{tpu_custom_call.1} parent=11 // pred_check
        %p220 = pneg %p149
      $region26: #{tpu_custom_call.1} parent=11 // pred_check_branch
        %222 = sbr.rel (%p220) target = $region28
      $region27: #{tpu_custom_call.1} parent=11 // pred_region
        _
      $region28: #{tpu_custom_call.1} parent=11 // pred_fallthru
        _
      // Predicated region
      $region29: #{tpu_custom_call.1} parent=11 // pred_check
        %p223 = pneg %p170
      $region30: #{tpu_custom_call.1} parent=11 // pred_check_branch
        %225 = sbr.rel (%p223) target = $region32
      $region31: #{tpu_custom_call.1} parent=11 // pred_region
        _
      $region32: #{tpu_custom_call.1} parent=11 // pred_fallthru
        _
    $region12: #{tpu_custom_call.1} parent=5 // pred_fallthru
      _
    %p226 = scmp.lt.s32.totalorder %s13, 2
    // Predicated region
    $region33: #{tpu_custom_call.1} parent=5 // pred_check
      %p227 = pneg %p226
    $region34: #{tpu_custom_call.1} parent=5 // pred_check_branch
      %229 = sbr.rel (%p227) target = $region36
    $region35: #{tpu_custom_call.1} parent=5 // pred_region
      // Predicated region
      $region37: #{tpu_custom_call.1} parent=35 // pred_check
        %p230 = pneg %p33
      $region38: #{tpu_custom_call.1} parent=35 // pred_check_branch
        %232 = sbr.rel (%p230) target = $region40
      $region39: #{tpu_custom_call.1} parent=35 // pred_region
        %p233 = scmp.lt.s32.totalorder %s13, 1
        %s234 = scalar_select %p233, %s13, 1
        %s235 = smul.addr %s234, 4
        %s236 = scalar_lea.vmem %s0, %s235
      $region40: #{tpu_custom_call.1} parent=35 // pred_fallthru
        _
      // Predicated region
      $region41: #{tpu_custom_call.1} parent=35 // pred_check
        %p237 = pneg %p59
      $region42: #{tpu_custom_call.1} parent=35 // pred_check_branch
        %239 = sbr.rel (%p237) target = $region44
      $region43: #{tpu_custom_call.1} parent=35 // pred_region
        %p240 = scmp.lt.s32.totalorder %s13, 1
        %s241 = scalar_select %p240, %s13, 1
        %s242 = smul.addr %s241, 32
        %s243 = smul.addr %s242, 4
        %s244 = scalar_lea.vmem %s1, %s243
      $region44: #{tpu_custom_call.1} parent=35 // pred_fallthru
        _
    $region36: #{tpu_custom_call.1} parent=5 // pred_fallthru
      _
    %p245 = scmp.le.s32.totalorder 1, %s13
    %p246 = scmp.lt.s32.totalorder %s13, 3
    %p247 = pnand %p245, %p246
    %p248 = pneg %p247
    // Predicated region
    $region45: #{tpu_custom_call.1} parent=5 // pred_check
      _
    $region46: #{tpu_custom_call.1} parent=5 // pred_check_branch
      %250 = sbr.rel (%p247) target = $region48
    $region47: #{tpu_custom_call.1} parent=5 // pred_region
      %s251 = ssub.s32 %s13, 1
      %p252 = scmp.lt.s32.totalorder %s18, 1
      %s253 = scalar_select %p252, %s18, 1
      %s254 = smul.addr %s253, 4
      %s255 = scalar_lea.vmem %s0, %s254
      %p256 = pneg %p39
      %p257 = pneg %p36
      %p258 = scmp.lt.s32.totalorder %s18, 1
      %s259 = scalar_select %p258, %s18, 1
      %s260 = smul.addr %s259, 32
      %s261 = smul.addr %s260, 4
      %s262 = scalar_lea.vmem %s1, %s261
      %p263 = pneg %p65
      %p264 = pneg %p62
      %p265 = pneg %p86
      %p266 = pneg %p83
      %p267 = pneg %p107
      %p268 = pneg %p104
      %p269 = pneg %p128
      %p270 = pneg %p125
      %p271 = pneg %p149
      %p272 = pneg %p146
      %p273 = pneg %p170
      %p274 = pneg %p167
      %p275 = pneg %p196
      %p276 = pneg %p193
      %p277 = scmp.lt.s32.totalorder %s18, 1
      %s278 = scalar_select %p277, %s18, 1
      %s279 = smul.addr %s278, 32
      %s280 = smul.addr %s279, 8
      %s281 = scalar_lea.vmem %s7, %s280
      %p282 = scmp.lt.s32.totalorder %s18, 1
      %s283 = scalar_select %p282, %s18, 1
      %s284 = smul.addr %s283, 4
      %s285 = scalar_lea.vmem %s0, %s284
      %p286 = scmp.lt.s32.totalorder %s18, 1
      %s287 = scalar_select %p286, %s18, 1
      %s288 = smul.addr %s287, 32
      %s289 = smul.addr %s288, 4
      %s290 = scalar_lea.vmem %s1, %s289
      %p291 = scmp.lt.s32.totalorder %s18, 1
      %s292 = scalar_select %p291, %s18, 1
      %s293 = smul.addr %s292, 32
      %s294 = smul.addr %s293, 8
      %s295 = scalar_lea.vmem %s7, %s294
      %vm297 = vcmask 31744
      %298 = vst.msk [vmem:[#allocation2] sm:$0xff] %vm297, 0.0
      %299 = vst.msk [vmem:[#allocation2 + $0x8] sm:$0xff] %vm297, 0.0
      %vm300 = vcmask 25600
      %301 = vst.msk [vmem:[#allocation2 + $0x10] sm:$0x3] %vm300, 0.0
      %s302 = scalar_lea.vmem [#allocation2], 408
      %303 = vst.msk [vmem:[%s302] sm:$0xff] %vm297, 0.0
      %304 = vst.msk [vmem:[%s302 + $0x8] sm:$0xff] %vm297, 0.0
      %305 = vst.msk [vmem:[%s302 + $0x10] sm:$0x3] %vm300, 0.0
      %vm306 = vcmask 24576
      %307 = vst.msk [vmem:[#allocation2] sm:$0x1] %vm306, 0.0
      %308 = vst.msk [vmem:[#allocation2 + $0x18] sm:$0x1] %vm306, 0.0
      %309 = vst.msk [vmem:[#allocation2 + $0x30] sm:$0x1] %vm306, 0.0
      %310 = vst.msk [vmem:[#allocation2 + $0x48] sm:$0x1] %vm306, 0.0
      %311 = vst.msk [vmem:[#allocation2 + $0x60] sm:$0x1] %vm306, 0.0
      %312 = vst.msk [vmem:[#allocation2 + $0x78] sm:$0x1] %vm306, 0.0
      %313 = vst.msk [vmem:[#allocation2 + $0x90] sm:$0x1] %vm306, 0.0
      %314 = vst.msk [vmem:[#allocation2 + $0xa8] sm:$0x1] %vm306, 0.0
      %315 = vst.msk [vmem:[#allocation2 + $0xc0] sm:$0x1] %vm306, 0.0
      %316 = vst.msk [vmem:[#allocation2 + $0xd8] sm:$0x1] %vm306, 0.0
      %317 = vst.msk [vmem:[#allocation2 + $0xf0] sm:$0x1] %vm306, 0.0
      %318 = vst.msk [vmem:[#allocation2 + $0x108] sm:$0x1] %vm306, 0.0
      %319 = vst.msk [vmem:[#allocation2 + $0x120] sm:$0x1] %vm306, 0.0
      %320 = vst.msk [vmem:[#allocation2 + $0x138] sm:$0x1] %vm306, 0.0
      %321 = vst.msk [vmem:[#allocation2 + $0x150] sm:$0x1] %vm306, 0.0
      %322 = vst.msk [vmem:[#allocation2 + $0x168] sm:$0x1] %vm306, 0.0
      %323 = vst.msk [vmem:[#allocation2 + $0x180] sm:$0x1] %vm306, 0.0
      %324 = vst.msk [vmem:[#allocation2 + $0x198] sm:$0x1] %vm306, 0.0
      %325 = vst.msk [vmem:[#allocation2 + $0x11] sm:$0x1] %vm306, 0.0
      %326 = vst.msk [vmem:[#allocation2 + $0x29] sm:$0x1] %vm306, 0.0
      %327 = vst.msk [vmem:[#allocation2 + $0x41] sm:$0x1] %vm306, 0.0
      %328 = vst.msk [vmem:[#allocation2 + $0x59] sm:$0x1] %vm306, 0.0
      %329 = vst.msk [vmem:[#allocation2 + $0x71] sm:$0x1] %vm306, 0.0
      %330 = vst.msk [vmem:[#allocation2 + $0x89] sm:$0x1] %vm306, 0.0
      %331 = vst.msk [vmem:[#allocation2 + $0xa1] sm:$0x1] %vm306, 0.0
      %332 = vst.msk [vmem:[#allocation2 + $0xb9] sm:$0x1] %vm306, 0.0
      %333 = vst.msk [vmem:[#allocation2 + $0xd1] sm:$0x1] %vm306, 0.0
      %334 = vst.msk [vmem:[#allocation2 + $0xe9] sm:$0x1] %vm306, 0.0
      %335 = vst.msk [vmem:[#allocation2 + $0x101] sm:$0x1] %vm306, 0.0
      %336 = vst.msk [vmem:[#allocation2 + $0x119] sm:$0x1] %vm306, 0.0
      %337 = vst.msk [vmem:[#allocation2 + $0x131] sm:$0x1] %vm306, 0.0
      %338 = vst.msk [vmem:[#allocation2 + $0x149] sm:$0x1] %vm306, 0.0
      %339 = vst.msk [vmem:[#allocation2 + $0x161] sm:$0x1] %vm306, 0.0
      %340 = vst.msk [vmem:[#allocation2 + $0x179] sm:$0x1] %vm306, 0.0
      %341 = vst.msk [vmem:[#allocation2 + $0x191] sm:$0x1] %vm306, 0.0
      %342 = vst.msk [vmem:[#allocation2 + $0x1a9] sm:$0x1] %vm306, 0.0
      %343 = vst.msk [vmem:[#allocation4] sm:$0xff] %vm297, 0.0
      %344 = vst.msk [vmem:[#allocation4 + $0x8] sm:$0xff] %vm297, 0.0
      %345 = vst.msk [vmem:[#allocation4 + $0x10] sm:$0x3] %vm300, 0.0
      %s346 = scalar_lea.vmem [#allocation4], 408
      %347 = vst.msk [vmem:[%s346] sm:$0xff] %vm297, 0.0
      %348 = vst.msk [vmem:[%s346 + $0x8] sm:$0xff] %vm297, 0.0
      %349 = vst.msk [vmem:[%s346 + $0x10] sm:$0x3] %vm300, 0.0
      %350 = vst.msk [vmem:[#allocation4] sm:$0x1] %vm306, 0.0
      %351 = vst.msk [vmem:[#allocation4 + $0x18] sm:$0x1] %vm306, 0.0
      %352 = vst.msk [vmem:[#allocation4 + $0x30] sm:$0x1] %vm306, 0.0
      %353 = vst.msk [vmem:[#allocation4 + $0x48] sm:$0x1] %vm306, 0.0
      %354 = vst.msk [vmem:[#allocation4 + $0x60] sm:$0x1] %vm306, 0.0
      %355 = vst.msk [vmem:[#allocation4 + $0x78] sm:$0x1] %vm306, 0.0
      %356 = vst.msk [vmem:[#allocation4 + $0x90] sm:$0x1] %vm306, 0.0
      %357 = vst.msk [vmem:[#allocation4 + $0xa8] sm:$0x1] %vm306, 0.0
      %358 = vst.msk [vmem:[#allocation4 + $0xc0] sm:$0x1] %vm306, 0.0
      %359 = vst.msk [vmem:[#allocation4 + $0xd8] sm:$0x1] %vm306, 0.0
      %360 = vst.msk [vmem:[#allocation4 + $0xf0] sm:$0x1] %vm306, 0.0
      %361 = vst.msk [vmem:[#allocation4 + $0x108] sm:$0x1] %vm306, 0.0
      %362 = vst.msk [vmem:[#allocation4 + $0x120] sm:$0x1] %vm306, 0.0
      %363 = vst.msk [vmem:[#allocation4 + $0x138] sm:$0x1] %vm306, 0.0
      %364 = vst.msk [vmem:[#allocation4 + $0x150] sm:$0x1] %vm306, 0.0
      %365 = vst.msk [vmem:[#allocation4 + $0x168] sm:$0x1] %vm306, 0.0
      %366 = vst.msk [vmem:[#allocation4 + $0x180] sm:$0x1] %vm306, 0.0
      %367 = vst.msk [vmem:[#allocation4 + $0x198] sm:$0x1] %vm306, 0.0
      %368 = vst.msk [vmem:[#allocation4 + $0x11] sm:$0x1] %vm306, 0.0
      %369 = vst.msk [vmem:[#allocation4 + $0x29] sm:$0x1] %vm306, 0.0
      %370 = vst.msk [vmem:[#allocation4 + $0x41] sm:$0x1] %vm306, 0.0
      %371 = vst.msk [vmem:[#allocation4 + $0x59] sm:$0x1] %vm306, 0.0
      %372 = vst.msk [vmem:[#allocation4 + $0x71] sm:$0x1] %vm306, 0.0
      %373 = vst.msk [vmem:[#allocation4 + $0x89] sm:$0x1] %vm306, 0.0
      %374 = vst.msk [vmem:[#allocation4 + $0xa1] sm:$0x1] %vm306, 0.0
      %375 = vst.msk [vmem:[#allocation4 + $0xb9] sm:$0x1] %vm306, 0.0
      %376 = vst.msk [vmem:[#allocation4 + $0xd1] sm:$0x1] %vm306, 0.0
      %377 = vst.msk [vmem:[#allocation4 + $0xe9] sm:$0x1] %vm306, 0.0
      %378 = vst.msk [vmem:[#allocation4 + $0x101] sm:$0x1] %vm306, 0.0
      %379 = vst.msk [vmem:[#allocation4 + $0x119] sm:$0x1] %vm306, 0.0
      %380 = vst.msk [vmem:[#allocation4 + $0x131] sm:$0x1] %vm306, 0.0
      %381 = vst.msk [vmem:[#allocation4 + $0x149] sm:$0x1] %vm306, 0.0
      %382 = vst.msk [vmem:[#allocation4 + $0x161] sm:$0x1] %vm306, 0.0
      %383 = vst.msk [vmem:[#allocation4 + $0x179] sm:$0x1] %vm306, 0.0
      %384 = vst.msk [vmem:[#allocation4 + $0x191] sm:$0x1] %vm306, 0.0
      %385 = vst.msk [vmem:[#allocation4 + $0x1a9] sm:$0x1] %vm306, 0.0
      %386 = vst.msk [vmem:[#allocation3] sm:$0xff] %vm297, 0.0
      %387 = vst.msk [vmem:[#allocation3 + $0x8] sm:$0xff] %vm297, 0.0
      %388 = vst.msk [vmem:[#allocation3 + $0x10] sm:$0x3] %vm300, 0.0
      %s389 = scalar_lea.vmem [#allocation3], 408
      %390 = vst.msk [vmem:[%s389] sm:$0xff] %vm297, 0.0
      %391 = vst.msk [vmem:[%s389 + $0x8] sm:$0xff] %vm297, 0.0
      %392 = vst.msk [vmem:[%s389 + $0x10] sm:$0x3] %vm300, 0.0
      %393 = vst.msk [vmem:[#allocation3] sm:$0x1] %vm306, 0.0
      %394 = vst.msk [vmem:[#allocation3 + $0x18] sm:$0x1] %vm306, 0.0
      %395 = vst.msk [vmem:[#allocation3 + $0x30] sm:$0x1] %vm306, 0.0
      %396 = vst.msk [vmem:[#allocation3 + $0x48] sm:$0x1] %vm306, 0.0
      %397 = vst.msk [vmem:[#allocation3 + $0x60] sm:$0x1] %vm306, 0.0
      %398 = vst.msk [vmem:[#allocation3 + $0x78] sm:$0x1] %vm306, 0.0
      %399 = vst.msk [vmem:[#allocation3 + $0x90] sm:$0x1] %vm306, 0.0
      %400 = vst.msk [vmem:[#allocation3 + $0xa8] sm:$0x1] %vm306, 0.0
      %401 = vst.msk [vmem:[#allocation3 + $0xc0] sm:$0x1] %vm306, 0.0
      %402 = vst.msk [vmem:[#allocation3 + $0xd8] sm:$0x1] %vm306, 0.0
      %403 = vst.msk [vmem:[#allocation3 + $0xf0] sm:$0x1] %vm306, 0.0
      %404 = vst.msk [vmem:[#allocation3 + $0x108] sm:$0x1] %vm306, 0.0
      %405 = vst.msk [vmem:[#allocation3 + $0x120] sm:$0x1] %vm306, 0.0
      %406 = vst.msk [vmem:[#allocation3 + $0x138] sm:$0x1] %vm306, 0.0
      %407 = vst.msk [vmem:[#allocation3 + $0x150] sm:$0x1] %vm306, 0.0
      %408 = vst.msk [vmem:[#allocation3 + $0x168] sm:$0x1] %vm306, 0.0
      %409 = vst.msk [vmem:[#allocation3 + $0x180] sm:$0x1] %vm306, 0.0
      %410 = vst.msk [vmem:[#allocation3 + $0x198] sm:$0x1] %vm306, 0.0
      %411 = vst.msk [vmem:[#allocation3 + $0x11] sm:$0x1] %vm306, 0.0
      %412 = vst.msk [vmem:[#allocation3 + $0x29] sm:$0x1] %vm306, 0.0
      %413 = vst.msk [vmem:[#allocation3 + $0x41] sm:$0x1] %vm306, 0.0
      %414 = vst.msk [vmem:[#allocation3 + $0x59] sm:$0x1] %vm306, 0.0
      %415 = vst.msk [vmem:[#allocation3 + $0x71] sm:$0x1] %vm306, 0.0
      %416 = vst.msk [vmem:[#allocation3 + $0x89] sm:$0x1] %vm306, 0.0
      %417 = vst.msk [vmem:[#allocation3 + $0xa1] sm:$0x1] %vm306, 0.0
      %418 = vst.msk [vmem:[#allocation3 + $0xb9] sm:$0x1] %vm306, 0.0
      %419 = vst.msk [vmem:[#allocation3 + $0xd1] sm:$0x1] %vm306, 0.0
      %420 = vst.msk [vmem:[#allocation3 + $0xe9] sm:$0x1] %vm306, 0.0
      %421 = vst.msk [vmem:[#allocation3 + $0x101] sm:$0x1] %vm306, 0.0
      %422 = vst.msk [vmem:[#allocation3 + $0x119] sm:$0x1] %vm306, 0.0
      %423 = vst.msk [vmem:[#allocation3 + $0x131] sm:$0x1] %vm306, 0.0
      %424 = vst.msk [vmem:[#allocation3 + $0x149] sm:$0x1] %vm306, 0.0
      %425 = vst.msk [vmem:[#allocation3 + $0x161] sm:$0x1] %vm306, 0.0
      %426 = vst.msk [vmem:[#allocation3 + $0x179] sm:$0x1] %vm306, 0.0
      %427 = vst.msk [vmem:[#allocation3 + $0x191] sm:$0x1] %vm306, 0.0
      %428 = vst.msk [vmem:[#allocation3 + $0x1a9] sm:$0x1] %vm306, 0.0
      %v429 = vld [vmem:[%s2] sm:$0xf]
      %v430 = vld [vmem:[%s2 + $0x4] sm:$0xf]
      %v431 = vld [vmem:[%s285] sm:$0xf]
      %v434 = vunpack.c.l.b16 %v429
      %v435 = vunpack.c.l.b16 %v430
      %v436 = vpack.c.b16 %v435, %v434
      %vm437 = vcmask 64512
      %v439 = vsel %vm437, %v436, 0
      %vm441 = vcmask 1043456
      %v443 = vsel %vm441, %v431, 0
      %445 = vmatprep.subr.bf16.mxu0 0
      %446 = vmatpush1.bf16.msra.mxu0 %v443
      %447 = vmatprep.subr.bf16.mxu0 0
      %448 = vmatpush1.bf16.msra.mxu0 0
      %449 = vmatprep.subr.bf16.mxu0 0
      %450 = vmatpush1.bf16.msra.mxu0 0
      %451 = vmatprep.subr.bf16.mxu0 0
      %452 = vmatpush1.bf16.msra.mxu0 0
      %453 = vmatprep.subr.bf16.mxu0 0
      %454 = vmatpush1.bf16.msra.mxu0 0
      %455 = vmatprep.subr.bf16.mxu0 0
      %456 = vmatpush1.bf16.msra.mxu0 0
      %457 = vmatprep.subr.bf16.mxu0 0
      %458 = vmatpush1.bf16.msra.mxu0 0
      %459 = vmatprep.subr.bf16.mxu0 0
      %460 = vmatpush1.bf16.msra.mxu0 0
      %461 = vmatprep.subr.bf16.mxu0 0
      %462 = vmatpush1.bf16.msra.mxu0 0
      %463 = vmatprep.subr.bf16.mxu0 0
      %464 = vmatpush1.bf16.msra.mxu0 0
      %465 = vmatprep.subr.bf16.mxu0 0
      %466 = vmatpush1.bf16.msra.mxu0 0
      %467 = vmatprep.subr.bf16.mxu0 0
      %468 = vmatpush1.bf16.msra.mxu0 0
      %469 = vmatprep.subr.bf16.mxu0 0
      %470 = vmatpush1.bf16.msra.mxu0 0
      %471 = vmatprep.subr.bf16.mxu0 0
      %472 = vmatpush1.bf16.msra.mxu0 0
      %473 = vmatprep.subr.bf16.mxu0 0
      %474 = vmatpush1.bf16.msra.mxu0 0
      %475 = vmatprep.subr.bf16.mxu0 0
      %476 = vmatpush1.bf16.msra.mxu0 0
      %477 = vmatprep.mubr.bf16.mxu0 0
      %478 = vmatmul.mubr.bf16.gmra.mrb[0].mxu0 %v439
      %v479 = vpop.f32.mrb[0].mxu0
      %v480 = vadd.f32 0.0, %v479
      %v481 = vpop.f32.mrb[0].mxu0
      %v482 = vpop.f32.mrb[0].mxu0
      %v483 = vadd.f32 0.0, %v482
      %v484 = vpop.f32.mrb[0].mxu0
      %485 = vdwg.mxu0
      %v486 = vmul.f32 %v480, 0.0
      %v487 = vmul.f32 %v483, 0.0
      %490 = vrot.lane.b32.xlu0 %v486, 124
      %v491 = vpop.permute.xlu0 %490
      %492 = vrot.lane.b32.xlu0 %v487, 124
      %v493 = vpop.permute.xlu0 %492
      %v496 = vadd.f32 %v480, %v491
      %v497 = vadd.f32 %v483, %v493
      %v500 = vcombine.high %v496, %v496
      %v502 = vunpack.c.l.s4 1966171168
      %v503 = vunpack.c.0.s8 %v502
      %v504 = vlaneseq
      %v505 = vshrl.u32 %v504, 7
      %v506 = vsub.s32 %v503, %v505
      %v507 = vrot.slane %v496, %v506
      %v509 = vunpack.c.l.s4 1966171168
      %v510 = vunpack.c.0.s8 %v509
      %v511 = vlaneseq
      %v512 = vshrl.u32 %v511, 7
      %v513 = vsub.s32 %v510, %v512
      %v514 = vrot.slane %v500, %v513
      %v515 = vcombine.high %v507, %v507
      %v516 = vcombine.high %v514, %v514
      %v518 = vunpack.c.l.s4 1966171168
      %v519 = vunpack.c.0.s8 %v518
      %v520 = vlaneseq
      %v521 = vshrl.u32 %v520, 7
      %v522 = vsub.s32 %v519, %v521
      %v523 = vrot.slane %v507, %v522
      %v525 = vunpack.c.l.s4 1966171168
      %v526 = vunpack.c.0.s8 %v525
      %v527 = vlaneseq
      %v528 = vshrl.u32 %v527, 7
      %v529 = vsub.s32 %v526, %v528
      %v530 = vrot.slane %v514, %v529
      %v532 = vunpack.c.l.s4 1966171168
      %v533 = vunpack.c.0.s8 %v532
      %v534 = vlaneseq
      %v535 = vshrl.u32 %v534, 7
      %v536 = vsub.s32 %v533, %v535
      %v537 = vrot.slane %v515, %v536
      %v539 = vunpack.c.l.s4 1966171168
      %v540 = vunpack.c.0.s8 %v539
      %v541 = vlaneseq
      %v542 = vshrl.u32 %v541, 7
      %v543 = vsub.s32 %v540, %v542
      %v544 = vrot.slane %v516, %v543
      %v545 = vcombine.high %v523, %v523
      %v546 = vcombine.high %v530, %v530
      %v547 = vcombine.high %v537, %v537
      %v548 = vcombine.high %v544, %v544
      %v549 = vcombine.high %v497, %v497
      %v551 = vunpack.c.l.s4 1966171168
      %v552 = vunpack.c.0.s8 %v551
      %v553 = vlaneseq
      %v554 = vshrl.u32 %v553, 7
      %v555 = vsub.s32 %v552, %v554
      %v556 = vrot.slane %v497, %v555
      %v558 = vunpack.c.l.s4 1966171168
      %v559 = vunpack.c.0.s8 %v558
      %v560 = vlaneseq
      %v561 = vshrl.u32 %v560, 7
      %v562 = vsub.s32 %v559, %v561
      %v563 = vrot.slane %v549, %v562
      %v564 = vcombine.high %v556, %v556
      %v565 = vcombine.high %v563, %v563
      %v567 = vunpack.c.l.s4 1966171168
      %v568 = vunpack.c.0.s8 %v567
      %v569 = vlaneseq
      %v570 = vshrl.u32 %v569, 7
      %v571 = vsub.s32 %v568, %v570
      %v572 = vrot.slane %v556, %v571
      %v574 = vunpack.c.l.s4 1966171168
      %v575 = vunpack.c.0.s8 %v574
      %v576 = vlaneseq
      %v577 = vshrl.u32 %v576, 7
      %v578 = vsub.s32 %v575, %v577
      %v579 = vrot.slane %v563, %v578
      %v581 = vunpack.c.l.s4 1966171168
      %v582 = vunpack.c.0.s8 %v581
      %v583 = vlaneseq
      %v584 = vshrl.u32 %v583, 7
      %v585 = vsub.s32 %v582, %v584
      %v586 = vrot.slane %v564, %v585
      %v588 = vunpack.c.l.s4 1966171168
      %v589 = vunpack.c.0.s8 %v588
      %v590 = vlaneseq
      %v591 = vshrl.u32 %v590, 7
      %v592 = vsub.s32 %v589, %v591
      %v593 = vrot.slane %v565, %v592
      %v594 = vcombine.high %v572, %v572
      %v595 = vcombine.high %v579, %v579
      %v596 = vcombine.high %v586, %v586
      %v597 = vcombine.high %v593, %v593
      %s614 = scalar_lea.vmem [#allocation3], 24
      %615 = vst.msk [vmem:[%s614 + $0x1] sm:$0x1] %vm306, %v523
      %616 = vst.msk [vmem:[%s614 + $0x19] sm:$0x1] %vm306, %v537
      %617 = vst.msk [vmem:[%s614 + $0x31] sm:$0x1] %vm306, %v545
      %618 = vst.msk [vmem:[%s614 + $0x49] sm:$0x1] %vm306, %v547
      %619 = vst.msk [vmem:[%s614 + $0x61] sm:$0x1] %vm306, %v530
      %620 = vst.msk [vmem:[%s614 + $0x79] sm:$0x1] %vm306, %v544
      %621 = vst.msk [vmem:[%s614 + $0x91] sm:$0x1] %vm306, %v546
      %622 = vst.msk [vmem:[%s614 + $0xa9] sm:$0x1] %vm306, %v548
      %623 = vst.msk [vmem:[%s614 + $0xc1] sm:$0x1] %vm306, %v572
      %624 = vst.msk [vmem:[%s614 + $0xd9] sm:$0x1] %vm306, %v586
      %625 = vst.msk [vmem:[%s614 + $0xf1] sm:$0x1] %vm306, %v594
      %626 = vst.msk [vmem:[%s614 + $0x109] sm:$0x1] %vm306, %v596
      %627 = vst.msk [vmem:[%s614 + $0x121] sm:$0x1] %vm306, %v579
      %628 = vst.msk [vmem:[%s614 + $0x139] sm:$0x1] %vm306, %v593
      %629 = vst.msk [vmem:[%s614 + $0x151] sm:$0x1] %vm306, %v595
      %630 = vst.msk [vmem:[%s614 + $0x169] sm:$0x1] %vm306, %v597
      %v631 = vmul.f32 %v480, 0.53333336
      %v632 = vmul.f32 %v483, 0.53333336
      %v633 = vmul.f32 %v480, 0.46666667
      %v634 = vmul.f32 %v483, 0.46666667
      %637 = vrot.lane.b32.xlu0 %v633, 124
      %v638 = vpop.permute.xlu0 %637
      %639 = vrot.lane.b32.xlu0 %v634, 124
      %v640 = vpop.permute.xlu0 %639
      %v643 = vadd.f32 %v631, %v638
      %v644 = vadd.f32 %v632, %v640
      %v647 = vcombine.high %v643, %v643
      %v649 = vunpack.c.l.s4 1966171168
      %v650 = vunpack.c.0.s8 %v649
      %v651 = vlaneseq
      %v652 = vshrl.u32 %v651, 7
      %v653 = vsub.s32 %v650, %v652
      %v654 = vrot.slane %v643, %v653
      %v656 = vunpack.c.l.s4 1966171168
      %v657 = vunpack.c.0.s8 %v656
      %v658 = vlaneseq
      %v659 = vshrl.u32 %v658, 7
      %v660 = vsub.s32 %v657, %v659
      %v661 = vrot.slane %v647, %v660
      %v662 = vcombine.high %v654, %v654
      %v663 = vcombine.high %v661, %v661
      %v665 = vunpack.c.l.s4 1966171168
      %v666 = vunpack.c.0.s8 %v665
      %v667 = vlaneseq
      %v668 = vshrl.u32 %v667, 7
      %v669 = vsub.s32 %v666, %v668
      %v670 = vrot.slane %v654, %v669
      %v672 = vunpack.c.l.s4 1966171168
      %v673 = vunpack.c.0.s8 %v672
      %v674 = vlaneseq
      %v675 = vshrl.u32 %v674, 7
      %v676 = vsub.s32 %v673, %v675
      %v677 = vrot.slane %v661, %v676
      %v679 = vunpack.c.l.s4 1966171168
      %v680 = vunpack.c.0.s8 %v679
      %v681 = vlaneseq
      %v682 = vshrl.u32 %v681, 7
      %v683 = vsub.s32 %v680, %v682
      %v684 = vrot.slane %v662, %v683
      %v686 = vunpack.c.l.s4 1966171168
      %v687 = vunpack.c.0.s8 %v686
      %v688 = vlaneseq
      %v689 = vshrl.u32 %v688, 7
      %v690 = vsub.s32 %v687, %v689
      %v691 = vrot.slane %v663, %v690
      %v692 = vcombine.high %v670, %v670
      %v693 = vcombine.high %v677, %v677
      %v694 = vcombine.high %v684, %v684
      %v695 = vcombine.high %v691, %v691
      %v696 = vcombine.high %v644, %v644
      %v698 = vunpack.c.l.s4 1966171168
      %v699 = vunpack.c.0.s8 %v698
      %v700 = vlaneseq
      %v701 = vshrl.u32 %v700, 7
      %v702 = vsub.s32 %v699, %v701
      %v703 = vrot.slane %v644, %v702
      %v705 = vunpack.c.l.s4 1966171168
      %v706 = vunpack.c.0.s8 %v705
      %v707 = vlaneseq
      %v708 = vshrl.u32 %v707, 7
      %v709 = vsub.s32 %v706, %v708
      %v710 = vrot.slane %v696, %v709
      %v711 = vcombine.high %v703, %v703
      %v712 = vcombine.high %v710, %v710
      %v714 = vunpack.c.l.s4 1966171168
      %v715 = vunpack.c.0.s8 %v714
      %v716 = vlaneseq
      %v717 = vshrl.u32 %v716, 7
      %v718 = vsub.s32 %v715, %v717
      %v719 = vrot.slane %v703, %v718
      %v721 = vunpack.c.l.s4 1966171168
      %v722 = vunpack.c.0.s8 %v721
      %v723 = vlaneseq
      %v724 = vshrl.u32 %v723, 7
      %v725 = vsub.s32 %v722, %v724
      %v726 = vrot.slane %v710, %v725
      %v728 = vunpack.c.l.s4 1966171168
      %v729 = vunpack.c.0.s8 %v728
      %v730 = vlaneseq
      %v731 = vshrl.u32 %v730, 7
      %v732 = vsub.s32 %v729, %v731
      %v733 = vrot.slane %v711, %v732
      %v735 = vunpack.c.l.s4 1966171168
      %v736 = vunpack.c.0.s8 %v735
      %v737 = vlaneseq
      %v738 = vshrl.u32 %v737, 7
      %v739 = vsub.s32 %v736, %v738
      %v740 = vrot.slane %v712, %v739
      %v741 = vcombine.high %v719, %v719
      %v742 = vcombine.high %v726, %v726
      %v743 = vcombine.high %v733, %v733
      %v744 = vcombine.high %v740, %v740
      %761 = vst.msk [vmem:[%s614 + $0x2] sm:$0x1] %vm306, %v670
      %762 = vst.msk [vmem:[%s614 + $0x1a] sm:$0x1] %vm306, %v684
      %763 = vst.msk [vmem:[%s614 + $0x32] sm:$0x1] %vm306, %v692
      %764 = vst.msk [vmem:[%s614 + $0x4a] sm:$0x1] %vm306, %v694
      %765 = vst.msk [vmem:[%s614 + $0x62] sm:$0x1] %vm306, %v677
      %766 = vst.msk [vmem:[%s614 + $0x7a] sm:$0x1] %vm306, %v691
      %767 = vst.msk [vmem:[%s614 + $0x92] sm:$0x1] %vm306, %v693
      %768 = vst.msk [vmem:[%s614 + $0xaa] sm:$0x1] %vm306, %v695
      %769 = vst.msk [vmem:[%s614 + $0xc2] sm:$0x1] %vm306, %v719
      %770 = vst.msk [vmem:[%s614 + $0xda] sm:$0x1] %vm306, %v733
      %771 = vst.msk [vmem:[%s614 + $0xf2] sm:$0x1] %vm306, %v741
      %772 = vst.msk [vmem:[%s614 + $0x10a] sm:$0x1] %vm306, %v743
      %773 = vst.msk [vmem:[%s614 + $0x122] sm:$0x1] %vm306, %v726
      %774 = vst.msk [vmem:[%s614 + $0x13a] sm:$0x1] %vm306, %v740
      %775 = vst.msk [vmem:[%s614 + $0x152] sm:$0x1] %vm306, %v742
      %776 = vst.msk [vmem:[%s614 + $0x16a] sm:$0x1] %vm306, %v744
      %v777 = vmul.f32 %v480, 0.06666667
      %v778 = vmul.f32 %v483, 0.06666667
      %v779 = vmul.f32 %v480, 0.93333334
      %v780 = vmul.f32 %v483, 0.93333334
      %783 = vrot.lane.b32.xlu0 %v779, 124
      %v784 = vpop.permute.xlu0 %783
      %785 = vrot.lane.b32.xlu0 %v780, 124
      %v786 = vpop.permute.xlu0 %785
      %v789 = vadd.f32 %v777, %v784
      %v790 = vadd.f32 %v778, %v786
      %v793 = vcombine.high %v789, %v789
      %v795 = vunpack.c.l.s4 1966171168
      %v796 = vunpack.c.0.s8 %v795
      %v797 = vlaneseq
      %v798 = vshrl.u32 %v797, 7
      %v799 = vsub.s32 %v796, %v798
      %v800 = vrot.slane %v789, %v799
      %v802 = vunpack.c.l.s4 1966171168
      %v803 = vunpack.c.0.s8 %v802
      %v804 = vlaneseq
      %v805 = vshrl.u32 %v804, 7
      %v806 = vsub.s32 %v803, %v805
      %v807 = vrot.slane %v793, %v806
      %v808 = vcombine.high %v800, %v800
      %v809 = vcombine.high %v807, %v807
      %v811 = vunpack.c.l.s4 1966171168
      %v812 = vunpack.c.0.s8 %v811
      %v813 = vlaneseq
      %v814 = vshrl.u32 %v813, 7
      %v815 = vsub.s32 %v812, %v814
      %v816 = vrot.slane %v800, %v815
      %v818 = vunpack.c.l.s4 1966171168
      %v819 = vunpack.c.0.s8 %v818
      %v820 = vlaneseq
      %v821 = vshrl.u32 %v820, 7
      %v822 = vsub.s32 %v819, %v821
      %v823 = vrot.slane %v807, %v822
      %v825 = vunpack.c.l.s4 1966171168
      %v826 = vunpack.c.0.s8 %v825
      %v827 = vlaneseq
      %v828 = vshrl.u32 %v827, 7
      %v829 = vsub.s32 %v826, %v828
      %v830 = vrot.slane %v808, %v829
      %v832 = vunpack.c.l.s4 1966171168
      %v833 = vunpack.c.0.s8 %v832
      %v834 = vlaneseq
      %v835 = vshrl.u32 %v834, 7
      %v836 = vsub.s32 %v833, %v835
      %v837 = vrot.slane %v809, %v836
      %v838 = vcombine.high %v816, %v816
      %v839 = vcombine.high %v823, %v823
      %v840 = vcombine.high %v830, %v830
      %v841 = vcombine.high %v837, %v837
      %v842 = vcombine.high %v790, %v790
      %v844 = vunpack.c.l.s4 1966171168
      %v845 = vunpack.c.0.s8 %v844
      %v846 = vlaneseq
      %v847 = vshrl.u32 %v846, 7
      %v848 = vsub.s32 %v845, %v847
      %v849 = vrot.slane %v790, %v848
      %v851 = vunpack.c.l.s4 1966171168
      %v852 = vunpack.c.0.s8 %v851
      %v853 = vlaneseq
      %v854 = vshrl.u32 %v853, 7
      %v855 = vsub.s32 %v852, %v854
      %v856 = vrot.slane %v842, %v855
      %v857 = vcombine.high %v849, %v849
      %v858 = vcombine.high %v856, %v856
      %v860 = vunpack.c.l.s4 1966171168
      %v861 = vunpack.c.0.s8 %v860
      %v862 = vlaneseq
      %v863 = vshrl.u32 %v862, 7
      %v864 = vsub.s32 %v861, %v863
      %v865 = vrot.slane %v849, %v864
      %v867 = vunpack.c.l.s4 1966171168
      %v868 = vunpack.c.0.s8 %v867
      %v869 = vlaneseq
      %v870 = vshrl.u32 %v869, 7
      %v871 = vsub.s32 %v868, %v870
      %v872 = vrot.slane %v856, %v871
      %v874 = vunpack.c.l.s4 1966171168
      %v875 = vunpack.c.0.s8 %v874
      %v876 = vlaneseq
      %v877 = vshrl.u32 %v876, 7
      %v878 = vsub.s32 %v875, %v877
      %v879 = vrot.slane %v857, %v878
      %v881 = vunpack.c.l.s4 1966171168
      %v882 = vunpack.c.0.s8 %v881
      %v883 = vlaneseq
      %v884 = vshrl.u32 %v883, 7
      %v885 = vsub.s32 %v882, %v884
      %v886 = vrot.slane %v858, %v885
      %v887 = vcombine.high %v865, %v865
      %v888 = vcombine.high %v872, %v872
      %v889 = vcombine.high %v879, %v879
      %v890 = vcombine.high %v886, %v886
      %907 = vst.msk [vmem:[%s614 + $0x3] sm:$0x1] %vm306, %v816
      %908 = vst.msk [vmem:[%s614 + $0x1b] sm:$0x1] %vm306, %v830
      %909 = vst.msk [vmem:[%s614 + $0x33] sm:$0x1] %vm306, %v838
      %910 = vst.msk [vmem:[%s614 + $0x4b] sm:$0x1] %vm306, %v840
      %911 = vst.msk [vmem:[%s614 + $0x63] sm:$0x1] %vm306, %v823
      %912 = vst.msk [vmem:[%s614 + $0x7b] sm:$0x1] %vm306, %v837
      %913 = vst.msk [vmem:[%s614 + $0x93] sm:$0x1] %vm306, %v839
      %914 = vst.msk [vmem:[%s614 + $0xab] sm:$0x1] %vm306, %v841
      %915 = vst.msk [vmem:[%s614 + $0xc3] sm:$0x1] %vm306, %v865
      %916 = vst.msk [vmem:[%s614 + $0xdb] sm:$0x1] %vm306, %v879
      %917 = vst.msk [vmem:[%s614 + $0xf3] sm:$0x1] %vm306, %v887
      %918 = vst.msk [vmem:[%s614 + $0x10b] sm:$0x1] %vm306, %v889
      %919 = vst.msk [vmem:[%s614 + $0x123] sm:$0x1] %vm306, %v872
      %920 = vst.msk [vmem:[%s614 + $0x13b] sm:$0x1] %vm306, %v886
      %921 = vst.msk [vmem:[%s614 + $0x153] sm:$0x1] %vm306, %v888
      %922 = vst.msk [vmem:[%s614 + $0x16b] sm:$0x1] %vm306, %v890
      %v923 = vmul.f32 %v480, 0.6
      %v924 = vmul.f32 %v483, 0.6
      %v925 = vmul.f32 %v480, 0.4
      %v926 = vmul.f32 %v483, 0.4
      %929 = vrot.lane.b32.xlu0 %v925, 124
      %v930 = vpop.permute.xlu0 %929
      %931 = vrot.lane.b32.xlu0 %v926, 124
      %v932 = vpop.permute.xlu0 %931
      %v935 = vadd.f32 %v923, %v930
      %v936 = vadd.f32 %v924, %v932
      %v939 = vcombine.high %v935, %v935
      %v941 = vunpack.c.l.s4 1966171168
      %v942 = vunpack.c.0.s8 %v941
      %v943 = vlaneseq
      %v944 = vshrl.u32 %v943, 7
      %v945 = vsub.s32 %v942, %v944
      %v946 = vrot.slane %v935, %v945
      %v948 = vunpack.c.l.s4 1966171168
      %v949 = vunpack.c.0.s8 %v948
      %v950 = vlaneseq
      %v951 = vshrl.u32 %v950, 7
      %v952 = vsub.s32 %v949, %v951
      %v953 = vrot.slane %v939, %v952
      %v954 = vcombine.high %v946, %v946
      %v955 = vcombine.high %v953, %v953
      %v957 = vunpack.c.l.s4 1966171168
      %v958 = vunpack.c.0.s8 %v957
      %v959 = vlaneseq
      %v960 = vshrl.u32 %v959, 7
      %v961 = vsub.s32 %v958, %v960
      %v962 = vrot.slane %v946, %v961
      %v964 = vunpack.c.l.s4 1966171168
      %v965 = vunpack.c.0.s8 %v964
      %v966 = vlaneseq
      %v967 = vshrl.u32 %v966, 7
      %v968 = vsub.s32 %v965, %v967
      %v969 = vrot.slane %v953, %v968
      %v971 = vunpack.c.l.s4 1966171168
      %v972 = vunpack.c.0.s8 %v971
      %v973 = vlaneseq
      %v974 = vshrl.u32 %v973, 7
      %v975 = vsub.s32 %v972, %v974
      %v976 = vrot.slane %v954, %v975
      %v978 = vunpack.c.l.s4 1966171168
      %v979 = vunpack.c.0.s8 %v978
      %v980 = vlaneseq
      %v981 = vshrl.u32 %v980, 7
      %v982 = vsub.s32 %v979, %v981
      %v983 = vrot.slane %v955, %v982
      %v984 = vcombine.high %v962, %v962
      %v985 = vcombine.high %v969, %v969
      %v986 = vcombine.high %v976, %v976
      %v987 = vcombine.high %v983, %v983
      %v988 = vcombine.high %v936, %v936
      %v990 = vunpack.c.l.s4 1966171168
      %v991 = vunpack.c.0.s8 %v990
      %v992 = vlaneseq
      %v993 = vshrl.u32 %v992, 7
      %v994 = vsub.s32 %v991, %v993
      %v995 = vrot.slane %v936, %v994
      %v997 = vunpack.c.l.s4 1966171168
      %v998 = vunpack.c.0.s8 %v997
      %v999 = vlaneseq
      %v1000 = vshrl.u32 %v999, 7
      %v1001 = vsub.s32 %v998, %v1000
      %v1002 = vrot.slane %v988, %v1001
      %v1003 = vcombine.high %v995, %v995
      %v1004 = vcombine.high %v1002, %v1002
      %v1006 = vunpack.c.l.s4 1966171168
      %v1007 = vunpack.c.0.s8 %v1006
      %v1008 = vlaneseq
      %v1009 = vshrl.u32 %v1008, 7
      %v1010 = vsub.s32 %v1007, %v1009
      %v1011 = vrot.slane %v995, %v1010
      %v1013 = vunpack.c.l.s4 1966171168
      %v1014 = vunpack.c.0.s8 %v1013
      %v1015 = vlaneseq
      %v1016 = vshrl.u32 %v1015, 7
      %v1017 = vsub.s32 %v1014, %v1016
      %v1018 = vrot.slane %v1002, %v1017
      %v1020 = vunpack.c.l.s4 1966171168
      %v1021 = vunpack.c.0.s8 %v1020
      %v1022 = vlaneseq
      %v1023 = vshrl.u32 %v1022, 7
      %v1024 = vsub.s32 %v1021, %v1023
      %v1025 = vrot.slane %v1003, %v1024
      %v1027 = vunpack.c.l.s4 1966171168
      %v1028 = vunpack.c.0.s8 %v1027
      %v1029 = vlaneseq
      %v1030 = vshrl.u32 %v1029, 7
      %v1031 = vsub.s32 %v1028, %v1030
      %v1032 = vrot.slane %v1004, %v1031
      %v1033 = vcombine.high %v1011, %v1011
      %v1034 = vcombine.high %v1018, %v1018
      %v1035 = vcombine.high %v1025, %v1025
      %v1036 = vcombine.high %v1032, %v1032
      %v1037 = vlaneseq
      %v1038 = vshrl.u32 %v1037, 7
      %v1039 = vsub.s32 0, %v1038
      %v1040 = vrot.slane %v962, %v1039
      %v1041 = vlaneseq
      %v1042 = vshrl.u32 %v1041, 7
      %v1043 = vsub.s32 0, %v1042
      %v1044 = vrot.slane %v976, %v1043
      %v1045 = vlaneseq
      %v1046 = vshrl.u32 %v1045, 7
      %v1047 = vsub.s32 0, %v1046
      %v1048 = vrot.slane %v984, %v1047
      %v1049 = vlaneseq
      %v1050 = vshrl.u32 %v1049, 7
      %v1051 = vsub.s32 0, %v1050
      %v1052 = vrot.slane %v986, %v1051
      %v1053 = vlaneseq
      %v1054 = vshrl.u32 %v1053, 7
      %v1055 = vsub.s32 0, %v1054
      %v1056 = vrot.slane %v969, %v1055
      %v1057 = vlaneseq
      %v1058 = vshrl.u32 %v1057, 7
      %v1059 = vsub.s32 0, %v1058
      %v1060 = vrot.slane %v983, %v1059
      %v1061 = vlaneseq
      %v1062 = vshrl.u32 %v1061, 7
      %v1063 = vsub.s32 0, %v1062
      %v1064 = vrot.slane %v985, %v1063
      %v1065 = vlaneseq
      %v1066 = vshrl.u32 %v1065, 7
      %v1067 = vsub.s32 0, %v1066
      %v1068 = vrot.slane %v987, %v1067
      %v1069 = vlaneseq
      %v1070 = vshrl.u32 %v1069, 7
      %v1071 = vsub.s32 0, %v1070
      %v1072 = vrot.slane %v1011, %v1071
      %v1073 = vlaneseq
      %v1074 = vshrl.u32 %v1073, 7
      %v1075 = vsub.s32 0, %v1074
      %v1076 = vrot.slane %v1025, %v1075
      %v1077 = vlaneseq
      %v1078 = vshrl.u32 %v1077, 7
      %v1079 = vsub.s32 0, %v1078
      %v1080 = vrot.slane %v1033, %v1079
      %v1081 = vlaneseq
      %v1082 = vshrl.u32 %v1081, 7
      %v1083 = vsub.s32 0, %v1082
      %v1084 = vrot.slane %v1035, %v1083
      %v1085 = vlaneseq
      %v1086 = vshrl.u32 %v1085, 7
      %v1087 = vsub.s32 0, %v1086
      %v1088 = vrot.slane %v1018, %v1087
      %v1089 = vlaneseq
      %v1090 = vshrl.u32 %v1089, 7
      %v1091 = vsub.s32 0, %v1090
      %v1092 = vrot.slane %v1032, %v1091
      %v1093 = vlaneseq
      %v1094 = vshrl.u32 %v1093, 7
      %v1095 = vsub.s32 0, %v1094
      %v1096 = vrot.slane %v1034, %v1095
      %v1097 = vlaneseq
      %v1098 = vshrl.u32 %v1097, 7
      %v1099 = vsub.s32 0, %v1098
      %v1100 = vrot.slane %v1036, %v1099
      %1101 = vrot.lane.b32.xlu0 %v1040, 124
      %v1102 = vpop.permute.xlu0 %1101
      %1103 = vrot.lane.b32.xlu0 %v1044, 124
      %v1104 = vpop.permute.xlu0 %1103
      %1105 = vrot.lane.b32.xlu0 %v1048, 124
      %v1106 = vpop.permute.xlu0 %1105
      %1107 = vrot.lane.b32.xlu0 %v1052, 124
      %v1108 = vpop.permute.xlu0 %1107
      %1109 = vrot.lane.b32.xlu0 %v1056, 124
      %v1110 = vpop.permute.xlu0 %1109
      %1111 = vrot.lane.b32.xlu0 %v1060, 124
      %v1112 = vpop.permute.xlu0 %1111
      %1113 = vrot.lane.b32.xlu0 %v1064, 124
      %v1114 = vpop.permute.xlu0 %1113
      %1115 = vrot.lane.b32.xlu0 %v1068, 124
      %v1116 = vpop.permute.xlu0 %1115
      %1117 = vrot.lane.b32.xlu0 %v1072, 124
      %v1118 = vpop.permute.xlu0 %1117
      %1119 = vrot.lane.b32.xlu0 %v1076, 124
      %v1120 = vpop.permute.xlu0 %1119
      %1121 = vrot.lane.b32.xlu0 %v1080, 124
      %v1122 = vpop.permute.xlu0 %1121
      %1123 = vrot.lane.b32.xlu0 %v1084, 124
      %v1124 = vpop.permute.xlu0 %1123
      %1125 = vrot.lane.b32.xlu0 %v1088, 124
      %v1126 = vpop.permute.xlu0 %1125
      %1127 = vrot.lane.b32.xlu0 %v1092, 124
      %v1128 = vpop.permute.xlu0 %1127
      %1129 = vrot.lane.b32.xlu0 %v1096, 124
      %v1130 = vpop.permute.xlu0 %1129
      %1131 = vrot.lane.b32.xlu0 %v1100, 124
      %v1132 = vpop.permute.xlu0 %1131
      %1149 = vst.msk [vmem:[%s614 + $0x4] sm:$0x1] %vm306, %v1102
      %1150 = vst.msk [vmem:[%s614 + $0x1c] sm:$0x1] %vm306, %v1104
      %1151 = vst.msk [vmem:[%s614 + $0x34] sm:$0x1] %vm306, %v1106
      %1152 = vst.msk [vmem:[%s614 + $0x4c] sm:$0x1] %vm306, %v1108
      %1153 = vst.msk [vmem:[%s614 + $0x64] sm:$0x1] %vm306, %v1110
      %1154 = vst.msk [vmem:[%s614 + $0x7c] sm:$0x1] %vm306, %v1112
      %1155 = vst.msk [vmem:[%s614 + $0x94] sm:$0x1] %vm306, %v1114
      %1156 = vst.msk [vmem:[%s614 + $0xac] sm:$0x1] %vm306, %v1116
      %1157 = vst.msk [vmem:[%s614 + $0xc4] sm:$0x1] %vm306, %v1118
      %1158 = vst.msk [vmem:[%s614 + $0xdc] sm:$0x1] %vm306, %v1120
      %1159 = vst.msk [vmem:[%s614 + $0xf4] sm:$0x1] %vm306, %v1122
      %1160 = vst.msk [vmem:[%s614 + $0x10c] sm:$0x1] %vm306, %v1124
      %1161 = vst.msk [vmem:[%s614 + $0x124] sm:$0x1] %vm306, %v1126
      %1162 = vst.msk [vmem:[%s614 + $0x13c] sm:$0x1] %vm306, %v1128
      %1163 = vst.msk [vmem:[%s614 + $0x154] sm:$0x1] %vm306, %v1130
      %1164 = vst.msk [vmem:[%s614 + $0x16c] sm:$0x1] %vm306, %v1132
      %v1165 = vmul.f32 %v480, 0.13333334
      %v1166 = vmul.f32 %v483, 0.13333334
      %v1167 = vmul.f32 %v480, 0.8666667
      %v1168 = vmul.f32 %v483, 0.8666667
      %1171 = vrot.lane.b32.xlu0 %v1167, 124
      %v1172 = vpop.permute.xlu0 %1171
      %1173 = vrot.lane.b32.xlu0 %v1168, 124
      %v1174 = vpop.permute.xlu0 %1173
      %v1177 = vadd.f32 %v1165, %v1172
      %v1178 = vadd.f32 %v1166, %v1174
      %v1181 = vcombine.high %v1177, %v1177
      %v1183 = vunpack.c.l.s4 1966171168
      %v1184 = vunpack.c.0.s8 %v1183
      %v1185 = vlaneseq
      %v1186 = vshrl.u32 %v1185, 7
      %v1187 = vsub.s32 %v1184, %v1186
      %v1188 = vrot.slane %v1177, %v1187
      %v1190 = vunpack.c.l.s4 1966171168
      %v1191 = vunpack.c.0.s8 %v1190
      %v1192 = vlaneseq
      %v1193 = vshrl.u32 %v1192, 7
      %v1194 = vsub.s32 %v1191, %v1193
      %v1195 = vrot.slane %v1181, %v1194
      %v1196 = vcombine.high %v1188, %v1188
      %v1197 = vcombine.high %v1195, %v1195
      %v1199 = vunpack.c.l.s4 1966171168
      %v1200 = vunpack.c.0.s8 %v1199
      %v1201 = vlaneseq
      %v1202 = vshrl.u32 %v1201, 7
      %v1203 = vsub.s32 %v1200, %v1202
      %v1204 = vrot.slane %v1188, %v1203
      %v1206 = vunpack.c.l.s4 1966171168
      %v1207 = vunpack.c.0.s8 %v1206
      %v1208 = vlaneseq
      %v1209 = vshrl.u32 %v1208, 7
      %v1210 = vsub.s32 %v1207, %v1209
      %v1211 = vrot.slane %v1195, %v1210
      %v1213 = vunpack.c.l.s4 1966171168
      %v1214 = vunpack.c.0.s8 %v1213
      %v1215 = vlaneseq
      %v1216 = vshrl.u32 %v1215, 7
      %v1217 = vsub.s32 %v1214, %v1216
      %v1218 = vrot.slane %v1196, %v1217
      %v1220 = vunpack.c.l.s4 1966171168
      %v1221 = vunpack.c.0.s8 %v1220
      %v1222 = vlaneseq
      %v1223 = vshrl.u32 %v1222, 7
      %v1224 = vsub.s32 %v1221, %v1223
      %v1225 = vrot.slane %v1197, %v1224
      %v1226 = vcombine.high %v1204, %v1204
      %v1227 = vcombine.high %v1211, %v1211
      %v1228 = vcombine.high %v1218, %v1218
      %v1229 = vcombine.high %v1225, %v1225
      %v1230 = vcombine.high %v1178, %v1178
      %v1232 = vunpack.c.l.s4 1966171168
      %v1233 = vunpack.c.0.s8 %v1232
      %v1234 = vlaneseq
      %v1235 = vshrl.u32 %v1234, 7
      %v1236 = vsub.s32 %v1233, %v1235
      %v1237 = vrot.slane %v1178, %v1236
      %v1239 = vunpack.c.l.s4 1966171168
      %v1240 = vunpack.c.0.s8 %v1239
      %v1241 = vlaneseq
      %v1242 = vshrl.u32 %v1241, 7
      %v1243 = vsub.s32 %v1240, %v1242
      %v1244 = vrot.slane %v1230, %v1243
      %v1245 = vcombine.high %v1237, %v1237
      %v1246 = vcombine.high %v1244, %v1244
      %v1248 = vunpack.c.l.s4 1966171168
      %v1249 = vunpack.c.0.s8 %v1248
      %v1250 = vlaneseq
      %v1251 = vshrl.u32 %v1250, 7
      %v1252 = vsub.s32 %v1249, %v1251
      %v1253 = vrot.slane %v1237, %v1252
      %v1255 = vunpack.c.l.s4 1966171168
      %v1256 = vunpack.c.0.s8 %v1255
      %v1257 = vlaneseq
      %v1258 = vshrl.u32 %v1257, 7
      %v1259 = vsub.s32 %v1256, %v1258
      %v1260 = vrot.slane %v1244, %v1259
      %v1262 = vunpack.c.l.s4 1966171168
      %v1263 = vunpack.c.0.s8 %v1262
      %v1264 = vlaneseq
      %v1265 = vshrl.u32 %v1264, 7
      %v1266 = vsub.s32 %v1263, %v1265
      %v1267 = vrot.slane %v1245, %v1266
      %v1269 = vunpack.c.l.s4 1966171168
      %v1270 = vunpack.c.0.s8 %v1269
      %v1271 = vlaneseq
      %v1272 = vshrl.u32 %v1271, 7
      %v1273 = vsub.s32 %v1270, %v1272
      %v1274 = vrot.slane %v1246, %v1273
      %v1275 = vcombine.high %v1253, %v1253
      %v1276 = vcombine.high %v1260, %v1260
      %v1277 = vcombine.high %v1267, %v1267
      %v1278 = vcombine.high %v1274, %v1274
      %v1279 = vlaneseq
      %v1280 = vshrl.u32 %v1279, 7
      %v1281 = vsub.s32 0, %v1280
      %v1282 = vrot.slane %v1204, %v1281
      %v1283 = vlaneseq
      %v1284 = vshrl.u32 %v1283, 7
      %v1285 = vsub.s32 0, %v1284
      %v1286 = vrot.slane %v1218, %v1285
      %v1287 = vlaneseq
      %v1288 = vshrl.u32 %v1287, 7
      %v1289 = vsub.s32 0, %v1288
      %v1290 = vrot.slane %v1226, %v1289
      %v1291 = vlaneseq
      %v1292 = vshrl.u32 %v1291, 7
      %v1293 = vsub.s32 0, %v1292
      %v1294 = vrot.slane %v1228, %v1293
      %v1295 = vlaneseq
      %v1296 = vshrl.u32 %v1295, 7
      %v1297 = vsub.s32 0, %v1296
      %v1298 = vrot.slane %v1211, %v1297
      %v1299 = vlaneseq
      %v1300 = vshrl.u32 %v1299, 7
      %v1301 = vsub.s32 0, %v1300
      %v1302 = vrot.slane %v1225, %v1301
      %v1303 = vlaneseq
      %v1304 = vshrl.u32 %v1303, 7
      %v1305 = vsub.s32 0, %v1304
      %v1306 = vrot.slane %v1227, %v1305
      %v1307 = vlaneseq
      %v1308 = vshrl.u32 %v1307, 7
      %v1309 = vsub.s32 0, %v1308
      %v1310 = vrot.slane %v1229, %v1309
      %v1311 = vlaneseq
      %v1312 = vshrl.u32 %v1311, 7
      %v1313 = vsub.s32 0, %v1312
      %v1314 = vrot.slane %v1253, %v1313
      %v1315 = vlaneseq
      %v1316 = vshrl.u32 %v1315, 7
      %v1317 = vsub.s32 0, %v1316
      %v1318 = vrot.slane %v1267, %v1317
      %v1319 = vlaneseq
      %v1320 = vshrl.u32 %v1319, 7
      %v1321 = vsub.s32 0, %v1320
      %v1322 = vrot.slane %v1275, %v1321
      %v1323 = vlaneseq
      %v1324 = vshrl.u32 %v1323, 7
      %v1325 = vsub.s32 0, %v1324
      %v1326 = vrot.slane %v1277, %v1325
      %v1327 = vlaneseq
      %v1328 = vshrl.u32 %v1327, 7
      %v1329 = vsub.s32 0, %v1328
      %v1330 = vrot.slane %v1260, %v1329
      %v1331 = vlaneseq
      %v1332 = vshrl.u32 %v1331, 7
      %v1333 = vsub.s32 0, %v1332
      %v1334 = vrot.slane %v1274, %v1333
      %v1335 = vlaneseq
      %v1336 = vshrl.u32 %v1335, 7
      %v1337 = vsub.s32 0, %v1336
      %v1338 = vrot.slane %v1276, %v1337
      %v1339 = vlaneseq
      %v1340 = vshrl.u32 %v1339, 7
      %v1341 = vsub.s32 0, %v1340
      %v1342 = vrot.slane %v1278, %v1341
      %1343 = vrot.lane.b32.xlu0 %v1282, 124
      %v1344 = vpop.permute.xlu0 %1343
      %1345 = vrot.lane.b32.xlu0 %v1286, 124
      %v1346 = vpop.permute.xlu0 %1345
      %1347 = vrot.lane.b32.xlu0 %v1290, 124
      %v1348 = vpop.permute.xlu0 %1347
      %1349 = vrot.lane.b32.xlu0 %v1294, 124
      %v1350 = vpop.permute.xlu0 %1349
      %1351 = vrot.lane.b32.xlu0 %v1298, 124
      %v1352 = vpop.permute.xlu0 %1351
      %1353 = vrot.lane.b32.xlu0 %v1302, 124
      %v1354 = vpop.permute.xlu0 %1353
      %1355 = vrot.lane.b32.xlu0 %v1306, 124
      %v1356 = vpop.permute.xlu0 %1355
      %1357 = vrot.lane.b32.xlu0 %v1310, 124
      %v1358 = vpop.permute.xlu0 %1357
      %1359 = vrot.lane.b32.xlu0 %v1314, 124
      %v1360 = vpop.permute.xlu0 %1359
      %1361 = vrot.lane.b32.xlu0 %v1318, 124
      %v1362 = vpop.permute.xlu0 %1361
      %1363 = vrot.lane.b32.xlu0 %v1322, 124
      %v1364 = vpop.permute.xlu0 %1363
      %1365 = vrot.lane.b32.xlu0 %v1326, 124
      %v1366 = vpop.permute.xlu0 %1365
      %1367 = vrot.lane.b32.xlu0 %v1330, 124
      %v1368 = vpop.permute.xlu0 %1367
      %1369 = vrot.lane.b32.xlu0 %v1334, 124
      %v1370 = vpop.permute.xlu0 %1369
      %1371 = vrot.lane.b32.xlu0 %v1338, 124
      %v1372 = vpop.permute.xlu0 %1371
      %1373 = vrot.lane.b32.xlu0 %v1342, 124
      %v1374 = vpop.permute.xlu0 %1373
      %1391 = vst.msk [vmem:[%s614 + $0x5] sm:$0x1] %vm306, %v1344
      %1392 = vst.msk [vmem:[%s614 + $0x1d] sm:$0x1] %vm306, %v1346
      %1393 = vst.msk [vmem:[%s614 + $0x35] sm:$0x1] %vm306, %v1348
      %1394 = vst.msk [vmem:[%s614 + $0x4d] sm:$0x1] %vm306, %v1350
      %1395 = vst.msk [vmem:[%s614 + $0x65] sm:$0x1] %vm306, %v1352
      %1396 = vst.msk [vmem:[%s614 + $0x7d] sm:$0x1] %vm306, %v1354
      %1397 = vst.msk [vmem:[%s614 + $0x95] sm:$0x1] %vm306, %v1356
      %1398 = vst.msk [vmem:[%s614 + $0xad] sm:$0x1] %vm306, %v1358
      %1399 = vst.msk [vmem:[%s614 + $0xc5] sm:$0x1] %vm306, %v1360
      %1400 = vst.msk [vmem:[%s614 + $0xdd] sm:$0x1] %vm306, %v1362
      %1401 = vst.msk [vmem:[%s614 + $0xf5] sm:$0x1] %vm306, %v1364
      %1402 = vst.msk [vmem:[%s614 + $0x10d] sm:$0x1] %vm306, %v1366
      %1403 = vst.msk [vmem:[%s614 + $0x125] sm:$0x1] %vm306, %v1368
      %1404 = vst.msk [vmem:[%s614 + $0x13d] sm:$0x1] %vm306, %v1370
      %1405 = vst.msk [vmem:[%s614 + $0x155] sm:$0x1] %vm306, %v1372
      %1406 = vst.msk [vmem:[%s614 + $0x16d] sm:$0x1] %vm306, %v1374
      %v1407 = vmul.f32 %v480, 0.6666667
      %v1408 = vmul.f32 %v483, 0.6666667
      %v1409 = vmul.f32 %v480, 0.33333334
      %v1410 = vmul.f32 %v483, 0.33333334
      %1413 = vrot.lane.b32.xlu0 %v1409, 124
      %v1414 = vpop.permute.xlu0 %1413
      %1415 = vrot.lane.b32.xlu0 %v1410, 124
      %v1416 = vpop.permute.xlu0 %1415
      %v1419 = vadd.f32 %v1407, %v1414
      %v1420 = vadd.f32 %v1408, %v1416
      %v1423 = vcombine.high %v1419, %v1419
      %v1425 = vunpack.c.l.s4 1966171168
      %v1426 = vunpack.c.0.s8 %v1425
      %v1427 = vlaneseq
      %v1428 = vshrl.u32 %v1427, 7
      %v1429 = vsub.s32 %v1426, %v1428
      %v1430 = vrot.slane %v1419, %v1429
      %v1432 = vunpack.c.l.s4 1966171168
      %v1433 = vunpack.c.0.s8 %v1432
      %v1434 = vlaneseq
      %v1435 = vshrl.u32 %v1434, 7
      %v1436 = vsub.s32 %v1433, %v1435
      %v1437 = vrot.slane %v1423, %v1436
      %v1438 = vcombine.high %v1430, %v1430
      %v1439 = vcombine.high %v1437, %v1437
      %v1441 = vunpack.c.l.s4 1966171168
      %v1442 = vunpack.c.0.s8 %v1441
      %v1443 = vlaneseq
      %v1444 = vshrl.u32 %v1443, 7
      %v1445 = vsub.s32 %v1442, %v1444
      %v1446 = vrot.slane %v1430, %v1445
      %v1448 = vunpack.c.l.s4 1966171168
      %v1449 = vunpack.c.0.s8 %v1448
      %v1450 = vlaneseq
      %v1451 = vshrl.u32 %v1450, 7
      %v1452 = vsub.s32 %v1449, %v1451
      %v1453 = vrot.slane %v1437, %v1452
      %v1455 = vunpack.c.l.s4 1966171168
      %v1456 = vunpack.c.0.s8 %v1455
      %v1457 = vlaneseq
      %v1458 = vshrl.u32 %v1457, 7
      %v1459 = vsub.s32 %v1456, %v1458
      %v1460 = vrot.slane %v1438, %v1459
      %v1462 = vunpack.c.l.s4 1966171168
      %v1463 = vunpack.c.0.s8 %v1462
      %v1464 = vlaneseq
      %v1465 = vshrl.u32 %v1464, 7
      %v1466 = vsub.s32 %v1463, %v1465
      %v1467 = vrot.slane %v1439, %v1466
      %v1468 = vcombine.high %v1446, %v1446
      %v1469 = vcombine.high %v1453, %v1453
      %v1470 = vcombine.high %v1460, %v1460
      %v1471 = vcombine.high %v1467, %v1467
      %v1472 = vcombine.high %v1420, %v1420
      %v1474 = vunpack.c.l.s4 1966171168
      %v1475 = vunpack.c.0.s8 %v1474
      %v1476 = vlaneseq
      %v1477 = vshrl.u32 %v1476, 7
      %v1478 = vsub.s32 %v1475, %v1477
      %v1479 = vrot.slane %v1420, %v1478
      %v1481 = vunpack.c.l.s4 1966171168
      %v1482 = vunpack.c.0.s8 %v1481
      %v1483 = vlaneseq
      %v1484 = vshrl.u32 %v1483, 7
      %v1485 = vsub.s32 %v1482, %v1484
      %v1486 = vrot.slane %v1472, %v1485
      %v1487 = vcombine.high %v1479, %v1479
      %v1488 = vcombine.high %v1486, %v1486
      %v1490 = vunpack.c.l.s4 1966171168
      %v1491 = vunpack.c.0.s8 %v1490
      %v1492 = vlaneseq
      %v1493 = vshrl.u32 %v1492, 7
      %v1494 = vsub.s32 %v1491, %v1493
      %v1495 = vrot.slane %v1479, %v1494
      %v1497 = vunpack.c.l.s4 1966171168
      %v1498 = vunpack.c.0.s8 %v1497
      %v1499 = vlaneseq
      %v1500 = vshrl.u32 %v1499, 7
      %v1501 = vsub.s32 %v1498, %v1500
      %v1502 = vrot.slane %v1486, %v1501
      %v1504 = vunpack.c.l.s4 1966171168
      %v1505 = vunpack.c.0.s8 %v1504
      %v1506 = vlaneseq
      %v1507 = vshrl.u32 %v1506, 7
      %v1508 = vsub.s32 %v1505, %v1507
      %v1509 = vrot.slane %v1487, %v1508
      %v1511 = vunpack.c.l.s4 1966171168
      %v1512 = vunpack.c.0.s8 %v1511
      %v1513 = vlaneseq
      %v1514 = vshrl.u32 %v1513, 7
      %v1515 = vsub.s32 %v1512, %v1514
      %v1516 = vrot.slane %v1488, %v1515
      %v1517 = vcombine.high %v1495, %v1495
      %v1518 = vcombine.high %v1502, %v1502
      %v1519 = vcombine.high %v1509, %v1509
      %v1520 = vcombine.high %v1516, %v1516
      %v1521 = vlaneseq
      %v1522 = vshrl.u32 %v1521, 7
      %v1523 = vsub.s32 0, %v1522
      %v1524 = vrot.slane %v1446, %v1523
      %v1525 = vlaneseq
      %v1526 = vshrl.u32 %v1525, 7
      %v1527 = vsub.s32 0, %v1526
      %v1528 = vrot.slane %v1460, %v1527
      %v1529 = vlaneseq
      %v1530 = vshrl.u32 %v1529, 7
      %v1531 = vsub.s32 0, %v1530
      %v1532 = vrot.slane %v1468, %v1531
      %v1533 = vlaneseq
      %v1534 = vshrl.u32 %v1533, 7
      %v1535 = vsub.s32 0, %v1534
      %v1536 = vrot.slane %v1470, %v1535
      %v1537 = vlaneseq
      %v1538 = vshrl.u32 %v1537, 7
      %v1539 = vsub.s32 0, %v1538
      %v1540 = vrot.slane %v1453, %v1539
      %v1541 = vlaneseq
      %v1542 = vshrl.u32 %v1541, 7
      %v1543 = vsub.s32 0, %v1542
      %v1544 = vrot.slane %v1467, %v1543
      %v1545 = vlaneseq
      %v1546 = vshrl.u32 %v1545, 7
      %v1547 = vsub.s32 0, %v1546
      %v1548 = vrot.slane %v1469, %v1547
      %v1549 = vlaneseq
      %v1550 = vshrl.u32 %v1549, 7
      %v1551 = vsub.s32 0, %v1550
      %v1552 = vrot.slane %v1471, %v1551
      %v1553 = vlaneseq
      %v1554 = vshrl.u32 %v1553, 7
      %v1555 = vsub.s32 0, %v1554
      %v1556 = vrot.slane %v1495, %v1555
      %v1557 = vlaneseq
      %v1558 = vshrl.u32 %v1557, 7
      %v1559 = vsub.s32 0, %v1558
      %v1560 = vrot.slane %v1509, %v1559
      %v1561 = vlaneseq
      %v1562 = vshrl.u32 %v1561, 7
      %v1563 = vsub.s32 0, %v1562
      %v1564 = vrot.slane %v1517, %v1563
      %v1565 = vlaneseq
      %v1566 = vshrl.u32 %v1565, 7
      %v1567 = vsub.s32 0, %v1566
      %v1568 = vrot.slane %v1519, %v1567
      %v1569 = vlaneseq
      %v1570 = vshrl.u32 %v1569, 7
      %v1571 = vsub.s32 0, %v1570
      %v1572 = vrot.slane %v1502, %v1571
      %v1573 = vlaneseq
      %v1574 = vshrl.u32 %v1573, 7
      %v1575 = vsub.s32 0, %v1574
      %v1576 = vrot.slane %v1516, %v1575
      %v1577 = vlaneseq
      %v1578 = vshrl.u32 %v1577, 7
      %v1579 = vsub.s32 0, %v1578
      %v1580 = vrot.slane %v1518, %v1579
      %v1581 = vlaneseq
      %v1582 = vshrl.u32 %v1581, 7
      %v1583 = vsub.s32 0, %v1582
      %v1584 = vrot.slane %v1520, %v1583
      %1585 = vrot.lane.b32.xlu0 %v1524, 120
      %v1586 = vpop.permute.xlu0 %1585
      %1587 = vrot.lane.b32.xlu0 %v1528, 120
      %v1588 = vpop.permute.xlu0 %1587
      %1589 = vrot.lane.b32.xlu0 %v1532, 120
      %v1590 = vpop.permute.xlu0 %1589
      %1591 = vrot.lane.b32.xlu0 %v1536, 120
      %v1592 = vpop.permute.xlu0 %1591
      %1593 = vrot.lane.b32.xlu0 %v1540, 120
      %v1594 = vpop.permute.xlu0 %1593
      %1595 = vrot.lane.b32.xlu0 %v1544, 120
      %v1596 = vpop.permute.xlu0 %1595
      %1597 = vrot.lane.b32.xlu0 %v1548, 120
      %v1598 = vpop.permute.xlu0 %1597
      %1599 = vrot.lane.b32.xlu0 %v1552, 120
      %v1600 = vpop.permute.xlu0 %1599
      %1601 = vrot.lane.b32.xlu0 %v1556, 120
      %v1602 = vpop.permute.xlu0 %1601
      %1603 = vrot.lane.b32.xlu0 %v1560, 120
      %v1604 = vpop.permute.xlu0 %1603
      %1605 = vrot.lane.b32.xlu0 %v1564, 120
      %v1606 = vpop.permute.xlu0 %1605
      %1607 = vrot.lane.b32.xlu0 %v1568, 120
      %v1608 = vpop.permute.xlu0 %1607
      %1609 = vrot.lane.b32.xlu0 %v1572, 120
      %v1610 = vpop.permute.xlu0 %1609
      %1611 = vrot.lane.b32.xlu0 %v1576, 120
      %v1612 = vpop.permute.xlu0 %1611
      %1613 = vrot.lane.b32.xlu0 %v1580, 120
      %v1614 = vpop.permute.xlu0 %1613
      %1615 = vrot.lane.b32.xlu0 %v1584, 120
      %v1616 = vpop.permute.xlu0 %1615
      %1633 = vst.msk [vmem:[%s614 + $0x6] sm:$0x1] %vm306, %v1586
      %1634 = vst.msk [vmem:[%s614 + $0x1e] sm:$0x1] %vm306, %v1588
      %1635 = vst.msk [vmem:[%s614 + $0x36] sm:$0x1] %vm306, %v1590
      %1636 = vst.msk [vmem:[%s614 + $0x4e] sm:$0x1] %vm306, %v1592
      %1637 = vst.msk [vmem:[%s614 + $0x66] sm:$0x1] %vm306, %v1594
      %1638 = vst.msk [vmem:[%s614 + $0x7e] sm:$0x1] %vm306, %v1596
      %1639 = vst.msk [vmem:[%s614 + $0x96] sm:$0x1] %vm306, %v1598
      %1640 = vst.msk [vmem:[%s614 + $0xae] sm:$0x1] %vm306, %v1600
      %1641 = vst.msk [vmem:[%s614 + $0xc6] sm:$0x1] %vm306, %v1602
      %1642 = vst.msk [vmem:[%s614 + $0xde] sm:$0x1] %vm306, %v1604
      %1643 = vst.msk [vmem:[%s614 + $0xf6] sm:$0x1] %vm306, %v1606
      %1644 = vst.msk [vmem:[%s614 + $0x10e] sm:$0x1] %vm306, %v1608
      %1645 = vst.msk [vmem:[%s614 + $0x126] sm:$0x1] %vm306, %v1610
      %1646 = vst.msk [vmem:[%s614 + $0x13e] sm:$0x1] %vm306, %v1612
      %1647 = vst.msk [vmem:[%s614 + $0x156] sm:$0x1] %vm306, %v1614
      %1648 = vst.msk [vmem:[%s614 + $0x16e] sm:$0x1] %vm306, %v1616
      %v1649 = vmul.f32 %v480, 0.2
      %v1650 = vmul.f32 %v483, 0.2
      %v1651 = vmul.f32 %v480, 0.8
      %v1652 = vmul.f32 %v483, 0.8
      %1655 = vrot.lane.b32.xlu0 %v1651, 124
      %v1656 = vpop.permute.xlu0 %1655
      %1657 = vrot.lane.b32.xlu0 %v1652, 124
      %v1658 = vpop.permute.xlu0 %1657
      %v1661 = vadd.f32 %v1649, %v1656
      %v1662 = vadd.f32 %v1650, %v1658
      %v1665 = vcombine.high %v1661, %v1661
      %v1667 = vunpack.c.l.s4 1966171168
      %v1668 = vunpack.c.0.s8 %v1667
      %v1669 = vlaneseq
      %v1670 = vshrl.u32 %v1669, 7
      %v1671 = vsub.s32 %v1668, %v1670
      %v1672 = vrot.slane %v1661, %v1671
      %v1674 = vunpack.c.l.s4 1966171168
      %v1675 = vunpack.c.0.s8 %v1674
      %v1676 = vlaneseq
      %v1677 = vshrl.u32 %v1676, 7
      %v1678 = vsub.s32 %v1675, %v1677
      %v1679 = vrot.slane %v1665, %v1678
      %v1680 = vcombine.high %v1672, %v1672
      %v1681 = vcombine.high %v1679, %v1679
      %v1683 = vunpack.c.l.s4 1966171168
      %v1684 = vunpack.c.0.s8 %v1683
      %v1685 = vlaneseq
      %v1686 = vshrl.u32 %v1685, 7
      %v1687 = vsub.s32 %v1684, %v1686
      %v1688 = vrot.slane %v1672, %v1687
      %v1690 = vunpack.c.l.s4 1966171168
      %v1691 = vunpack.c.0.s8 %v1690
      %v1692 = vlaneseq
      %v1693 = vshrl.u32 %v1692, 7
      %v1694 = vsub.s32 %v1691, %v1693
      %v1695 = vrot.slane %v1679, %v1694
      %v1697 = vunpack.c.l.s4 1966171168
      %v1698 = vunpack.c.0.s8 %v1697
      %v1699 = vlaneseq
      %v1700 = vshrl.u32 %v1699, 7
      %v1701 = vsub.s32 %v1698, %v1700
      %v1702 = vrot.slane %v1680, %v1701
      %v1704 = vunpack.c.l.s4 1966171168
      %v1705 = vunpack.c.0.s8 %v1704
      %v1706 = vlaneseq
      %v1707 = vshrl.u32 %v1706, 7
      %v1708 = vsub.s32 %v1705, %v1707
      %v1709 = vrot.slane %v1681, %v1708
      %v1710 = vcombine.high %v1688, %v1688
      %v1711 = vcombine.high %v1695, %v1695
      %v1712 = vcombine.high %v1702, %v1702
      %v1713 = vcombine.high %v1709, %v1709
      %v1714 = vcombine.high %v1662, %v1662
      %v1716 = vunpack.c.l.s4 1966171168
      %v1717 = vunpack.c.0.s8 %v1716
      %v1718 = vlaneseq
      %v1719 = vshrl.u32 %v1718, 7
      %v1720 = vsub.s32 %v1717, %v1719
      %v1721 = vrot.slane %v1662, %v1720
      %v1723 = vunpack.c.l.s4 1966171168
      %v1724 = vunpack.c.0.s8 %v1723
      %v1725 = vlaneseq
      %v1726 = vshrl.u32 %v1725, 7
      %v1727 = vsub.s32 %v1724, %v1726
      %v1728 = vrot.slane %v1714, %v1727
      %v1729 = vcombine.high %v1721, %v1721
      %v1730 = vcombine.high %v1728, %v1728
      %v1732 = vunpack.c.l.s4 1966171168
      %v1733 = vunpack.c.0.s8 %v1732
      %v1734 = vlaneseq
      %v1735 = vshrl.u32 %v1734, 7
      %v1736 = vsub.s32 %v1733, %v1735
      %v1737 = vrot.slane %v1721, %v1736
      %v1739 = vunpack.c.l.s4 1966171168
      %v1740 = vunpack.c.0.s8 %v1739
      %v1741 = vlaneseq
      %v1742 = vshrl.u32 %v1741, 7
      %v1743 = vsub.s32 %v1740, %v1742
      %v1744 = vrot.slane %v1728, %v1743
      %v1746 = vunpack.c.l.s4 1966171168
      %v1747 = vunpack.c.0.s8 %v1746
      %v1748 = vlaneseq
      %v1749 = vshrl.u32 %v1748, 7
      %v1750 = vsub.s32 %v1747, %v1749
      %v1751 = vrot.slane %v1729, %v1750
      %v1753 = vunpack.c.l.s4 1966171168
      %v1754 = vunpack.c.0.s8 %v1753
      %v1755 = vlaneseq
      %v1756 = vshrl.u32 %v1755, 7
      %v1757 = vsub.s32 %v1754, %v1756
      %v1758 = vrot.slane %v1730, %v1757
      %v1759 = vcombine.high %v1737, %v1737
      %v1760 = vcombine.high %v1744, %v1744
      %v1761 = vcombine.high %v1751, %v1751
      %v1762 = vcombine.high %v1758, %v1758
      %v1763 = vlaneseq
      %v1764 = vshrl.u32 %v1763, 7
      %v1765 = vsub.s32 0, %v1764
      %v1766 = vrot.slane %v1688, %v1765
      %v1767 = vlaneseq
      %v1768 = vshrl.u32 %v1767, 7
      %v1769 = vsub.s32 0, %v1768
      %v1770 = vrot.slane %v1702, %v1769
      %v1771 = vlaneseq
      %v1772 = vshrl.u32 %v1771, 7
      %v1773 = vsub.s32 0, %v1772
      %v1774 = vrot.slane %v1710, %v1773
      %v1775 = vlaneseq
      %v1776 = vshrl.u32 %v1775, 7
      %v1777 = vsub.s32 0, %v1776
      %v1778 = vrot.slane %v1712, %v1777
      %v1779 = vlaneseq
      %v1780 = vshrl.u32 %v1779, 7
      %v1781 = vsub.s32 0, %v1780
      %v1782 = vrot.slane %v1695, %v1781
      %v1783 = vlaneseq
      %v1784 = vshrl.u32 %v1783, 7
      %v1785 = vsub.s32 0, %v1784
      %v1786 = vrot.slane %v1709, %v1785
      %v1787 = vlaneseq
      %v1788 = vshrl.u32 %v1787, 7
      %v1789 = vsub.s32 0, %v1788
      %v1790 = vrot.slane %v1711, %v1789
      %v1791 = vlaneseq
      %v1792 = vshrl.u32 %v1791, 7
      %v1793 = vsub.s32 0, %v1792
      %v1794 = vrot.slane %v1713, %v1793
      %v1795 = vlaneseq
      %v1796 = vshrl.u32 %v1795, 7
      %v1797 = vsub.s32 0, %v1796
      %v1798 = vrot.slane %v1737, %v1797
      %v1799 = vlaneseq
      %v1800 = vshrl.u32 %v1799, 7
      %v1801 = vsub.s32 0, %v1800
      %v1802 = vrot.slane %v1751, %v1801
      %v1803 = vlaneseq
      %v1804 = vshrl.u32 %v1803, 7
      %v1805 = vsub.s32 0, %v1804
      %v1806 = vrot.slane %v1759, %v1805
      %v1807 = vlaneseq
      %v1808 = vshrl.u32 %v1807, 7
      %v1809 = vsub.s32 0, %v1808
      %v1810 = vrot.slane %v1761, %v1809
      %v1811 = vlaneseq
      %v1812 = vshrl.u32 %v1811, 7
      %v1813 = vsub.s32 0, %v1812
      %v1814 = vrot.slane %v1744, %v1813
      %v1815 = vlaneseq
      %v1816 = vshrl.u32 %v1815, 7
      %v1817 = vsub.s32 0, %v1816
      %v1818 = vrot.slane %v1758, %v1817
      %v1819 = vlaneseq
      %v1820 = vshrl.u32 %v1819, 7
      %v1821 = vsub.s32 0, %v1820
      %v1822 = vrot.slane %v1760, %v1821
      %v1823 = vlaneseq
      %v1824 = vshrl.u32 %v1823, 7
      %v1825 = vsub.s32 0, %v1824
      %v1826 = vrot.slane %v1762, %v1825
      %1827 = vrot.lane.b32.xlu0 %v1766, 120
      %v1828 = vpop.permute.xlu0 %1827
      %1829 = vrot.lane.b32.xlu0 %v1770, 120
      %v1830 = vpop.permute.xlu0 %1829
      %1831 = vrot.lane.b32.xlu0 %v1774, 120
      %v1832 = vpop.permute.xlu0 %1831
      %1833 = vrot.lane.b32.xlu0 %v1778, 120
      %v1834 = vpop.permute.xlu0 %1833
      %1835 = vrot.lane.b32.xlu0 %v1782, 120
      %v1836 = vpop.permute.xlu0 %1835
      %1837 = vrot.lane.b32.xlu0 %v1786, 120
      %v1838 = vpop.permute.xlu0 %1837
      %1839 = vrot.lane.b32.xlu0 %v1790, 120
      %v1840 = vpop.permute.xlu0 %1839
      %1841 = vrot.lane.b32.xlu0 %v1794, 120
      %v1842 = vpop.permute.xlu0 %1841
      %1843 = vrot.lane.b32.xlu0 %v1798, 120
      %v1844 = vpop.permute.xlu0 %1843
      %1845 = vrot.lane.b32.xlu0 %v1802, 120
      %v1846 = vpop.permute.xlu0 %1845
      %1847 = vrot.lane.b32.xlu0 %v1806, 120
      %v1848 = vpop.permute.xlu0 %1847
      %1849 = vrot.lane.b32.xlu0 %v1810, 120
      %v1850 = vpop.permute.xlu0 %1849
      %1851 = vrot.lane.b32.xlu0 %v1814, 120
      %v1852 = vpop.permute.xlu0 %1851
      %1853 = vrot.lane.b32.xlu0 %v1818, 120
      %v1854 = vpop.permute.xlu0 %1853
      %1855 = vrot.lane.b32.xlu0 %v1822, 120
      %v1856 = vpop.permute.xlu0 %1855
      %1857 = vrot.lane.b32.xlu0 %v1826, 120
      %v1858 = vpop.permute.xlu0 %1857
      %1875 = vst.msk [vmem:[%s614 + $0x7] sm:$0x1] %vm306, %v1828
      %1876 = vst.msk [vmem:[%s614 + $0x1f] sm:$0x1] %vm306, %v1830
      %1877 = vst.msk [vmem:[%s614 + $0x37] sm:$0x1] %vm306, %v1832
      %1878 = vst.msk [vmem:[%s614 + $0x4f] sm:$0x1] %vm306, %v1834
      %1879 = vst.msk [vmem:[%s614 + $0x67] sm:$0x1] %vm306, %v1836
      %1880 = vst.msk [vmem:[%s614 + $0x7f] sm:$0x1] %vm306, %v1838
      %1881 = vst.msk [vmem:[%s614 + $0x97] sm:$0x1] %vm306, %v1840
      %1882 = vst.msk [vmem:[%s614 + $0xaf] sm:$0x1] %vm306, %v1842
      %1883 = vst.msk [vmem:[%s614 + $0xc7] sm:$0x1] %vm306, %v1844
      %1884 = vst.msk [vmem:[%s614 + $0xdf] sm:$0x1] %vm306, %v1846
      %1885 = vst.msk [vmem:[%s614 + $0xf7] sm:$0x1] %vm306, %v1848
      %1886 = vst.msk [vmem:[%s614 + $0x10f] sm:$0x1] %vm306, %v1850
      %1887 = vst.msk [vmem:[%s614 + $0x127] sm:$0x1] %vm306, %v1852
      %1888 = vst.msk [vmem:[%s614 + $0x13f] sm:$0x1] %vm306, %v1854
      %1889 = vst.msk [vmem:[%s614 + $0x157] sm:$0x1] %vm306, %v1856
      %1890 = vst.msk [vmem:[%s614 + $0x16f] sm:$0x1] %vm306, %v1858
      %v1891 = vmul.f32 %v480, 0.73333335
      %v1892 = vmul.f32 %v483, 0.73333335
      %v1893 = vmul.f32 %v480, 0.26666668
      %v1894 = vmul.f32 %v483, 0.26666668
      %1897 = vrot.lane.b32.xlu0 %v1893, 124
      %v1898 = vpop.permute.xlu0 %1897
      %1899 = vrot.lane.b32.xlu0 %v1894, 124
      %v1900 = vpop.permute.xlu0 %1899
      %v1903 = vadd.f32 %v1891, %v1898
      %v1904 = vadd.f32 %v1892, %v1900
      %v1907 = vcombine.high %v1903, %v1903
      %v1909 = vunpack.c.l.s4 1966171168
      %v1910 = vunpack.c.0.s8 %v1909
      %v1911 = vlaneseq
      %v1912 = vshrl.u32 %v1911, 7
      %v1913 = vsub.s32 %v1910, %v1912
      %v1914 = vrot.slane %v1903, %v1913
      %v1916 = vunpack.c.l.s4 1966171168
      %v1917 = vunpack.c.0.s8 %v1916
      %v1918 = vlaneseq
      %v1919 = vshrl.u32 %v1918, 7
      %v1920 = vsub.s32 %v1917, %v1919
      %v1921 = vrot.slane %v1907, %v1920
      %v1922 = vcombine.high %v1914, %v1914
      %v1923 = vcombine.high %v1921, %v1921
      %v1925 = vunpack.c.l.s4 1966171168
      %v1926 = vunpack.c.0.s8 %v1925
      %v1927 = vlaneseq
      %v1928 = vshrl.u32 %v1927, 7
      %v1929 = vsub.s32 %v1926, %v1928
      %v1930 = vrot.slane %v1914, %v1929
      %v1932 = vunpack.c.l.s4 1966171168
      %v1933 = vunpack.c.0.s8 %v1932
      %v1934 = vlaneseq
      %v1935 = vshrl.u32 %v1934, 7
      %v1936 = vsub.s32 %v1933, %v1935
      %v1937 = vrot.slane %v1921, %v1936
      %v1939 = vunpack.c.l.s4 1966171168
      %v1940 = vunpack.c.0.s8 %v1939
      %v1941 = vlaneseq
      %v1942 = vshrl.u32 %v1941, 7
      %v1943 = vsub.s32 %v1940, %v1942
      %v1944 = vrot.slane %v1922, %v1943
      %v1946 = vunpack.c.l.s4 1966171168
      %v1947 = vunpack.c.0.s8 %v1946
      %v1948 = vlaneseq
      %v1949 = vshrl.u32 %v1948, 7
      %v1950 = vsub.s32 %v1947, %v1949
      %v1951 = vrot.slane %v1923, %v1950
      %v1952 = vcombine.high %v1930, %v1930
      %v1953 = vcombine.high %v1937, %v1937
      %v1954 = vcombine.high %v1944, %v1944
      %v1955 = vcombine.high %v1951, %v1951
      %v1956 = vcombine.high %v1904, %v1904
      %v1958 = vunpack.c.l.s4 1966171168
      %v1959 = vunpack.c.0.s8 %v1958
      %v1960 = vlaneseq
      %v1961 = vshrl.u32 %v1960, 7
      %v1962 = vsub.s32 %v1959, %v1961
      %v1963 = vrot.slane %v1904, %v1962
      %v1965 = vunpack.c.l.s4 1966171168
      %v1966 = vunpack.c.0.s8 %v1965
      %v1967 = vlaneseq
      %v1968 = vshrl.u32 %v1967, 7
      %v1969 = vsub.s32 %v1966, %v1968
      %v1970 = vrot.slane %v1956, %v1969
      %v1971 = vcombine.high %v1963, %v1963
      %v1972 = vcombine.high %v1970, %v1970
      %v1974 = vunpack.c.l.s4 1966171168
      %v1975 = vunpack.c.0.s8 %v1974
      %v1976 = vlaneseq
      %v1977 = vshrl.u32 %v1976, 7
      %v1978 = vsub.s32 %v1975, %v1977
      %v1979 = vrot.slane %v1963, %v1978
      %v1981 = vunpack.c.l.s4 1966171168
      %v1982 = vunpack.c.0.s8 %v1981
      %v1983 = vlaneseq
      %v1984 = vshrl.u32 %v1983, 7
      %v1985 = vsub.s32 %v1982, %v1984
      %v1986 = vrot.slane %v1970, %v1985
      %v1988 = vunpack.c.l.s4 1966171168
      %v1989 = vunpack.c.0.s8 %v1988
      %v1990 = vlaneseq
      %v1991 = vshrl.u32 %v1990, 7
      %v1992 = vsub.s32 %v1989, %v1991
      %v1993 = vrot.slane %v1971, %v1992
      %v1995 = vunpack.c.l.s4 1966171168
      %v1996 = vunpack.c.0.s8 %v1995
      %v1997 = vlaneseq
      %v1998 = vshrl.u32 %v1997, 7
      %v1999 = vsub.s32 %v1996, %v1998
      %v2000 = vrot.slane %v1972, %v1999
      %v2001 = vcombine.high %v1979, %v1979
      %v2002 = vcombine.high %v1986, %v1986
      %v2003 = vcombine.high %v1993, %v1993
      %v2004 = vcombine.high %v2000, %v2000
      %v2005 = vlaneseq
      %v2006 = vshrl.u32 %v2005, 7
      %v2007 = vsub.s32 0, %v2006
      %v2008 = vrot.slane %v1930, %v2007
      %v2009 = vlaneseq
      %v2010 = vshrl.u32 %v2009, 7
      %v2011 = vsub.s32 0, %v2010
      %v2012 = vrot.slane %v1944, %v2011
      %v2013 = vlaneseq
      %v2014 = vshrl.u32 %v2013, 7
      %v2015 = vsub.s32 0, %v2014
      %v2016 = vrot.slane %v1952, %v2015
      %v2017 = vlaneseq
      %v2018 = vshrl.u32 %v2017, 7
      %v2019 = vsub.s32 0, %v2018
      %v2020 = vrot.slane %v1954, %v2019
      %v2021 = vlaneseq
      %v2022 = vshrl.u32 %v2021, 7
      %v2023 = vsub.s32 0, %v2022
      %v2024 = vrot.slane %v1937, %v2023
      %v2025 = vlaneseq
      %v2026 = vshrl.u32 %v2025, 7
      %v2027 = vsub.s32 0, %v2026
      %v2028 = vrot.slane %v1951, %v2027
      %v2029 = vlaneseq
      %v2030 = vshrl.u32 %v2029, 7
      %v2031 = vsub.s32 0, %v2030
      %v2032 = vrot.slane %v1953, %v2031
      %v2033 = vlaneseq
      %v2034 = vshrl.u32 %v2033, 7
      %v2035 = vsub.s32 0, %v2034
      %v2036 = vrot.slane %v1955, %v2035
      %v2037 = vlaneseq
      %v2038 = vshrl.u32 %v2037, 7
      %v2039 = vsub.s32 0, %v2038
      %v2040 = vrot.slane %v1979, %v2039
      %v2041 = vlaneseq
      %v2042 = vshrl.u32 %v2041, 7
      %v2043 = vsub.s32 0, %v2042
      %v2044 = vrot.slane %v1993, %v2043
      %v2045 = vlaneseq
      %v2046 = vshrl.u32 %v2045, 7
      %v2047 = vsub.s32 0, %v2046
      %v2048 = vrot.slane %v2001, %v2047
      %v2049 = vlaneseq
      %v2050 = vshrl.u32 %v2049, 7
      %v2051 = vsub.s32 0, %v2050
      %v2052 = vrot.slane %v2003, %v2051
      %v2053 = vlaneseq
      %v2054 = vshrl.u32 %v2053, 7
      %v2055 = vsub.s32 0, %v2054
      %v2056 = vrot.slane %v1986, %v2055
      %v2057 = vlaneseq
      %v2058 = vshrl.u32 %v2057, 7
      %v2059 = vsub.s32 0, %v2058
      %v2060 = vrot.slane %v2000, %v2059
      %v2061 = vlaneseq
      %v2062 = vshrl.u32 %v2061, 7
      %v2063 = vsub.s32 0, %v2062
      %v2064 = vrot.slane %v2002, %v2063
      %v2065 = vlaneseq
      %v2066 = vshrl.u32 %v2065, 7
      %v2067 = vsub.s32 0, %v2066
      %v2068 = vrot.slane %v2004, %v2067
      %2069 = vrot.lane.b32.xlu0 %v2008, 116
      %v2070 = vpop.permute.xlu0 %2069
      %2071 = vrot.lane.b32.xlu0 %v2012, 116
      %v2072 = vpop.permute.xlu0 %2071
      %2073 = vrot.lane.b32.xlu0 %v2016, 116
      %v2074 = vpop.permute.xlu0 %2073
      %2075 = vrot.lane.b32.xlu0 %v2020, 116
      %v2076 = vpop.permute.xlu0 %2075
      %2077 = vrot.lane.b32.xlu0 %v2024, 116
      %v2078 = vpop.permute.xlu0 %2077
      %2079 = vrot.lane.b32.xlu0 %v2028, 116
      %v2080 = vpop.permute.xlu0 %2079
      %2081 = vrot.lane.b32.xlu0 %v2032, 116
      %v2082 = vpop.permute.xlu0 %2081
      %2083 = vrot.lane.b32.xlu0 %v2036, 116
      %v2084 = vpop.permute.xlu0 %2083
      %2085 = vrot.lane.b32.xlu0 %v2040, 116
      %v2086 = vpop.permute.xlu0 %2085
      %2087 = vrot.lane.b32.xlu0 %v2044, 116
      %v2088 = vpop.permute.xlu0 %2087
      %2089 = vrot.lane.b32.xlu0 %v2048, 116
      %v2090 = vpop.permute.xlu0 %2089
      %2091 = vrot.lane.b32.xlu0 %v2052, 116
      %v2092 = vpop.permute.xlu0 %2091
      %2093 = vrot.lane.b32.xlu0 %v2056, 116
      %v2094 = vpop.permute.xlu0 %2093
      %2095 = vrot.lane.b32.xlu0 %v2060, 116
      %v2096 = vpop.permute.xlu0 %2095
      %2097 = vrot.lane.b32.xlu0 %v2064, 116
      %v2098 = vpop.permute.xlu0 %2097
      %2099 = vrot.lane.b32.xlu0 %v2068, 116
      %v2100 = vpop.permute.xlu0 %2099
      %2117 = vst.msk [vmem:[%s614 + $0x8] sm:$0x1] %vm306, %v2070
      %2118 = vst.msk [vmem:[%s614 + $0x20] sm:$0x1] %vm306, %v2072
      %2119 = vst.msk [vmem:[%s614 + $0x38] sm:$0x1] %vm306, %v2074
      %2120 = vst.msk [vmem:[%s614 + $0x50] sm:$0x1] %vm306, %v2076
      %2121 = vst.msk [vmem:[%s614 + $0x68] sm:$0x1] %vm306, %v2078
      %2122 = vst.msk [vmem:[%s614 + $0x80] sm:$0x1] %vm306, %v2080
      %2123 = vst.msk [vmem:[%s614 + $0x98] sm:$0x1] %vm306, %v2082
      %2124 = vst.msk [vmem:[%s614 + $0xb0] sm:$0x1] %vm306, %v2084
      %2125 = vst.msk [vmem:[%s614 + $0xc8] sm:$0x1] %vm306, %v2086
      %2126 = vst.msk [vmem:[%s614 + $0xe0] sm:$0x1] %vm306, %v2088
      %2127 = vst.msk [vmem:[%s614 + $0xf8] sm:$0x1] %vm306, %v2090
      %2128 = vst.msk [vmem:[%s614 + $0x110] sm:$0x1] %vm306, %v2092
      %2129 = vst.msk [vmem:[%s614 + $0x128] sm:$0x1] %vm306, %v2094
      %2130 = vst.msk [vmem:[%s614 + $0x140] sm:$0x1] %vm306, %v2096
      %2131 = vst.msk [vmem:[%s614 + $0x158] sm:$0x1] %vm306, %v2098
      %2132 = vst.msk [vmem:[%s614 + $0x170] sm:$0x1] %vm306, %v2100
      %2135 = vrot.lane.b32.xlu0 %v1891, 124
      %v2136 = vpop.permute.xlu0 %2135
      %2137 = vrot.lane.b32.xlu0 %v1892, 124
      %v2138 = vpop.permute.xlu0 %2137
      %v2141 = vadd.f32 %v1893, %v2136
      %v2142 = vadd.f32 %v1894, %v2138
      %v2145 = vcombine.high %v2141, %v2141
      %v2147 = vunpack.c.l.s4 1966171168
      %v2148 = vunpack.c.0.s8 %v2147
      %v2149 = vlaneseq
      %v2150 = vshrl.u32 %v2149, 7
      %v2151 = vsub.s32 %v2148, %v2150
      %v2152 = vrot.slane %v2141, %v2151
      %v2154 = vunpack.c.l.s4 1966171168
      %v2155 = vunpack.c.0.s8 %v2154
      %v2156 = vlaneseq
      %v2157 = vshrl.u32 %v2156, 7
      %v2158 = vsub.s32 %v2155, %v2157
      %v2159 = vrot.slane %v2145, %v2158
      %v2160 = vcombine.high %v2152, %v2152
      %v2161 = vcombine.high %v2159, %v2159
      %v2163 = vunpack.c.l.s4 1966171168
      %v2164 = vunpack.c.0.s8 %v2163
      %v2165 = vlaneseq
      %v2166 = vshrl.u32 %v2165, 7
      %v2167 = vsub.s32 %v2164, %v2166
      %v2168 = vrot.slane %v2152, %v2167
      %v2170 = vunpack.c.l.s4 1966171168
      %v2171 = vunpack.c.0.s8 %v2170
      %v2172 = vlaneseq
      %v2173 = vshrl.u32 %v2172, 7
      %v2174 = vsub.s32 %v2171, %v2173
      %v2175 = vrot.slane %v2159, %v2174
      %v2177 = vunpack.c.l.s4 1966171168
      %v2178 = vunpack.c.0.s8 %v2177
      %v2179 = vlaneseq
      %v2180 = vshrl.u32 %v2179, 7
      %v2181 = vsub.s32 %v2178, %v2180
      %v2182 = vrot.slane %v2160, %v2181
      %v2184 = vunpack.c.l.s4 1966171168
      %v2185 = vunpack.c.0.s8 %v2184
      %v2186 = vlaneseq
      %v2187 = vshrl.u32 %v2186, 7
      %v2188 = vsub.s32 %v2185, %v2187
      %v2189 = vrot.slane %v2161, %v2188
      %v2190 = vcombine.high %v2168, %v2168
      %v2191 = vcombine.high %v2175, %v2175
      %v2192 = vcombine.high %v2182, %v2182
      %v2193 = vcombine.high %v2189, %v2189
      %v2194 = vcombine.high %v2142, %v2142
      %v2196 = vunpack.c.l.s4 1966171168
      %v2197 = vunpack.c.0.s8 %v2196
      %v2198 = vlaneseq
      %v2199 = vshrl.u32 %v2198, 7
      %v2200 = vsub.s32 %v2197, %v2199
      %v2201 = vrot.slane %v2142, %v2200
      %v2203 = vunpack.c.l.s4 1966171168
      %v2204 = vunpack.c.0.s8 %v2203
      %v2205 = vlaneseq
      %v2206 = vshrl.u32 %v2205, 7
      %v2207 = vsub.s32 %v2204, %v2206
      %v2208 = vrot.slane %v2194, %v2207
      %v2209 = vcombine.high %v2201, %v2201
      %v2210 = vcombine.high %v2208, %v2208
      %v2212 = vunpack.c.l.s4 1966171168
      %v2213 = vunpack.c.0.s8 %v2212
      %v2214 = vlaneseq
      %v2215 = vshrl.u32 %v2214, 7
      %v2216 = vsub.s32 %v2213, %v2215
      %v2217 = vrot.slane %v2201, %v2216
      %v2219 = vunpack.c.l.s4 1966171168
      %v2220 = vunpack.c.0.s8 %v2219
      %v2221 = vlaneseq
      %v2222 = vshrl.u32 %v2221, 7
      %v2223 = vsub.s32 %v2220, %v2222
      %v2224 = vrot.slane %v2208, %v2223
      %v2226 = vunpack.c.l.s4 1966171168
      %v2227 = vunpack.c.0.s8 %v2226
      %v2228 = vlaneseq
      %v2229 = vshrl.u32 %v2228, 7
      %v2230 = vsub.s32 %v2227, %v2229
      %v2231 = vrot.slane %v2209, %v2230
      %v2233 = vunpack.c.l.s4 1966171168
      %v2234 = vunpack.c.0.s8 %v2233
      %v2235 = vlaneseq
      %v2236 = vshrl.u32 %v2235, 7
      %v2237 = vsub.s32 %v2234, %v2236
      %v2238 = vrot.slane %v2210, %v2237
      %v2239 = vcombine.high %v2217, %v2217
      %v2240 = vcombine.high %v2224, %v2224
      %v2241 = vcombine.high %v2231, %v2231
      %v2242 = vcombine.high %v2238, %v2238
      %v2243 = vlaneseq
      %v2244 = vshrl.u32 %v2243, 7
      %v2245 = vsub.s32 0, %v2244
      %v2246 = vrot.slane %v2168, %v2245
      %v2247 = vlaneseq
      %v2248 = vshrl.u32 %v2247, 7
      %v2249 = vsub.s32 0, %v2248
      %v2250 = vrot.slane %v2182, %v2249
      %v2251 = vlaneseq
      %v2252 = vshrl.u32 %v2251, 7
      %v2253 = vsub.s32 0, %v2252
      %v2254 = vrot.slane %v2190, %v2253
      %v2255 = vlaneseq
      %v2256 = vshrl.u32 %v2255, 7
      %v2257 = vsub.s32 0, %v2256
      %v2258 = vrot.slane %v2192, %v2257
      %v2259 = vlaneseq
      %v2260 = vshrl.u32 %v2259, 7
      %v2261 = vsub.s32 0, %v2260
      %v2262 = vrot.slane %v2175, %v2261
      %v2263 = vlaneseq
      %v2264 = vshrl.u32 %v2263, 7
      %v2265 = vsub.s32 0, %v2264
      %v2266 = vrot.slane %v2189, %v2265
      %v2267 = vlaneseq
      %v2268 = vshrl.u32 %v2267, 7
      %v2269 = vsub.s32 0, %v2268
      %v2270 = vrot.slane %v2191, %v2269
      %v2271 = vlaneseq
      %v2272 = vshrl.u32 %v2271, 7
      %v2273 = vsub.s32 0, %v2272
      %v2274 = vrot.slane %v2193, %v2273
      %v2275 = vlaneseq
      %v2276 = vshrl.u32 %v2275, 7
      %v2277 = vsub.s32 0, %v2276
      %v2278 = vrot.slane %v2217, %v2277
      %v2279 = vlaneseq
      %v2280 = vshrl.u32 %v2279, 7
      %v2281 = vsub.s32 0, %v2280
      %v2282 = vrot.slane %v2231, %v2281
      %v2283 = vlaneseq
      %v2284 = vshrl.u32 %v2283, 7
      %v2285 = vsub.s32 0, %v2284
      %v2286 = vrot.slane %v2239, %v2285
      %v2287 = vlaneseq
      %v2288 = vshrl.u32 %v2287, 7
      %v2289 = vsub.s32 0, %v2288
      %v2290 = vrot.slane %v2241, %v2289
      %v2291 = vlaneseq
      %v2292 = vshrl.u32 %v2291, 7
      %v2293 = vsub.s32 0, %v2292
      %v2294 = vrot.slane %v2224, %v2293
      %v2295 = vlaneseq
      %v2296 = vshrl.u32 %v2295, 7
      %v2297 = vsub.s32 0, %v2296
      %v2298 = vrot.slane %v2238, %v2297
      %v2299 = vlaneseq
      %v2300 = vshrl.u32 %v2299, 7
      %v2301 = vsub.s32 0, %v2300
      %v2302 = vrot.slane %v2240, %v2301
      %v2303 = vlaneseq
      %v2304 = vshrl.u32 %v2303, 7
      %v2305 = vsub.s32 0, %v2304
      %v2306 = vrot.slane %v2242, %v2305
      %2307 = vrot.lane.b32.xlu0 %v2246, 116
      %v2308 = vpop.permute.xlu0 %2307
      %2309 = vrot.lane.b32.xlu0 %v2250, 116
      %v2310 = vpop.permute.xlu0 %2309
      %2311 = vrot.lane.b32.xlu0 %v2254, 116
      %v2312 = vpop.permute.xlu0 %2311
      %2313 = vrot.lane.b32.xlu0 %v2258, 116
      %v2314 = vpop.permute.xlu0 %2313
      %2315 = vrot.lane.b32.xlu0 %v2262, 116
      %v2316 = vpop.permute.xlu0 %2315
      %2317 = vrot.lane.b32.xlu0 %v2266, 116
      %v2318 = vpop.permute.xlu0 %2317
      %2319 = vrot.lane.b32.xlu0 %v2270, 116
      %v2320 = vpop.permute.xlu0 %2319
      %2321 = vrot.lane.b32.xlu0 %v2274, 116
      %v2322 = vpop.permute.xlu0 %2321
      %2323 = vrot.lane.b32.xlu0 %v2278, 116
      %v2324 = vpop.permute.xlu0 %2323
      %2325 = vrot.lane.b32.xlu0 %v2282, 116
      %v2326 = vpop.permute.xlu0 %2325
      %2327 = vrot.lane.b32.xlu0 %v2286, 116
      %v2328 = vpop.permute.xlu0 %2327
      %2329 = vrot.lane.b32.xlu0 %v2290, 116
      %v2330 = vpop.permute.xlu0 %2329
      %2331 = vrot.lane.b32.xlu0 %v2294, 116
      %v2332 = vpop.permute.xlu0 %2331
      %2333 = vrot.lane.b32.xlu0 %v2298, 116
      %v2334 = vpop.permute.xlu0 %2333
      %2335 = vrot.lane.b32.xlu0 %v2302, 116
      %v2336 = vpop.permute.xlu0 %2335
      %2337 = vrot.lane.b32.xlu0 %v2306, 116
      %v2338 = vpop.permute.xlu0 %2337
      %2355 = vst.msk [vmem:[%s614 + $0x9] sm:$0x1] %vm306, %v2308
      %2356 = vst.msk [vmem:[%s614 + $0x21] sm:$0x1] %vm306, %v2310
      %2357 = vst.msk [vmem:[%s614 + $0x39] sm:$0x1] %vm306, %v2312
      %2358 = vst.msk [vmem:[%s614 + $0x51] sm:$0x1] %vm306, %v2314
      %2359 = vst.msk [vmem:[%s614 + $0x69] sm:$0x1] %vm306, %v2316
      %2360 = vst.msk [vmem:[%s614 + $0x81] sm:$0x1] %vm306, %v2318
      %2361 = vst.msk [vmem:[%s614 + $0x99] sm:$0x1] %vm306, %v2320
      %2362 = vst.msk [vmem:[%s614 + $0xb1] sm:$0x1] %vm306, %v2322
      %2363 = vst.msk [vmem:[%s614 + $0xc9] sm:$0x1] %vm306, %v2324
      %2364 = vst.msk [vmem:[%s614 + $0xe1] sm:$0x1] %vm306, %v2326
      %2365 = vst.msk [vmem:[%s614 + $0xf9] sm:$0x1] %vm306, %v2328
      %2366 = vst.msk [vmem:[%s614 + $0x111] sm:$0x1] %vm306, %v2330
      %2367 = vst.msk [vmem:[%s614 + $0x129] sm:$0x1] %vm306, %v2332
      %2368 = vst.msk [vmem:[%s614 + $0x141] sm:$0x1] %vm306, %v2334
      %2369 = vst.msk [vmem:[%s614 + $0x159] sm:$0x1] %vm306, %v2336
      %2370 = vst.msk [vmem:[%s614 + $0x171] sm:$0x1] %vm306, %v2338
      %2373 = vrot.lane.b32.xlu0 %v1649, 124
      %v2374 = vpop.permute.xlu0 %2373
      %2375 = vrot.lane.b32.xlu0 %v1650, 124
      %v2376 = vpop.permute.xlu0 %2375
      %v2379 = vadd.f32 %v1651, %v2374
      %v2380 = vadd.f32 %v1652, %v2376
      %v2383 = vcombine.high %v2379, %v2379
      %v2385 = vunpack.c.l.s4 1966171168
      %v2386 = vunpack.c.0.s8 %v2385
      %v2387 = vlaneseq
      %v2388 = vshrl.u32 %v2387, 7
      %v2389 = vsub.s32 %v2386, %v2388
      %v2390 = vrot.slane %v2379, %v2389
      %v2392 = vunpack.c.l.s4 1966171168
      %v2393 = vunpack.c.0.s8 %v2392
      %v2394 = vlaneseq
      %v2395 = vshrl.u32 %v2394, 7
      %v2396 = vsub.s32 %v2393, %v2395
      %v2397 = vrot.slane %v2383, %v2396
      %v2398 = vcombine.high %v2390, %v2390
      %v2399 = vcombine.high %v2397, %v2397
      %v2401 = vunpack.c.l.s4 1966171168
      %v2402 = vunpack.c.0.s8 %v2401
      %v2403 = vlaneseq
      %v2404 = vshrl.u32 %v2403, 7
      %v2405 = vsub.s32 %v2402, %v2404
      %v2406 = vrot.slane %v2390, %v2405
      %v2408 = vunpack.c.l.s4 1966171168
      %v2409 = vunpack.c.0.s8 %v2408
      %v2410 = vlaneseq
      %v2411 = vshrl.u32 %v2410, 7
      %v2412 = vsub.s32 %v2409, %v2411
      %v2413 = vrot.slane %v2397, %v2412
      %v2415 = vunpack.c.l.s4 1966171168
      %v2416 = vunpack.c.0.s8 %v2415
      %v2417 = vlaneseq
      %v2418 = vshrl.u32 %v2417, 7
      %v2419 = vsub.s32 %v2416, %v2418
      %v2420 = vrot.slane %v2398, %v2419
      %v2422 = vunpack.c.l.s4 1966171168
      %v2423 = vunpack.c.0.s8 %v2422
      %v2424 = vlaneseq
      %v2425 = vshrl.u32 %v2424, 7
      %v2426 = vsub.s32 %v2423, %v2425
      %v2427 = vrot.slane %v2399, %v2426
      %v2428 = vcombine.high %v2406, %v2406
      %v2429 = vcombine.high %v2413, %v2413
      %v2430 = vcombine.high %v2420, %v2420
      %v2431 = vcombine.high %v2427, %v2427
      %v2432 = vcombine.high %v2380, %v2380
      %v2434 = vunpack.c.l.s4 1966171168
      %v2435 = vunpack.c.0.s8 %v2434
      %v2436 = vlaneseq
      %v2437 = vshrl.u32 %v2436, 7
      %v2438 = vsub.s32 %v2435, %v2437
      %v2439 = vrot.slane %v2380, %v2438
      %v2441 = vunpack.c.l.s4 1966171168
      %v2442 = vunpack.c.0.s8 %v2441
      %v2443 = vlaneseq
      %v2444 = vshrl.u32 %v2443, 7
      %v2445 = vsub.s32 %v2442, %v2444
      %v2446 = vrot.slane %v2432, %v2445
      %v2447 = vcombine.high %v2439, %v2439
      %v2448 = vcombine.high %v2446, %v2446
      %v2450 = vunpack.c.l.s4 1966171168
      %v2451 = vunpack.c.0.s8 %v2450
      %v2452 = vlaneseq
      %v2453 = vshrl.u32 %v2452, 7
      %v2454 = vsub.s32 %v2451, %v2453
      %v2455 = vrot.slane %v2439, %v2454
      %v2457 = vunpack.c.l.s4 1966171168
      %v2458 = vunpack.c.0.s8 %v2457
      %v2459 = vlaneseq
      %v2460 = vshrl.u32 %v2459, 7
      %v2461 = vsub.s32 %v2458, %v2460
      %v2462 = vrot.slane %v2446, %v2461
      %v2464 = vunpack.c.l.s4 1966171168
      %v2465 = vunpack.c.0.s8 %v2464
      %v2466 = vlaneseq
      %v2467 = vshrl.u32 %v2466, 7
      %v2468 = vsub.s32 %v2465, %v2467
      %v2469 = vrot.slane %v2447, %v2468
      %v2471 = vunpack.c.l.s4 1966171168
      %v2472 = vunpack.c.0.s8 %v2471
      %v2473 = vlaneseq
      %v2474 = vshrl.u32 %v2473, 7
      %v2475 = vsub.s32 %v2472, %v2474
      %v2476 = vrot.slane %v2448, %v2475
      %v2477 = vcombine.high %v2455, %v2455
      %v2478 = vcombine.high %v2462, %v2462
      %v2479 = vcombine.high %v2469, %v2469
      %v2480 = vcombine.high %v2476, %v2476
      %v2481 = vlaneseq
      %v2482 = vshrl.u32 %v2481, 7
      %v2483 = vsub.s32 0, %v2482
      %v2484 = vrot.slane %v2406, %v2483
      %v2485 = vlaneseq
      %v2486 = vshrl.u32 %v2485, 7
      %v2487 = vsub.s32 0, %v2486
      %v2488 = vrot.slane %v2420, %v2487
      %v2489 = vlaneseq
      %v2490 = vshrl.u32 %v2489, 7
      %v2491 = vsub.s32 0, %v2490
      %v2492 = vrot.slane %v2428, %v2491
      %v2493 = vlaneseq
      %v2494 = vshrl.u32 %v2493, 7
      %v2495 = vsub.s32 0, %v2494
      %v2496 = vrot.slane %v2430, %v2495
      %v2497 = vlaneseq
      %v2498 = vshrl.u32 %v2497, 7
      %v2499 = vsub.s32 0, %v2498
      %v2500 = vrot.slane %v2413, %v2499
      %v2501 = vlaneseq
      %v2502 = vshrl.u32 %v2501, 7
      %v2503 = vsub.s32 0, %v2502
      %v2504 = vrot.slane %v2427, %v2503
      %v2505 = vlaneseq
      %v2506 = vshrl.u32 %v2505, 7
      %v2507 = vsub.s32 0, %v2506
      %v2508 = vrot.slane %v2429, %v2507
      %v2509 = vlaneseq
      %v2510 = vshrl.u32 %v2509, 7
      %v2511 = vsub.s32 0, %v2510
      %v2512 = vrot.slane %v2431, %v2511
      %v2513 = vlaneseq
      %v2514 = vshrl.u32 %v2513, 7
      %v2515 = vsub.s32 0, %v2514
      %v2516 = vrot.slane %v2455, %v2515
      %v2517 = vlaneseq
      %v2518 = vshrl.u32 %v2517, 7
      %v2519 = vsub.s32 0, %v2518
      %v2520 = vrot.slane %v2469, %v2519
      %v2521 = vlaneseq
      %v2522 = vshrl.u32 %v2521, 7
      %v2523 = vsub.s32 0, %v2522
      %v2524 = vrot.slane %v2477, %v2523
      %v2525 = vlaneseq
      %v2526 = vshrl.u32 %v2525, 7
      %v2527 = vsub.s32 0, %v2526
      %v2528 = vrot.slane %v2479, %v2527
      %v2529 = vlaneseq
      %v2530 = vshrl.u32 %v2529, 7
      %v2531 = vsub.s32 0, %v2530
      %v2532 = vrot.slane %v2462, %v2531
      %v2533 = vlaneseq
      %v2534 = vshrl.u32 %v2533, 7
      %v2535 = vsub.s32 0, %v2534
      %v2536 = vrot.slane %v2476, %v2535
      %v2537 = vlaneseq
      %v2538 = vshrl.u32 %v2537, 7
      %v2539 = vsub.s32 0, %v2538
      %v2540 = vrot.slane %v2478, %v2539
      %v2541 = vlaneseq
      %v2542 = vshrl.u32 %v2541, 7
      %v2543 = vsub.s32 0, %v2542
      %v2544 = vrot.slane %v2480, %v2543
      %2545 = vrot.lane.b32.xlu0 %v2484, 112
      %v2546 = vpop.permute.xlu0 %2545
      %2547 = vrot.lane.b32.xlu0 %v2488, 112
      %v2548 = vpop.permute.xlu0 %2547
      %2549 = vrot.lane.b32.xlu0 %v2492, 112
      %v2550 = vpop.permute.xlu0 %2549
      %2551 = vrot.lane.b32.xlu0 %v2496, 112
      %v2552 = vpop.permute.xlu0 %2551
      %2553 = vrot.lane.b32.xlu0 %v2500, 112
      %v2554 = vpop.permute.xlu0 %2553
      %2555 = vrot.lane.b32.xlu0 %v2504, 112
      %v2556 = vpop.permute.xlu0 %2555
      %2557 = vrot.lane.b32.xlu0 %v2508, 112
      %v2558 = vpop.permute.xlu0 %2557
      %2559 = vrot.lane.b32.xlu0 %v2512, 112
      %v2560 = vpop.permute.xlu0 %2559
      %2561 = vrot.lane.b32.xlu0 %v2516, 112
      %v2562 = vpop.permute.xlu0 %2561
      %2563 = vrot.lane.b32.xlu0 %v2520, 112
      %v2564 = vpop.permute.xlu0 %2563
      %2565 = vrot.lane.b32.xlu0 %v2524, 112
      %v2566 = vpop.permute.xlu0 %2565
      %2567 = vrot.lane.b32.xlu0 %v2528, 112
      %v2568 = vpop.permute.xlu0 %2567
      %2569 = vrot.lane.b32.xlu0 %v2532, 112
      %v2570 = vpop.permute.xlu0 %2569
      %2571 = vrot.lane.b32.xlu0 %v2536, 112
      %v2572 = vpop.permute.xlu0 %2571
      %2573 = vrot.lane.b32.xlu0 %v2540, 112
      %v2574 = vpop.permute.xlu0 %2573
      %2575 = vrot.lane.b32.xlu0 %v2544, 112
      %v2576 = vpop.permute.xlu0 %2575
      %2593 = vst.msk [vmem:[%s614 + $0xa] sm:$0x1] %vm306, %v2546
      %2594 = vst.msk [vmem:[%s614 + $0x22] sm:$0x1] %vm306, %v2548
      %2595 = vst.msk [vmem:[%s614 + $0x3a] sm:$0x1] %vm306, %v2550
      %2596 = vst.msk [vmem:[%s614 + $0x52] sm:$0x1] %vm306, %v2552
      %2597 = vst.msk [vmem:[%s614 + $0x6a] sm:$0x1] %vm306, %v2554
      %2598 = vst.msk [vmem:[%s614 + $0x82] sm:$0x1] %vm306, %v2556
      %2599 = vst.msk [vmem:[%s614 + $0x9a] sm:$0x1] %vm306, %v2558
      %2600 = vst.msk [vmem:[%s614 + $0xb2] sm:$0x1] %vm306, %v2560
      %2601 = vst.msk [vmem:[%s614 + $0xca] sm:$0x1] %vm306, %v2562
      %2602 = vst.msk [vmem:[%s614 + $0xe2] sm:$0x1] %vm306, %v2564
      %2603 = vst.msk [vmem:[%s614 + $0xfa] sm:$0x1] %vm306, %v2566
      %2604 = vst.msk [vmem:[%s614 + $0x112] sm:$0x1] %vm306, %v2568
      %2605 = vst.msk [vmem:[%s614 + $0x12a] sm:$0x1] %vm306, %v2570
      %2606 = vst.msk [vmem:[%s614 + $0x142] sm:$0x1] %vm306, %v2572
      %2607 = vst.msk [vmem:[%s614 + $0x15a] sm:$0x1] %vm306, %v2574
      %2608 = vst.msk [vmem:[%s614 + $0x172] sm:$0x1] %vm306, %v2576
      %2611 = vrot.lane.b32.xlu0 %v1407, 124
      %v2612 = vpop.permute.xlu0 %2611
      %2613 = vrot.lane.b32.xlu0 %v1408, 124
      %v2614 = vpop.permute.xlu0 %2613
      %v2617 = vadd.f32 %v1409, %v2612
      %v2618 = vadd.f32 %v1410, %v2614
      %v2621 = vcombine.high %v2617, %v2617
      %v2623 = vunpack.c.l.s4 1966171168
      %v2624 = vunpack.c.0.s8 %v2623
      %v2625 = vlaneseq
      %v2626 = vshrl.u32 %v2625, 7
      %v2627 = vsub.s32 %v2624, %v2626
      %v2628 = vrot.slane %v2617, %v2627
      %v2630 = vunpack.c.l.s4 1966171168
      %v2631 = vunpack.c.0.s8 %v2630
      %v2632 = vlaneseq
      %v2633 = vshrl.u32 %v2632, 7
      %v2634 = vsub.s32 %v2631, %v2633
      %v2635 = vrot.slane %v2621, %v2634
      %v2636 = vcombine.high %v2628, %v2628
      %v2637 = vcombine.high %v2635, %v2635
      %v2639 = vunpack.c.l.s4 1966171168
      %v2640 = vunpack.c.0.s8 %v2639
      %v2641 = vlaneseq
      %v2642 = vshrl.u32 %v2641, 7
      %v2643 = vsub.s32 %v2640, %v2642
      %v2644 = vrot.slane %v2628, %v2643
      %v2646 = vunpack.c.l.s4 1966171168
      %v2647 = vunpack.c.0.s8 %v2646
      %v2648 = vlaneseq
      %v2649 = vshrl.u32 %v2648, 7
      %v2650 = vsub.s32 %v2647, %v2649
      %v2651 = vrot.slane %v2635, %v2650
      %v2653 = vunpack.c.l.s4 1966171168
      %v2654 = vunpack.c.0.s8 %v2653
      %v2655 = vlaneseq
      %v2656 = vshrl.u32 %v2655, 7
      %v2657 = vsub.s32 %v2654, %v2656
      %v2658 = vrot.slane %v2636, %v2657
      %v2660 = vunpack.c.l.s4 1966171168
      %v2661 = vunpack.c.0.s8 %v2660
      %v2662 = vlaneseq
      %v2663 = vshrl.u32 %v2662, 7
      %v2664 = vsub.s32 %v2661, %v2663
      %v2665 = vrot.slane %v2637, %v2664
      %v2666 = vcombine.high %v2644, %v2644
      %v2667 = vcombine.high %v2651, %v2651
      %v2668 = vcombine.high %v2658, %v2658
      %v2669 = vcombine.high %v2665, %v2665
      %v2670 = vcombine.high %v2618, %v2618
      %v2672 = vunpack.c.l.s4 1966171168
      %v2673 = vunpack.c.0.s8 %v2672
      %v2674 = vlaneseq
      %v2675 = vshrl.u32 %v2674, 7
      %v2676 = vsub.s32 %v2673, %v2675
      %v2677 = vrot.slane %v2618, %v2676
      %v2679 = vunpack.c.l.s4 1966171168
      %v2680 = vunpack.c.0.s8 %v2679
      %v2681 = vlaneseq
      %v2682 = vshrl.u32 %v2681, 7
      %v2683 = vsub.s32 %v2680, %v2682
      %v2684 = vrot.slane %v2670, %v2683
      %v2685 = vcombine.high %v2677, %v2677
      %v2686 = vcombine.high %v2684, %v2684
      %v2688 = vunpack.c.l.s4 1966171168
      %v2689 = vunpack.c.0.s8 %v2688
      %v2690 = vlaneseq
      %v2691 = vshrl.u32 %v2690, 7
      %v2692 = vsub.s32 %v2689, %v2691
      %v2693 = vrot.slane %v2677, %v2692
      %v2695 = vunpack.c.l.s4 1966171168
      %v2696 = vunpack.c.0.s8 %v2695
      %v2697 = vlaneseq
      %v2698 = vshrl.u32 %v2697, 7
      %v2699 = vsub.s32 %v2696, %v2698
      %v2700 = vrot.slane %v2684, %v2699
      %v2702 = vunpack.c.l.s4 1966171168
      %v2703 = vunpack.c.0.s8 %v2702
      %v2704 = vlaneseq
      %v2705 = vshrl.u32 %v2704, 7
      %v2706 = vsub.s32 %v2703, %v2705
      %v2707 = vrot.slane %v2685, %v2706
      %v2709 = vunpack.c.l.s4 1966171168
      %v2710 = vunpack.c.0.s8 %v2709
      %v2711 = vlaneseq
      %v2712 = vshrl.u32 %v2711, 7
      %v2713 = vsub.s32 %v2710, %v2712
      %v2714 = vrot.slane %v2686, %v2713
      %v2715 = vcombine.high %v2693, %v2693
      %v2716 = vcombine.high %v2700, %v2700
      %v2717 = vcombine.high %v2707, %v2707
      %v2718 = vcombine.high %v2714, %v2714
      %v2719 = vlaneseq
      %v2720 = vshrl.u32 %v2719, 7
      %v2721 = vsub.s32 0, %v2720
      %v2722 = vrot.slane %v2644, %v2721
      %v2723 = vlaneseq
      %v2724 = vshrl.u32 %v2723, 7
      %v2725 = vsub.s32 0, %v2724
      %v2726 = vrot.slane %v2658, %v2725
      %v2727 = vlaneseq
      %v2728 = vshrl.u32 %v2727, 7
      %v2729 = vsub.s32 0, %v2728
      %v2730 = vrot.slane %v2666, %v2729
      %v2731 = vlaneseq
      %v2732 = vshrl.u32 %v2731, 7
      %v2733 = vsub.s32 0, %v2732
      %v2734 = vrot.slane %v2668, %v2733
      %v2735 = vlaneseq
      %v2736 = vshrl.u32 %v2735, 7
      %v2737 = vsub.s32 0, %v2736
      %v2738 = vrot.slane %v2651, %v2737
      %v2739 = vlaneseq
      %v2740 = vshrl.u32 %v2739, 7
      %v2741 = vsub.s32 0, %v2740
      %v2742 = vrot.slane %v2665, %v2741
      %v2743 = vlaneseq
      %v2744 = vshrl.u32 %v2743, 7
      %v2745 = vsub.s32 0, %v2744
      %v2746 = vrot.slane %v2667, %v2745
      %v2747 = vlaneseq
      %v2748 = vshrl.u32 %v2747, 7
      %v2749 = vsub.s32 0, %v2748
      %v2750 = vrot.slane %v2669, %v2749
      %v2751 = vlaneseq
      %v2752 = vshrl.u32 %v2751, 7
      %v2753 = vsub.s32 0, %v2752
      %v2754 = vrot.slane %v2693, %v2753
      %v2755 = vlaneseq
      %v2756 = vshrl.u32 %v2755, 7
      %v2757 = vsub.s32 0, %v2756
      %v2758 = vrot.slane %v2707, %v2757
      %v2759 = vlaneseq
      %v2760 = vshrl.u32 %v2759, 7
      %v2761 = vsub.s32 0, %v2760
      %v2762 = vrot.slane %v2715, %v2761
      %v2763 = vlaneseq
      %v2764 = vshrl.u32 %v2763, 7
      %v2765 = vsub.s32 0, %v2764
      %v2766 = vrot.slane %v2717, %v2765
      %v2767 = vlaneseq
      %v2768 = vshrl.u32 %v2767, 7
      %v2769 = vsub.s32 0, %v2768
      %v2770 = vrot.slane %v2700, %v2769
      %v2771 = vlaneseq
      %v2772 = vshrl.u32 %v2771, 7
      %v2773 = vsub.s32 0, %v2772
      %v2774 = vrot.slane %v2714, %v2773
      %v2775 = vlaneseq
      %v2776 = vshrl.u32 %v2775, 7
      %v2777 = vsub.s32 0, %v2776
      %v2778 = vrot.slane %v2716, %v2777
      %v2779 = vlaneseq
      %v2780 = vshrl.u32 %v2779, 7
      %v2781 = vsub.s32 0, %v2780
      %v2782 = vrot.slane %v2718, %v2781
      %2783 = vrot.lane.b32.xlu0 %v2722, 112
      %v2784 = vpop.permute.xlu0 %2783
      %2785 = vrot.lane.b32.xlu0 %v2726, 112
      %v2786 = vpop.permute.xlu0 %2785
      %2787 = vrot.lane.b32.xlu0 %v2730, 112
      %v2788 = vpop.permute.xlu0 %2787
      %2789 = vrot.lane.b32.xlu0 %v2734, 112
      %v2790 = vpop.permute.xlu0 %2789
      %2791 = vrot.lane.b32.xlu0 %v2738, 112
      %v2792 = vpop.permute.xlu0 %2791
      %2793 = vrot.lane.b32.xlu0 %v2742, 112
      %v2794 = vpop.permute.xlu0 %2793
      %2795 = vrot.lane.b32.xlu0 %v2746, 112
      %v2796 = vpop.permute.xlu0 %2795
      %2797 = vrot.lane.b32.xlu0 %v2750, 112
      %v2798 = vpop.permute.xlu0 %2797
      %2799 = vrot.lane.b32.xlu0 %v2754, 112
      %v2800 = vpop.permute.xlu0 %2799
      %2801 = vrot.lane.b32.xlu0 %v2758, 112
      %v2802 = vpop.permute.xlu0 %2801
      %2803 = vrot.lane.b32.xlu0 %v2762, 112
      %v2804 = vpop.permute.xlu0 %2803
      %2805 = vrot.lane.b32.xlu0 %v2766, 112
      %v2806 = vpop.permute.xlu0 %2805
      %2807 = vrot.lane.b32.xlu0 %v2770, 112
      %v2808 = vpop.permute.xlu0 %2807
      %2809 = vrot.lane.b32.xlu0 %v2774, 112
      %v2810 = vpop.permute.xlu0 %2809
      %2811 = vrot.lane.b32.xlu0 %v2778, 112
      %v2812 = vpop.permute.xlu0 %2811
      %2813 = vrot.lane.b32.xlu0 %v2782, 112
      %v2814 = vpop.permute.xlu0 %2813
      %2831 = vst.msk [vmem:[%s614 + $0xb] sm:$0x1] %vm306, %v2784
      %2832 = vst.msk [vmem:[%s614 + $0x23] sm:$0x1] %vm306, %v2786
      %2833 = vst.msk [vmem:[%s614 + $0x3b] sm:$0x1] %vm306, %v2788
      %2834 = vst.msk [vmem:[%s614 + $0x53] sm:$0x1] %vm306, %v2790
      %2835 = vst.msk [vmem:[%s614 + $0x6b] sm:$0x1] %vm306, %v2792
      %2836 = vst.msk [vmem:[%s614 + $0x83] sm:$0x1] %vm306, %v2794
      %2837 = vst.msk [vmem:[%s614 + $0x9b] sm:$0x1] %vm306, %v2796
      %2838 = vst.msk [vmem:[%s614 + $0xb3] sm:$0x1] %vm306, %v2798
      %2839 = vst.msk [vmem:[%s614 + $0xcb] sm:$0x1] %vm306, %v2800
      %2840 = vst.msk [vmem:[%s614 + $0xe3] sm:$0x1] %vm306, %v2802
      %2841 = vst.msk [vmem:[%s614 + $0xfb] sm:$0x1] %vm306, %v2804
      %2842 = vst.msk [vmem:[%s614 + $0x113] sm:$0x1] %vm306, %v2806
      %2843 = vst.msk [vmem:[%s614 + $0x12b] sm:$0x1] %vm306, %v2808
      %2844 = vst.msk [vmem:[%s614 + $0x143] sm:$0x1] %vm306, %v2810
      %2845 = vst.msk [vmem:[%s614 + $0x15b] sm:$0x1] %vm306, %v2812
      %2846 = vst.msk [vmem:[%s614 + $0x173] sm:$0x1] %vm306, %v2814
      %2849 = vrot.lane.b32.xlu0 %v1165, 124
      %v2850 = vpop.permute.xlu0 %2849
      %2851 = vrot.lane.b32.xlu0 %v1166, 124
      %v2852 = vpop.permute.xlu0 %2851
      %v2855 = vadd.f32 %v1167, %v2850
      %v2856 = vadd.f32 %v1168, %v2852
      %v2859 = vcombine.high %v2855, %v2855
      %v2861 = vunpack.c.l.s4 1966171168
      %v2862 = vunpack.c.0.s8 %v2861
      %v2863 = vlaneseq
      %v2864 = vshrl.u32 %v2863, 7
      %v2865 = vsub.s32 %v2862, %v2864
      %v2866 = vrot.slane %v2855, %v2865
      %v2868 = vunpack.c.l.s4 1966171168
      %v2869 = vunpack.c.0.s8 %v2868
      %v2870 = vlaneseq
      %v2871 = vshrl.u32 %v2870, 7
      %v2872 = vsub.s32 %v2869, %v2871
      %v2873 = vrot.slane %v2859, %v2872
      %v2874 = vcombine.high %v2866, %v2866
      %v2875 = vcombine.high %v2873, %v2873
      %v2877 = vunpack.c.l.s4 1966171168
      %v2878 = vunpack.c.0.s8 %v2877
      %v2879 = vlaneseq
      %v2880 = vshrl.u32 %v2879, 7
      %v2881 = vsub.s32 %v2878, %v2880
      %v2882 = vrot.slane %v2866, %v2881
      %v2884 = vunpack.c.l.s4 1966171168
      %v2885 = vunpack.c.0.s8 %v2884
      %v2886 = vlaneseq
      %v2887 = vshrl.u32 %v2886, 7
      %v2888 = vsub.s32 %v2885, %v2887
      %v2889 = vrot.slane %v2873, %v2888
      %v2891 = vunpack.c.l.s4 1966171168
      %v2892 = vunpack.c.0.s8 %v2891
      %v2893 = vlaneseq
      %v2894 = vshrl.u32 %v2893, 7
      %v2895 = vsub.s32 %v2892, %v2894
      %v2896 = vrot.slane %v2874, %v2895
      %v2898 = vunpack.c.l.s4 1966171168
      %v2899 = vunpack.c.0.s8 %v2898
      %v2900 = vlaneseq
      %v2901 = vshrl.u32 %v2900, 7
      %v2902 = vsub.s32 %v2899, %v2901
      %v2903 = vrot.slane %v2875, %v2902
      %v2904 = vcombine.high %v2882, %v2882
      %v2905 = vcombine.high %v2889, %v2889
      %v2906 = vcombine.high %v2896, %v2896
      %v2907 = vcombine.high %v2903, %v2903
      %v2908 = vcombine.high %v2856, %v2856
      %v2910 = vunpack.c.l.s4 1966171168
      %v2911 = vunpack.c.0.s8 %v2910
      %v2912 = vlaneseq
      %v2913 = vshrl.u32 %v2912, 7
      %v2914 = vsub.s32 %v2911, %v2913
      %v2915 = vrot.slane %v2856, %v2914
      %v2917 = vunpack.c.l.s4 1966171168
      %v2918 = vunpack.c.0.s8 %v2917
      %v2919 = vlaneseq
      %v2920 = vshrl.u32 %v2919, 7
      %v2921 = vsub.s32 %v2918, %v2920
      %v2922 = vrot.slane %v2908, %v2921
      %v2923 = vcombine.high %v2915, %v2915
      %v2924 = vcombine.high %v2922, %v2922
      %v2926 = vunpack.c.l.s4 1966171168
      %v2927 = vunpack.c.0.s8 %v2926
      %v2928 = vlaneseq
      %v2929 = vshrl.u32 %v2928, 7
      %v2930 = vsub.s32 %v2927, %v2929
      %v2931 = vrot.slane %v2915, %v2930
      %v2933 = vunpack.c.l.s4 1966171168
      %v2934 = vunpack.c.0.s8 %v2933
      %v2935 = vlaneseq
      %v2936 = vshrl.u32 %v2935, 7
      %v2937 = vsub.s32 %v2934, %v2936
      %v2938 = vrot.slane %v2922, %v2937
      %v2940 = vunpack.c.l.s4 1966171168
      %v2941 = vunpack.c.0.s8 %v2940
      %v2942 = vlaneseq
      %v2943 = vshrl.u32 %v2942, 7
      %v2944 = vsub.s32 %v2941, %v2943
      %v2945 = vrot.slane %v2923, %v2944
      %v2947 = vunpack.c.l.s4 1966171168
      %v2948 = vunpack.c.0.s8 %v2947
      %v2949 = vlaneseq
      %v2950 = vshrl.u32 %v2949, 7
      %v2951 = vsub.s32 %v2948, %v2950
      %v2952 = vrot.slane %v2924, %v2951
      %v2953 = vcombine.high %v2931, %v2931
      %v2954 = vcombine.high %v2938, %v2938
      %v2955 = vcombine.high %v2945, %v2945
      %v2956 = vcombine.high %v2952, %v2952
      %v2957 = vlaneseq
      %v2958 = vshrl.u32 %v2957, 7
      %v2959 = vsub.s32 0, %v2958
      %v2960 = vrot.slane %v2882, %v2959
      %v2961 = vlaneseq
      %v2962 = vshrl.u32 %v2961, 7
      %v2963 = vsub.s32 0, %v2962
      %v2964 = vrot.slane %v2896, %v2963
      %v2965 = vlaneseq
      %v2966 = vshrl.u32 %v2965, 7
      %v2967 = vsub.s32 0, %v2966
      %v2968 = vrot.slane %v2904, %v2967
      %v2969 = vlaneseq
      %v2970 = vshrl.u32 %v2969, 7
      %v2971 = vsub.s32 0, %v2970
      %v2972 = vrot.slane %v2906, %v2971
      %v2973 = vlaneseq
      %v2974 = vshrl.u32 %v2973, 7
      %v2975 = vsub.s32 0, %v2974
      %v2976 = vrot.slane %v2889, %v2975
      %v2977 = vlaneseq
      %v2978 = vshrl.u32 %v2977, 7
      %v2979 = vsub.s32 0, %v2978
      %v2980 = vrot.slane %v2903, %v2979
      %v2981 = vlaneseq
      %v2982 = vshrl.u32 %v2981, 7
      %v2983 = vsub.s32 0, %v2982
      %v2984 = vrot.slane %v2905, %v2983
      %v2985 = vlaneseq
      %v2986 = vshrl.u32 %v2985, 7
      %v2987 = vsub.s32 0, %v2986
      %v2988 = vrot.slane %v2907, %v2987
      %v2989 = vlaneseq
      %v2990 = vshrl.u32 %v2989, 7
      %v2991 = vsub.s32 0, %v2990
      %v2992 = vrot.slane %v2931, %v2991
      %v2993 = vlaneseq
      %v2994 = vshrl.u32 %v2993, 7
      %v2995 = vsub.s32 0, %v2994
      %v2996 = vrot.slane %v2945, %v2995
      %v2997 = vlaneseq
      %v2998 = vshrl.u32 %v2997, 7
      %v2999 = vsub.s32 0, %v2998
      %v3000 = vrot.slane %v2953, %v2999
      %v3001 = vlaneseq
      %v3002 = vshrl.u32 %v3001, 7
      %v3003 = vsub.s32 0, %v3002
      %v3004 = vrot.slane %v2955, %v3003
      %v3005 = vlaneseq
      %v3006 = vshrl.u32 %v3005, 7
      %v3007 = vsub.s32 0, %v3006
      %v3008 = vrot.slane %v2938, %v3007
      %v3009 = vlaneseq
      %v3010 = vshrl.u32 %v3009, 7
      %v3011 = vsub.s32 0, %v3010
      %v3012 = vrot.slane %v2952, %v3011
      %v3013 = vlaneseq
      %v3014 = vshrl.u32 %v3013, 7
      %v3015 = vsub.s32 0, %v3014
      %v3016 = vrot.slane %v2954, %v3015
      %v3017 = vlaneseq
      %v3018 = vshrl.u32 %v3017, 7
      %v3019 = vsub.s32 0, %v3018
      %v3020 = vrot.slane %v2956, %v3019
      %3021 = vrot.lane.b32.xlu0 %v2960, 108
      %v3022 = vpop.permute.xlu0 %3021
      %3023 = vrot.lane.b32.xlu0 %v2964, 108
      %v3024 = vpop.permute.xlu0 %3023
      %3025 = vrot.lane.b32.xlu0 %v2968, 108
      %v3026 = vpop.permute.xlu0 %3025
      %3027 = vrot.lane.b32.xlu0 %v2972, 108
      %v3028 = vpop.permute.xlu0 %3027
      %3029 = vrot.lane.b32.xlu0 %v2976, 108
      %v3030 = vpop.permute.xlu0 %3029
      %3031 = vrot.lane.b32.xlu0 %v2980, 108
      %v3032 = vpop.permute.xlu0 %3031
      %3033 = vrot.lane.b32.xlu0 %v2984, 108
      %v3034 = vpop.permute.xlu0 %3033
      %3035 = vrot.lane.b32.xlu0 %v2988, 108
      %v3036 = vpop.permute.xlu0 %3035
      %3037 = vrot.lane.b32.xlu0 %v2992, 108
      %v3038 = vpop.permute.xlu0 %3037
      %3039 = vrot.lane.b32.xlu0 %v2996, 108
      %v3040 = vpop.permute.xlu0 %3039
      %3041 = vrot.lane.b32.xlu0 %v3000, 108
      %v3042 = vpop.permute.xlu0 %3041
      %3043 = vrot.lane.b32.xlu0 %v3004, 108
      %v3044 = vpop.permute.xlu0 %3043
      %3045 = vrot.lane.b32.xlu0 %v3008, 108
      %v3046 = vpop.permute.xlu0 %3045
      %3047 = vrot.lane.b32.xlu0 %v3012, 108
      %v3048 = vpop.permute.xlu0 %3047
      %3049 = vrot.lane.b32.xlu0 %v3016, 108
      %v3050 = vpop.permute.xlu0 %3049
      %3051 = vrot.lane.b32.xlu0 %v3020, 108
      %v3052 = vpop.permute.xlu0 %3051
      %3069 = vst.msk [vmem:[%s614 + $0xc] sm:$0x1] %vm306, %v3022
      %3070 = vst.msk [vmem:[%s614 + $0x24] sm:$0x1] %vm306, %v3024
      %3071 = vst.msk [vmem:[%s614 + $0x3c] sm:$0x1] %vm306, %v3026
      %3072 = vst.msk [vmem:[%s614 + $0x54] sm:$0x1] %vm306, %v3028
      %3073 = vst.msk [vmem:[%s614 + $0x6c] sm:$0x1] %vm306, %v3030
      %3074 = vst.msk [vmem:[%s614 + $0x84] sm:$0x1] %vm306, %v3032
      %3075 = vst.msk [vmem:[%s614 + $0x9c] sm:$0x1] %vm306, %v3034
      %3076 = vst.msk [vmem:[%s614 + $0xb4] sm:$0x1] %vm306, %v3036
      %3077 = vst.msk [vmem:[%s614 + $0xcc] sm:$0x1] %vm306, %v3038
      %3078 = vst.msk [vmem:[%s614 + $0xe4] sm:$0x1] %vm306, %v3040
      %3079 = vst.msk [vmem:[%s614 + $0xfc] sm:$0x1] %vm306, %v3042
      %3080 = vst.msk [vmem:[%s614 + $0x114] sm:$0x1] %vm306, %v3044
      %3081 = vst.msk [vmem:[%s614 + $0x12c] sm:$0x1] %vm306, %v3046
      %3082 = vst.msk [vmem:[%s614 + $0x144] sm:$0x1] %vm306, %v3048
      %3083 = vst.msk [vmem:[%s614 + $0x15c] sm:$0x1] %vm306, %v3050
      %3084 = vst.msk [vmem:[%s614 + $0x174] sm:$0x1] %vm306, %v3052
      %3087 = vrot.lane.b32.xlu0 %v923, 124
      %v3088 = vpop.permute.xlu0 %3087
      %3089 = vrot.lane.b32.xlu0 %v924, 124
      %v3090 = vpop.permute.xlu0 %3089
      %v3093 = vadd.f32 %v925, %v3088
      %v3094 = vadd.f32 %v926, %v3090
      %v3097 = vcombine.high %v3093, %v3093
      %v3099 = vunpack.c.l.s4 1966171168
      %v3100 = vunpack.c.0.s8 %v3099
      %v3101 = vlaneseq
      %v3102 = vshrl.u32 %v3101, 7
      %v3103 = vsub.s32 %v3100, %v3102
      %v3104 = vrot.slane %v3093, %v3103
      %v3106 = vunpack.c.l.s4 1966171168
      %v3107 = vunpack.c.0.s8 %v3106
      %v3108 = vlaneseq
      %v3109 = vshrl.u32 %v3108, 7
      %v3110 = vsub.s32 %v3107, %v3109
      %v3111 = vrot.slane %v3097, %v3110
      %v3112 = vcombine.high %v3104, %v3104
      %v3113 = vcombine.high %v3111, %v3111
      %v3115 = vunpack.c.l.s4 1966171168
      %v3116 = vunpack.c.0.s8 %v3115
      %v3117 = vlaneseq
      %v3118 = vshrl.u32 %v3117, 7
      %v3119 = vsub.s32 %v3116, %v3118
      %v3120 = vrot.slane %v3104, %v3119
      %v3122 = vunpack.c.l.s4 1966171168
      %v3123 = vunpack.c.0.s8 %v3122
      %v3124 = vlaneseq
      %v3125 = vshrl.u32 %v3124, 7
      %v3126 = vsub.s32 %v3123, %v3125
      %v3127 = vrot.slane %v3111, %v3126
      %v3129 = vunpack.c.l.s4 1966171168
      %v3130 = vunpack.c.0.s8 %v3129
      %v3131 = vlaneseq
      %v3132 = vshrl.u32 %v3131, 7
      %v3133 = vsub.s32 %v3130, %v3132
      %v3134 = vrot.slane %v3112, %v3133
      %v3136 = vunpack.c.l.s4 1966171168
      %v3137 = vunpack.c.0.s8 %v3136
      %v3138 = vlaneseq
      %v3139 = vshrl.u32 %v3138, 7
      %v3140 = vsub.s32 %v3137, %v3139
      %v3141 = vrot.slane %v3113, %v3140
      %v3142 = vcombine.high %v3120, %v3120
      %v3143 = vcombine.high %v3127, %v3127
      %v3144 = vcombine.high %v3134, %v3134
      %v3145 = vcombine.high %v3141, %v3141
      %v3146 = vcombine.high %v3094, %v3094
      %v3148 = vunpack.c.l.s4 1966171168
      %v3149 = vunpack.c.0.s8 %v3148
      %v3150 = vlaneseq
      %v3151 = vshrl.u32 %v3150, 7
      %v3152 = vsub.s32 %v3149, %v3151
      %v3153 = vrot.slane %v3094, %v3152
      %v3155 = vunpack.c.l.s4 1966171168
      %v3156 = vunpack.c.0.s8 %v3155
      %v3157 = vlaneseq
      %v3158 = vshrl.u32 %v3157, 7
      %v3159 = vsub.s32 %v3156, %v3158
      %v3160 = vrot.slane %v3146, %v3159
      %v3161 = vcombine.high %v3153, %v3153
      %v3162 = vcombine.high %v3160, %v3160
      %v3164 = vunpack.c.l.s4 1966171168
      %v3165 = vunpack.c.0.s8 %v3164
      %v3166 = vlaneseq
      %v3167 = vshrl.u32 %v3166, 7
      %v3168 = vsub.s32 %v3165, %v3167
      %v3169 = vrot.slane %v3153, %v3168
      %v3171 = vunpack.c.l.s4 1966171168
      %v3172 = vunpack.c.0.s8 %v3171
      %v3173 = vlaneseq
      %v3174 = vshrl.u32 %v3173, 7
      %v3175 = vsub.s32 %v3172, %v3174
      %v3176 = vrot.slane %v3160, %v3175
      %v3178 = vunpack.c.l.s4 1966171168
      %v3179 = vunpack.c.0.s8 %v3178
      %v3180 = vlaneseq
      %v3181 = vshrl.u32 %v3180, 7
      %v3182 = vsub.s32 %v3179, %v3181
      %v3183 = vrot.slane %v3161, %v3182
      %v3185 = vunpack.c.l.s4 1966171168
      %v3186 = vunpack.c.0.s8 %v3185
      %v3187 = vlaneseq
      %v3188 = vshrl.u32 %v3187, 7
      %v3189 = vsub.s32 %v3186, %v3188
      %v3190 = vrot.slane %v3162, %v3189
      %v3191 = vcombine.high %v3169, %v3169
      %v3192 = vcombine.high %v3176, %v3176
      %v3193 = vcombine.high %v3183, %v3183
      %v3194 = vcombine.high %v3190, %v3190
      %v3195 = vlaneseq
      %v3196 = vshrl.u32 %v3195, 7
      %v3197 = vsub.s32 0, %v3196
      %v3198 = vrot.slane %v3120, %v3197
      %v3199 = vlaneseq
      %v3200 = vshrl.u32 %v3199, 7
      %v3201 = vsub.s32 0, %v3200
      %v3202 = vrot.slane %v3134, %v3201
      %v3203 = vlaneseq
      %v3204 = vshrl.u32 %v3203, 7
      %v3205 = vsub.s32 0, %v3204
      %v3206 = vrot.slane %v3142, %v3205
      %v3207 = vlaneseq
      %v3208 = vshrl.u32 %v3207, 7
      %v3209 = vsub.s32 0, %v3208
      %v3210 = vrot.slane %v3144, %v3209
      %v3211 = vlaneseq
      %v3212 = vshrl.u32 %v3211, 7
      %v3213 = vsub.s32 0, %v3212
      %v3214 = vrot.slane %v3127, %v3213
      %v3215 = vlaneseq
      %v3216 = vshrl.u32 %v3215, 7
      %v3217 = vsub.s32 0, %v3216
      %v3218 = vrot.slane %v3141, %v3217
      %v3219 = vlaneseq
      %v3220 = vshrl.u32 %v3219, 7
      %v3221 = vsub.s32 0, %v3220
      %v3222 = vrot.slane %v3143, %v3221
      %v3223 = vlaneseq
      %v3224 = vshrl.u32 %v3223, 7
      %v3225 = vsub.s32 0, %v3224
      %v3226 = vrot.slane %v3145, %v3225
      %v3227 = vlaneseq
      %v3228 = vshrl.u32 %v3227, 7
      %v3229 = vsub.s32 0, %v3228
      %v3230 = vrot.slane %v3169, %v3229
      %v3231 = vlaneseq
      %v3232 = vshrl.u32 %v3231, 7
      %v3233 = vsub.s32 0, %v3232
      %v3234 = vrot.slane %v3183, %v3233
      %v3235 = vlaneseq
      %v3236 = vshrl.u32 %v3235, 7
      %v3237 = vsub.s32 0, %v3236
      %v3238 = vrot.slane %v3191, %v3237
      %v3239 = vlaneseq
      %v3240 = vshrl.u32 %v3239, 7
      %v3241 = vsub.s32 0, %v3240
      %v3242 = vrot.slane %v3193, %v3241
      %v3243 = vlaneseq
      %v3244 = vshrl.u32 %v3243, 7
      %v3245 = vsub.s32 0, %v3244
      %v3246 = vrot.slane %v3176, %v3245
      %v3247 = vlaneseq
      %v3248 = vshrl.u32 %v3247, 7
      %v3249 = vsub.s32 0, %v3248
      %v3250 = vrot.slane %v3190, %v3249
      %v3251 = vlaneseq
      %v3252 = vshrl.u32 %v3251, 7
      %v3253 = vsub.s32 0, %v3252
      %v3254 = vrot.slane %v3192, %v3253
      %v3255 = vlaneseq
      %v3256 = vshrl.u32 %v3255, 7
      %v3257 = vsub.s32 0, %v3256
      %v3258 = vrot.slane %v3194, %v3257
      %3259 = vrot.lane.b32.xlu0 %v3198, 108
      %v3260 = vpop.permute.xlu0 %3259
      %3261 = vrot.lane.b32.xlu0 %v3202, 108
      %v3262 = vpop.permute.xlu0 %3261
      %3263 = vrot.lane.b32.xlu0 %v3206, 108
      %v3264 = vpop.permute.xlu0 %3263
      %3265 = vrot.lane.b32.xlu0 %v3210, 108
      %v3266 = vpop.permute.xlu0 %3265
      %3267 = vrot.lane.b32.xlu0 %v3214, 108
      %v3268 = vpop.permute.xlu0 %3267
      %3269 = vrot.lane.b32.xlu0 %v3218, 108
      %v3270 = vpop.permute.xlu0 %3269
      %3271 = vrot.lane.b32.xlu0 %v3222, 108
      %v3272 = vpop.permute.xlu0 %3271
      %3273 = vrot.lane.b32.xlu0 %v3226, 108
      %v3274 = vpop.permute.xlu0 %3273
      %3275 = vrot.lane.b32.xlu0 %v3230, 108
      %v3276 = vpop.permute.xlu0 %3275
      %3277 = vrot.lane.b32.xlu0 %v3234, 108
      %v3278 = vpop.permute.xlu0 %3277
      %3279 = vrot.lane.b32.xlu0 %v3238, 108
      %v3280 = vpop.permute.xlu0 %3279
      %3281 = vrot.lane.b32.xlu0 %v3242, 108
      %v3282 = vpop.permute.xlu0 %3281
      %3283 = vrot.lane.b32.xlu0 %v3246, 108
      %v3284 = vpop.permute.xlu0 %3283
      %3285 = vrot.lane.b32.xlu0 %v3250, 108
      %v3286 = vpop.permute.xlu0 %3285
      %3287 = vrot.lane.b32.xlu0 %v3254, 108
      %v3288 = vpop.permute.xlu0 %3287
      %3289 = vrot.lane.b32.xlu0 %v3258, 108
      %v3290 = vpop.permute.xlu0 %3289
      %3307 = vst.msk [vmem:[%s614 + $0xd] sm:$0x1] %vm306, %v3260
      %3308 = vst.msk [vmem:[%s614 + $0x25] sm:$0x1] %vm306, %v3262
      %3309 = vst.msk [vmem:[%s614 + $0x3d] sm:$0x1] %vm306, %v3264
      %3310 = vst.msk [vmem:[%s614 + $0x55] sm:$0x1] %vm306, %v3266
      %3311 = vst.msk [vmem:[%s614 + $0x6d] sm:$0x1] %vm306, %v3268
      %3312 = vst.msk [vmem:[%s614 + $0x85] sm:$0x1] %vm306, %v3270
      %3313 = vst.msk [vmem:[%s614 + $0x9d] sm:$0x1] %vm306, %v3272
      %3314 = vst.msk [vmem:[%s614 + $0xb5] sm:$0x1] %vm306, %v3274
      %3315 = vst.msk [vmem:[%s614 + $0xcd] sm:$0x1] %vm306, %v3276
      %3316 = vst.msk [vmem:[%s614 + $0xe5] sm:$0x1] %vm306, %v3278
      %3317 = vst.msk [vmem:[%s614 + $0xfd] sm:$0x1] %vm306, %v3280
      %3318 = vst.msk [vmem:[%s614 + $0x115] sm:$0x1] %vm306, %v3282
      %3319 = vst.msk [vmem:[%s614 + $0x12d] sm:$0x1] %vm306, %v3284
      %3320 = vst.msk [vmem:[%s614 + $0x145] sm:$0x1] %vm306, %v3286
      %3321 = vst.msk [vmem:[%s614 + $0x15d] sm:$0x1] %vm306, %v3288
      %3322 = vst.msk [vmem:[%s614 + $0x175] sm:$0x1] %vm306, %v3290
      %3325 = vrot.lane.b32.xlu0 %v777, 124
      %v3326 = vpop.permute.xlu0 %3325
      %3327 = vrot.lane.b32.xlu0 %v778, 124
      %v3328 = vpop.permute.xlu0 %3327
      %v3331 = vadd.f32 %v779, %v3326
      %v3332 = vadd.f32 %v780, %v3328
      %v3335 = vcombine.high %v3331, %v3331
      %v3337 = vunpack.c.l.s4 1966171168
      %v3338 = vunpack.c.0.s8 %v3337
      %v3339 = vlaneseq
      %v3340 = vshrl.u32 %v3339, 7
      %v3341 = vsub.s32 %v3338, %v3340
      %v3342 = vrot.slane %v3331, %v3341
      %v3344 = vunpack.c.l.s4 1966171168
      %v3345 = vunpack.c.0.s8 %v3344
      %v3346 = vlaneseq
      %v3347 = vshrl.u32 %v3346, 7
      %v3348 = vsub.s32 %v3345, %v3347
      %v3349 = vrot.slane %v3335, %v3348
      %v3350 = vcombine.high %v3342, %v3342
      %v3351 = vcombine.high %v3349, %v3349
      %v3353 = vunpack.c.l.s4 1966171168
      %v3354 = vunpack.c.0.s8 %v3353
      %v3355 = vlaneseq
      %v3356 = vshrl.u32 %v3355, 7
      %v3357 = vsub.s32 %v3354, %v3356
      %v3358 = vrot.slane %v3342, %v3357
      %v3360 = vunpack.c.l.s4 1966171168
      %v3361 = vunpack.c.0.s8 %v3360
      %v3362 = vlaneseq
      %v3363 = vshrl.u32 %v3362, 7
      %v3364 = vsub.s32 %v3361, %v3363
      %v3365 = vrot.slane %v3349, %v3364
      %v3367 = vunpack.c.l.s4 1966171168
      %v3368 = vunpack.c.0.s8 %v3367
      %v3369 = vlaneseq
      %v3370 = vshrl.u32 %v3369, 7
      %v3371 = vsub.s32 %v3368, %v3370
      %v3372 = vrot.slane %v3350, %v3371
      %v3374 = vunpack.c.l.s4 1966171168
      %v3375 = vunpack.c.0.s8 %v3374
      %v3376 = vlaneseq
      %v3377 = vshrl.u32 %v3376, 7
      %v3378 = vsub.s32 %v3375, %v3377
      %v3379 = vrot.slane %v3351, %v3378
      %v3380 = vcombine.high %v3358, %v3358
      %v3381 = vcombine.high %v3365, %v3365
      %v3382 = vcombine.high %v3372, %v3372
      %v3383 = vcombine.high %v3379, %v3379
      %v3384 = vcombine.high %v3332, %v3332
      %v3386 = vunpack.c.l.s4 1966171168
      %v3387 = vunpack.c.0.s8 %v3386
      %v3388 = vlaneseq
      %v3389 = vshrl.u32 %v3388, 7
      %v3390 = vsub.s32 %v3387, %v3389
      %v3391 = vrot.slane %v3332, %v3390
      %v3393 = vunpack.c.l.s4 1966171168
      %v3394 = vunpack.c.0.s8 %v3393
      %v3395 = vlaneseq
      %v3396 = vshrl.u32 %v3395, 7
      %v3397 = vsub.s32 %v3394, %v3396
      %v3398 = vrot.slane %v3384, %v3397
      %v3399 = vcombine.high %v3391, %v3391
      %v3400 = vcombine.high %v3398, %v3398
      %v3402 = vunpack.c.l.s4 1966171168
      %v3403 = vunpack.c.0.s8 %v3402
      %v3404 = vlaneseq
      %v3405 = vshrl.u32 %v3404, 7
      %v3406 = vsub.s32 %v3403, %v3405
      %v3407 = vrot.slane %v3391, %v3406
      %v3409 = vunpack.c.l.s4 1966171168
      %v3410 = vunpack.c.0.s8 %v3409
      %v3411 = vlaneseq
      %v3412 = vshrl.u32 %v3411, 7
      %v3413 = vsub.s32 %v3410, %v3412
      %v3414 = vrot.slane %v3398, %v3413
      %v3416 = vunpack.c.l.s4 1966171168
      %v3417 = vunpack.c.0.s8 %v3416
      %v3418 = vlaneseq
      %v3419 = vshrl.u32 %v3418, 7
      %v3420 = vsub.s32 %v3417, %v3419
      %v3421 = vrot.slane %v3399, %v3420
      %v3423 = vunpack.c.l.s4 1966171168
      %v3424 = vunpack.c.0.s8 %v3423
      %v3425 = vlaneseq
      %v3426 = vshrl.u32 %v3425, 7
      %v3427 = vsub.s32 %v3424, %v3426
      %v3428 = vrot.slane %v3400, %v3427
      %v3429 = vcombine.high %v3407, %v3407
      %v3430 = vcombine.high %v3414, %v3414
      %v3431 = vcombine.high %v3421, %v3421
      %v3432 = vcombine.high %v3428, %v3428
      %v3433 = vlaneseq
      %v3434 = vshrl.u32 %v3433, 7
      %v3435 = vsub.s32 0, %v3434
      %v3436 = vrot.slane %v3358, %v3435
      %v3437 = vlaneseq
      %v3438 = vshrl.u32 %v3437, 7
      %v3439 = vsub.s32 0, %v3438
      %v3440 = vrot.slane %v3372, %v3439
      %v3441 = vlaneseq
      %v3442 = vshrl.u32 %v3441, 7
      %v3443 = vsub.s32 0, %v3442
      %v3444 = vrot.slane %v3380, %v3443
      %v3445 = vlaneseq
      %v3446 = vshrl.u32 %v3445, 7
      %v3447 = vsub.s32 0, %v3446
      %v3448 = vrot.slane %v3382, %v3447
      %v3449 = vlaneseq
      %v3450 = vshrl.u32 %v3449, 7
      %v3451 = vsub.s32 0, %v3450
      %v3452 = vrot.slane %v3365, %v3451
      %v3453 = vlaneseq
      %v3454 = vshrl.u32 %v3453, 7
      %v3455 = vsub.s32 0, %v3454
      %v3456 = vrot.slane %v3379, %v3455
      %v3457 = vlaneseq
      %v3458 = vshrl.u32 %v3457, 7
      %v3459 = vsub.s32 0, %v3458
      %v3460 = vrot.slane %v3381, %v3459
      %v3461 = vlaneseq
      %v3462 = vshrl.u32 %v3461, 7
      %v3463 = vsub.s32 0, %v3462
      %v3464 = vrot.slane %v3383, %v3463
      %v3465 = vlaneseq
      %v3466 = vshrl.u32 %v3465, 7
      %v3467 = vsub.s32 0, %v3466
      %v3468 = vrot.slane %v3407, %v3467
      %v3469 = vlaneseq
      %v3470 = vshrl.u32 %v3469, 7
      %v3471 = vsub.s32 0, %v3470
      %v3472 = vrot.slane %v3421, %v3471
      %v3473 = vlaneseq
      %v3474 = vshrl.u32 %v3473, 7
      %v3475 = vsub.s32 0, %v3474
      %v3476 = vrot.slane %v3429, %v3475
      %v3477 = vlaneseq
      %v3478 = vshrl.u32 %v3477, 7
      %v3479 = vsub.s32 0, %v3478
      %v3480 = vrot.slane %v3431, %v3479
      %v3481 = vlaneseq
      %v3482 = vshrl.u32 %v3481, 7
      %v3483 = vsub.s32 0, %v3482
      %v3484 = vrot.slane %v3414, %v3483
      %v3485 = vlaneseq
      %v3486 = vshrl.u32 %v3485, 7
      %v3487 = vsub.s32 0, %v3486
      %v3488 = vrot.slane %v3428, %v3487
      %v3489 = vlaneseq
      %v3490 = vshrl.u32 %v3489, 7
      %v3491 = vsub.s32 0, %v3490
      %v3492 = vrot.slane %v3430, %v3491
      %v3493 = vlaneseq
      %v3494 = vshrl.u32 %v3493, 7
      %v3495 = vsub.s32 0, %v3494
      %v3496 = vrot.slane %v3432, %v3495
      %3497 = vrot.lane.b32.xlu0 %v3436, 104
      %v3498 = vpop.permute.xlu0 %3497
      %3499 = vrot.lane.b32.xlu0 %v3440, 104
      %v3500 = vpop.permute.xlu0 %3499
      %3501 = vrot.lane.b32.xlu0 %v3444, 104
      %v3502 = vpop.permute.xlu0 %3501
      %3503 = vrot.lane.b32.xlu0 %v3448, 104
      %v3504 = vpop.permute.xlu0 %3503
      %3505 = vrot.lane.b32.xlu0 %v3452, 104
      %v3506 = vpop.permute.xlu0 %3505
      %3507 = vrot.lane.b32.xlu0 %v3456, 104
      %v3508 = vpop.permute.xlu0 %3507
      %3509 = vrot.lane.b32.xlu0 %v3460, 104
      %v3510 = vpop.permute.xlu0 %3509
      %3511 = vrot.lane.b32.xlu0 %v3464, 104
      %v3512 = vpop.permute.xlu0 %3511
      %3513 = vrot.lane.b32.xlu0 %v3468, 104
      %v3514 = vpop.permute.xlu0 %3513
      %3515 = vrot.lane.b32.xlu0 %v3472, 104
      %v3516 = vpop.permute.xlu0 %3515
      %3517 = vrot.lane.b32.xlu0 %v3476, 104
      %v3518 = vpop.permute.xlu0 %3517
      %3519 = vrot.lane.b32.xlu0 %v3480, 104
      %v3520 = vpop.permute.xlu0 %3519
      %3521 = vrot.lane.b32.xlu0 %v3484, 104
      %v3522 = vpop.permute.xlu0 %3521
      %3523 = vrot.lane.b32.xlu0 %v3488, 104
      %v3524 = vpop.permute.xlu0 %3523
      %3525 = vrot.lane.b32.xlu0 %v3492, 104
      %v3526 = vpop.permute.xlu0 %3525
      %3527 = vrot.lane.b32.xlu0 %v3496, 104
      %v3528 = vpop.permute.xlu0 %3527
      %3545 = vst.msk [vmem:[%s614 + $0xe] sm:$0x1] %vm306, %v3498
      %3546 = vst.msk [vmem:[%s614 + $0x26] sm:$0x1] %vm306, %v3500
      %3547 = vst.msk [vmem:[%s614 + $0x3e] sm:$0x1] %vm306, %v3502
      %3548 = vst.msk [vmem:[%s614 + $0x56] sm:$0x1] %vm306, %v3504
      %3549 = vst.msk [vmem:[%s614 + $0x6e] sm:$0x1] %vm306, %v3506
      %3550 = vst.msk [vmem:[%s614 + $0x86] sm:$0x1] %vm306, %v3508
      %3551 = vst.msk [vmem:[%s614 + $0x9e] sm:$0x1] %vm306, %v3510
      %3552 = vst.msk [vmem:[%s614 + $0xb6] sm:$0x1] %vm306, %v3512
      %3553 = vst.msk [vmem:[%s614 + $0xce] sm:$0x1] %vm306, %v3514
      %3554 = vst.msk [vmem:[%s614 + $0xe6] sm:$0x1] %vm306, %v3516
      %3555 = vst.msk [vmem:[%s614 + $0xfe] sm:$0x1] %vm306, %v3518
      %3556 = vst.msk [vmem:[%s614 + $0x116] sm:$0x1] %vm306, %v3520
      %3557 = vst.msk [vmem:[%s614 + $0x12e] sm:$0x1] %vm306, %v3522
      %3558 = vst.msk [vmem:[%s614 + $0x146] sm:$0x1] %vm306, %v3524
      %3559 = vst.msk [vmem:[%s614 + $0x15e] sm:$0x1] %vm306, %v3526
      %3560 = vst.msk [vmem:[%s614 + $0x176] sm:$0x1] %vm306, %v3528
      %3563 = vrot.lane.b32.xlu0 %v631, 124
      %v3564 = vpop.permute.xlu0 %3563
      %3565 = vrot.lane.b32.xlu0 %v632, 124
      %v3566 = vpop.permute.xlu0 %3565
      %v3569 = vadd.f32 %v633, %v3564
      %v3570 = vadd.f32 %v634, %v3566
      %v3573 = vcombine.high %v3569, %v3569
      %v3575 = vunpack.c.l.s4 1966171168
      %v3576 = vunpack.c.0.s8 %v3575
      %v3577 = vlaneseq
      %v3578 = vshrl.u32 %v3577, 7
      %v3579 = vsub.s32 %v3576, %v3578
      %v3580 = vrot.slane %v3569, %v3579
      %v3582 = vunpack.c.l.s4 1966171168
      %v3583 = vunpack.c.0.s8 %v3582
      %v3584 = vlaneseq
      %v3585 = vshrl.u32 %v3584, 7
      %v3586 = vsub.s32 %v3583, %v3585
      %v3587 = vrot.slane %v3573, %v3586
      %v3588 = vcombine.high %v3580, %v3580
      %v3589 = vcombine.high %v3587, %v3587
      %v3591 = vunpack.c.l.s4 1966171168
      %v3592 = vunpack.c.0.s8 %v3591
      %v3593 = vlaneseq
      %v3594 = vshrl.u32 %v3593, 7
      %v3595 = vsub.s32 %v3592, %v3594
      %v3596 = vrot.slane %v3580, %v3595
      %v3598 = vunpack.c.l.s4 1966171168
      %v3599 = vunpack.c.0.s8 %v3598
      %v3600 = vlaneseq
      %v3601 = vshrl.u32 %v3600, 7
      %v3602 = vsub.s32 %v3599, %v3601
      %v3603 = vrot.slane %v3587, %v3602
      %v3605 = vunpack.c.l.s4 1966171168
      %v3606 = vunpack.c.0.s8 %v3605
      %v3607 = vlaneseq
      %v3608 = vshrl.u32 %v3607, 7
      %v3609 = vsub.s32 %v3606, %v3608
      %v3610 = vrot.slane %v3588, %v3609
      %v3612 = vunpack.c.l.s4 1966171168
      %v3613 = vunpack.c.0.s8 %v3612
      %v3614 = vlaneseq
      %v3615 = vshrl.u32 %v3614, 7
      %v3616 = vsub.s32 %v3613, %v3615
      %v3617 = vrot.slane %v3589, %v3616
      %v3618 = vcombine.high %v3596, %v3596
      %v3619 = vcombine.high %v3603, %v3603
      %v3620 = vcombine.high %v3610, %v3610
      %v3621 = vcombine.high %v3617, %v3617
      %v3622 = vcombine.high %v3570, %v3570
      %v3624 = vunpack.c.l.s4 1966171168
      %v3625 = vunpack.c.0.s8 %v3624
      %v3626 = vlaneseq
      %v3627 = vshrl.u32 %v3626, 7
      %v3628 = vsub.s32 %v3625, %v3627
      %v3629 = vrot.slane %v3570, %v3628
      %v3631 = vunpack.c.l.s4 1966171168
      %v3632 = vunpack.c.0.s8 %v3631
      %v3633 = vlaneseq
      %v3634 = vshrl.u32 %v3633, 7
      %v3635 = vsub.s32 %v3632, %v3634
      %v3636 = vrot.slane %v3622, %v3635
      %v3637 = vcombine.high %v3629, %v3629
      %v3638 = vcombine.high %v3636, %v3636
      %v3640 = vunpack.c.l.s4 1966171168
      %v3641 = vunpack.c.0.s8 %v3640
      %v3642 = vlaneseq
      %v3643 = vshrl.u32 %v3642, 7
      %v3644 = vsub.s32 %v3641, %v3643
      %v3645 = vrot.slane %v3629, %v3644
      %v3647 = vunpack.c.l.s4 1966171168
      %v3648 = vunpack.c.0.s8 %v3647
      %v3649 = vlaneseq
      %v3650 = vshrl.u32 %v3649, 7
      %v3651 = vsub.s32 %v3648, %v3650
      %v3652 = vrot.slane %v3636, %v3651
      %v3654 = vunpack.c.l.s4 1966171168
      %v3655 = vunpack.c.0.s8 %v3654
      %v3656 = vlaneseq
      %v3657 = vshrl.u32 %v3656, 7
      %v3658 = vsub.s32 %v3655, %v3657
      %v3659 = vrot.slane %v3637, %v3658
      %v3661 = vunpack.c.l.s4 1966171168
      %v3662 = vunpack.c.0.s8 %v3661
      %v3663 = vlaneseq
      %v3664 = vshrl.u32 %v3663, 7
      %v3665 = vsub.s32 %v3662, %v3664
      %v3666 = vrot.slane %v3638, %v3665
      %v3667 = vcombine.high %v3645, %v3645
      %v3668 = vcombine.high %v3652, %v3652
      %v3669 = vcombine.high %v3659, %v3659
      %v3670 = vcombine.high %v3666, %v3666
      %v3671 = vlaneseq
      %v3672 = vshrl.u32 %v3671, 7
      %v3673 = vsub.s32 0, %v3672
      %v3674 = vrot.slane %v3596, %v3673
      %v3675 = vlaneseq
      %v3676 = vshrl.u32 %v3675, 7
      %v3677 = vsub.s32 0, %v3676
      %v3678 = vrot.slane %v3610, %v3677
      %v3679 = vlaneseq
      %v3680 = vshrl.u32 %v3679, 7
      %v3681 = vsub.s32 0, %v3680
      %v3682 = vrot.slane %v3618, %v3681
      %v3683 = vlaneseq
      %v3684 = vshrl.u32 %v3683, 7
      %v3685 = vsub.s32 0, %v3684
      %v3686 = vrot.slane %v3620, %v3685
      %v3687 = vlaneseq
      %v3688 = vshrl.u32 %v3687, 7
      %v3689 = vsub.s32 0, %v3688
      %v3690 = vrot.slane %v3603, %v3689
      %v3691 = vlaneseq
      %v3692 = vshrl.u32 %v3691, 7
      %v3693 = vsub.s32 0, %v3692
      %v3694 = vrot.slane %v3617, %v3693
      %v3695 = vlaneseq
      %v3696 = vshrl.u32 %v3695, 7
      %v3697 = vsub.s32 0, %v3696
      %v3698 = vrot.slane %v3619, %v3697
      %v3699 = vlaneseq
      %v3700 = vshrl.u32 %v3699, 7
      %v3701 = vsub.s32 0, %v3700
      %v3702 = vrot.slane %v3621, %v3701
      %v3703 = vlaneseq
      %v3704 = vshrl.u32 %v3703, 7
      %v3705 = vsub.s32 0, %v3704
      %v3706 = vrot.slane %v3645, %v3705
      %v3707 = vlaneseq
      %v3708 = vshrl.u32 %v3707, 7
      %v3709 = vsub.s32 0, %v3708
      %v3710 = vrot.slane %v3659, %v3709
      %v3711 = vlaneseq
      %v3712 = vshrl.u32 %v3711, 7
      %v3713 = vsub.s32 0, %v3712
      %v3714 = vrot.slane %v3667, %v3713
      %v3715 = vlaneseq
      %v3716 = vshrl.u32 %v3715, 7
      %v3717 = vsub.s32 0, %v3716
      %v3718 = vrot.slane %v3669, %v3717
      %v3719 = vlaneseq
      %v3720 = vshrl.u32 %v3719, 7
      %v3721 = vsub.s32 0, %v3720
      %v3722 = vrot.slane %v3652, %v3721
      %v3723 = vlaneseq
      %v3724 = vshrl.u32 %v3723, 7
      %v3725 = vsub.s32 0, %v3724
      %v3726 = vrot.slane %v3666, %v3725
      %v3727 = vlaneseq
      %v3728 = vshrl.u32 %v3727, 7
      %v3729 = vsub.s32 0, %v3728
      %v3730 = vrot.slane %v3668, %v3729
      %v3731 = vlaneseq
      %v3732 = vshrl.u32 %v3731, 7
      %v3733 = vsub.s32 0, %v3732
      %v3734 = vrot.slane %v3670, %v3733
      %3735 = vrot.lane.b32.xlu0 %v3674, 104
      %v3736 = vpop.permute.xlu0 %3735
      %3737 = vrot.lane.b32.xlu0 %v3678, 104
      %v3738 = vpop.permute.xlu0 %3737
      %3739 = vrot.lane.b32.xlu0 %v3682, 104
      %v3740 = vpop.permute.xlu0 %3739
      %3741 = vrot.lane.b32.xlu0 %v3686, 104
      %v3742 = vpop.permute.xlu0 %3741
      %3743 = vrot.lane.b32.xlu0 %v3690, 104
      %v3744 = vpop.permute.xlu0 %3743
      %3745 = vrot.lane.b32.xlu0 %v3694, 104
      %v3746 = vpop.permute.xlu0 %3745
      %3747 = vrot.lane.b32.xlu0 %v3698, 104
      %v3748 = vpop.permute.xlu0 %3747
      %3749 = vrot.lane.b32.xlu0 %v3702, 104
      %v3750 = vpop.permute.xlu0 %3749
      %3751 = vrot.lane.b32.xlu0 %v3706, 104
      %v3752 = vpop.permute.xlu0 %3751
      %3753 = vrot.lane.b32.xlu0 %v3710, 104
      %v3754 = vpop.permute.xlu0 %3753
      %3755 = vrot.lane.b32.xlu0 %v3714, 104
      %v3756 = vpop.permute.xlu0 %3755
      %3757 = vrot.lane.b32.xlu0 %v3718, 104
      %v3758 = vpop.permute.xlu0 %3757
      %3759 = vrot.lane.b32.xlu0 %v3722, 104
      %v3760 = vpop.permute.xlu0 %3759
      %3761 = vrot.lane.b32.xlu0 %v3726, 104
      %v3762 = vpop.permute.xlu0 %3761
      %3763 = vrot.lane.b32.xlu0 %v3730, 104
      %v3764 = vpop.permute.xlu0 %3763
      %3765 = vrot.lane.b32.xlu0 %v3734, 104
      %v3766 = vpop.permute.xlu0 %3765
      %3783 = vst.msk [vmem:[%s614 + $0xf] sm:$0x1] %vm306, %v3736
      %3784 = vst.msk [vmem:[%s614 + $0x27] sm:$0x1] %vm306, %v3738
      %3785 = vst.msk [vmem:[%s614 + $0x3f] sm:$0x1] %vm306, %v3740
      %3786 = vst.msk [vmem:[%s614 + $0x57] sm:$0x1] %vm306, %v3742
      %3787 = vst.msk [vmem:[%s614 + $0x6f] sm:$0x1] %vm306, %v3744
      %3788 = vst.msk [vmem:[%s614 + $0x87] sm:$0x1] %vm306, %v3746
      %3789 = vst.msk [vmem:[%s614 + $0x9f] sm:$0x1] %vm306, %v3748
      %3790 = vst.msk [vmem:[%s614 + $0xb7] sm:$0x1] %vm306, %v3750
      %3791 = vst.msk [vmem:[%s614 + $0xcf] sm:$0x1] %vm306, %v3752
      %3792 = vst.msk [vmem:[%s614 + $0xe7] sm:$0x1] %vm306, %v3754
      %3793 = vst.msk [vmem:[%s614 + $0xff] sm:$0x1] %vm306, %v3756
      %3794 = vst.msk [vmem:[%s614 + $0x117] sm:$0x1] %vm306, %v3758
      %3795 = vst.msk [vmem:[%s614 + $0x12f] sm:$0x1] %vm306, %v3760
      %3796 = vst.msk [vmem:[%s614 + $0x147] sm:$0x1] %vm306, %v3762
      %3797 = vst.msk [vmem:[%s614 + $0x15f] sm:$0x1] %vm306, %v3764
      %3798 = vst.msk [vmem:[%s614 + $0x177] sm:$0x1] %vm306, %v3766
      %3801 = vrot.lane.b32.xlu0 %v480, 124
      %v3802 = vpop.permute.xlu0 %3801
      %3803 = vrot.lane.b32.xlu0 %v483, 124
      %v3804 = vpop.permute.xlu0 %3803
      %v3807 = vadd.f32 %v486, %v3802
      %v3808 = vadd.f32 %v487, %v3804
      %v3811 = vcombine.high %v3807, %v3807
      %v3813 = vunpack.c.l.s4 1966171168
      %v3814 = vunpack.c.0.s8 %v3813
      %v3815 = vlaneseq
      %v3816 = vshrl.u32 %v3815, 7
      %v3817 = vsub.s32 %v3814, %v3816
      %v3818 = vrot.slane %v3807, %v3817
      %v3820 = vunpack.c.l.s4 1966171168
      %v3821 = vunpack.c.0.s8 %v3820
      %v3822 = vlaneseq
      %v3823 = vshrl.u32 %v3822, 7
      %v3824 = vsub.s32 %v3821, %v3823
      %v3825 = vrot.slane %v3811, %v3824
      %v3826 = vcombine.high %v3818, %v3818
      %v3827 = vcombine.high %v3825, %v3825
      %v3829 = vunpack.c.l.s4 1966171168
      %v3830 = vunpack.c.0.s8 %v3829
      %v3831 = vlaneseq
      %v3832 = vshrl.u32 %v3831, 7
      %v3833 = vsub.s32 %v3830, %v3832
      %v3834 = vrot.slane %v3818, %v3833
      %v3836 = vunpack.c.l.s4 1966171168
      %v3837 = vunpack.c.0.s8 %v3836
      %v3838 = vlaneseq
      %v3839 = vshrl.u32 %v3838, 7
      %v3840 = vsub.s32 %v3837, %v3839
      %v3841 = vrot.slane %v3825, %v3840
      %v3843 = vunpack.c.l.s4 1966171168
      %v3844 = vunpack.c.0.s8 %v3843
      %v3845 = vlaneseq
      %v3846 = vshrl.u32 %v3845, 7
      %v3847 = vsub.s32 %v3844, %v3846
      %v3848 = vrot.slane %v3826, %v3847
      %v3850 = vunpack.c.l.s4 1966171168
      %v3851 = vunpack.c.0.s8 %v3850
      %v3852 = vlaneseq
      %v3853 = vshrl.u32 %v3852, 7
      %v3854 = vsub.s32 %v3851, %v3853
      %v3855 = vrot.slane %v3827, %v3854
      %v3856 = vcombine.high %v3834, %v3834
      %v3857 = vcombine.high %v3841, %v3841
      %v3858 = vcombine.high %v3848, %v3848
      %v3859 = vcombine.high %v3855, %v3855
      %v3860 = vcombine.high %v3808, %v3808
      %v3862 = vunpack.c.l.s4 1966171168
      %v3863 = vunpack.c.0.s8 %v3862
      %v3864 = vlaneseq
      %v3865 = vshrl.u32 %v3864, 7
      %v3866 = vsub.s32 %v3863, %v3865
      %v3867 = vrot.slane %v3808, %v3866
      %v3869 = vunpack.c.l.s4 1966171168
      %v3870 = vunpack.c.0.s8 %v3869
      %v3871 = vlaneseq
      %v3872 = vshrl.u32 %v3871, 7
      %v3873 = vsub.s32 %v3870, %v3872
      %v3874 = vrot.slane %v3860, %v3873
      %v3875 = vcombine.high %v3867, %v3867
      %v3876 = vcombine.high %v3874, %v3874
      %v3878 = vunpack.c.l.s4 1966171168
      %v3879 = vunpack.c.0.s8 %v3878
      %v3880 = vlaneseq
      %v3881 = vshrl.u32 %v3880, 7
      %v3882 = vsub.s32 %v3879, %v3881
      %v3883 = vrot.slane %v3867, %v3882
      %v3885 = vunpack.c.l.s4 1966171168
      %v3886 = vunpack.c.0.s8 %v3885
      %v3887 = vlaneseq
      %v3888 = vshrl.u32 %v3887, 7
      %v3889 = vsub.s32 %v3886, %v3888
      %v3890 = vrot.slane %v3874, %v3889
      %v3892 = vunpack.c.l.s4 1966171168
      %v3893 = vunpack.c.0.s8 %v3892
      %v3894 = vlaneseq
      %v3895 = vshrl.u32 %v3894, 7
      %v3896 = vsub.s32 %v3893, %v3895
      %v3897 = vrot.slane %v3875, %v3896
      %v3899 = vunpack.c.l.s4 1966171168
      %v3900 = vunpack.c.0.s8 %v3899
      %v3901 = vlaneseq
      %v3902 = vshrl.u32 %v3901, 7
      %v3903 = vsub.s32 %v3900, %v3902
      %v3904 = vrot.slane %v3876, %v3903
      %v3905 = vcombine.high %v3883, %v3883
      %v3906 = vcombine.high %v3890, %v3890
      %v3907 = vcombine.high %v3897, %v3897
      %v3908 = vcombine.high %v3904, %v3904
      %v3909 = vlaneseq
      %v3910 = vshrl.u32 %v3909, 7
      %v3911 = vsub.s32 0, %v3910
      %v3912 = vrot.slane %v3834, %v3911
      %v3913 = vlaneseq
      %v3914 = vshrl.u32 %v3913, 7
      %v3915 = vsub.s32 0, %v3914
      %v3916 = vrot.slane %v3848, %v3915
      %v3917 = vlaneseq
      %v3918 = vshrl.u32 %v3917, 7
      %v3919 = vsub.s32 0, %v3918
      %v3920 = vrot.slane %v3856, %v3919
      %v3921 = vlaneseq
      %v3922 = vshrl.u32 %v3921, 7
      %v3923 = vsub.s32 0, %v3922
      %v3924 = vrot.slane %v3858, %v3923
      %v3925 = vlaneseq
      %v3926 = vshrl.u32 %v3925, 7
      %v3927 = vsub.s32 0, %v3926
      %v3928 = vrot.slane %v3841, %v3927
      %v3929 = vlaneseq
      %v3930 = vshrl.u32 %v3929, 7
      %v3931 = vsub.s32 0, %v3930
      %v3932 = vrot.slane %v3855, %v3931
      %v3933 = vlaneseq
      %v3934 = vshrl.u32 %v3933, 7
      %v3935 = vsub.s32 0, %v3934
      %v3936 = vrot.slane %v3857, %v3935
      %v3937 = vlaneseq
      %v3938 = vshrl.u32 %v3937, 7
      %v3939 = vsub.s32 0, %v3938
      %v3940 = vrot.slane %v3859, %v3939
      %v3941 = vlaneseq
      %v3942 = vshrl.u32 %v3941, 7
      %v3943 = vsub.s32 0, %v3942
      %v3944 = vrot.slane %v3883, %v3943
      %v3945 = vlaneseq
      %v3946 = vshrl.u32 %v3945, 7
      %v3947 = vsub.s32 0, %v3946
      %v3948 = vrot.slane %v3897, %v3947
      %v3949 = vlaneseq
      %v3950 = vshrl.u32 %v3949, 7
      %v3951 = vsub.s32 0, %v3950
      %v3952 = vrot.slane %v3905, %v3951
      %v3953 = vlaneseq
      %v3954 = vshrl.u32 %v3953, 7
      %v3955 = vsub.s32 0, %v3954
      %v3956 = vrot.slane %v3907, %v3955
      %v3957 = vlaneseq
      %v3958 = vshrl.u32 %v3957, 7
      %v3959 = vsub.s32 0, %v3958
      %v3960 = vrot.slane %v3890, %v3959
      %v3961 = vlaneseq
      %v3962 = vshrl.u32 %v3961, 7
      %v3963 = vsub.s32 0, %v3962
      %v3964 = vrot.slane %v3904, %v3963
      %v3965 = vlaneseq
      %v3966 = vshrl.u32 %v3965, 7
      %v3967 = vsub.s32 0, %v3966
      %v3968 = vrot.slane %v3906, %v3967
      %v3969 = vlaneseq
      %v3970 = vshrl.u32 %v3969, 7
      %v3971 = vsub.s32 0, %v3970
      %v3972 = vrot.slane %v3908, %v3971
      %3973 = vrot.lane.b32.xlu0 %v3912, 104
      %v3974 = vpop.permute.xlu0 %3973
      %3975 = vrot.lane.b32.xlu0 %v3916, 104
      %v3976 = vpop.permute.xlu0 %3975
      %3977 = vrot.lane.b32.xlu0 %v3920, 104
      %v3978 = vpop.permute.xlu0 %3977
      %3979 = vrot.lane.b32.xlu0 %v3924, 104
      %v3980 = vpop.permute.xlu0 %3979
      %3981 = vrot.lane.b32.xlu0 %v3928, 104
      %v3982 = vpop.permute.xlu0 %3981
      %3983 = vrot.lane.b32.xlu0 %v3932, 104
      %v3984 = vpop.permute.xlu0 %3983
      %3985 = vrot.lane.b32.xlu0 %v3936, 104
      %v3986 = vpop.permute.xlu0 %3985
      %3987 = vrot.lane.b32.xlu0 %v3940, 104
      %v3988 = vpop.permute.xlu0 %3987
      %3989 = vrot.lane.b32.xlu0 %v3944, 104
      %v3990 = vpop.permute.xlu0 %3989
      %3991 = vrot.lane.b32.xlu0 %v3948, 104
      %v3992 = vpop.permute.xlu0 %3991
      %3993 = vrot.lane.b32.xlu0 %v3952, 104
      %v3994 = vpop.permute.xlu0 %3993
      %3995 = vrot.lane.b32.xlu0 %v3956, 104
      %v3996 = vpop.permute.xlu0 %3995
      %3997 = vrot.lane.b32.xlu0 %v3960, 104
      %v3998 = vpop.permute.xlu0 %3997
      %3999 = vrot.lane.b32.xlu0 %v3964, 104
      %v4000 = vpop.permute.xlu0 %3999
      %4001 = vrot.lane.b32.xlu0 %v3968, 104
      %v4002 = vpop.permute.xlu0 %4001
      %4003 = vrot.lane.b32.xlu0 %v3972, 104
      %v4004 = vpop.permute.xlu0 %4003
      %4021 = vst.msk [vmem:[%s614 + $0x10] sm:$0x1] %vm306, %v3974
      %4022 = vst.msk [vmem:[%s614 + $0x28] sm:$0x1] %vm306, %v3976
      %4023 = vst.msk [vmem:[%s614 + $0x40] sm:$0x1] %vm306, %v3978
      %4024 = vst.msk [vmem:[%s614 + $0x58] sm:$0x1] %vm306, %v3980
      %4025 = vst.msk [vmem:[%s614 + $0x70] sm:$0x1] %vm306, %v3982
      %4026 = vst.msk [vmem:[%s614 + $0x88] sm:$0x1] %vm306, %v3984
      %4027 = vst.msk [vmem:[%s614 + $0xa0] sm:$0x1] %vm306, %v3986
      %4028 = vst.msk [vmem:[%s614 + $0xb8] sm:$0x1] %vm306, %v3988
      %4029 = vst.msk [vmem:[%s614 + $0xd0] sm:$0x1] %vm306, %v3990
      %4030 = vst.msk [vmem:[%s614 + $0xe8] sm:$0x1] %vm306, %v3992
      %4031 = vst.msk [vmem:[%s614 + $0x100] sm:$0x1] %vm306, %v3994
      %4032 = vst.msk [vmem:[%s614 + $0x118] sm:$0x1] %vm306, %v3996
      %4033 = vst.msk [vmem:[%s614 + $0x130] sm:$0x1] %vm306, %v3998
      %4034 = vst.msk [vmem:[%s614 + $0x148] sm:$0x1] %vm306, %v4000
      %4035 = vst.msk [vmem:[%s614 + $0x160] sm:$0x1] %vm306, %v4002
      %4036 = vst.msk [vmem:[%s614 + $0x178] sm:$0x1] %vm306, %v4004
      %v4037 = vld [vmem:[%s290] sm:$0xf]
      %v4038 = vld [vmem:[%s290 + $0x4] sm:$0xf]
      %v4039 = vld [vmem:[%s290 + $0x8] sm:$0xf]
      %v4040 = vld [vmem:[%s290 + $0xc] sm:$0xf]
      %v4041 = vld [vmem:[%s290 + $0x10] sm:$0xf]
      %v4042 = vld [vmem:[%s290 + $0x14] sm:$0xf]
      %v4043 = vld [vmem:[%s290 + $0x18] sm:$0xf]
      %v4044 = vld [vmem:[%s290 + $0x1c] sm:$0xf]
      %v4045 = vld [vmem:[%s290 + $0x20] sm:$0xf]
      %v4046 = vld [vmem:[%s290 + $0x24] sm:$0xf]
      %v4047 = vld [vmem:[%s290 + $0x28] sm:$0xf]
      %v4048 = vld [vmem:[%s290 + $0x2c] sm:$0xf]
      %v4049 = vld [vmem:[%s290 + $0x30] sm:$0xf]
      %v4050 = vld [vmem:[%s290 + $0x34] sm:$0xf]
      %v4051 = vld [vmem:[%s290 + $0x38] sm:$0xf]
      %v4052 = vld [vmem:[%s290 + $0x3c] sm:$0xf]
      %v4053 = vld [vmem:[%s290 + $0x40] sm:$0xf]
      %v4054 = vld [vmem:[%s290 + $0x44] sm:$0xf]
      %v4055 = vld [vmem:[%s290 + $0x48] sm:$0xf]
      %v4056 = vld [vmem:[%s290 + $0x4c] sm:$0xf]
      %v4057 = vld [vmem:[%s290 + $0x50] sm:$0xf]
      %v4058 = vld [vmem:[%s290 + $0x54] sm:$0xf]
      %v4059 = vld [vmem:[%s290 + $0x58] sm:$0xf]
      %v4060 = vld [vmem:[%s290 + $0x5c] sm:$0xf]
      %v4061 = vld [vmem:[%s290 + $0x60] sm:$0xf]
      %v4062 = vld [vmem:[%s290 + $0x64] sm:$0xf]
      %v4063 = vld [vmem:[%s290 + $0x68] sm:$0xf]
      %v4064 = vld [vmem:[%s290 + $0x6c] sm:$0xf]
      %v4065 = vld [vmem:[%s290 + $0x70] sm:$0xf]
      %v4066 = vld [vmem:[%s290 + $0x74] sm:$0xf]
      %v4067 = vld [vmem:[%s290 + $0x78] sm:$0xf]
      %v4068 = vld [vmem:[%s290 + $0x7c] sm:$0xf]
      %v4069 = vunpack.c.l.bf16 %v4037
      %v4070 = vunpack.c.l.bf16 %v4038
      %v4071 = vunpack.c.l.bf16 %v4039
      %v4072 = vunpack.c.l.bf16 %v4040
      %v4073 = vunpack.c.l.bf16 %v4041
      %v4074 = vunpack.c.l.bf16 %v4042
      %v4075 = vunpack.c.l.bf16 %v4043
      %v4076 = vunpack.c.l.bf16 %v4044
      %v4077 = vunpack.c.l.bf16 %v4045
      %v4078 = vunpack.c.l.bf16 %v4046
      %v4079 = vunpack.c.l.bf16 %v4047
      %v4080 = vunpack.c.l.bf16 %v4048
      %v4081 = vunpack.c.l.bf16 %v4049
      %v4082 = vunpack.c.l.bf16 %v4050
      %v4083 = vunpack.c.l.bf16 %v4051
      %v4084 = vunpack.c.l.bf16 %v4052
      %v4085 = vunpack.c.l.bf16 %v4053
      %v4086 = vunpack.c.l.bf16 %v4054
      %v4087 = vunpack.c.l.bf16 %v4055
      %v4088 = vunpack.c.l.bf16 %v4056
      %v4089 = vunpack.c.l.bf16 %v4057
      %v4090 = vunpack.c.l.bf16 %v4058
      %v4091 = vunpack.c.l.bf16 %v4059
      %v4092 = vunpack.c.l.bf16 %v4060
      %v4093 = vunpack.c.l.bf16 %v4061
      %v4094 = vunpack.c.l.bf16 %v4062
      %v4095 = vunpack.c.l.bf16 %v4063
      %v4096 = vunpack.c.l.bf16 %v4064
      %v4097 = vunpack.c.l.bf16 %v4065
      %v4098 = vunpack.c.l.bf16 %v4066
      %v4099 = vunpack.c.l.bf16 %v4067
      %v4100 = vunpack.c.l.bf16 %v4068
      %s4101 = scalar_lea.vmem [#allocation2], 24
      %4102 = vst.msk [vmem:[%s4101 + $0x1] sm:$0xff] %vm297, %v4069
      %4103 = vst.msk [vmem:[%s4101 + $0x9] sm:$0xff] %vm297, %v4070
      %4104 = vst.msk [vmem:[%s4101 + $0x19] sm:$0xff] %vm297, %v4071
      %4105 = vst.msk [vmem:[%s4101 + $0x21] sm:$0xff] %vm297, %v4072
      %4106 = vst.msk [vmem:[%s4101 + $0x31] sm:$0xff] %vm297, %v4073
      %4107 = vst.msk [vmem:[%s4101 + $0x39] sm:$0xff] %vm297, %v4074
      %4108 = vst.msk [vmem:[%s4101 + $0x49] sm:$0xff] %vm297, %v4075
      %4109 = vst.msk [vmem:[%s4101 + $0x51] sm:$0xff] %vm297, %v4076
      %4110 = vst.msk [vmem:[%s4101 + $0x61] sm:$0xff] %vm297, %v4077
      %4111 = vst.msk [vmem:[%s4101 + $0x69] sm:$0xff] %vm297, %v4078
      %4112 = vst.msk [vmem:[%s4101 + $0x79] sm:$0xff] %vm297, %v4079
      %4113 = vst.msk [vmem:[%s4101 + $0x81] sm:$0xff] %vm297, %v4080
      %4114 = vst.msk [vmem:[%s4101 + $0x91] sm:$0xff] %vm297, %v4081
      %4115 = vst.msk [vmem:[%s4101 + $0x99] sm:$0xff] %vm297, %v4082
      %4116 = vst.msk [vmem:[%s4101 + $0xa9] sm:$0xff] %vm297, %v4083
      %4117 = vst.msk [vmem:[%s4101 + $0xb1] sm:$0xff] %vm297, %v4084
      %4118 = vst.msk [vmem:[%s4101 + $0xc1] sm:$0xff] %vm297, %v4085
      %4119 = vst.msk [vmem:[%s4101 + $0xc9] sm:$0xff] %vm297, %v4086
      %4120 = vst.msk [vmem:[%s4101 + $0xd9] sm:$0xff] %vm297, %v4087
      %4121 = vst.msk [vmem:[%s4101 + $0xe1] sm:$0xff] %vm297, %v4088
      %4122 = vst.msk [vmem:[%s4101 + $0xf1] sm:$0xff] %vm297, %v4089
      %4123 = vst.msk [vmem:[%s4101 + $0xf9] sm:$0xff] %vm297, %v4090
      %4124 = vst.msk [vmem:[%s4101 + $0x109] sm:$0xff] %vm297, %v4091
      %4125 = vst.msk [vmem:[%s4101 + $0x111] sm:$0xff] %vm297, %v4092
      %4126 = vst.msk [vmem:[%s4101 + $0x121] sm:$0xff] %vm297, %v4093
      %4127 = vst.msk [vmem:[%s4101 + $0x129] sm:$0xff] %vm297, %v4094
      %4128 = vst.msk [vmem:[%s4101 + $0x139] sm:$0xff] %vm297, %v4095
      %4129 = vst.msk [vmem:[%s4101 + $0x141] sm:$0xff] %vm297, %v4096
      %4130 = vst.msk [vmem:[%s4101 + $0x151] sm:$0xff] %vm297, %v4097
      %4131 = vst.msk [vmem:[%s4101 + $0x159] sm:$0xff] %vm297, %v4098
      %4132 = vst.msk [vmem:[%s4101 + $0x169] sm:$0xff] %vm297, %v4099
      %4133 = vst.msk [vmem:[%s4101 + $0x171] sm:$0xff] %vm297, %v4100
      %v4134 = vld [vmem:[#allocation2] sm:$0xff]
      %v4135 = vld [vmem:[#allocation2 + $0x8] sm:$0xff]
      %v4136 = vld [vmem:[#allocation2 + $0x18] sm:$0xff]
      %v4137 = vld [vmem:[#allocation2 + $0x20] sm:$0xff]
      %v4138 = vld [vmem:[#allocation2 + $0x30] sm:$0xff]
      %v4139 = vld [vmem:[#allocation2 + $0x38] sm:$0xff]
      %v4140 = vld [vmem:[#allocation2 + $0x48] sm:$0xff]
      %v4141 = vld [vmem:[#allocation2 + $0x50] sm:$0xff]
      %v4142 = vld [vmem:[#allocation2 + $0x60] sm:$0xff]
      %v4143 = vld [vmem:[#allocation2 + $0x68] sm:$0xff]
      %v4144 = vld [vmem:[#allocation2 + $0x78] sm:$0xff]
      %v4145 = vld [vmem:[#allocation2 + $0x80] sm:$0xff]
      %v4146 = vld [vmem:[#allocation2 + $0x90] sm:$0xff]
      %v4147 = vld [vmem:[#allocation2 + $0x98] sm:$0xff]
      %v4148 = vld [vmem:[#allocation2 + $0xa8] sm:$0xff]
      %v4149 = vld [vmem:[#allocation2 + $0xb0] sm:$0xff]
      %v4150 = vld [vmem:[#allocation2 + $0xc0] sm:$0xff]
      %v4151 = vld [vmem:[#allocation2 + $0xc8] sm:$0xff]
      %v4152 = vld [vmem:[#allocation2 + $0xd8] sm:$0xff]
      %v4153 = vld [vmem:[#allocation2 + $0xe0] sm:$0xff]
      %v4154 = vld [vmem:[#allocation2 + $0xf0] sm:$0xff]
      %v4155 = vld [vmem:[#allocation2 + $0xf8] sm:$0xff]
      %v4156 = vld [vmem:[#allocation2 + $0x108] sm:$0xff]
      %v4157 = vld [vmem:[#allocation2 + $0x110] sm:$0xff]
      %v4158 = vld [vmem:[#allocation2 + $0x120] sm:$0xff]
      %v4159 = vld [vmem:[#allocation2 + $0x128] sm:$0xff]
      %v4160 = vld [vmem:[#allocation2 + $0x138] sm:$0xff]
      %v4161 = vld [vmem:[#allocation2 + $0x140] sm:$0xff]
      %v4162 = vld [vmem:[#allocation2 + $0x150] sm:$0xff]
      %v4163 = vld [vmem:[#allocation2 + $0x158] sm:$0xff]
      %v4164 = vld [vmem:[#allocation2 + $0x168] sm:$0xff]
      %v4165 = vld [vmem:[#allocation2 + $0x170] sm:$0xff]
      %v4166 = vpack.c.bf16 %v4135, %v4134
      %v4167 = vpack.c.bf16 %v4137, %v4136
      %v4168 = vpack.c.bf16 %v4139, %v4138
      %v4169 = vpack.c.bf16 %v4141, %v4140
      %v4170 = vpack.c.bf16 %v4143, %v4142
      %v4171 = vpack.c.bf16 %v4145, %v4144
      %v4172 = vpack.c.bf16 %v4147, %v4146
      %v4173 = vpack.c.bf16 %v4149, %v4148
      %v4174 = vpack.c.bf16 %v4151, %v4150
      %v4175 = vpack.c.bf16 %v4153, %v4152
      %v4176 = vpack.c.bf16 %v4155, %v4154
      %v4177 = vpack.c.bf16 %v4157, %v4156
      %v4178 = vpack.c.bf16 %v4159, %v4158
      %v4179 = vpack.c.bf16 %v4161, %v4160
      %v4180 = vpack.c.bf16 %v4163, %v4162
      %v4181 = vpack.c.bf16 %v4165, %v4164
      %4182 = vst.msk [vmem:[#allocation5] sm:$0xff] %vm297, %v4166
      %4183 = vst.msk [vmem:[#allocation5 + $0x8] sm:$0xff] %vm297, %v4167
      %4184 = vst.msk [vmem:[#allocation5 + $0x10] sm:$0xff] %vm297, %v4168
      %4185 = vst.msk [vmem:[#allocation5 + $0x18] sm:$0xff] %vm297, %v4169
      %4186 = vst.msk [vmem:[#allocation5 + $0x20] sm:$0xff] %vm297, %v4170
      %4187 = vst.msk [vmem:[#allocation5 + $0x28] sm:$0xff] %vm297, %v4171
      %4188 = vst.msk [vmem:[#allocation5 + $0x30] sm:$0xff] %vm297, %v4172
      %4189 = vst.msk [vmem:[#allocation5 + $0x38] sm:$0xff] %vm297, %v4173
      %4190 = vst.msk [vmem:[#allocation5 + $0x40] sm:$0xff] %vm297, %v4174
      %4191 = vst.msk [vmem:[#allocation5 + $0x48] sm:$0xff] %vm297, %v4175
      %4192 = vst.msk [vmem:[#allocation5 + $0x50] sm:$0xff] %vm297, %v4176
      %4193 = vst.msk [vmem:[#allocation5 + $0x58] sm:$0xff] %vm297, %v4177
      %4194 = vst.msk [vmem:[#allocation5 + $0x60] sm:$0xff] %vm297, %v4178
      %4195 = vst.msk [vmem:[#allocation5 + $0x68] sm:$0xff] %vm297, %v4179
      %4196 = vst.msk [vmem:[#allocation5 + $0x70] sm:$0xff] %vm297, %v4180
      %4197 = vst.msk [vmem:[#allocation5 + $0x78] sm:$0xff] %vm297, %v4181
      %v4198 = vld [vmem:[#allocation3] sm:$0xff]
      %v4199 = vld [vmem:[#allocation3 + $0x8] sm:$0xff]
      %v4200 = vld [vmem:[#allocation3 + $0x18] sm:$0xff]
      %v4201 = vld [vmem:[#allocation3 + $0x20] sm:$0xff]
      %v4202 = vld [vmem:[#allocation3 + $0x30] sm:$0xff]
      %v4203 = vld [vmem:[#allocation3 + $0x38] sm:$0xff]
      %v4204 = vld [vmem:[#allocation3 + $0x48] sm:$0xff]
      %v4205 = vld [vmem:[#allocation3 + $0x50] sm:$0xff]
      %v4206 = vld [vmem:[#allocation3 + $0x60] sm:$0xff]
      %v4207 = vld [vmem:[#allocation3 + $0x68] sm:$0xff]
      %v4208 = vld [vmem:[#allocation3 + $0x78] sm:$0xff]
      %v4209 = vld [vmem:[#allocation3 + $0x80] sm:$0xff]
      %v4210 = vld [vmem:[#allocation3 + $0x90] sm:$0xff]
      %v4211 = vld [vmem:[#allocation3 + $0x98] sm:$0xff]
      %v4212 = vld [vmem:[#allocation3 + $0xa8] sm:$0xff]
      %v4213 = vld [vmem:[#allocation3 + $0xb0] sm:$0xff]
      %v4214 = vld [vmem:[#allocation3 + $0xc0] sm:$0xff]
      %v4215 = vld [vmem:[#allocation3 + $0xc8] sm:$0xff]
      %v4216 = vld [vmem:[#allocation3 + $0xd8] sm:$0xff]
      %v4217 = vld [vmem:[#allocation3 + $0xe0] sm:$0xff]
      %v4218 = vld [vmem:[#allocation3 + $0xf0] sm:$0xff]
      %v4219 = vld [vmem:[#allocation3 + $0xf8] sm:$0xff]
      %v4220 = vld [vmem:[#allocation3 + $0x108] sm:$0xff]
      %v4221 = vld [vmem:[#allocation3 + $0x110] sm:$0xff]
      %v4222 = vld [vmem:[#allocation3 + $0x120] sm:$0xff]
      %v4223 = vld [vmem:[#allocation3 + $0x128] sm:$0xff]
      %v4224 = vld [vmem:[#allocation3 + $0x138] sm:$0xff]
      %v4225 = vld [vmem:[#allocation3 + $0x140] sm:$0xff]
      %v4226 = vld [vmem:[#allocation3 + $0x150] sm:$0xff]
      %v4227 = vld [vmem:[#allocation3 + $0x158] sm:$0xff]
      %v4228 = vld [vmem:[#allocation3 + $0x168] sm:$0xff]
      %v4229 = vld [vmem:[#allocation3 + $0x170] sm:$0xff]
      %v4230 = vpack.c.bf16 %v4199, %v4198
      %v4231 = vpack.c.bf16 %v4201, %v4200
      %v4232 = vpack.c.bf16 %v4203, %v4202
      %v4233 = vpack.c.bf16 %v4205, %v4204
      %v4234 = vpack.c.bf16 %v4207, %v4206
      %v4235 = vpack.c.bf16 %v4209, %v4208
      %v4236 = vpack.c.bf16 %v4211, %v4210
      %v4237 = vpack.c.bf16 %v4213, %v4212
      %v4238 = vpack.c.bf16 %v4215, %v4214
      %v4239 = vpack.c.bf16 %v4217, %v4216
      %v4240 = vpack.c.bf16 %v4219, %v4218
      %v4241 = vpack.c.bf16 %v4221, %v4220
      %v4242 = vpack.c.bf16 %v4223, %v4222
      %v4243 = vpack.c.bf16 %v4225, %v4224
      %v4244 = vpack.c.bf16 %v4227, %v4226
      %v4245 = vpack.c.bf16 %v4229, %v4228
      %4262 = vrot.lane.b32.xlu0 %v4230, 4
      %v4263 = vpop.permute.xlu0 %4262
      %4264 = vrot.lane.b32.xlu0 %v4231, 4
      %v4265 = vpop.permute.xlu0 %4264
      %4266 = vrot.lane.b32.xlu0 %v4232, 4
      %v4267 = vpop.permute.xlu0 %4266
      %4268 = vrot.lane.b32.xlu0 %v4233, 4
      %v4269 = vpop.permute.xlu0 %4268
      %4270 = vrot.lane.b32.xlu0 %v4234, 4
      %v4271 = vpop.permute.xlu0 %4270
      %4272 = vrot.lane.b32.xlu0 %v4235, 4
      %v4273 = vpop.permute.xlu0 %4272
      %4274 = vrot.lane.b32.xlu0 %v4236, 4
      %v4275 = vpop.permute.xlu0 %4274
      %4276 = vrot.lane.b32.xlu0 %v4237, 4
      %v4277 = vpop.permute.xlu0 %4276
      %4278 = vrot.lane.b32.xlu0 %v4238, 4
      %v4279 = vpop.permute.xlu0 %4278
      %4280 = vrot.lane.b32.xlu0 %v4239, 4
      %v4281 = vpop.permute.xlu0 %4280
      %4282 = vrot.lane.b32.xlu0 %v4240, 4
      %v4283 = vpop.permute.xlu0 %4282
      %4284 = vrot.lane.b32.xlu0 %v4241, 4
      %v4285 = vpop.permute.xlu0 %4284
      %4286 = vrot.lane.b32.xlu0 %v4242, 4
      %v4287 = vpop.permute.xlu0 %4286
      %4288 = vrot.lane.b32.xlu0 %v4243, 4
      %v4289 = vpop.permute.xlu0 %4288
      %4290 = vrot.lane.b32.xlu0 %v4244, 4
      %v4291 = vpop.permute.xlu0 %4290
      %4292 = vrot.lane.b32.xlu0 %v4245, 4
      %v4293 = vpop.permute.xlu0 %4292
      %vm4310 = vcmask 64544
      %4311 = vst.msk [vmem:[#allocation5] sm:$0xff] %vm4310, %v4263
      %4312 = vst.msk [vmem:[#allocation5 + $0x8] sm:$0xff] %vm4310, %v4265
      %4313 = vst.msk [vmem:[#allocation5 + $0x10] sm:$0xff] %vm4310, %v4267
      %4314 = vst.msk [vmem:[#allocation5 + $0x18] sm:$0xff] %vm4310, %v4269
      %4315 = vst.msk [vmem:[#allocation5 + $0x20] sm:$0xff] %vm4310, %v4271
      %4316 = vst.msk [vmem:[#allocation5 + $0x28] sm:$0xff] %vm4310, %v4273
      %4317 = vst.msk [vmem:[#allocation5 + $0x30] sm:$0xff] %vm4310, %v4275
      %4318 = vst.msk [vmem:[#allocation5 + $0x38] sm:$0xff] %vm4310, %v4277
      %4319 = vst.msk [vmem:[#allocation5 + $0x40] sm:$0xff] %vm4310, %v4279
      %4320 = vst.msk [vmem:[#allocation5 + $0x48] sm:$0xff] %vm4310, %v4281
      %4321 = vst.msk [vmem:[#allocation5 + $0x50] sm:$0xff] %vm4310, %v4283
      %4322 = vst.msk [vmem:[#allocation5 + $0x58] sm:$0xff] %vm4310, %v4285
      %4323 = vst.msk [vmem:[#allocation5 + $0x60] sm:$0xff] %vm4310, %v4287
      %4324 = vst.msk [vmem:[#allocation5 + $0x68] sm:$0xff] %vm4310, %v4289
      %4325 = vst.msk [vmem:[#allocation5 + $0x70] sm:$0xff] %vm4310, %v4291
      %4326 = vst.msk [vmem:[#allocation5 + $0x78] sm:$0xff] %vm4310, %v4293
      %v4327 = vld [vmem:[#allocation2 + $0x1] sm:$0xff]
      %v4328 = vld [vmem:[#allocation2 + $0x9] sm:$0xff]
      %v4329 = vld [vmem:[#allocation2 + $0x19] sm:$0xff]
      %v4330 = vld [vmem:[#allocation2 + $0x21] sm:$0xff]
      %v4331 = vld [vmem:[#allocation2 + $0x31] sm:$0xff]
      %v4332 = vld [vmem:[#allocation2 + $0x39] sm:$0xff]
      %v4333 = vld [vmem:[#allocation2 + $0x49] sm:$0xff]
      %v4334 = vld [vmem:[#allocation2 + $0x51] sm:$0xff]
      %v4335 = vld [vmem:[#allocation2 + $0x61] sm:$0xff]
      %v4336 = vld [vmem:[#allocation2 + $0x69] sm:$0xff]
      %v4337 = vld [vmem:[#allocation2 + $0x79] sm:$0xff]
      %v4338 = vld [vmem:[#allocation2 + $0x81] sm:$0xff]
      %v4339 = vld [vmem:[#allocation2 + $0x91] sm:$0xff]
      %v4340 = vld [vmem:[#allocation2 + $0x99] sm:$0xff]
      %v4341 = vld [vmem:[#allocation2 + $0xa9] sm:$0xff]
      %v4342 = vld [vmem:[#allocation2 + $0xb1] sm:$0xff]
      %v4343 = vld [vmem:[#allocation2 + $0xc1] sm:$0xff]
      %v4344 = vld [vmem:[#allocation2 + $0xc9] sm:$0xff]
      %v4345 = vld [vmem:[#allocation2 + $0xd9] sm:$0xff]
      %v4346 = vld [vmem:[#allocation2 + $0xe1] sm:$0xff]
      %v4347 = vld [vmem:[#allocation2 + $0xf1] sm:$0xff]
      %v4348 = vld [vmem:[#allocation2 + $0xf9] sm:$0xff]
      %v4349 = vld [vmem:[#allocation2 + $0x109] sm:$0xff]
      %v4350 = vld [vmem:[#allocation2 + $0x111] sm:$0xff]
      %v4351 = vld [vmem:[#allocation2 + $0x121] sm:$0xff]
      %v4352 = vld [vmem:[#allocation2 + $0x129] sm:$0xff]
      %v4353 = vld [vmem:[#allocation2 + $0x139] sm:$0xff]
      %v4354 = vld [vmem:[#allocation2 + $0x141] sm:$0xff]
      %v4355 = vld [vmem:[#allocation2 + $0x151] sm:$0xff]
      %v4356 = vld [vmem:[#allocation2 + $0x159] sm:$0xff]
      %v4357 = vld [vmem:[#allocation2 + $0x169] sm:$0xff]
      %v4358 = vld [vmem:[#allocation2 + $0x171] sm:$0xff]
      %v4359 = vpack.c.bf16 %v4328, %v4327
      %v4360 = vpack.c.bf16 %v4330, %v4329
      %v4361 = vpack.c.bf16 %v4332, %v4331
      %v4362 = vpack.c.bf16 %v4334, %v4333
      %v4363 = vpack.c.bf16 %v4336, %v4335
      %v4364 = vpack.c.bf16 %v4338, %v4337
      %v4365 = vpack.c.bf16 %v4340, %v4339
      %v4366 = vpack.c.bf16 %v4342, %v4341
      %v4367 = vpack.c.bf16 %v4344, %v4343
      %v4368 = vpack.c.bf16 %v4346, %v4345
      %v4369 = vpack.c.bf16 %v4348, %v4347
      %v4370 = vpack.c.bf16 %v4350, %v4349
      %v4371 = vpack.c.bf16 %v4352, %v4351
      %v4372 = vpack.c.bf16 %v4354, %v4353
      %v4373 = vpack.c.bf16 %v4356, %v4355
      %v4374 = vpack.c.bf16 %v4358, %v4357
      %4391 = vrot.lane.b32.xlu0 %v4359, 8
      %v4392 = vpop.permute.xlu0 %4391
      %4393 = vrot.lane.b32.xlu0 %v4360, 8
      %v4394 = vpop.permute.xlu0 %4393
      %4395 = vrot.lane.b32.xlu0 %v4361, 8
      %v4396 = vpop.permute.xlu0 %4395
      %4397 = vrot.lane.b32.xlu0 %v4362, 8
      %v4398 = vpop.permute.xlu0 %4397
      %4399 = vrot.lane.b32.xlu0 %v4363, 8
      %v4400 = vpop.permute.xlu0 %4399
      %4401 = vrot.lane.b32.xlu0 %v4364, 8
      %v4402 = vpop.permute.xlu0 %4401
      %4403 = vrot.lane.b32.xlu0 %v4365, 8
      %v4404 = vpop.permute.xlu0 %4403
      %4405 = vrot.lane.b32.xlu0 %v4366, 8
      %v4406 = vpop.permute.xlu0 %4405
      %4407 = vrot.lane.b32.xlu0 %v4367, 8
      %v4408 = vpop.permute.xlu0 %4407
      %4409 = vrot.lane.b32.xlu0 %v4368, 8
      %v4410 = vpop.permute.xlu0 %4409
      %4411 = vrot.lane.b32.xlu0 %v4369, 8
      %v4412 = vpop.permute.xlu0 %4411
      %4413 = vrot.lane.b32.xlu0 %v4370, 8
      %v4414 = vpop.permute.xlu0 %4413
      %4415 = vrot.lane.b32.xlu0 %v4371, 8
      %v4416 = vpop.permute.xlu0 %4415
      %4417 = vrot.lane.b32.xlu0 %v4372, 8
      %v4418 = vpop.permute.xlu0 %4417
      %4419 = vrot.lane.b32.xlu0 %v4373, 8
      %v4420 = vpop.permute.xlu0 %4419
      %4421 = vrot.lane.b32.xlu0 %v4374, 8
      %v4422 = vpop.permute.xlu0 %4421
      %vm4439 = vcmask 97344
      %4440 = vst.msk [vmem:[#allocation5] sm:$0xff] %vm4439, %v4392
      %4441 = vst.msk [vmem:[#allocation5 + $0x8] sm:$0xff] %vm4439, %v4394
      %4442 = vst.msk [vmem:[#allocation5 + $0x10] sm:$0xff] %vm4439, %v4396
      %4443 = vst.msk [vmem:[#allocation5 + $0x18] sm:$0xff] %vm4439, %v4398
      %4444 = vst.msk [vmem:[#allocation5 + $0x20] sm:$0xff] %vm4439, %v4400
      %4445 = vst.msk [vmem:[#allocation5 + $0x28] sm:$0xff] %vm4439, %v4402
      %4446 = vst.msk [vmem:[#allocation5 + $0x30] sm:$0xff] %vm4439, %v4404
      %4447 = vst.msk [vmem:[#allocation5 + $0x38] sm:$0xff] %vm4439, %v4406
      %4448 = vst.msk [vmem:[#allocation5 + $0x40] sm:$0xff] %vm4439, %v4408
      %4449 = vst.msk [vmem:[#allocation5 + $0x48] sm:$0xff] %vm4439, %v4410
      %4450 = vst.msk [vmem:[#allocation5 + $0x50] sm:$0xff] %vm4439, %v4412
      %4451 = vst.msk [vmem:[#allocation5 + $0x58] sm:$0xff] %vm4439, %v4414
      %4452 = vst.msk [vmem:[#allocation5 + $0x60] sm:$0xff] %vm4439, %v4416
      %4453 = vst.msk [vmem:[#allocation5 + $0x68] sm:$0xff] %vm4439, %v4418
      %4454 = vst.msk [vmem:[#allocation5 + $0x70] sm:$0xff] %vm4439, %v4420
      %4455 = vst.msk [vmem:[#allocation5 + $0x78] sm:$0xff] %vm4439, %v4422
      %v4456 = vld [vmem:[#allocation3 + $0x1] sm:$0xff]
      %v4457 = vld [vmem:[#allocation3 + $0x9] sm:$0xff]
      %v4458 = vld [vmem:[#allocation3 + $0x19] sm:$0xff]
      %v4459 = vld [vmem:[#allocation3 + $0x21] sm:$0xff]
      %v4460 = vld [vmem:[#allocation3 + $0x31] sm:$0xff]
      %v4461 = vld [vmem:[#allocation3 + $0x39] sm:$0xff]
      %v4462 = vld [vmem:[#allocation3 + $0x49] sm:$0xff]
      %v4463 = vld [vmem:[#allocation3 + $0x51] sm:$0xff]
      %v4464 = vld [vmem:[#allocation3 + $0x61] sm:$0xff]
      %v4465 = vld [vmem:[#allocation3 + $0x69] sm:$0xff]
      %v4466 = vld [vmem:[#allocation3 + $0x79] sm:$0xff]
      %v4467 = vld [vmem:[#allocation3 + $0x81] sm:$0xff]
      %v4468 = vld [vmem:[#allocation3 + $0x91] sm:$0xff]
      %v4469 = vld [vmem:[#allocation3 + $0x99] sm:$0xff]
      %v4470 = vld [vmem:[#allocation3 + $0xa9] sm:$0xff]
      %v4471 = vld [vmem:[#allocation3 + $0xb1] sm:$0xff]
      %v4472 = vld [vmem:[#allocation3 + $0xc1] sm:$0xff]
      %v4473 = vld [vmem:[#allocation3 + $0xc9] sm:$0xff]
      %v4474 = vld [vmem:[#allocation3 + $0xd9] sm:$0xff]
      %v4475 = vld [vmem:[#allocation3 + $0xe1] sm:$0xff]
      %v4476 = vld [vmem:[#allocation3 + $0xf1] sm:$0xff]
      %v4477 = vld [vmem:[#allocation3 + $0xf9] sm:$0xff]
      %v4478 = vld [vmem:[#allocation3 + $0x109] sm:$0xff]
      %v4479 = vld [vmem:[#allocation3 + $0x111] sm:$0xff]
      %v4480 = vld [vmem:[#allocation3 + $0x121] sm:$0xff]
      %v4481 = vld [vmem:[#allocation3 + $0x129] sm:$0xff]
      %v4482 = vld [vmem:[#allocation3 + $0x139] sm:$0xff]
      %v4483 = vld [vmem:[#allocation3 + $0x141] sm:$0xff]
      %v4484 = vld [vmem:[#allocation3 + $0x151] sm:$0xff]
      %v4485 = vld [vmem:[#allocation3 + $0x159] sm:$0xff]
      %v4486 = vld [vmem:[#allocation3 + $0x169] sm:$0xff]
      %v4487 = vld [vmem:[#allocation3 + $0x171] sm:$0xff]
      %v4488 = vpack.c.bf16 %v4457, %v4456
      %v4489 = vpack.c.bf16 %v4459, %v4458
      %v4490 = vpack.c.bf16 %v4461, %v4460
      %v4491 = vpack.c.bf16 %v4463, %v4462
      %v4492 = vpack.c.bf16 %v4465, %v4464
      %v4493 = vpack.c.bf16 %v4467, %v4466
      %v4494 = vpack.c.bf16 %v4469, %v4468
      %v4495 = vpack.c.bf16 %v4471, %v4470
      %v4496 = vpack.c.bf16 %v4473, %v4472
      %v4497 = vpack.c.bf16 %v4475, %v4474
      %v4498 = vpack.c.bf16 %v4477, %v4476
      %v4499 = vpack.c.bf16 %v4479, %v4478
      %v4500 = vpack.c.bf16 %v4481, %v4480
      %v4501 = vpack.c.bf16 %v4483, %v4482
      %v4502 = vpack.c.bf16 %v4485, %v4484
      %v4503 = vpack.c.bf16 %v4487, %v4486
      %4520 = vrot.lane.b32.xlu0 %v4488, 12
      %v4521 = vpop.permute.xlu0 %4520
      %4522 = vrot.lane.b32.xlu0 %v4489, 12
      %v4523 = vpop.permute.xlu0 %4522
      %4524 = vrot.lane.b32.xlu0 %v4490, 12
      %v4525 = vpop.permute.xlu0 %4524
      %4526 = vrot.lane.b32.xlu0 %v4491, 12
      %v4527 = vpop.permute.xlu0 %4526
      %4528 = vrot.lane.b32.xlu0 %v4492, 12
      %v4529 = vpop.permute.xlu0 %4528
      %4530 = vrot.lane.b32.xlu0 %v4493, 12
      %v4531 = vpop.permute.xlu0 %4530
      %4532 = vrot.lane.b32.xlu0 %v4494, 12
      %v4533 = vpop.permute.xlu0 %4532
      %4534 = vrot.lane.b32.xlu0 %v4495, 12
      %v4535 = vpop.permute.xlu0 %4534
      %4536 = vrot.lane.b32.xlu0 %v4496, 12
      %v4537 = vpop.permute.xlu0 %4536
      %4538 = vrot.lane.b32.xlu0 %v4497, 12
      %v4539 = vpop.permute.xlu0 %4538
      %4540 = vrot.lane.b32.xlu0 %v4498, 12
      %v4541 = vpop.permute.xlu0 %4540
      %4542 = vrot.lane.b32.xlu0 %v4499, 12
      %v4543 = vpop.permute.xlu0 %4542
      %4544 = vrot.lane.b32.xlu0 %v4500, 12
      %v4545 = vpop.permute.xlu0 %4544
      %4546 = vrot.lane.b32.xlu0 %v4501, 12
      %v4547 = vpop.permute.xlu0 %4546
      %4548 = vrot.lane.b32.xlu0 %v4502, 12
      %v4549 = vpop.permute.xlu0 %4548
      %4550 = vrot.lane.b32.xlu0 %v4503, 12
      %v4551 = vpop.permute.xlu0 %4550
      %vm4568 = vcmask 130144
      %4569 = vst.msk [vmem:[#allocation5] sm:$0xff] %vm4568, %v4521
      %4570 = vst.msk [vmem:[#allocation5 + $0x8] sm:$0xff] %vm4568, %v4523
      %4571 = vst.msk [vmem:[#allocation5 + $0x10] sm:$0xff] %vm4568, %v4525
      %4572 = vst.msk [vmem:[#allocation5 + $0x18] sm:$0xff] %vm4568, %v4527
      %4573 = vst.msk [vmem:[#allocation5 + $0x20] sm:$0xff] %vm4568, %v4529
      %4574 = vst.msk [vmem:[#allocation5 + $0x28] sm:$0xff] %vm4568, %v4531
      %4575 = vst.msk [vmem:[#allocation5 + $0x30] sm:$0xff] %vm4568, %v4533
      %4576 = vst.msk [vmem:[#allocation5 + $0x38] sm:$0xff] %vm4568, %v4535
      %4577 = vst.msk [vmem:[#allocation5 + $0x40] sm:$0xff] %vm4568, %v4537
      %4578 = vst.msk [vmem:[#allocation5 + $0x48] sm:$0xff] %vm4568, %v4539
      %4579 = vst.msk [vmem:[#allocation5 + $0x50] sm:$0xff] %vm4568, %v4541
      %4580 = vst.msk [vmem:[#allocation5 + $0x58] sm:$0xff] %vm4568, %v4543
      %4581 = vst.msk [vmem:[#allocation5 + $0x60] sm:$0xff] %vm4568, %v4545
      %4582 = vst.msk [vmem:[#allocation5 + $0x68] sm:$0xff] %vm4568, %v4547
      %4583 = vst.msk [vmem:[#allocation5 + $0x70] sm:$0xff] %vm4568, %v4549
      %4584 = vst.msk [vmem:[#allocation5 + $0x78] sm:$0xff] %vm4568, %v4551
      %v4585 = vld [vmem:[#allocation2 + $0x2] sm:$0xff]
      %v4586 = vld [vmem:[#allocation2 + $0xa] sm:$0xff]
      %v4587 = vld [vmem:[#allocation2 + $0x1a] sm:$0xff]
      %v4588 = vld [vmem:[#allocation2 + $0x22] sm:$0xff]
      %v4589 = vld [vmem:[#allocation2 + $0x32] sm:$0xff]
      %v4590 = vld [vmem:[#allocation2 + $0x3a] sm:$0xff]
      %v4591 = vld [vmem:[#allocation2 + $0x4a] sm:$0xff]
      %v4592 = vld [vmem:[#allocation2 + $0x52] sm:$0xff]
      %v4593 = vld [vmem:[#allocation2 + $0x62] sm:$0xff]
      %v4594 = vld [vmem:[#allocation2 + $0x6a] sm:$0xff]
      %v4595 = vld [vmem:[#allocation2 + $0x7a] sm:$0xff]
      %v4596 = vld [vmem:[#allocation2 + $0x82] sm:$0xff]
      %v4597 = vld [vmem:[#allocation2 + $0x92] sm:$0xff]
      %v4598 = vld [vmem:[#allocation2 + $0x9a] sm:$0xff]
      %v4599 = vld [vmem:[#allocation2 + $0xaa] sm:$0xff]
      %v4600 = vld [vmem:[#allocation2 + $0xb2] sm:$0xff]
      %v4601 = vld [vmem:[#allocation2 + $0xc2] sm:$0xff]
      %v4602 = vld [vmem:[#allocation2 + $0xca] sm:$0xff]
      %v4603 = vld [vmem:[#allocation2 + $0xda] sm:$0xff]
      %v4604 = vld [vmem:[#allocation2 + $0xe2] sm:$0xff]
      %v4605 = vld [vmem:[#allocation2 + $0xf2] sm:$0xff]
      %v4606 = vld [vmem:[#allocation2 + $0xfa] sm:$0xff]
      %v4607 = vld [vmem:[#allocation2 + $0x10a] sm:$0xff]
      %v4608 = vld [vmem:[#allocation2 + $0x112] sm:$0xff]
      %v4609 = vld [vmem:[#allocation2 + $0x122] sm:$0xff]
      %v4610 = vld [vmem:[#allocation2 + $0x12a] sm:$0xff]
      %v4611 = vld [vmem:[#allocation2 + $0x13a] sm:$0xff]
      %v4612 = vld [vmem:[#allocation2 + $0x142] sm:$0xff]
      %v4613 = vld [vmem:[#allocation2 + $0x152] sm:$0xff]
      %v4614 = vld [vmem:[#allocation2 + $0x15a] sm:$0xff]
      %v4615 = vld [vmem:[#allocation2 + $0x16a] sm:$0xff]
      %v4616 = vld [vmem:[#allocation2 + $0x172] sm:$0xff]
      %v4617 = vpack.c.bf16 %v4586, %v4585
      %v4618 = vpack.c.bf16 %v4588, %v4587
      %v4619 = vpack.c.bf16 %v4590, %v4589
      %v4620 = vpack.c.bf16 %v4592, %v4591
      %v4621 = vpack.c.bf16 %v4594, %v4593
      %v4622 = vpack.c.bf16 %v4596, %v4595
      %v4623 = vpack.c.bf16 %v4598, %v4597
      %v4624 = vpack.c.bf16 %v4600, %v4599
      %v4625 = vpack.c.bf16 %v4602, %v4601
      %v4626 = vpack.c.bf16 %v4604, %v4603
      %v4627 = vpack.c.bf16 %v4606, %v4605
      %v4628 = vpack.c.bf16 %v4608, %v4607
      %v4629 = vpack.c.bf16 %v4610, %v4609
      %v4630 = vpack.c.bf16 %v4612, %v4611
      %v4631 = vpack.c.bf16 %v4614, %v4613
      %v4632 = vpack.c.bf16 %v4616, %v4615
      %4649 = vrot.lane.b32.xlu0 %v4617, 16
      %v4650 = vpop.permute.xlu0 %4649
      %4651 = vrot.lane.b32.xlu0 %v4618, 16
      %v4652 = vpop.permute.xlu0 %4651
      %4653 = vrot.lane.b32.xlu0 %v4619, 16
      %v4654 = vpop.permute.xlu0 %4653
      %4655 = vrot.lane.b32.xlu0 %v4620, 16
      %v4656 = vpop.permute.xlu0 %4655
      %4657 = vrot.lane.b32.xlu0 %v4621, 16
      %v4658 = vpop.permute.xlu0 %4657
      %4659 = vrot.lane.b32.xlu0 %v4622, 16
      %v4660 = vpop.permute.xlu0 %4659
      %4661 = vrot.lane.b32.xlu0 %v4623, 16
      %v4662 = vpop.permute.xlu0 %4661
      %4663 = vrot.lane.b32.xlu0 %v4624, 16
      %v4664 = vpop.permute.xlu0 %4663
      %4665 = vrot.lane.b32.xlu0 %v4625, 16
      %v4666 = vpop.permute.xlu0 %4665
      %4667 = vrot.lane.b32.xlu0 %v4626, 16
      %v4668 = vpop.permute.xlu0 %4667
      %4669 = vrot.lane.b32.xlu0 %v4627, 16
      %v4670 = vpop.permute.xlu0 %4669
      %4671 = vrot.lane.b32.xlu0 %v4628, 16
      %v4672 = vpop.permute.xlu0 %4671
      %4673 = vrot.lane.b32.xlu0 %v4629, 16
      %v4674 = vpop.permute.xlu0 %4673
      %4675 = vrot.lane.b32.xlu0 %v4630, 16
      %v4676 = vpop.permute.xlu0 %4675
      %4677 = vrot.lane.b32.xlu0 %v4631, 16
      %v4678 = vpop.permute.xlu0 %4677
      %4679 = vrot.lane.b32.xlu0 %v4632, 16
      %v4680 = vpop.permute.xlu0 %4679
      %vm4697 = vcmask 162944
      %4698 = vst.msk [vmem:[#allocation5] sm:$0xff] %vm4697, %v4650
      %4699 = vst.msk [vmem:[#allocation5 + $0x8] sm:$0xff] %vm4697, %v4652
      %4700 = vst.msk [vmem:[#allocation5 + $0x10] sm:$0xff] %vm4697, %v4654
      %4701 = vst.msk [vmem:[#allocation5 + $0x18] sm:$0xff] %vm4697, %v4656
      %4702 = vst.msk [vmem:[#allocation5 + $0x20] sm:$0xff] %vm4697, %v4658
      %4703 = vst.msk [vmem:[#allocation5 + $0x28] sm:$0xff] %vm4697, %v4660
      %4704 = vst.msk [vmem:[#allocation5 + $0x30] sm:$0xff] %vm4697, %v4662
      %4705 = vst.msk [vmem:[#allocation5 + $0x38] sm:$0xff] %vm4697, %v4664
      %4706 = vst.msk [vmem:[#allocation5 + $0x40] sm:$0xff] %vm4697, %v4666
      %4707 = vst.msk [vmem:[#allocation5 + $0x48] sm:$0xff] %vm4697, %v4668
      %4708 = vst.msk [vmem:[#allocation5 + $0x50] sm:$0xff] %vm4697, %v4670
      %4709 = vst.msk [vmem:[#allocation5 + $0x58] sm:$0xff] %vm4697, %v4672
      %4710 = vst.msk [vmem:[#allocation5 + $0x60] sm:$0xff] %vm4697, %v4674
      %4711 = vst.msk [vmem:[#allocation5 + $0x68] sm:$0xff] %vm4697, %v4676
      %4712 = vst.msk [vmem:[#allocation5 + $0x70] sm:$0xff] %vm4697, %v4678
      %4713 = vst.msk [vmem:[#allocation5 + $0x78] sm:$0xff] %vm4697, %v4680
      %v4714 = vld [vmem:[#allocation3 + $0x2] sm:$0xff]
      %v4715 = vld [vmem:[#allocation3 + $0xa] sm:$0xff]
      %v4716 = vld [vmem:[#allocation3 + $0x1a] sm:$0xff]
      %v4717 = vld [vmem:[#allocation3 + $0x22] sm:$0xff]
      %v4718 = vld [vmem:[#allocation3 + $0x32] sm:$0xff]
      %v4719 = vld [vmem:[#allocation3 + $0x3a] sm:$0xff]
      %v4720 = vld [vmem:[#allocation3 + $0x4a] sm:$0xff]
      %v4721 = vld [vmem:[#allocation3 + $0x52] sm:$0xff]
      %v4722 = vld [vmem:[#allocation3 + $0x62] sm:$0xff]
      %v4723 = vld [vmem:[#allocation3 + $0x6a] sm:$0xff]
      %v4724 = vld [vmem:[#allocation3 + $0x7a] sm:$0xff]
      %v4725 = vld [vmem:[#allocation3 + $0x82] sm:$0xff]
      %v4726 = vld [vmem:[#allocation3 + $0x92] sm:$0xff]
      %v4727 = vld [vmem:[#allocation3 + $0x9a] sm:$0xff]
      %v4728 = vld [vmem:[#allocation3 + $0xaa] sm:$0xff]
      %v4729 = vld [vmem:[#allocation3 + $0xb2] sm:$0xff]
      %v4730 = vld [vmem:[#allocation3 + $0xc2] sm:$0xff]
      %v4731 = vld [vmem:[#allocation3 + $0xca] sm:$0xff]
      %v4732 = vld [vmem:[#allocation3 + $0xda] sm:$0xff]
      %v4733 = vld [vmem:[#allocation3 + $0xe2] sm:$0xff]
      %v4734 = vld [vmem:[#allocation3 + $0xf2] sm:$0xff]
      %v4735 = vld [vmem:[#allocation3 + $0xfa] sm:$0xff]
      %v4736 = vld [vmem:[#allocation3 + $0x10a] sm:$0xff]
      %v4737 = vld [vmem:[#allocation3 + $0x112] sm:$0xff]
      %v4738 = vld [vmem:[#allocation3 + $0x122] sm:$0xff]
      %v4739 = vld [vmem:[#allocation3 + $0x12a] sm:$0xff]
      %v4740 = vld [vmem:[#allocation3 + $0x13a] sm:$0xff]
      %v4741 = vld [vmem:[#allocation3 + $0x142] sm:$0xff]
      %v4742 = vld [vmem:[#allocation3 + $0x152] sm:$0xff]
      %v4743 = vld [vmem:[#allocation3 + $0x15a] sm:$0xff]
      %v4744 = vld [vmem:[#allocation3 + $0x16a] sm:$0xff]
      %v4745 = vld [vmem:[#allocation3 + $0x172] sm:$0xff]
      %v4746 = vpack.c.bf16 %v4715, %v4714
      %v4747 = vpack.c.bf16 %v4717, %v4716
      %v4748 = vpack.c.bf16 %v4719, %v4718
      %v4749 = vpack.c.bf16 %v4721, %v4720
      %v4750 = vpack.c.bf16 %v4723, %v4722
      %v4751 = vpack.c.bf16 %v4725, %v4724
      %v4752 = vpack.c.bf16 %v4727, %v4726
      %v4753 = vpack.c.bf16 %v4729, %v4728
      %v4754 = vpack.c.bf16 %v4731, %v4730
      %v4755 = vpack.c.bf16 %v4733, %v4732
      %v4756 = vpack.c.bf16 %v4735, %v4734
      %v4757 = vpack.c.bf16 %v4737, %v4736
      %v4758 = vpack.c.bf16 %v4739, %v4738
      %v4759 = vpack.c.bf16 %v4741, %v4740
      %v4760 = vpack.c.bf16 %v4743, %v4742
      %v4761 = vpack.c.bf16 %v4745, %v4744
      %4778 = vrot.lane.b32.xlu0 %v4746, 20
      %v4779 = vpop.permute.xlu0 %4778
      %4780 = vrot.lane.b32.xlu0 %v4747, 20
      %v4781 = vpop.permute.xlu0 %4780
      %4782 = vrot.lane.b32.xlu0 %v4748, 20
      %v4783 = vpop.permute.xlu0 %4782
      %4784 = vrot.lane.b32.xlu0 %v4749, 20
      %v4785 = vpop.permute.xlu0 %4784
      %4786 = vrot.lane.b32.xlu0 %v4750, 20
      %v4787 = vpop.permute.xlu0 %4786
      %4788 = vrot.lane.b32.xlu0 %v4751, 20
      %v4789 = vpop.permute.xlu0 %4788
      %4790 = vrot.lane.b32.xlu0 %v4752, 20
      %v4791 = vpop.permute.xlu0 %4790
      %4792 = vrot.lane.b32.xlu0 %v4753, 20
      %v4793 = vpop.permute.xlu0 %4792
      %4794 = vrot.lane.b32.xlu0 %v4754, 20
      %v4795 = vpop.permute.xlu0 %4794
      %4796 = vrot.lane.b32.xlu0 %v4755, 20
      %v4797 = vpop.permute.xlu0 %4796
      %4798 = vrot.lane.b32.xlu0 %v4756, 20
      %v4799 = vpop.permute.xlu0 %4798
      %4800 = vrot.lane.b32.xlu0 %v4757, 20
      %v4801 = vpop.permute.xlu0 %4800
      %4802 = vrot.lane.b32.xlu0 %v4758, 20
      %v4803 = vpop.permute.xlu0 %4802
      %4804 = vrot.lane.b32.xlu0 %v4759, 20
      %v4805 = vpop.permute.xlu0 %4804
      %4806 = vrot.lane.b32.xlu0 %v4760, 20
      %v4807 = vpop.permute.xlu0 %4806
      %4808 = vrot.lane.b32.xlu0 %v4761, 20
      %v4809 = vpop.permute.xlu0 %4808
      %vm4826 = vcmask 195744
      %4827 = vst.msk [vmem:[#allocation5] sm:$0xff] %vm4826, %v4779
      %4828 = vst.msk [vmem:[#allocation5 + $0x8] sm:$0xff] %vm4826, %v4781
      %4829 = vst.msk [vmem:[#allocation5 + $0x10] sm:$0xff] %vm4826, %v4783
      %4830 = vst.msk [vmem:[#allocation5 + $0x18] sm:$0xff] %vm4826, %v4785
      %4831 = vst.msk [vmem:[#allocation5 + $0x20] sm:$0xff] %vm4826, %v4787
      %4832 = vst.msk [vmem:[#allocation5 + $0x28] sm:$0xff] %vm4826, %v4789
      %4833 = vst.msk [vmem:[#allocation5 + $0x30] sm:$0xff] %vm4826, %v4791
      %4834 = vst.msk [vmem:[#allocation5 + $0x38] sm:$0xff] %vm4826, %v4793
      %4835 = vst.msk [vmem:[#allocation5 + $0x40] sm:$0xff] %vm4826, %v4795
      %4836 = vst.msk [vmem:[#allocation5 + $0x48] sm:$0xff] %vm4826, %v4797
      %4837 = vst.msk [vmem:[#allocation5 + $0x50] sm:$0xff] %vm4826, %v4799
      %4838 = vst.msk [vmem:[#allocation5 + $0x58] sm:$0xff] %vm4826, %v4801
      %4839 = vst.msk [vmem:[#allocation5 + $0x60] sm:$0xff] %vm4826, %v4803
      %4840 = vst.msk [vmem:[#allocation5 + $0x68] sm:$0xff] %vm4826, %v4805
      %4841 = vst.msk [vmem:[#allocation5 + $0x70] sm:$0xff] %vm4826, %v4807
      %4842 = vst.msk [vmem:[#allocation5 + $0x78] sm:$0xff] %vm4826, %v4809
      %v4843 = vld [vmem:[%s4101] sm:$0xff]
      %v4844 = vld [vmem:[%s4101 + $0x8] sm:$0xff]
      %v4845 = vld [vmem:[%s4101 + $0x18] sm:$0xff]
      %v4846 = vld [vmem:[%s4101 + $0x20] sm:$0xff]
      %v4847 = vld [vmem:[%s4101 + $0x30] sm:$0xff]
      %v4848 = vld [vmem:[%s4101 + $0x38] sm:$0xff]
      %v4849 = vld [vmem:[%s4101 + $0x48] sm:$0xff]
      %v4850 = vld [vmem:[%s4101 + $0x50] sm:$0xff]
      %v4851 = vld [vmem:[%s4101 + $0x60] sm:$0xff]
      %v4852 = vld [vmem:[%s4101 + $0x68] sm:$0xff]
      %v4853 = vld [vmem:[%s4101 + $0x78] sm:$0xff]
      %v4854 = vld [vmem:[%s4101 + $0x80] sm:$0xff]
      %v4855 = vld [vmem:[%s4101 + $0x90] sm:$0xff]
      %v4856 = vld [vmem:[%s4101 + $0x98] sm:$0xff]
      %v4857 = vld [vmem:[%s4101 + $0xa8] sm:$0xff]
      %v4858 = vld [vmem:[%s4101 + $0xb0] sm:$0xff]
      %v4859 = vld [vmem:[%s4101 + $0xc0] sm:$0xff]
      %v4860 = vld [vmem:[%s4101 + $0xc8] sm:$0xff]
      %v4861 = vld [vmem:[%s4101 + $0xd8] sm:$0xff]
      %v4862 = vld [vmem:[%s4101 + $0xe0] sm:$0xff]
      %v4863 = vld [vmem:[%s4101 + $0xf0] sm:$0xff]
      %v4864 = vld [vmem:[%s4101 + $0xf8] sm:$0xff]
      %v4865 = vld [vmem:[%s4101 + $0x108] sm:$0xff]
      %v4866 = vld [vmem:[%s4101 + $0x110] sm:$0xff]
      %v4867 = vld [vmem:[%s4101 + $0x120] sm:$0xff]
      %v4868 = vld [vmem:[%s4101 + $0x128] sm:$0xff]
      %v4869 = vld [vmem:[%s4101 + $0x138] sm:$0xff]
      %v4870 = vld [vmem:[%s4101 + $0x140] sm:$0xff]
      %v4871 = vld [vmem:[%s4101 + $0x150] sm:$0xff]
      %v4872 = vld [vmem:[%s4101 + $0x158] sm:$0xff]
      %v4873 = vld [vmem:[%s4101 + $0x168] sm:$0xff]
      %v4874 = vld [vmem:[%s4101 + $0x170] sm:$0xff]
      %v4875 = vpack.c.bf16 %v4844, %v4843
      %v4876 = vpack.c.bf16 %v4846, %v4845
      %v4877 = vpack.c.bf16 %v4848, %v4847
      %v4878 = vpack.c.bf16 %v4850, %v4849
      %v4879 = vpack.c.bf16 %v4852, %v4851
      %v4880 = vpack.c.bf16 %v4854, %v4853
      %v4881 = vpack.c.bf16 %v4856, %v4855
      %v4882 = vpack.c.bf16 %v4858, %v4857
      %v4883 = vpack.c.bf16 %v4860, %v4859
      %v4884 = vpack.c.bf16 %v4862, %v4861
      %v4885 = vpack.c.bf16 %v4864, %v4863
      %v4886 = vpack.c.bf16 %v4866, %v4865
      %v4887 = vpack.c.bf16 %v4868, %v4867
      %v4888 = vpack.c.bf16 %v4870, %v4869
      %v4889 = vpack.c.bf16 %v4872, %v4871
      %v4890 = vpack.c.bf16 %v4874, %v4873
      %4907 = vrot.lane.b32.xlu0 %v4875, 24
      %v4908 = vpop.permute.xlu0 %4907
      %4909 = vrot.lane.b32.xlu0 %v4876, 24
      %v4910 = vpop.permute.xlu0 %4909
      %4911 = vrot.lane.b32.xlu0 %v4877, 24
      %v4912 = vpop.permute.xlu0 %4911
      %4913 = vrot.lane.b32.xlu0 %v4878, 24
      %v4914 = vpop.permute.xlu0 %4913
      %4915 = vrot.lane.b32.xlu0 %v4879, 24
      %v4916 = vpop.permute.xlu0 %4915
      %4917 = vrot.lane.b32.xlu0 %v4880, 24
      %v4918 = vpop.permute.xlu0 %4917
      %4919 = vrot.lane.b32.xlu0 %v4881, 24
      %v4920 = vpop.permute.xlu0 %4919
      %4921 = vrot.lane.b32.xlu0 %v4882, 24
      %v4922 = vpop.permute.xlu0 %4921
      %4923 = vrot.lane.b32.xlu0 %v4883, 24
      %v4924 = vpop.permute.xlu0 %4923
      %4925 = vrot.lane.b32.xlu0 %v4884, 24
      %v4926 = vpop.permute.xlu0 %4925
      %4927 = vrot.lane.b32.xlu0 %v4885, 24
      %v4928 = vpop.permute.xlu0 %4927
      %4929 = vrot.lane.b32.xlu0 %v4886, 24
      %v4930 = vpop.permute.xlu0 %4929
      %4931 = vrot.lane.b32.xlu0 %v4887, 24
      %v4932 = vpop.permute.xlu0 %4931
      %4933 = vrot.lane.b32.xlu0 %v4888, 24
      %v4934 = vpop.permute.xlu0 %4933
      %4935 = vrot.lane.b32.xlu0 %v4889, 24
      %v4936 = vpop.permute.xlu0 %4935
      %4937 = vrot.lane.b32.xlu0 %v4890, 24
      %v4938 = vpop.permute.xlu0 %4937
      %vm4955 = vcmask 228544
      %4956 = vst.msk [vmem:[#allocation5] sm:$0xff] %vm4955, %v4908
      %4957 = vst.msk [vmem:[#allocation5 + $0x8] sm:$0xff] %vm4955, %v4910
      %4958 = vst.msk [vmem:[#allocation5 + $0x10] sm:$0xff] %vm4955, %v4912
      %4959 = vst.msk [vmem:[#allocation5 + $0x18] sm:$0xff] %vm4955, %v4914
      %4960 = vst.msk [vmem:[#allocation5 + $0x20] sm:$0xff] %vm4955, %v4916
      %4961 = vst.msk [vmem:[#allocation5 + $0x28] sm:$0xff] %vm4955, %v4918
      %4962 = vst.msk [vmem:[#allocation5 + $0x30] sm:$0xff] %vm4955, %v4920
      %4963 = vst.msk [vmem:[#allocation5 + $0x38] sm:$0xff] %vm4955, %v4922
      %4964 = vst.msk [vmem:[#allocation5 + $0x40] sm:$0xff] %vm4955, %v4924
      %4965 = vst.msk [vmem:[#allocation5 + $0x48] sm:$0xff] %vm4955, %v4926
      %4966 = vst.msk [vmem:[#allocation5 + $0x50] sm:$0xff] %vm4955, %v4928
      %4967 = vst.msk [vmem:[#allocation5 + $0x58] sm:$0xff] %vm4955, %v4930
      %4968 = vst.msk [vmem:[#allocation5 + $0x60] sm:$0xff] %vm4955, %v4932
      %4969 = vst.msk [vmem:[#allocation5 + $0x68] sm:$0xff] %vm4955, %v4934
      %4970 = vst.msk [vmem:[#allocation5 + $0x70] sm:$0xff] %vm4955, %v4936
      %4971 = vst.msk [vmem:[#allocation5 + $0x78] sm:$0xff] %vm4955, %v4938
      %v4972 = vld [vmem:[%s614] sm:$0xff]
      %v4973 = vld [vmem:[%s614 + $0x8] sm:$0xff]
      %v4974 = vld [vmem:[%s614 + $0x18] sm:$0xff]
      %v4975 = vld [vmem:[%s614 + $0x20] sm:$0xff]
      %v4976 = vld [vmem:[%s614 + $0x30] sm:$0xff]
      %v4977 = vld [vmem:[%s614 + $0x38] sm:$0xff]
      %v4978 = vld [vmem:[%s614 + $0x48] sm:$0xff]
      %v4979 = vld [vmem:[%s614 + $0x50] sm:$0xff]
      %v4980 = vld [vmem:[%s614 + $0x60] sm:$0xff]
      %v4981 = vld [vmem:[%s614 + $0x68] sm:$0xff]
      %v4982 = vld [vmem:[%s614 + $0x78] sm:$0xff]
      %v4983 = vld [vmem:[%s614 + $0x80] sm:$0xff]
      %v4984 = vld [vmem:[%s614 + $0x90] sm:$0xff]
      %v4985 = vld [vmem:[%s614 + $0x98] sm:$0xff]
      %v4986 = vld [vmem:[%s614 + $0xa8] sm:$0xff]
      %v4987 = vld [vmem:[%s614 + $0xb0] sm:$0xff]
      %v4988 = vld [vmem:[%s614 + $0xc0] sm:$0xff]
      %v4989 = vld [vmem:[%s614 + $0xc8] sm:$0xff]
      %v4990 = vld [vmem:[%s614 + $0xd8] sm:$0xff]
      %v4991 = vld [vmem:[%s614 + $0xe0] sm:$0xff]
      %v4992 = vld [vmem:[%s614 + $0xf0] sm:$0xff]
      %v4993 = vld [vmem:[%s614 + $0xf8] sm:$0xff]
      %v4994 = vld [vmem:[%s614 + $0x108] sm:$0xff]
      %v4995 = vld [vmem:[%s614 + $0x110] sm:$0xff]
      %v4996 = vld [vmem:[%s614 + $0x120] sm:$0xff]
      %v4997 = vld [vmem:[%s614 + $0x128] sm:$0xff]
      %v4998 = vld [vmem:[%s614 + $0x138] sm:$0xff]
      %v4999 = vld [vmem:[%s614 + $0x140] sm:$0xff]
      %v5000 = vld [vmem:[%s614 + $0x150] sm:$0xff]
      %v5001 = vld [vmem:[%s614 + $0x158] sm:$0xff]
      %v5002 = vld [vmem:[%s614 + $0x168] sm:$0xff]
      %v5003 = vld [vmem:[%s614 + $0x170] sm:$0xff]
      %v5004 = vpack.c.bf16 %v4973, %v4972
      %v5005 = vpack.c.bf16 %v4975, %v4974
      %v5006 = vpack.c.bf16 %v4977, %v4976
      %v5007 = vpack.c.bf16 %v4979, %v4978
      %v5008 = vpack.c.bf16 %v4981, %v4980
      %v5009 = vpack.c.bf16 %v4983, %v4982
      %v5010 = vpack.c.bf16 %v4985, %v4984
      %v5011 = vpack.c.bf16 %v4987, %v4986
      %v5012 = vpack.c.bf16 %v4989, %v4988
      %v5013 = vpack.c.bf16 %v4991, %v4990
      %v5014 = vpack.c.bf16 %v4993, %v4992
      %v5015 = vpack.c.bf16 %v4995, %v4994
      %v5016 = vpack.c.bf16 %v4997, %v4996
      %v5017 = vpack.c.bf16 %v4999, %v4998
      %v5018 = vpack.c.bf16 %v5001, %v5000
      %v5019 = vpack.c.bf16 %v5003, %v5002
      %5036 = vrot.lane.b32.xlu0 %v5004, 28
      %v5037 = vpop.permute.xlu0 %5036
      %5038 = vrot.lane.b32.xlu0 %v5005, 28
      %v5039 = vpop.permute.xlu0 %5038
      %5040 = vrot.lane.b32.xlu0 %v5006, 28
      %v5041 = vpop.permute.xlu0 %5040
      %5042 = vrot.lane.b32.xlu0 %v5007, 28
      %v5043 = vpop.permute.xlu0 %5042
      %5044 = vrot.lane.b32.xlu0 %v5008, 28
      %v5045 = vpop.permute.xlu0 %5044
      %5046 = vrot.lane.b32.xlu0 %v5009, 28
      %v5047 = vpop.permute.xlu0 %5046
      %5048 = vrot.lane.b32.xlu0 %v5010, 28
      %v5049 = vpop.permute.xlu0 %5048
      %5050 = vrot.lane.b32.xlu0 %v5011, 28
      %v5051 = vpop.permute.xlu0 %5050
      %5052 = vrot.lane.b32.xlu0 %v5012, 28
      %v5053 = vpop.permute.xlu0 %5052
      %5054 = vrot.lane.b32.xlu0 %v5013, 28
      %v5055 = vpop.permute.xlu0 %5054
      %5056 = vrot.lane.b32.xlu0 %v5014, 28
      %v5057 = vpop.permute.xlu0 %5056
      %5058 = vrot.lane.b32.xlu0 %v5015, 28
      %v5059 = vpop.permute.xlu0 %5058
      %5060 = vrot.lane.b32.xlu0 %v5016, 28
      %v5061 = vpop.permute.xlu0 %5060
      %5062 = vrot.lane.b32.xlu0 %v5017, 28
      %v5063 = vpop.permute.xlu0 %5062
      %5064 = vrot.lane.b32.xlu0 %v5018, 28
      %v5065 = vpop.permute.xlu0 %5064
      %5066 = vrot.lane.b32.xlu0 %v5019, 28
      %v5067 = vpop.permute.xlu0 %5066
      %vm5084 = vcmask 261344
      %5085 = vst.msk [vmem:[#allocation5] sm:$0xff] %vm5084, %v5037
      %5086 = vst.msk [vmem:[#allocation5 + $0x8] sm:$0xff] %vm5084, %v5039
      %5087 = vst.msk [vmem:[#allocation5 + $0x10] sm:$0xff] %vm5084, %v5041
      %5088 = vst.msk [vmem:[#allocation5 + $0x18] sm:$0xff] %vm5084, %v5043
      %5089 = vst.msk [vmem:[#allocation5 + $0x20] sm:$0xff] %vm5084, %v5045
      %5090 = vst.msk [vmem:[#allocation5 + $0x28] sm:$0xff] %vm5084, %v5047
      %5091 = vst.msk [vmem:[#allocation5 + $0x30] sm:$0xff] %vm5084, %v5049
      %5092 = vst.msk [vmem:[#allocation5 + $0x38] sm:$0xff] %vm5084, %v5051
      %5093 = vst.msk [vmem:[#allocation5 + $0x40] sm:$0xff] %vm5084, %v5053
      %5094 = vst.msk [vmem:[#allocation5 + $0x48] sm:$0xff] %vm5084, %v5055
      %5095 = vst.msk [vmem:[#allocation5 + $0x50] sm:$0xff] %vm5084, %v5057
      %5096 = vst.msk [vmem:[#allocation5 + $0x58] sm:$0xff] %vm5084, %v5059
      %5097 = vst.msk [vmem:[#allocation5 + $0x60] sm:$0xff] %vm5084, %v5061
      %5098 = vst.msk [vmem:[#allocation5 + $0x68] sm:$0xff] %vm5084, %v5063
      %5099 = vst.msk [vmem:[#allocation5 + $0x70] sm:$0xff] %vm5084, %v5065
      %5100 = vst.msk [vmem:[#allocation5 + $0x78] sm:$0xff] %vm5084, %v5067
      %v5101 = vld [vmem:[%s4101 + $0x1] sm:$0xff]
      %v5102 = vld [vmem:[%s4101 + $0x9] sm:$0xff]
      %v5103 = vld [vmem:[%s4101 + $0x19] sm:$0xff]
      %v5104 = vld [vmem:[%s4101 + $0x21] sm:$0xff]
      %v5105 = vld [vmem:[%s4101 + $0x31] sm:$0xff]
      %v5106 = vld [vmem:[%s4101 + $0x39] sm:$0xff]
      %v5107 = vld [vmem:[%s4101 + $0x49] sm:$0xff]
      %v5108 = vld [vmem:[%s4101 + $0x51] sm:$0xff]
      %v5109 = vld [vmem:[%s4101 + $0x61] sm:$0xff]
      %v5110 = vld [vmem:[%s4101 + $0x69] sm:$0xff]
      %v5111 = vld [vmem:[%s4101 + $0x79] sm:$0xff]
      %v5112 = vld [vmem:[%s4101 + $0x81] sm:$0xff]
      %v5113 = vld [vmem:[%s4101 + $0x91] sm:$0xff]
      %v5114 = vld [vmem:[%s4101 + $0x99] sm:$0xff]
      %v5115 = vld [vmem:[%s4101 + $0xa9] sm:$0xff]
      %v5116 = vld [vmem:[%s4101 + $0xb1] sm:$0xff]
      %v5117 = vld [vmem:[%s4101 + $0xc1] sm:$0xff]
      %v5118 = vld [vmem:[%s4101 + $0xc9] sm:$0xff]
      %v5119 = vld [vmem:[%s4101 + $0xd9] sm:$0xff]
      %v5120 = vld [vmem:[%s4101 + $0xe1] sm:$0xff]
      %v5121 = vld [vmem:[%s4101 + $0xf1] sm:$0xff]
      %v5122 = vld [vmem:[%s4101 + $0xf9] sm:$0xff]
      %v5123 = vld [vmem:[%s4101 + $0x109] sm:$0xff]
      %v5124 = vld [vmem:[%s4101 + $0x111] sm:$0xff]
      %v5125 = vld [vmem:[%s4101 + $0x121] sm:$0xff]
      %v5126 = vld [vmem:[%s4101 + $0x129] sm:$0xff]
      %v5127 = vld [vmem:[%s4101 + $0x139] sm:$0xff]
      %v5128 = vld [vmem:[%s4101 + $0x141] sm:$0xff]
      %v5129 = vld [vmem:[%s4101 + $0x151] sm:$0xff]
      %v5130 = vld [vmem:[%s4101 + $0x159] sm:$0xff]
      %v5131 = vld [vmem:[%s4101 + $0x169] sm:$0xff]
      %v5132 = vld [vmem:[%s4101 + $0x171] sm:$0xff]
      %v5133 = vpack.c.bf16 %v5102, %v5101
      %v5134 = vpack.c.bf16 %v5104, %v5103
      %v5135 = vpack.c.bf16 %v5106, %v5105
      %v5136 = vpack.c.bf16 %v5108, %v5107
      %v5137 = vpack.c.bf16 %v5110, %v5109
      %v5138 = vpack.c.bf16 %v5112, %v5111
      %v5139 = vpack.c.bf16 %v5114, %v5113
      %v5140 = vpack.c.bf16 %v5116, %v5115
      %v5141 = vpack.c.bf16 %v5118, %v5117
      %v5142 = vpack.c.bf16 %v5120, %v5119
      %v5143 = vpack.c.bf16 %v5122, %v5121
      %v5144 = vpack.c.bf16 %v5124, %v5123
      %v5145 = vpack.c.bf16 %v5126, %v5125
      %v5146 = vpack.c.bf16 %v5128, %v5127
      %v5147 = vpack.c.bf16 %v5130, %v5129
      %v5148 = vpack.c.bf16 %v5132, %v5131
      %5165 = vrot.lane.b32.xlu0 %v5133, 32
      %v5166 = vpop.permute.xlu0 %5165
      %5167 = vrot.lane.b32.xlu0 %v5134, 32
      %v5168 = vpop.permute.xlu0 %5167
      %5169 = vrot.lane.b32.xlu0 %v5135, 32
      %v5170 = vpop.permute.xlu0 %5169
      %5171 = vrot.lane.b32.xlu0 %v5136, 32
      %v5172 = vpop.permute.xlu0 %5171
      %5173 = vrot.lane.b32.xlu0 %v5137, 32
      %v5174 = vpop.permute.xlu0 %5173
      %5175 = vrot.lane.b32.xlu0 %v5138, 32
      %v5176 = vpop.permute.xlu0 %5175
      %5177 = vrot.lane.b32.xlu0 %v5139, 32
      %v5178 = vpop.permute.xlu0 %5177
      %5179 = vrot.lane.b32.xlu0 %v5140, 32
      %v5180 = vpop.permute.xlu0 %5179
      %5181 = vrot.lane.b32.xlu0 %v5141, 32
      %v5182 = vpop.permute.xlu0 %5181
      %5183 = vrot.lane.b32.xlu0 %v5142, 32
      %v5184 = vpop.permute.xlu0 %5183
      %5185 = vrot.lane.b32.xlu0 %v5143, 32
      %v5186 = vpop.permute.xlu0 %5185
      %5187 = vrot.lane.b32.xlu0 %v5144, 32
      %v5188 = vpop.permute.xlu0 %5187
      %5189 = vrot.lane.b32.xlu0 %v5145, 32
      %v5190 = vpop.permute.xlu0 %5189
      %5191 = vrot.lane.b32.xlu0 %v5146, 32
      %v5192 = vpop.permute.xlu0 %5191
      %5193 = vrot.lane.b32.xlu0 %v5147, 32
      %v5194 = vpop.permute.xlu0 %5193
      %5195 = vrot.lane.b32.xlu0 %v5148, 32
      %v5196 = vpop.permute.xlu0 %5195
      %vm5213 = vcmask 294144
      %5214 = vst.msk [vmem:[#allocation5] sm:$0xff] %vm5213, %v5166
      %5215 = vst.msk [vmem:[#allocation5 + $0x8] sm:$0xff] %vm5213, %v5168
      %5216 = vst.msk [vmem:[#allocation5 + $0x10] sm:$0xff] %vm5213, %v5170
      %5217 = vst.msk [vmem:[#allocation5 + $0x18] sm:$0xff] %vm5213, %v5172
      %5218 = vst.msk [vmem:[#allocation5 + $0x20] sm:$0xff] %vm5213, %v5174
      %5219 = vst.msk [vmem:[#allocation5 + $0x28] sm:$0xff] %vm5213, %v5176
      %5220 = vst.msk [vmem:[#allocation5 + $0x30] sm:$0xff] %vm5213, %v5178
      %5221 = vst.msk [vmem:[#allocation5 + $0x38] sm:$0xff] %vm5213, %v5180
      %5222 = vst.msk [vmem:[#allocation5 + $0x40] sm:$0xff] %vm5213, %v5182
      %5223 = vst.msk [vmem:[#allocation5 + $0x48] sm:$0xff] %vm5213, %v5184
      %5224 = vst.msk [vmem:[#allocation5 + $0x50] sm:$0xff] %vm5213, %v5186
      %5225 = vst.msk [vmem:[#allocation5 + $0x58] sm:$0xff] %vm5213, %v5188
      %5226 = vst.msk [vmem:[#allocation5 + $0x60] sm:$0xff] %vm5213, %v5190
      %5227 = vst.msk [vmem:[#allocation5 + $0x68] sm:$0xff] %vm5213, %v5192
      %5228 = vst.msk [vmem:[#allocation5 + $0x70] sm:$0xff] %vm5213, %v5194
      %5229 = vst.msk [vmem:[#allocation5 + $0x78] sm:$0xff] %vm5213, %v5196
      %v5230 = vld [vmem:[%s614 + $0x1] sm:$0xff]
      %v5231 = vld [vmem:[%s614 + $0x9] sm:$0xff]
      %v5232 = vld [vmem:[%s614 + $0x19] sm:$0xff]
      %v5233 = vld [vmem:[%s614 + $0x21] sm:$0xff]
      %v5234 = vld [vmem:[%s614 + $0x31] sm:$0xff]
      %v5235 = vld [vmem:[%s614 + $0x39] sm:$0xff]
      %v5236 = vld [vmem:[%s614 + $0x49] sm:$0xff]
      %v5237 = vld [vmem:[%s614 + $0x51] sm:$0xff]
      %v5238 = vld [vmem:[%s614 + $0x61] sm:$0xff]
      %v5239 = vld [vmem:[%s614 + $0x69] sm:$0xff]
      %v5240 = vld [vmem:[%s614 + $0x79] sm:$0xff]
      %v5241 = vld [vmem:[%s614 + $0x81] sm:$0xff]
      %v5242 = vld [vmem:[%s614 + $0x91] sm:$0xff]
      %v5243 = vld [vmem:[%s614 + $0x99] sm:$0xff]
      %v5244 = vld [vmem:[%s614 + $0xa9] sm:$0xff]
      %v5245 = vld [vmem:[%s614 + $0xb1] sm:$0xff]
      %v5246 = vld [vmem:[%s614 + $0xc1] sm:$0xff]
      %v5247 = vld [vmem:[%s614 + $0xc9] sm:$0xff]
      %v5248 = vld [vmem:[%s614 + $0xd9] sm:$0xff]
      %v5249 = vld [vmem:[%s614 + $0xe1] sm:$0xff]
      %v5250 = vld [vmem:[%s614 + $0xf1] sm:$0xff]
      %v5251 = vld [vmem:[%s614 + $0xf9] sm:$0xff]
      %v5252 = vld [vmem:[%s614 + $0x109] sm:$0xff]
      %v5253 = vld [vmem:[%s614 + $0x111] sm:$0xff]
      %v5254 = vld [vmem:[%s614 + $0x121] sm:$0xff]
      %v5255 = vld [vmem:[%s614 + $0x129] sm:$0xff]
      %v5256 = vld [vmem:[%s614 + $0x139] sm:$0xff]
      %v5257 = vld [vmem:[%s614 + $0x141] sm:$0xff]
      %v5258 = vld [vmem:[%s614 + $0x151] sm:$0xff]
      %v5259 = vld [vmem:[%s614 + $0x159] sm:$0xff]
      %v5260 = vld [vmem:[%s614 + $0x169] sm:$0xff]
      %v5261 = vld [vmem:[%s614 + $0x171] sm:$0xff]
      %v5262 = vpack.c.bf16 %v5231, %v5230
      %v5263 = vpack.c.bf16 %v5233, %v5232
      %v5264 = vpack.c.bf16 %v5235, %v5234
      %v5265 = vpack.c.bf16 %v5237, %v5236
      %v5266 = vpack.c.bf16 %v5239, %v5238
      %v5267 = vpack.c.bf16 %v5241, %v5240
      %v5268 = vpack.c.bf16 %v5243, %v5242
      %v5269 = vpack.c.bf16 %v5245, %v5244
      %v5270 = vpack.c.bf16 %v5247, %v5246
      %v5271 = vpack.c.bf16 %v5249, %v5248
      %v5272 = vpack.c.bf16 %v5251, %v5250
      %v5273 = vpack.c.bf16 %v5253, %v5252
      %v5274 = vpack.c.bf16 %v5255, %v5254
      %v5275 = vpack.c.bf16 %v5257, %v5256
      %v5276 = vpack.c.bf16 %v5259, %v5258
      %v5277 = vpack.c.bf16 %v5261, %v5260
      %5294 = vrot.lane.b32.xlu0 %v5262, 36
      %v5295 = vpop.permute.xlu0 %5294
      %5296 = vrot.lane.b32.xlu0 %v5263, 36
      %v5297 = vpop.permute.xlu0 %5296
      %5298 = vrot.lane.b32.xlu0 %v5264, 36
      %v5299 = vpop.permute.xlu0 %5298
      %5300 = vrot.lane.b32.xlu0 %v5265, 36
      %v5301 = vpop.permute.xlu0 %5300
      %5302 = vrot.lane.b32.xlu0 %v5266, 36
      %v5303 = vpop.permute.xlu0 %5302
      %5304 = vrot.lane.b32.xlu0 %v5267, 36
      %v5305 = vpop.permute.xlu0 %5304
      %5306 = vrot.lane.b32.xlu0 %v5268, 36
      %v5307 = vpop.permute.xlu0 %5306
      %5308 = vrot.lane.b32.xlu0 %v5269, 36
      %v5309 = vpop.permute.xlu0 %5308
      %5310 = vrot.lane.b32.xlu0 %v5270, 36
      %v5311 = vpop.permute.xlu0 %5310
      %5312 = vrot.lane.b32.xlu0 %v5271, 36
      %v5313 = vpop.permute.xlu0 %5312
      %5314 = vrot.lane.b32.xlu0 %v5272, 36
      %v5315 = vpop.permute.xlu0 %5314
      %5316 = vrot.lane.b32.xlu0 %v5273, 36
      %v5317 = vpop.permute.xlu0 %5316
      %5318 = vrot.lane.b32.xlu0 %v5274, 36
      %v5319 = vpop.permute.xlu0 %5318
      %5320 = vrot.lane.b32.xlu0 %v5275, 36
      %v5321 = vpop.permute.xlu0 %5320
      %5322 = vrot.lane.b32.xlu0 %v5276, 36
      %v5323 = vpop.permute.xlu0 %5322
      %5324 = vrot.lane.b32.xlu0 %v5277, 36
      %v5325 = vpop.permute.xlu0 %5324
      %vm5342 = vcmask 326944
      %5343 = vst.msk [vmem:[#allocation5] sm:$0xff] %vm5342, %v5295
      %5344 = vst.msk [vmem:[#allocation5 + $0x8] sm:$0xff] %vm5342, %v5297
      %5345 = vst.msk [vmem:[#allocation5 + $0x10] sm:$0xff] %vm5342, %v5299
      %5346 = vst.msk [vmem:[#allocation5 + $0x18] sm:$0xff] %vm5342, %v5301
      %5347 = vst.msk [vmem:[#allocation5 + $0x20] sm:$0xff] %vm5342, %v5303
      %5348 = vst.msk [vmem:[#allocation5 + $0x28] sm:$0xff] %vm5342, %v5305
      %5349 = vst.msk [vmem:[#allocation5 + $0x30] sm:$0xff] %vm5342, %v5307
      %5350 = vst.msk [vmem:[#allocation5 + $0x38] sm:$0xff] %vm5342, %v5309
      %5351 = vst.msk [vmem:[#allocation5 + $0x40] sm:$0xff] %vm5342, %v5311
      %5352 = vst.msk [vmem:[#allocation5 + $0x48] sm:$0xff] %vm5342, %v5313
      %5353 = vst.msk [vmem:[#allocation5 + $0x50] sm:$0xff] %vm5342, %v5315
      %5354 = vst.msk [vmem:[#allocation5 + $0x58] sm:$0xff] %vm5342, %v5317
      %5355 = vst.msk [vmem:[#allocation5 + $0x60] sm:$0xff] %vm5342, %v5319
      %5356 = vst.msk [vmem:[#allocation5 + $0x68] sm:$0xff] %vm5342, %v5321
      %5357 = vst.msk [vmem:[#allocation5 + $0x70] sm:$0xff] %vm5342, %v5323
      %5358 = vst.msk [vmem:[#allocation5 + $0x78] sm:$0xff] %vm5342, %v5325
      %v5359 = vld [vmem:[%s4101 + $0x2] sm:$0xff]
      %v5360 = vld [vmem:[%s4101 + $0xa] sm:$0xff]
      %v5361 = vld [vmem:[%s4101 + $0x1a] sm:$0xff]
      %v5362 = vld [vmem:[%s4101 + $0x22] sm:$0xff]
      %v5363 = vld [vmem:[%s4101 + $0x32] sm:$0xff]
      %v5364 = vld [vmem:[%s4101 + $0x3a] sm:$0xff]
      %v5365 = vld [vmem:[%s4101 + $0x4a] sm:$0xff]
      %v5366 = vld [vmem:[%s4101 + $0x52] sm:$0xff]
      %v5367 = vld [vmem:[%s4101 + $0x62] sm:$0xff]
      %v5368 = vld [vmem:[%s4101 + $0x6a] sm:$0xff]
      %v5369 = vld [vmem:[%s4101 + $0x7a] sm:$0xff]
      %v5370 = vld [vmem:[%s4101 + $0x82] sm:$0xff]
      %v5371 = vld [vmem:[%s4101 + $0x92] sm:$0xff]
      %v5372 = vld [vmem:[%s4101 + $0x9a] sm:$0xff]
      %v5373 = vld [vmem:[%s4101 + $0xaa] sm:$0xff]
      %v5374 = vld [vmem:[%s4101 + $0xb2] sm:$0xff]
      %v5375 = vld [vmem:[%s4101 + $0xc2] sm:$0xff]
      %v5376 = vld [vmem:[%s4101 + $0xca] sm:$0xff]
      %v5377 = vld [vmem:[%s4101 + $0xda] sm:$0xff]
      %v5378 = vld [vmem:[%s4101 + $0xe2] sm:$0xff]
      %v5379 = vld [vmem:[%s4101 + $0xf2] sm:$0xff]
      %v5380 = vld [vmem:[%s4101 + $0xfa] sm:$0xff]
      %v5381 = vld [vmem:[%s4101 + $0x10a] sm:$0xff]
      %v5382 = vld [vmem:[%s4101 + $0x112] sm:$0xff]
      %v5383 = vld [vmem:[%s4101 + $0x122] sm:$0xff]
      %v5384 = vld [vmem:[%s4101 + $0x12a] sm:$0xff]
      %v5385 = vld [vmem:[%s4101 + $0x13a] sm:$0xff]
      %v5386 = vld [vmem:[%s4101 + $0x142] sm:$0xff]
      %v5387 = vld [vmem:[%s4101 + $0x152] sm:$0xff]
      %v5388 = vld [vmem:[%s4101 + $0x15a] sm:$0xff]
      %v5389 = vld [vmem:[%s4101 + $0x16a] sm:$0xff]
      %v5390 = vld [vmem:[%s4101 + $0x172] sm:$0xff]
      %v5391 = vpack.c.bf16 %v5360, %v5359
      %v5392 = vpack.c.bf16 %v5362, %v5361
      %v5393 = vpack.c.bf16 %v5364, %v5363
      %v5394 = vpack.c.bf16 %v5366, %v5365
      %v5395 = vpack.c.bf16 %v5368, %v5367
      %v5396 = vpack.c.bf16 %v5370, %v5369
      %v5397 = vpack.c.bf16 %v5372, %v5371
      %v5398 = vpack.c.bf16 %v5374, %v5373
      %v5399 = vpack.c.bf16 %v5376, %v5375
      %v5400 = vpack.c.bf16 %v5378, %v5377
      %v5401 = vpack.c.bf16 %v5380, %v5379
      %v5402 = vpack.c.bf16 %v5382, %v5381
      %v5403 = vpack.c.bf16 %v5384, %v5383
      %v5404 = vpack.c.bf16 %v5386, %v5385
      %v5405 = vpack.c.bf16 %v5388, %v5387
      %v5406 = vpack.c.bf16 %v5390, %v5389
      %5423 = vrot.lane.b32.xlu0 %v5391, 40
      %v5424 = vpop.permute.xlu0 %5423
      %5425 = vrot.lane.b32.xlu0 %v5392, 40
      %v5426 = vpop.permute.xlu0 %5425
      %5427 = vrot.lane.b32.xlu0 %v5393, 40
      %v5428 = vpop.permute.xlu0 %5427
      %5429 = vrot.lane.b32.xlu0 %v5394, 40
      %v5430 = vpop.permute.xlu0 %5429
      %5431 = vrot.lane.b32.xlu0 %v5395, 40
      %v5432 = vpop.permute.xlu0 %5431
      %5433 = vrot.lane.b32.xlu0 %v5396, 40
      %v5434 = vpop.permute.xlu0 %5433
      %5435 = vrot.lane.b32.xlu0 %v5397, 40
      %v5436 = vpop.permute.xlu0 %5435
      %5437 = vrot.lane.b32.xlu0 %v5398, 40
      %v5438 = vpop.permute.xlu0 %5437
      %5439 = vrot.lane.b32.xlu0 %v5399, 40
      %v5440 = vpop.permute.xlu0 %5439
      %5441 = vrot.lane.b32.xlu0 %v5400, 40
      %v5442 = vpop.permute.xlu0 %5441
      %5443 = vrot.lane.b32.xlu0 %v5401, 40
      %v5444 = vpop.permute.xlu0 %5443
      %5445 = vrot.lane.b32.xlu0 %v5402, 40
      %v5446 = vpop.permute.xlu0 %5445
      %5447 = vrot.lane.b32.xlu0 %v5403, 40
      %v5448 = vpop.permute.xlu0 %5447
      %5449 = vrot.lane.b32.xlu0 %v5404, 40
      %v5450 = vpop.permute.xlu0 %5449
      %5451 = vrot.lane.b32.xlu0 %v5405, 40
      %v5452 = vpop.permute.xlu0 %5451
      %5453 = vrot.lane.b32.xlu0 %v5406, 40
      %v5454 = vpop.permute.xlu0 %5453
      %vm5471 = vcmask 359744
      %5472 = vst.msk [vmem:[#allocation5] sm:$0xff] %vm5471, %v5424
      %5473 = vst.msk [vmem:[#allocation5 + $0x8] sm:$0xff] %vm5471, %v5426
      %5474 = vst.msk [vmem:[#allocation5 + $0x10] sm:$0xff] %vm5471, %v5428
      %5475 = vst.msk [vmem:[#allocation5 + $0x18] sm:$0xff] %vm5471, %v5430
      %5476 = vst.msk [vmem:[#allocation5 + $0x20] sm:$0xff] %vm5471, %v5432
      %5477 = vst.msk [vmem:[#allocation5 + $0x28] sm:$0xff] %vm5471, %v5434
      %5478 = vst.msk [vmem:[#allocation5 + $0x30] sm:$0xff] %vm5471, %v5436
      %5479 = vst.msk [vmem:[#allocation5 + $0x38] sm:$0xff] %vm5471, %v5438
      %5480 = vst.msk [vmem:[#allocation5 + $0x40] sm:$0xff] %vm5471, %v5440
      %5481 = vst.msk [vmem:[#allocation5 + $0x48] sm:$0xff] %vm5471, %v5442
      %5482 = vst.msk [vmem:[#allocation5 + $0x50] sm:$0xff] %vm5471, %v5444
      %5483 = vst.msk [vmem:[#allocation5 + $0x58] sm:$0xff] %vm5471, %v5446
      %5484 = vst.msk [vmem:[#allocation5 + $0x60] sm:$0xff] %vm5471, %v5448
      %5485 = vst.msk [vmem:[#allocation5 + $0x68] sm:$0xff] %vm5471, %v5450
      %5486 = vst.msk [vmem:[#allocation5 + $0x70] sm:$0xff] %vm5471, %v5452
      %5487 = vst.msk [vmem:[#allocation5 + $0x78] sm:$0xff] %vm5471, %v5454
      %v5488 = vld [vmem:[%s614 + $0x2] sm:$0xff]
      %v5489 = vld [vmem:[%s614 + $0xa] sm:$0xff]
      %v5490 = vld [vmem:[%s614 + $0x1a] sm:$0xff]
      %v5491 = vld [vmem:[%s614 + $0x22] sm:$0xff]
      %v5492 = vld [vmem:[%s614 + $0x32] sm:$0xff]
      %v5493 = vld [vmem:[%s614 + $0x3a] sm:$0xff]
      %v5494 = vld [vmem:[%s614 + $0x4a] sm:$0xff]
      %v5495 = vld [vmem:[%s614 + $0x52] sm:$0xff]
      %v5496 = vld [vmem:[%s614 + $0x62] sm:$0xff]
      %v5497 = vld [vmem:[%s614 + $0x6a] sm:$0xff]
      %v5498 = vld [vmem:[%s614 + $0x7a] sm:$0xff]
      %v5499 = vld [vmem:[%s614 + $0x82] sm:$0xff]
      %v5500 = vld [vmem:[%s614 + $0x92] sm:$0xff]
      %v5501 = vld [vmem:[%s614 + $0x9a] sm:$0xff]
      %v5502 = vld [vmem:[%s614 + $0xaa] sm:$0xff]
      %v5503 = vld [vmem:[%s614 + $0xb2] sm:$0xff]
      %v5504 = vld [vmem:[%s614 + $0xc2] sm:$0xff]
      %v5505 = vld [vmem:[%s614 + $0xca] sm:$0xff]
      %v5506 = vld [vmem:[%s614 + $0xda] sm:$0xff]
      %v5507 = vld [vmem:[%s614 + $0xe2] sm:$0xff]
      %v5508 = vld [vmem:[%s614 + $0xf2] sm:$0xff]
      %v5509 = vld [vmem:[%s614 + $0xfa] sm:$0xff]
      %v5510 = vld [vmem:[%s614 + $0x10a] sm:$0xff]
      %v5511 = vld [vmem:[%s614 + $0x112] sm:$0xff]
      %v5512 = vld [vmem:[%s614 + $0x122] sm:$0xff]
      %v5513 = vld [vmem:[%s614 + $0x12a] sm:$0xff]
      %v5514 = vld [vmem:[%s614 + $0x13a] sm:$0xff]
      %v5515 = vld [vmem:[%s614 + $0x142] sm:$0xff]
      %v5516 = vld [vmem:[%s614 + $0x152] sm:$0xff]
      %v5517 = vld [vmem:[%s614 + $0x15a] sm:$0xff]
      %v5518 = vld [vmem:[%s614 + $0x16a] sm:$0xff]
      %v5519 = vld [vmem:[%s614 + $0x172] sm:$0xff]
      %v5520 = vpack.c.bf16 %v5489, %v5488
      %v5521 = vpack.c.bf16 %v5491, %v5490
      %v5522 = vpack.c.bf16 %v5493, %v5492
      %v5523 = vpack.c.bf16 %v5495, %v5494
      %v5524 = vpack.c.bf16 %v5497, %v5496
      %v5525 = vpack.c.bf16 %v5499, %v5498
      %v5526 = vpack.c.bf16 %v5501, %v5500
      %v5527 = vpack.c.bf16 %v5503, %v5502
      %v5528 = vpack.c.bf16 %v5505, %v5504
      %v5529 = vpack.c.bf16 %v5507, %v5506
      %v5530 = vpack.c.bf16 %v5509, %v5508
      %v5531 = vpack.c.bf16 %v5511, %v5510
      %v5532 = vpack.c.bf16 %v5513, %v5512
      %v5533 = vpack.c.bf16 %v5515, %v5514
      %v5534 = vpack.c.bf16 %v5517, %v5516
      %v5535 = vpack.c.bf16 %v5519, %v5518
      %5552 = vrot.lane.b32.xlu0 %v5520, 44
      %v5553 = vpop.permute.xlu0 %5552
      %5554 = vrot.lane.b32.xlu0 %v5521, 44
      %v5555 = vpop.permute.xlu0 %5554
      %5556 = vrot.lane.b32.xlu0 %v5522, 44
      %v5557 = vpop.permute.xlu0 %5556
      %5558 = vrot.lane.b32.xlu0 %v5523, 44
      %v5559 = vpop.permute.xlu0 %5558
      %5560 = vrot.lane.b32.xlu0 %v5524, 44
      %v5561 = vpop.permute.xlu0 %5560
      %5562 = vrot.lane.b32.xlu0 %v5525, 44
      %v5563 = vpop.permute.xlu0 %5562
      %5564 = vrot.lane.b32.xlu0 %v5526, 44
      %v5565 = vpop.permute.xlu0 %5564
      %5566 = vrot.lane.b32.xlu0 %v5527, 44
      %v5567 = vpop.permute.xlu0 %5566
      %5568 = vrot.lane.b32.xlu0 %v5528, 44
      %v5569 = vpop.permute.xlu0 %5568
      %5570 = vrot.lane.b32.xlu0 %v5529, 44
      %v5571 = vpop.permute.xlu0 %5570
      %5572 = vrot.lane.b32.xlu0 %v5530, 44
      %v5573 = vpop.permute.xlu0 %5572
      %5574 = vrot.lane.b32.xlu0 %v5531, 44
      %v5575 = vpop.permute.xlu0 %5574
      %5576 = vrot.lane.b32.xlu0 %v5532, 44
      %v5577 = vpop.permute.xlu0 %5576
      %5578 = vrot.lane.b32.xlu0 %v5533, 44
      %v5579 = vpop.permute.xlu0 %5578
      %5580 = vrot.lane.b32.xlu0 %v5534, 44
      %v5581 = vpop.permute.xlu0 %5580
      %5582 = vrot.lane.b32.xlu0 %v5535, 44
      %v5583 = vpop.permute.xlu0 %5582
      %vm5600 = vcmask 392544
      %5601 = vst.msk [vmem:[#allocation5] sm:$0xff] %vm5600, %v5553
      %5602 = vst.msk [vmem:[#allocation5 + $0x8] sm:$0xff] %vm5600, %v5555
      %5603 = vst.msk [vmem:[#allocation5 + $0x10] sm:$0xff] %vm5600, %v5557
      %5604 = vst.msk [vmem:[#allocation5 + $0x18] sm:$0xff] %vm5600, %v5559
      %5605 = vst.msk [vmem:[#allocation5 + $0x20] sm:$0xff] %vm5600, %v5561
      %5606 = vst.msk [vmem:[#allocation5 + $0x28] sm:$0xff] %vm5600, %v5563
      %5607 = vst.msk [vmem:[#allocation5 + $0x30] sm:$0xff] %vm5600, %v5565
      %5608 = vst.msk [vmem:[#allocation5 + $0x38] sm:$0xff] %vm5600, %v5567
      %5609 = vst.msk [vmem:[#allocation5 + $0x40] sm:$0xff] %vm5600, %v5569
      %5610 = vst.msk [vmem:[#allocation5 + $0x48] sm:$0xff] %vm5600, %v5571
      %5611 = vst.msk [vmem:[#allocation5 + $0x50] sm:$0xff] %vm5600, %v5573
      %5612 = vst.msk [vmem:[#allocation5 + $0x58] sm:$0xff] %vm5600, %v5575
      %5613 = vst.msk [vmem:[#allocation5 + $0x60] sm:$0xff] %vm5600, %v5577
      %5614 = vst.msk [vmem:[#allocation5 + $0x68] sm:$0xff] %vm5600, %v5579
      %5615 = vst.msk [vmem:[#allocation5 + $0x70] sm:$0xff] %vm5600, %v5581
      %5616 = vst.msk [vmem:[#allocation5 + $0x78] sm:$0xff] %vm5600, %v5583
      %s5617 = scalar_lea.vmem [#allocation2], 48
      %v5618 = vld [vmem:[%s5617] sm:$0xff]
      %v5619 = vld [vmem:[%s5617 + $0x8] sm:$0xff]
      %v5620 = vld [vmem:[%s5617 + $0x18] sm:$0xff]
      %v5621 = vld [vmem:[%s5617 + $0x20] sm:$0xff]
      %v5622 = vld [vmem:[%s5617 + $0x30] sm:$0xff]
      %v5623 = vld [vmem:[%s5617 + $0x38] sm:$0xff]
      %v5624 = vld [vmem:[%s5617 + $0x48] sm:$0xff]
      %v5625 = vld [vmem:[%s5617 + $0x50] sm:$0xff]
      %v5626 = vld [vmem:[%s5617 + $0x60] sm:$0xff]
      %v5627 = vld [vmem:[%s5617 + $0x68] sm:$0xff]
      %v5628 = vld [vmem:[%s5617 + $0x78] sm:$0xff]
      %v5629 = vld [vmem:[%s5617 + $0x80] sm:$0xff]
      %v5630 = vld [vmem:[%s5617 + $0x90] sm:$0xff]
      %v5631 = vld [vmem:[%s5617 + $0x98] sm:$0xff]
      %v5632 = vld [vmem:[%s5617 + $0xa8] sm:$0xff]
      %v5633 = vld [vmem:[%s5617 + $0xb0] sm:$0xff]
      %v5634 = vld [vmem:[%s5617 + $0xc0] sm:$0xff]
      %v5635 = vld [vmem:[%s5617 + $0xc8] sm:$0xff]
      %v5636 = vld [vmem:[%s5617 + $0xd8] sm:$0xff]
      %v5637 = vld [vmem:[%s5617 + $0xe0] sm:$0xff]
      %v5638 = vld [vmem:[%s5617 + $0xf0] sm:$0xff]
      %v5639 = vld [vmem:[%s5617 + $0xf8] sm:$0xff]
      %v5640 = vld [vmem:[%s5617 + $0x108] sm:$0xff]
      %v5641 = vld [vmem:[%s5617 + $0x110] sm:$0xff]
      %v5642 = vld [vmem:[%s5617 + $0x120] sm:$0xff]
      %v5643 = vld [vmem:[%s5617 + $0x128] sm:$0xff]
      %v5644 = vld [vmem:[%s5617 + $0x138] sm:$0xff]
      %v5645 = vld [vmem:[%s5617 + $0x140] sm:$0xff]
      %v5646 = vld [vmem:[%s5617 + $0x150] sm:$0xff]
      %v5647 = vld [vmem:[%s5617 + $0x158] sm:$0xff]
      %v5648 = vld [vmem:[%s5617 + $0x168] sm:$0xff]
      %v5649 = vld [vmem:[%s5617 + $0x170] sm:$0xff]
      %v5650 = vpack.c.bf16 %v5619, %v5618
      %v5651 = vpack.c.bf16 %v5621, %v5620
      %v5652 = vpack.c.bf16 %v5623, %v5622
      %v5653 = vpack.c.bf16 %v5625, %v5624
      %v5654 = vpack.c.bf16 %v5627, %v5626
      %v5655 = vpack.c.bf16 %v5629, %v5628
      %v5656 = vpack.c.bf16 %v5631, %v5630
      %v5657 = vpack.c.bf16 %v5633, %v5632
      %v5658 = vpack.c.bf16 %v5635, %v5634
      %v5659 = vpack.c.bf16 %v5637, %v5636
      %v5660 = vpack.c.bf16 %v5639, %v5638
      %v5661 = vpack.c.bf16 %v5641, %v5640
      %v5662 = vpack.c.bf16 %v5643, %v5642
      %v5663 = vpack.c.bf16 %v5645, %v5644
      %v5664 = vpack.c.bf16 %v5647, %v5646
      %v5665 = vpack.c.bf16 %v5649, %v5648
      %5682 = vrot.lane.b32.xlu0 %v5650, 48
      %v5683 = vpop.permute.xlu0 %5682
      %5684 = vrot.lane.b32.xlu0 %v5651, 48
      %v5685 = vpop.permute.xlu0 %5684
      %5686 = vrot.lane.b32.xlu0 %v5652, 48
      %v5687 = vpop.permute.xlu0 %5686
      %5688 = vrot.lane.b32.xlu0 %v5653, 48
      %v5689 = vpop.permute.xlu0 %5688
      %5690 = vrot.lane.b32.xlu0 %v5654, 48
      %v5691 = vpop.permute.xlu0 %5690
      %5692 = vrot.lane.b32.xlu0 %v5655, 48
      %v5693 = vpop.permute.xlu0 %5692
      %5694 = vrot.lane.b32.xlu0 %v5656, 48
      %v5695 = vpop.permute.xlu0 %5694
      %5696 = vrot.lane.b32.xlu0 %v5657, 48
      %v5697 = vpop.permute.xlu0 %5696
      %5698 = vrot.lane.b32.xlu0 %v5658, 48
      %v5699 = vpop.permute.xlu0 %5698
      %5700 = vrot.lane.b32.xlu0 %v5659, 48
      %v5701 = vpop.permute.xlu0 %5700
      %5702 = vrot.lane.b32.xlu0 %v5660, 48
      %v5703 = vpop.permute.xlu0 %5702
      %5704 = vrot.lane.b32.xlu0 %v5661, 48
      %v5705 = vpop.permute.xlu0 %5704
      %5706 = vrot.lane.b32.xlu0 %v5662, 48
      %v5707 = vpop.permute.xlu0 %5706
      %5708 = vrot.lane.b32.xlu0 %v5663, 48
      %v5709 = vpop.permute.xlu0 %5708
      %5710 = vrot.lane.b32.xlu0 %v5664, 48
      %v5711 = vpop.permute.xlu0 %5710
      %5712 = vrot.lane.b32.xlu0 %v5665, 48
      %v5713 = vpop.permute.xlu0 %5712
      %vm5730 = vcmask 425344
      %5731 = vst.msk [vmem:[#allocation5] sm:$0xff] %vm5730, %v5683
      %5732 = vst.msk [vmem:[#allocation5 + $0x8] sm:$0xff] %vm5730, %v5685
      %5733 = vst.msk [vmem:[#allocation5 + $0x10] sm:$0xff] %vm5730, %v5687
      %5734 = vst.msk [vmem:[#allocation5 + $0x18] sm:$0xff] %vm5730, %v5689
      %5735 = vst.msk [vmem:[#allocation5 + $0x20] sm:$0xff] %vm5730, %v5691
      %5736 = vst.msk [vmem:[#allocation5 + $0x28] sm:$0xff] %vm5730, %v5693
      %5737 = vst.msk [vmem:[#allocation5 + $0x30] sm:$0xff] %vm5730, %v5695
      %5738 = vst.msk [vmem:[#allocation5 + $0x38] sm:$0xff] %vm5730, %v5697
      %5739 = vst.msk [vmem:[#allocation5 + $0x40] sm:$0xff] %vm5730, %v5699
      %5740 = vst.msk [vmem:[#allocation5 + $0x48] sm:$0xff] %vm5730, %v5701
      %5741 = vst.msk [vmem:[#allocation5 + $0x50] sm:$0xff] %vm5730, %v5703
      %5742 = vst.msk [vmem:[#allocation5 + $0x58] sm:$0xff] %vm5730, %v5705
      %5743 = vst.msk [vmem:[#allocation5 + $0x60] sm:$0xff] %vm5730, %v5707
      %5744 = vst.msk [vmem:[#allocation5 + $0x68] sm:$0xff] %vm5730, %v5709
      %5745 = vst.msk [vmem:[#allocation5 + $0x70] sm:$0xff] %vm5730, %v5711
      %5746 = vst.msk [vmem:[#allocation5 + $0x78] sm:$0xff] %vm5730, %v5713
      %s5747 = scalar_lea.vmem [#allocation3], 48
      %v5748 = vld [vmem:[%s5747] sm:$0xff]
      %v5749 = vld [vmem:[%s5747 + $0x8] sm:$0xff]
      %v5750 = vld [vmem:[%s5747 + $0x18] sm:$0xff]
      %v5751 = vld [vmem:[%s5747 + $0x20] sm:$0xff]
      %v5752 = vld [vmem:[%s5747 + $0x30] sm:$0xff]
      %v5753 = vld [vmem:[%s5747 + $0x38] sm:$0xff]
      %v5754 = vld [vmem:[%s5747 + $0x48] sm:$0xff]
      %v5755 = vld [vmem:[%s5747 + $0x50] sm:$0xff]
      %v5756 = vld [vmem:[%s5747 + $0x60] sm:$0xff]
      %v5757 = vld [vmem:[%s5747 + $0x68] sm:$0xff]
      %v5758 = vld [vmem:[%s5747 + $0x78] sm:$0xff]
      %v5759 = vld [vmem:[%s5747 + $0x80] sm:$0xff]
      %v5760 = vld [vmem:[%s5747 + $0x90] sm:$0xff]
      %v5761 = vld [vmem:[%s5747 + $0x98] sm:$0xff]
      %v5762 = vld [vmem:[%s5747 + $0xa8] sm:$0xff]
      %v5763 = vld [vmem:[%s5747 + $0xb0] sm:$0xff]
      %v5764 = vld [vmem:[%s5747 + $0xc0] sm:$0xff]
      %v5765 = vld [vmem:[%s5747 + $0xc8] sm:$0xff]
      %v5766 = vld [vmem:[%s5747 + $0xd8] sm:$0xff]
      %v5767 = vld [vmem:[%s5747 + $0xe0] sm:$0xff]
      %v5768 = vld [vmem:[%s5747 + $0xf0] sm:$0xff]
      %v5769 = vld [vmem:[%s5747 + $0xf8] sm:$0xff]
      %v5770 = vld [vmem:[%s5747 + $0x108] sm:$0xff]
      %v5771 = vld [vmem:[%s5747 + $0x110] sm:$0xff]
      %v5772 = vld [vmem:[%s5747 + $0x120] sm:$0xff]
      %v5773 = vld [vmem:[%s5747 + $0x128] sm:$0xff]
      %v5774 = vld [vmem:[%s5747 + $0x138] sm:$0xff]
      %v5775 = vld [vmem:[%s5747 + $0x140] sm:$0xff]
      %v5776 = vld [vmem:[%s5747 + $0x150] sm:$0xff]
      %v5777 = vld [vmem:[%s5747 + $0x158] sm:$0xff]
      %v5778 = vld [vmem:[%s5747 + $0x168] sm:$0xff]
      %v5779 = vld [vmem:[%s5747 + $0x170] sm:$0xff]
      %v5780 = vpack.c.bf16 %v5749, %v5748
      %v5781 = vpack.c.bf16 %v5751, %v5750
      %v5782 = vpack.c.bf16 %v5753, %v5752
      %v5783 = vpack.c.bf16 %v5755, %v5754
      %v5784 = vpack.c.bf16 %v5757, %v5756
      %v5785 = vpack.c.bf16 %v5759, %v5758
      %v5786 = vpack.c.bf16 %v5761, %v5760
      %v5787 = vpack.c.bf16 %v5763, %v5762
      %v5788 = vpack.c.bf16 %v5765, %v5764
      %v5789 = vpack.c.bf16 %v5767, %v5766
      %v5790 = vpack.c.bf16 %v5769, %v5768
      %v5791 = vpack.c.bf16 %v5771, %v5770
      %v5792 = vpack.c.bf16 %v5773, %v5772
      %v5793 = vpack.c.bf16 %v5775, %v5774
      %v5794 = vpack.c.bf16 %v5777, %v5776
      %v5795 = vpack.c.bf16 %v5779, %v5778
      %5812 = vrot.lane.b32.xlu0 %v5780, 52
      %v5813 = vpop.permute.xlu0 %5812
      %5814 = vrot.lane.b32.xlu0 %v5781, 52
      %v5815 = vpop.permute.xlu0 %5814
      %5816 = vrot.lane.b32.xlu0 %v5782, 52
      %v5817 = vpop.permute.xlu0 %5816
      %5818 = vrot.lane.b32.xlu0 %v5783, 52
      %v5819 = vpop.permute.xlu0 %5818
      %5820 = vrot.lane.b32.xlu0 %v5784, 52
      %v5821 = vpop.permute.xlu0 %5820
      %5822 = vrot.lane.b32.xlu0 %v5785, 52
      %v5823 = vpop.permute.xlu0 %5822
      %5824 = vrot.lane.b32.xlu0 %v5786, 52
      %v5825 = vpop.permute.xlu0 %5824
      %5826 = vrot.lane.b32.xlu0 %v5787, 52
      %v5827 = vpop.permute.xlu0 %5826
      %5828 = vrot.lane.b32.xlu0 %v5788, 52
      %v5829 = vpop.permute.xlu0 %5828
      %5830 = vrot.lane.b32.xlu0 %v5789, 52
      %v5831 = vpop.permute.xlu0 %5830
      %5832 = vrot.lane.b32.xlu0 %v5790, 52
      %v5833 = vpop.permute.xlu0 %5832
      %5834 = vrot.lane.b32.xlu0 %v5791, 52
      %v5835 = vpop.permute.xlu0 %5834
      %5836 = vrot.lane.b32.xlu0 %v5792, 52
      %v5837 = vpop.permute.xlu0 %5836
      %5838 = vrot.lane.b32.xlu0 %v5793, 52
      %v5839 = vpop.permute.xlu0 %5838
      %5840 = vrot.lane.b32.xlu0 %v5794, 52
      %v5841 = vpop.permute.xlu0 %5840
      %5842 = vrot.lane.b32.xlu0 %v5795, 52
      %v5843 = vpop.permute.xlu0 %5842
      %vm5860 = vcmask 458144
      %5861 = vst.msk [vmem:[#allocation5] sm:$0xff] %vm5860, %v5813
      %5862 = vst.msk [vmem:[#allocation5 + $0x8] sm:$0xff] %vm5860, %v5815
      %5863 = vst.msk [vmem:[#allocation5 + $0x10] sm:$0xff] %vm5860, %v5817
      %5864 = vst.msk [vmem:[#allocation5 + $0x18] sm:$0xff] %vm5860, %v5819
      %5865 = vst.msk [vmem:[#allocation5 + $0x20] sm:$0xff] %vm5860, %v5821
      %5866 = vst.msk [vmem:[#allocation5 + $0x28] sm:$0xff] %vm5860, %v5823
      %5867 = vst.msk [vmem:[#allocation5 + $0x30] sm:$0xff] %vm5860, %v5825
      %5868 = vst.msk [vmem:[#allocation5 + $0x38] sm:$0xff] %vm5860, %v5827
      %5869 = vst.msk [vmem:[#allocation5 + $0x40] sm:$0xff] %vm5860, %v5829
      %5870 = vst.msk [vmem:[#allocation5 + $0x48] sm:$0xff] %vm5860, %v5831
      %5871 = vst.msk [vmem:[#allocation5 + $0x50] sm:$0xff] %vm5860, %v5833
      %5872 = vst.msk [vmem:[#allocation5 + $0x58] sm:$0xff] %vm5860, %v5835
      %5873 = vst.msk [vmem:[#allocation5 + $0x60] sm:$0xff] %vm5860, %v5837
      %5874 = vst.msk [vmem:[#allocation5 + $0x68] sm:$0xff] %vm5860, %v5839
      %5875 = vst.msk [vmem:[#allocation5 + $0x70] sm:$0xff] %vm5860, %v5841
      %5876 = vst.msk [vmem:[#allocation5 + $0x78] sm:$0xff] %vm5860, %v5843
      %v5877 = vld [vmem:[%s5617 + $0x1] sm:$0xff]
      %v5878 = vld [vmem:[%s5617 + $0x9] sm:$0xff]
      %v5879 = vld [vmem:[%s5617 + $0x19] sm:$0xff]
      %v5880 = vld [vmem:[%s5617 + $0x21] sm:$0xff]
      %v5881 = vld [vmem:[%s5617 + $0x31] sm:$0xff]
      %v5882 = vld [vmem:[%s5617 + $0x39] sm:$0xff]
      %v5883 = vld [vmem:[%s5617 + $0x49] sm:$0xff]
      %v5884 = vld [vmem:[%s5617 + $0x51] sm:$0xff]
      %v5885 = vld [vmem:[%s5617 + $0x61] sm:$0xff]
      %v5886 = vld [vmem:[%s5617 + $0x69] sm:$0xff]
      %v5887 = vld [vmem:[%s5617 + $0x79] sm:$0xff]
      %v5888 = vld [vmem:[%s5617 + $0x81] sm:$0xff]
      %v5889 = vld [vmem:[%s5617 + $0x91] sm:$0xff]
      %v5890 = vld [vmem:[%s5617 + $0x99] sm:$0xff]
      %v5891 = vld [vmem:[%s5617 + $0xa9] sm:$0xff]
      %v5892 = vld [vmem:[%s5617 + $0xb1] sm:$0xff]
      %v5893 = vld [vmem:[%s5617 + $0xc1] sm:$0xff]
      %v5894 = vld [vmem:[%s5617 + $0xc9] sm:$0xff]
      %v5895 = vld [vmem:[%s5617 + $0xd9] sm:$0xff]
      %v5896 = vld [vmem:[%s5617 + $0xe1] sm:$0xff]
      %v5897 = vld [vmem:[%s5617 + $0xf1] sm:$0xff]
      %v5898 = vld [vmem:[%s5617 + $0xf9] sm:$0xff]
      %v5899 = vld [vmem:[%s5617 + $0x109] sm:$0xff]
      %v5900 = vld [vmem:[%s5617 + $0x111] sm:$0xff]
      %v5901 = vld [vmem:[%s5617 + $0x121] sm:$0xff]
      %v5902 = vld [vmem:[%s5617 + $0x129] sm:$0xff]
      %v5903 = vld [vmem:[%s5617 + $0x139] sm:$0xff]
      %v5904 = vld [vmem:[%s5617 + $0x141] sm:$0xff]
      %v5905 = vld [vmem:[%s5617 + $0x151] sm:$0xff]
      %v5906 = vld [vmem:[%s5617 + $0x159] sm:$0xff]
      %v5907 = vld [vmem:[%s5617 + $0x169] sm:$0xff]
      %v5908 = vld [vmem:[%s5617 + $0x171] sm:$0xff]
      %v5909 = vpack.c.bf16 %v5878, %v5877
      %v5910 = vpack.c.bf16 %v5880, %v5879
      %v5911 = vpack.c.bf16 %v5882, %v5881
      %v5912 = vpack.c.bf16 %v5884, %v5883
      %v5913 = vpack.c.bf16 %v5886, %v5885
      %v5914 = vpack.c.bf16 %v5888, %v5887
      %v5915 = vpack.c.bf16 %v5890, %v5889
      %v5916 = vpack.c.bf16 %v5892, %v5891
      %v5917 = vpack.c.bf16 %v5894, %v5893
      %v5918 = vpack.c.bf16 %v5896, %v5895
      %v5919 = vpack.c.bf16 %v5898, %v5897
      %v5920 = vpack.c.bf16 %v5900, %v5899
      %v5921 = vpack.c.bf16 %v5902, %v5901
      %v5922 = vpack.c.bf16 %v5904, %v5903
      %v5923 = vpack.c.bf16 %v5906, %v5905
      %v5924 = vpack.c.bf16 %v5908, %v5907
      %5941 = vrot.lane.b32.xlu0 %v5909, 56
      %v5942 = vpop.permute.xlu0 %5941
      %5943 = vrot.lane.b32.xlu0 %v5910, 56
      %v5944 = vpop.permute.xlu0 %5943
      %5945 = vrot.lane.b32.xlu0 %v5911, 56
      %v5946 = vpop.permute.xlu0 %5945
      %5947 = vrot.lane.b32.xlu0 %v5912, 56
      %v5948 = vpop.permute.xlu0 %5947
      %5949 = vrot.lane.b32.xlu0 %v5913, 56
      %v5950 = vpop.permute.xlu0 %5949
      %5951 = vrot.lane.b32.xlu0 %v5914, 56
      %v5952 = vpop.permute.xlu0 %5951
      %5953 = vrot.lane.b32.xlu0 %v5915, 56
      %v5954 = vpop.permute.xlu0 %5953
      %5955 = vrot.lane.b32.xlu0 %v5916, 56
      %v5956 = vpop.permute.xlu0 %5955
      %5957 = vrot.lane.b32.xlu0 %v5917, 56
      %v5958 = vpop.permute.xlu0 %5957
      %5959 = vrot.lane.b32.xlu0 %v5918, 56
      %v5960 = vpop.permute.xlu0 %5959
      %5961 = vrot.lane.b32.xlu0 %v5919, 56
      %v5962 = vpop.permute.xlu0 %5961
      %5963 = vrot.lane.b32.xlu0 %v5920, 56
      %v5964 = vpop.permute.xlu0 %5963
      %5965 = vrot.lane.b32.xlu0 %v5921, 56
      %v5966 = vpop.permute.xlu0 %5965
      %5967 = vrot.lane.b32.xlu0 %v5922, 56
      %v5968 = vpop.permute.xlu0 %5967
      %5969 = vrot.lane.b32.xlu0 %v5923, 56
      %v5970 = vpop.permute.xlu0 %5969
      %5971 = vrot.lane.b32.xlu0 %v5924, 56
      %v5972 = vpop.permute.xlu0 %5971
      %vm5989 = vcmask 490944
      %5990 = vst.msk [vmem:[#allocation5] sm:$0xff] %vm5989, %v5942
      %5991 = vst.msk [vmem:[#allocation5 + $0x8] sm:$0xff] %vm5989, %v5944
      %5992 = vst.msk [vmem:[#allocation5 + $0x10] sm:$0xff] %vm5989, %v5946
      %5993 = vst.msk [vmem:[#allocation5 + $0x18] sm:$0xff] %vm5989, %v5948
      %5994 = vst.msk [vmem:[#allocation5 + $0x20] sm:$0xff] %vm5989, %v5950
      %5995 = vst.msk [vmem:[#allocation5 + $0x28] sm:$0xff] %vm5989, %v5952
      %5996 = vst.msk [vmem:[#allocation5 + $0x30] sm:$0xff] %vm5989, %v5954
      %5997 = vst.msk [vmem:[#allocation5 + $0x38] sm:$0xff] %vm5989, %v5956
      %5998 = vst.msk [vmem:[#allocation5 + $0x40] sm:$0xff] %vm5989, %v5958
      %5999 = vst.msk [vmem:[#allocation5 + $0x48] sm:$0xff] %vm5989, %v5960
      %6000 = vst.msk [vmem:[#allocation5 + $0x50] sm:$0xff] %vm5989, %v5962
      %6001 = vst.msk [vmem:[#allocation5 + $0x58] sm:$0xff] %vm5989, %v5964
      %6002 = vst.msk [vmem:[#allocation5 + $0x60] sm:$0xff] %vm5989, %v5966
      %6003 = vst.msk [vmem:[#allocation5 + $0x68] sm:$0xff] %vm5989, %v5968
      %6004 = vst.msk [vmem:[#allocation5 + $0x70] sm:$0xff] %vm5989, %v5970
      %6005 = vst.msk [vmem:[#allocation5 + $0x78] sm:$0xff] %vm5989, %v5972
      %v6006 = vld [vmem:[%s5747 + $0x1] sm:$0xff]
      %v6007 = vld [vmem:[%s5747 + $0x9] sm:$0xff]
      %v6008 = vld [vmem:[%s5747 + $0x19] sm:$0xff]
      %v6009 = vld [vmem:[%s5747 + $0x21] sm:$0xff]
      %v6010 = vld [vmem:[%s5747 + $0x31] sm:$0xff]
      %v6011 = vld [vmem:[%s5747 + $0x39] sm:$0xff]
      %v6012 = vld [vmem:[%s5747 + $0x49] sm:$0xff]
      %v6013 = vld [vmem:[%s5747 + $0x51] sm:$0xff]
      %v6014 = vld [vmem:[%s5747 + $0x61] sm:$0xff]
      %v6015 = vld [vmem:[%s5747 + $0x69] sm:$0xff]
      %v6016 = vld [vmem:[%s5747 + $0x79] sm:$0xff]
      %v6017 = vld [vmem:[%s5747 + $0x81] sm:$0xff]
      %v6018 = vld [vmem:[%s5747 + $0x91] sm:$0xff]
      %v6019 = vld [vmem:[%s5747 + $0x99] sm:$0xff]
      %v6020 = vld [vmem:[%s5747 + $0xa9] sm:$0xff]
      %v6021 = vld [vmem:[%s5747 + $0xb1] sm:$0xff]
      %v6022 = vld [vmem:[%s5747 + $0xc1] sm:$0xff]
      %v6023 = vld [vmem:[%s5747 + $0xc9] sm:$0xff]
      %v6024 = vld [vmem:[%s5747 + $0xd9] sm:$0xff]
      %v6025 = vld [vmem:[%s5747 + $0xe1] sm:$0xff]
      %v6026 = vld [vmem:[%s5747 + $0xf1] sm:$0xff]
      %v6027 = vld [vmem:[%s5747 + $0xf9] sm:$0xff]
      %v6028 = vld [vmem:[%s5747 + $0x109] sm:$0xff]
      %v6029 = vld [vmem:[%s5747 + $0x111] sm:$0xff]
      %v6030 = vld [vmem:[%s5747 + $0x121] sm:$0xff]
      %v6031 = vld [vmem:[%s5747 + $0x129] sm:$0xff]
      %v6032 = vld [vmem:[%s5747 + $0x139] sm:$0xff]
      %v6033 = vld [vmem:[%s5747 + $0x141] sm:$0xff]
      %v6034 = vld [vmem:[%s5747 + $0x151] sm:$0xff]
      %v6035 = vld [vmem:[%s5747 + $0x159] sm:$0xff]
      %v6036 = vld [vmem:[%s5747 + $0x169] sm:$0xff]
      %v6037 = vld [vmem:[%s5747 + $0x171] sm:$0xff]
      %v6038 = vpack.c.bf16 %v6007, %v6006
      %v6039 = vpack.c.bf16 %v6009, %v6008
      %v6040 = vpack.c.bf16 %v6011, %v6010
      %v6041 = vpack.c.bf16 %v6013, %v6012
      %v6042 = vpack.c.bf16 %v6015, %v6014
      %v6043 = vpack.c.bf16 %v6017, %v6016
      %v6044 = vpack.c.bf16 %v6019, %v6018
      %v6045 = vpack.c.bf16 %v6021, %v6020
      %v6046 = vpack.c.bf16 %v6023, %v6022
      %v6047 = vpack.c.bf16 %v6025, %v6024
      %v6048 = vpack.c.bf16 %v6027, %v6026
      %v6049 = vpack.c.bf16 %v6029, %v6028
      %v6050 = vpack.c.bf16 %v6031, %v6030
      %v6051 = vpack.c.bf16 %v6033, %v6032
      %v6052 = vpack.c.bf16 %v6035, %v6034
      %v6053 = vpack.c.bf16 %v6037, %v6036
      %6070 = vrot.lane.b32.xlu0 %v6038, 60
      %v6071 = vpop.permute.xlu0 %6070
      %6072 = vrot.lane.b32.xlu0 %v6039, 60
      %v6073 = vpop.permute.xlu0 %6072
      %6074 = vrot.lane.b32.xlu0 %v6040, 60
      %v6075 = vpop.permute.xlu0 %6074
      %6076 = vrot.lane.b32.xlu0 %v6041, 60
      %v6077 = vpop.permute.xlu0 %6076
      %6078 = vrot.lane.b32.xlu0 %v6042, 60
      %v6079 = vpop.permute.xlu0 %6078
      %6080 = vrot.lane.b32.xlu0 %v6043, 60
      %v6081 = vpop.permute.xlu0 %6080
      %6082 = vrot.lane.b32.xlu0 %v6044, 60
      %v6083 = vpop.permute.xlu0 %6082
      %6084 = vrot.lane.b32.xlu0 %v6045, 60
      %v6085 = vpop.permute.xlu0 %6084
      %6086 = vrot.lane.b32.xlu0 %v6046, 60
      %v6087 = vpop.permute.xlu0 %6086
      %6088 = vrot.lane.b32.xlu0 %v6047, 60
      %v6089 = vpop.permute.xlu0 %6088
      %6090 = vrot.lane.b32.xlu0 %v6048, 60
      %v6091 = vpop.permute.xlu0 %6090
      %6092 = vrot.lane.b32.xlu0 %v6049, 60
      %v6093 = vpop.permute.xlu0 %6092
      %6094 = vrot.lane.b32.xlu0 %v6050, 60
      %v6095 = vpop.permute.xlu0 %6094
      %6096 = vrot.lane.b32.xlu0 %v6051, 60
      %v6097 = vpop.permute.xlu0 %6096
      %6098 = vrot.lane.b32.xlu0 %v6052, 60
      %v6099 = vpop.permute.xlu0 %6098
      %6100 = vrot.lane.b32.xlu0 %v6053, 60
      %v6101 = vpop.permute.xlu0 %6100
      %vm6118 = vcmask 523744
      %6119 = vst.msk [vmem:[#allocation5] sm:$0xff] %vm6118, %v6071
      %6120 = vst.msk [vmem:[#allocation5 + $0x8] sm:$0xff] %vm6118, %v6073
      %6121 = vst.msk [vmem:[#allocation5 + $0x10] sm:$0xff] %vm6118, %v6075
      %6122 = vst.msk [vmem:[#allocation5 + $0x18] sm:$0xff] %vm6118, %v6077
      %6123 = vst.msk [vmem:[#allocation5 + $0x20] sm:$0xff] %vm6118, %v6079
      %6124 = vst.msk [vmem:[#allocation5 + $0x28] sm:$0xff] %vm6118, %v6081
      %6125 = vst.msk [vmem:[#allocation5 + $0x30] sm:$0xff] %vm6118, %v6083
      %6126 = vst.msk [vmem:[#allocation5 + $0x38] sm:$0xff] %vm6118, %v6085
      %6127 = vst.msk [vmem:[#allocation5 + $0x40] sm:$0xff] %vm6118, %v6087
      %6128 = vst.msk [vmem:[#allocation5 + $0x48] sm:$0xff] %vm6118, %v6089
      %6129 = vst.msk [vmem:[#allocation5 + $0x50] sm:$0xff] %vm6118, %v6091
      %6130 = vst.msk [vmem:[#allocation5 + $0x58] sm:$0xff] %vm6118, %v6093
      %6131 = vst.msk [vmem:[#allocation5 + $0x60] sm:$0xff] %vm6118, %v6095
      %6132 = vst.msk [vmem:[#allocation5 + $0x68] sm:$0xff] %vm6118, %v6097
      %6133 = vst.msk [vmem:[#allocation5 + $0x70] sm:$0xff] %vm6118, %v6099
      %6134 = vst.msk [vmem:[#allocation5 + $0x78] sm:$0xff] %vm6118, %v6101
      %v6135 = vld [vmem:[%s5617 + $0x2] sm:$0xff]
      %v6136 = vld [vmem:[%s5617 + $0xa] sm:$0xff]
      %v6137 = vld [vmem:[%s5617 + $0x1a] sm:$0xff]
      %v6138 = vld [vmem:[%s5617 + $0x22] sm:$0xff]
      %v6139 = vld [vmem:[%s5617 + $0x32] sm:$0xff]
      %v6140 = vld [vmem:[%s5617 + $0x3a] sm:$0xff]
      %v6141 = vld [vmem:[%s5617 + $0x4a] sm:$0xff]
      %v6142 = vld [vmem:[%s5617 + $0x52] sm:$0xff]
      %v6143 = vld [vmem:[%s5617 + $0x62] sm:$0xff]
      %v6144 = vld [vmem:[%s5617 + $0x6a] sm:$0xff]
      %v6145 = vld [vmem:[%s5617 + $0x7a] sm:$0xff]
      %v6146 = vld [vmem:[%s5617 + $0x82] sm:$0xff]
      %v6147 = vld [vmem:[%s5617 + $0x92] sm:$0xff]
      %v6148 = vld [vmem:[%s5617 + $0x9a] sm:$0xff]
      %v6149 = vld [vmem:[%s5617 + $0xaa] sm:$0xff]
      %v6150 = vld [vmem:[%s5617 + $0xb2] sm:$0xff]
      %v6151 = vld [vmem:[%s5617 + $0xc2] sm:$0xff]
      %v6152 = vld [vmem:[%s5617 + $0xca] sm:$0xff]
      %v6153 = vld [vmem:[%s5617 + $0xda] sm:$0xff]
      %v6154 = vld [vmem:[%s5617 + $0xe2] sm:$0xff]
      %v6155 = vld [vmem:[%s5617 + $0xf2] sm:$0xff]
      %v6156 = vld [vmem:[%s5617 + $0xfa] sm:$0xff]
      %v6157 = vld [vmem:[%s5617 + $0x10a] sm:$0xff]
      %v6158 = vld [vmem:[%s5617 + $0x112] sm:$0xff]
      %v6159 = vld [vmem:[%s5617 + $0x122] sm:$0xff]
      %v6160 = vld [vmem:[%s5617 + $0x12a] sm:$0xff]
      %v6161 = vld [vmem:[%s5617 + $0x13a] sm:$0xff]
      %v6162 = vld [vmem:[%s5617 + $0x142] sm:$0xff]
      %v6163 = vld [vmem:[%s5617 + $0x152] sm:$0xff]
      %v6164 = vld [vmem:[%s5617 + $0x15a] sm:$0xff]
      %v6165 = vld [vmem:[%s5617 + $0x16a] sm:$0xff]
      %v6166 = vld [vmem:[%s5617 + $0x172] sm:$0xff]
      %v6167 = vpack.c.bf16 %v6136, %v6135
      %v6168 = vpack.c.bf16 %v6138, %v6137
      %v6169 = vpack.c.bf16 %v6140, %v6139
      %v6170 = vpack.c.bf16 %v6142, %v6141
      %v6171 = vpack.c.bf16 %v6144, %v6143
      %v6172 = vpack.c.bf16 %v6146, %v6145
      %v6173 = vpack.c.bf16 %v6148, %v6147
      %v6174 = vpack.c.bf16 %v6150, %v6149
      %v6175 = vpack.c.bf16 %v6152, %v6151
      %v6176 = vpack.c.bf16 %v6154, %v6153
      %v6177 = vpack.c.bf16 %v6156, %v6155
      %v6178 = vpack.c.bf16 %v6158, %v6157
      %v6179 = vpack.c.bf16 %v6160, %v6159
      %v6180 = vpack.c.bf16 %v6162, %v6161
      %v6181 = vpack.c.bf16 %v6164, %v6163
      %v6182 = vpack.c.bf16 %v6166, %v6165
      %6199 = vrot.lane.b32.xlu0 %v6167, 64
      %v6200 = vpop.permute.xlu0 %6199
      %6201 = vrot.lane.b32.xlu0 %v6168, 64
      %v6202 = vpop.permute.xlu0 %6201
      %6203 = vrot.lane.b32.xlu0 %v6169, 64
      %v6204 = vpop.permute.xlu0 %6203
      %6205 = vrot.lane.b32.xlu0 %v6170, 64
      %v6206 = vpop.permute.xlu0 %6205
      %6207 = vrot.lane.b32.xlu0 %v6171, 64
      %v6208 = vpop.permute.xlu0 %6207
      %6209 = vrot.lane.b32.xlu0 %v6172, 64
      %v6210 = vpop.permute.xlu0 %6209
      %6211 = vrot.lane.b32.xlu0 %v6173, 64
      %v6212 = vpop.permute.xlu0 %6211
      %6213 = vrot.lane.b32.xlu0 %v6174, 64
      %v6214 = vpop.permute.xlu0 %6213
      %6215 = vrot.lane.b32.xlu0 %v6175, 64
      %v6216 = vpop.permute.xlu0 %6215
      %6217 = vrot.lane.b32.xlu0 %v6176, 64
      %v6218 = vpop.permute.xlu0 %6217
      %6219 = vrot.lane.b32.xlu0 %v6177, 64
      %v6220 = vpop.permute.xlu0 %6219
      %6221 = vrot.lane.b32.xlu0 %v6178, 64
      %v6222 = vpop.permute.xlu0 %6221
      %6223 = vrot.lane.b32.xlu0 %v6179, 64
      %v6224 = vpop.permute.xlu0 %6223
      %6225 = vrot.lane.b32.xlu0 %v6180, 64
      %v6226 = vpop.permute.xlu0 %6225
      %6227 = vrot.lane.b32.xlu0 %v6181, 64
      %v6228 = vpop.permute.xlu0 %6227
      %6229 = vrot.lane.b32.xlu0 %v6182, 64
      %v6230 = vpop.permute.xlu0 %6229
      %vm6247 = vcmask 556544
      %6248 = vst.msk [vmem:[#allocation5] sm:$0xff] %vm6247, %v6200
      %6249 = vst.msk [vmem:[#allocation5 + $0x8] sm:$0xff] %vm6247, %v6202
      %6250 = vst.msk [vmem:[#allocation5 + $0x10] sm:$0xff] %vm6247, %v6204
      %6251 = vst.msk [vmem:[#allocation5 + $0x18] sm:$0xff] %vm6247, %v6206
      %6252 = vst.msk [vmem:[#allocation5 + $0x20] sm:$0xff] %vm6247, %v6208
      %6253 = vst.msk [vmem:[#allocation5 + $0x28] sm:$0xff] %vm6247, %v6210
      %6254 = vst.msk [vmem:[#allocation5 + $0x30] sm:$0xff] %vm6247, %v6212
      %6255 = vst.msk [vmem:[#allocation5 + $0x38] sm:$0xff] %vm6247, %v6214
      %6256 = vst.msk [vmem:[#allocation5 + $0x40] sm:$0xff] %vm6247, %v6216
      %6257 = vst.msk [vmem:[#allocation5 + $0x48] sm:$0xff] %vm6247, %v6218
      %6258 = vst.msk [vmem:[#allocation5 + $0x50] sm:$0xff] %vm6247, %v6220
      %6259 = vst.msk [vmem:[#allocation5 + $0x58] sm:$0xff] %vm6247, %v6222
      %6260 = vst.msk [vmem:[#allocation5 + $0x60] sm:$0xff] %vm6247, %v6224
      %6261 = vst.msk [vmem:[#allocation5 + $0x68] sm:$0xff] %vm6247, %v6226
      %6262 = vst.msk [vmem:[#allocation5 + $0x70] sm:$0xff] %vm6247, %v6228
      %6263 = vst.msk [vmem:[#allocation5 + $0x78] sm:$0xff] %vm6247, %v6230
      %v6264 = vld [vmem:[%s5747 + $0x2] sm:$0xff]
      %v6265 = vld [vmem:[%s5747 + $0xa] sm:$0xff]
      %v6266 = vld [vmem:[%s5747 + $0x1a] sm:$0xff]
      %v6267 = vld [vmem:[%s5747 + $0x22] sm:$0xff]
      %v6268 = vld [vmem:[%s5747 + $0x32] sm:$0xff]
      %v6269 = vld [vmem:[%s5747 + $0x3a] sm:$0xff]
      %v6270 = vld [vmem:[%s5747 + $0x4a] sm:$0xff]
      %v6271 = vld [vmem:[%s5747 + $0x52] sm:$0xff]
      %v6272 = vld [vmem:[%s5747 + $0x62] sm:$0xff]
      %v6273 = vld [vmem:[%s5747 + $0x6a] sm:$0xff]
      %v6274 = vld [vmem:[%s5747 + $0x7a] sm:$0xff]
      %v6275 = vld [vmem:[%s5747 + $0x82] sm:$0xff]
      %v6276 = vld [vmem:[%s5747 + $0x92] sm:$0xff]
      %v6277 = vld [vmem:[%s5747 + $0x9a] sm:$0xff]
      %v6278 = vld [vmem:[%s5747 + $0xaa] sm:$0xff]
      %v6279 = vld [vmem:[%s5747 + $0xb2] sm:$0xff]
      %v6280 = vld [vmem:[%s5747 + $0xc2] sm:$0xff]
      %v6281 = vld [vmem:[%s5747 + $0xca] sm:$0xff]
      %v6282 = vld [vmem:[%s5747 + $0xda] sm:$0xff]
      %v6283 = vld [vmem:[%s5747 + $0xe2] sm:$0xff]
      %v6284 = vld [vmem:[%s5747 + $0xf2] sm:$0xff]
      %v6285 = vld [vmem:[%s5747 + $0xfa] sm:$0xff]
      %v6286 = vld [vmem:[%s5747 + $0x10a] sm:$0xff]
      %v6287 = vld [vmem:[%s5747 + $0x112] sm:$0xff]
      %v6288 = vld [vmem:[%s5747 + $0x122] sm:$0xff]
      %v6289 = vld [vmem:[%s5747 + $0x12a] sm:$0xff]
      %v6290 = vld [vmem:[%s5747 + $0x13a] sm:$0xff]
      %v6291 = vld [vmem:[%s5747 + $0x142] sm:$0xff]
      %v6292 = vld [vmem:[%s5747 + $0x152] sm:$0xff]
      %v6293 = vld [vmem:[%s5747 + $0x15a] sm:$0xff]
      %v6294 = vld [vmem:[%s5747 + $0x16a] sm:$0xff]
      %v6295 = vld [vmem:[%s5747 + $0x172] sm:$0xff]
      %v6296 = vpack.c.bf16 %v6265, %v6264
      %v6297 = vpack.c.bf16 %v6267, %v6266
      %v6298 = vpack.c.bf16 %v6269, %v6268
      %v6299 = vpack.c.bf16 %v6271, %v6270
      %v6300 = vpack.c.bf16 %v6273, %v6272
      %v6301 = vpack.c.bf16 %v6275, %v6274
      %v6302 = vpack.c.bf16 %v6277, %v6276
      %v6303 = vpack.c.bf16 %v6279, %v6278
      %v6304 = vpack.c.bf16 %v6281, %v6280
      %v6305 = vpack.c.bf16 %v6283, %v6282
      %v6306 = vpack.c.bf16 %v6285, %v6284
      %v6307 = vpack.c.bf16 %v6287, %v6286
      %v6308 = vpack.c.bf16 %v6289, %v6288
      %v6309 = vpack.c.bf16 %v6291, %v6290
      %v6310 = vpack.c.bf16 %v6293, %v6292
      %v6311 = vpack.c.bf16 %v6295, %v6294
      %6328 = vrot.lane.b32.xlu0 %v6296, 68
      %v6329 = vpop.permute.xlu0 %6328
      %6330 = vrot.lane.b32.xlu0 %v6297, 68
      %v6331 = vpop.permute.xlu0 %6330
      %6332 = vrot.lane.b32.xlu0 %v6298, 68
      %v6333 = vpop.permute.xlu0 %6332
      %6334 = vrot.lane.b32.xlu0 %v6299, 68
      %v6335 = vpop.permute.xlu0 %6334
      %6336 = vrot.lane.b32.xlu0 %v6300, 68
      %v6337 = vpop.permute.xlu0 %6336
      %6338 = vrot.lane.b32.xlu0 %v6301, 68
      %v6339 = vpop.permute.xlu0 %6338
      %6340 = vrot.lane.b32.xlu0 %v6302, 68
      %v6341 = vpop.permute.xlu0 %6340
      %6342 = vrot.lane.b32.xlu0 %v6303, 68
      %v6343 = vpop.permute.xlu0 %6342
      %6344 = vrot.lane.b32.xlu0 %v6304, 68
      %v6345 = vpop.permute.xlu0 %6344
      %6346 = vrot.lane.b32.xlu0 %v6305, 68
      %v6347 = vpop.permute.xlu0 %6346
      %6348 = vrot.lane.b32.xlu0 %v6306, 68
      %v6349 = vpop.permute.xlu0 %6348
      %6350 = vrot.lane.b32.xlu0 %v6307, 68
      %v6351 = vpop.permute.xlu0 %6350
      %6352 = vrot.lane.b32.xlu0 %v6308, 68
      %v6353 = vpop.permute.xlu0 %6352
      %6354 = vrot.lane.b32.xlu0 %v6309, 68
      %v6355 = vpop.permute.xlu0 %6354
      %6356 = vrot.lane.b32.xlu0 %v6310, 68
      %v6357 = vpop.permute.xlu0 %6356
      %6358 = vrot.lane.b32.xlu0 %v6311, 68
      %v6359 = vpop.permute.xlu0 %6358
      %vm6376 = vcmask 589344
      %6377 = vst.msk [vmem:[#allocation5] sm:$0xff] %vm6376, %v6329
      %6378 = vst.msk [vmem:[#allocation5 + $0x8] sm:$0xff] %vm6376, %v6331
      %6379 = vst.msk [vmem:[#allocation5 + $0x10] sm:$0xff] %vm6376, %v6333
      %6380 = vst.msk [vmem:[#allocation5 + $0x18] sm:$0xff] %vm6376, %v6335
      %6381 = vst.msk [vmem:[#allocation5 + $0x20] sm:$0xff] %vm6376, %v6337
      %6382 = vst.msk [vmem:[#allocation5 + $0x28] sm:$0xff] %vm6376, %v6339
      %6383 = vst.msk [vmem:[#allocation5 + $0x30] sm:$0xff] %vm6376, %v6341
      %6384 = vst.msk [vmem:[#allocation5 + $0x38] sm:$0xff] %vm6376, %v6343
      %6385 = vst.msk [vmem:[#allocation5 + $0x40] sm:$0xff] %vm6376, %v6345
      %6386 = vst.msk [vmem:[#allocation5 + $0x48] sm:$0xff] %vm6376, %v6347
      %6387 = vst.msk [vmem:[#allocation5 + $0x50] sm:$0xff] %vm6376, %v6349
      %6388 = vst.msk [vmem:[#allocation5 + $0x58] sm:$0xff] %vm6376, %v6351
      %6389 = vst.msk [vmem:[#allocation5 + $0x60] sm:$0xff] %vm6376, %v6353
      %6390 = vst.msk [vmem:[#allocation5 + $0x68] sm:$0xff] %vm6376, %v6355
      %6391 = vst.msk [vmem:[#allocation5 + $0x70] sm:$0xff] %vm6376, %v6357
      %6392 = vst.msk [vmem:[#allocation5 + $0x78] sm:$0xff] %vm6376, %v6359
      %v6393 = vld [vmem:[#allocation5] sm:$0xff]
      %v6394 = vld [vmem:[#allocation5 + $0x8] sm:$0xff]
      %v6395 = vld [vmem:[#allocation5 + $0x10] sm:$0xff]
      %v6396 = vld [vmem:[#allocation5 + $0x18] sm:$0xff]
      %v6397 = vld [vmem:[#allocation5 + $0x20] sm:$0xff]
      %v6398 = vld [vmem:[#allocation5 + $0x28] sm:$0xff]
      %v6399 = vld [vmem:[#allocation5 + $0x30] sm:$0xff]
      %v6400 = vld [vmem:[#allocation5 + $0x38] sm:$0xff]
      %v6401 = vld [vmem:[#allocation5 + $0x40] sm:$0xff]
      %v6402 = vld [vmem:[#allocation5 + $0x48] sm:$0xff]
      %v6403 = vld [vmem:[#allocation5 + $0x50] sm:$0xff]
      %v6404 = vld [vmem:[#allocation5 + $0x58] sm:$0xff]
      %v6405 = vld [vmem:[#allocation5 + $0x60] sm:$0xff]
      %v6406 = vld [vmem:[#allocation5 + $0x68] sm:$0xff]
      %v6407 = vld [vmem:[#allocation5 + $0x70] sm:$0xff]
      %v6408 = vld [vmem:[#allocation5 + $0x78] sm:$0xff]
      %v6409 = vld [vmem:[%s3] sm:$0xf]
      %v6410 = vld [vmem:[%s3 + $0x4] sm:$0xf]
      %v6411 = vld [vmem:[%s3 + $0x8] sm:$0xf]
      %v6412 = vld [vmem:[%s3 + $0xc] sm:$0xf]
      %v6413 = vld [vmem:[%s3 + $0x10] sm:$0xf]
      %v6414 = vld [vmem:[%s3 + $0x14] sm:$0xf]
      %v6415 = vld [vmem:[%s3 + $0x18] sm:$0xf]
      %v6416 = vld [vmem:[%s3 + $0x1c] sm:$0xf]
      %v6417 = vld [vmem:[%s3 + $0x20] sm:$0xf]
      %v6427 = vunpack.c.l.b16 %v6409
      %v6428 = vunpack.c.l.b16 %v6410
      %v6429 = vunpack.c.l.b16 %v6411
      %v6430 = vunpack.c.l.b16 %v6412
      %v6431 = vunpack.c.l.b16 %v6413
      %v6432 = vunpack.c.l.b16 %v6414
      %v6433 = vunpack.c.l.b16 %v6415
      %v6434 = vunpack.c.l.b16 %v6416
      %v6435 = vunpack.c.l.b16 %v6417
      %v6436 = vpack.c.b16 %v6428, %v6427
      %v6437 = vpack.c.b16 %v6430, %v6429
      %v6438 = vpack.c.b16 %v6432, %v6431
      %v6439 = vpack.c.b16 %v6434, %v6433
      %v6440 = vpack.c.b16 %v6435, %v6435
      %vm6445 = vcmask 588800
      %v6447 = vsel %vm6445, %v6393, 0
      %v6450 = vsel %vm6445, %v6394, 0
      %v6453 = vsel %vm6445, %v6395, 0
      %v6456 = vsel %vm6445, %v6396, 0
      %v6459 = vsel %vm6445, %v6397, 0
      %v6462 = vsel %vm6445, %v6398, 0
      %v6465 = vsel %vm6445, %v6399, 0
      %v6468 = vsel %vm6445, %v6400, 0
      %v6471 = vsel %vm6445, %v6401, 0
      %v6474 = vsel %vm6445, %v6402, 0
      %v6477 = vsel %vm6445, %v6403, 0
      %v6480 = vsel %vm6445, %v6404, 0
      %v6483 = vsel %vm6445, %v6405, 0
      %v6486 = vsel %vm6445, %v6406, 0
      %v6489 = vsel %vm6445, %v6407, 0
      %v6492 = vsel %vm6445, %v6408, 0
      %v6495 = vsel %vm441, %v6440, 0
      %6497 = vmatprep.subr.bf16.mxu0 0
      %6498 = vmatpush1.bf16.msra.mxu0 %v6436
      %6499 = vmatprep.subr.bf16.mxu0 0
      %6500 = vmatpush1.bf16.msra.mxu0 %v6437
      %6501 = vmatprep.subr.bf16.mxu0 0
      %6502 = vmatpush1.bf16.msra.mxu0 %v6438
      %6503 = vmatprep.subr.bf16.mxu0 0
      %6504 = vmatpush1.bf16.msra.mxu0 %v6439
      %6505 = vmatprep.subr.bf16.mxu0 0
      %6506 = vmatpush1.bf16.msra.mxu0 %v6495
      %6507 = vmatprep.subr.bf16.mxu0 0
      %6508 = vmatpush1.bf16.msra.mxu0 0
      %6509 = vmatprep.subr.bf16.mxu0 0
      %6510 = vmatpush1.bf16.msra.mxu0 0
      %6511 = vmatprep.subr.bf16.mxu0 0
      %6512 = vmatpush1.bf16.msra.mxu0 0
      %6513 = vmatprep.subr.bf16.mxu0 0
      %6514 = vmatpush1.bf16.msra.mxu0 0
      %6515 = vmatprep.subr.bf16.mxu0 0
      %6516 = vmatpush1.bf16.msra.mxu0 0
      %6517 = vmatprep.subr.bf16.mxu0 0
      %6518 = vmatpush1.bf16.msra.mxu0 0
      %6519 = vmatprep.subr.bf16.mxu0 0
      %6520 = vmatpush1.bf16.msra.mxu0 0
      %6521 = vmatprep.subr.bf16.mxu0 0
      %6522 = vmatpush1.bf16.msra.mxu0 0
      %6523 = vmatprep.subr.bf16.mxu0 0
      %6524 = vmatpush1.bf16.msra.mxu0 0
      %6525 = vmatprep.subr.bf16.mxu0 0
      %6526 = vmatpush1.bf16.msra.mxu0 0
      %6527 = vmatprep.subr.bf16.mxu0 0
      %6528 = vmatpush1.bf16.msra.mxu0 0
      %6529 = vmatprep.mubr.bf16.mxu0 0
      %6530 = vmatmul.mubr.bf16.gmra.mrb[0].mxu0 %v6447
      %v6531 = vpop.f32.mrb[0].mxu0
      %v6532 = vadd.f32 0.0, %v6531
      %v6533 = vpop.f32.mrb[0].mxu0
      %v6534 = vpop.f32.mrb[0].mxu0
      %v6535 = vadd.f32 0.0, %v6534
      %v6536 = vpop.f32.mrb[0].mxu0
      %6537 = vmatprep.mubr.bf16.mxu0 0
      %6538 = vmatmul.mubr.bf16.gmra.mrb[0].mxu0 %v6450
      %v6539 = vpop.f32.mrb[0].mxu0
      %v6540 = vadd.f32 0.0, %v6539
      %v6541 = vpop.f32.mrb[0].mxu0
      %v6542 = vpop.f32.mrb[0].mxu0
      %v6543 = vadd.f32 0.0, %v6542
      %v6544 = vpop.f32.mrb[0].mxu0
      %6545 = vmatprep.mubr.bf16.mxu0 0
      %6546 = vmatmul.mubr.bf16.gmra.mrb[0].mxu0 %v6453
      %v6547 = vpop.f32.mrb[0].mxu0
      %v6548 = vadd.f32 0.0, %v6547
      %v6549 = vpop.f32.mrb[0].mxu0
      %v6550 = vpop.f32.mrb[0].mxu0
      %v6551 = vadd.f32 0.0, %v6550
      %v6552 = vpop.f32.mrb[0].mxu0
      %6553 = vmatprep.mubr.bf16.mxu0 0
      %6554 = vmatmul.mubr.bf16.gmra.mrb[0].mxu0 %v6456
      %v6555 = vpop.f32.mrb[0].mxu0
      %v6556 = vadd.f32 0.0, %v6555
      %v6557 = vpop.f32.mrb[0].mxu0
      %v6558 = vpop.f32.mrb[0].mxu0
      %v6559 = vadd.f32 0.0, %v6558
      %v6560 = vpop.f32.mrb[0].mxu0
      %6561 = vmatprep.mubr.bf16.mxu0 0
      %6562 = vmatmul.mubr.bf16.gmra.mrb[0].mxu0 %v6459
      %v6563 = vpop.f32.mrb[0].mxu0
      %v6564 = vadd.f32 0.0, %v6563
      %v6565 = vpop.f32.mrb[0].mxu0
      %v6566 = vpop.f32.mrb[0].mxu0
      %v6567 = vadd.f32 0.0, %v6566
      %v6568 = vpop.f32.mrb[0].mxu0
      %6569 = vmatprep.mubr.bf16.mxu0 0
      %6570 = vmatmul.mubr.bf16.gmra.mrb[0].mxu0 %v6462
      %v6571 = vpop.f32.mrb[0].mxu0
      %v6572 = vadd.f32 0.0, %v6571
      %v6573 = vpop.f32.mrb[0].mxu0
      %v6574 = vpop.f32.mrb[0].mxu0
      %v6575 = vadd.f32 0.0, %v6574
      %v6576 = vpop.f32.mrb[0].mxu0
      %6577 = vmatprep.mubr.bf16.mxu0 0
      %6578 = vmatmul.mubr.bf16.gmra.mrb[0].mxu0 %v6465
      %v6579 = vpop.f32.mrb[0].mxu0
      %v6580 = vadd.f32 0.0, %v6579
      %v6581 = vpop.f32.mrb[0].mxu0
      %v6582 = vpop.f32.mrb[0].mxu0
      %v6583 = vadd.f32 0.0, %v6582
      %v6584 = vpop.f32.mrb[0].mxu0
      %6585 = vmatprep.mubr.bf16.mxu0 0
      %6586 = vmatmul.mubr.bf16.gmra.mrb[0].mxu0 %v6468
      %v6587 = vpop.f32.mrb[0].mxu0
      %v6588 = vadd.f32 0.0, %v6587
      %v6589 = vpop.f32.mrb[0].mxu0
      %v6590 = vpop.f32.mrb[0].mxu0
      %v6591 = vadd.f32 0.0, %v6590
      %v6592 = vpop.f32.mrb[0].mxu0
      %6593 = vmatprep.mubr.bf16.mxu0 0
      %6594 = vmatmul.mubr.bf16.gmra.mrb[0].mxu0 %v6471
      %v6595 = vpop.f32.mrb[0].mxu0
      %v6596 = vadd.f32 0.0, %v6595
      %v6597 = vpop.f32.mrb[0].mxu0
      %v6598 = vpop.f32.mrb[0].mxu0
      %v6599 = vadd.f32 0.0, %v6598
      %v6600 = vpop.f32.mrb[0].mxu0
      %6601 = vmatprep.mubr.bf16.mxu0 0
      %6602 = vmatmul.mubr.bf16.gmra.mrb[0].mxu0 %v6474
      %v6603 = vpop.f32.mrb[0].mxu0
      %v6604 = vadd.f32 0.0, %v6603
      %v6605 = vpop.f32.mrb[0].mxu0
      %v6606 = vpop.f32.mrb[0].mxu0
      %v6607 = vadd.f32 0.0, %v6606
      %v6608 = vpop.f32.mrb[0].mxu0
      %6609 = vmatprep.mubr.bf16.mxu0 0
      %6610 = vmatmul.mubr.bf16.gmra.mrb[0].mxu0 %v6477
      %v6611 = vpop.f32.mrb[0].mxu0
      %v6612 = vadd.f32 0.0, %v6611
      %v6613 = vpop.f32.mrb[0].mxu0
      %v6614 = vpop.f32.mrb[0].mxu0
      %v6615 = vadd.f32 0.0, %v6614
      %v6616 = vpop.f32.mrb[0].mxu0
      %6617 = vmatprep.mubr.bf16.mxu0 0
      %6618 = vmatmul.mubr.bf16.gmra.mrb[0].mxu0 %v6480
      %v6619 = vpop.f32.mrb[0].mxu0
      %v6620 = vadd.f32 0.0, %v6619
      %v6621 = vpop.f32.mrb[0].mxu0
      %v6622 = vpop.f32.mrb[0].mxu0
      %v6623 = vadd.f32 0.0, %v6622
      %v6624 = vpop.f32.mrb[0].mxu0
      %6625 = vmatprep.mubr.bf16.mxu0 0
      %6626 = vmatmul.mubr.bf16.gmra.mrb[0].mxu0 %v6483
      %v6627 = vpop.f32.mrb[0].mxu0
      %v6628 = vadd.f32 0.0, %v6627
      %v6629 = vpop.f32.mrb[0].mxu0
      %v6630 = vpop.f32.mrb[0].mxu0
      %v6631 = vadd.f32 0.0, %v6630
      %v6632 = vpop.f32.mrb[0].mxu0
      %6633 = vmatprep.mubr.bf16.mxu0 0
      %6634 = vmatmul.mubr.bf16.gmra.mrb[0].mxu0 %v6486
      %v6635 = vpop.f32.mrb[0].mxu0
      %v6636 = vadd.f32 0.0, %v6635
      %v6637 = vpop.f32.mrb[0].mxu0
      %v6638 = vpop.f32.mrb[0].mxu0
      %v6639 = vadd.f32 0.0, %v6638
      %v6640 = vpop.f32.mrb[0].mxu0
      %6641 = vmatprep.mubr.bf16.mxu0 0
      %6642 = vmatmul.mubr.bf16.gmra.mrb[0].mxu0 %v6489
      %v6643 = vpop.f32.mrb[0].mxu0
      %v6644 = vadd.f32 0.0, %v6643
      %v6645 = vpop.f32.mrb[0].mxu0
      %v6646 = vpop.f32.mrb[0].mxu0
      %v6647 = vadd.f32 0.0, %v6646
      %v6648 = vpop.f32.mrb[0].mxu0
      %6649 = vmatprep.mubr.bf16.mxu0 0
      %6650 = vmatmul.mubr.bf16.gmra.mrb[0].mxu0 %v6492
      %v6651 = vpop.f32.mrb[0].mxu0
      %v6652 = vadd.f32 0.0, %v6651
      %v6653 = vpop.f32.mrb[0].mxu0
      %v6654 = vpop.f32.mrb[0].mxu0
      %v6655 = vadd.f32 0.0, %v6654
      %v6656 = vpop.f32.mrb[0].mxu0
      %6657 = vdwg.mxu0
      %v6658 = vld [vmem:[%s4] sm:$0x1]
      %v6659 = vlaneseq
      %v6660 = vshrl.u32 %v6659, 7
      %v6661 = vsub.s32 0, %v6660
      %v6662 = vrot.slane %v6658, %v6661
      %v6663 = vmul.f32 %v6532, %v6662
      %v6664 = vmul.f32 %v6535, %v6662
      %v6665 = vmul.f32 %v6540, %v6662
      %v6666 = vmul.f32 %v6543, %v6662
      %v6667 = vmul.f32 %v6548, %v6662
      %v6668 = vmul.f32 %v6551, %v6662
      %v6669 = vmul.f32 %v6556, %v6662
      %v6670 = vmul.f32 %v6559, %v6662
      %v6671 = vmul.f32 %v6564, %v6662
      %v6672 = vmul.f32 %v6567, %v6662
      %v6673 = vmul.f32 %v6572, %v6662
      %v6674 = vmul.f32 %v6575, %v6662
      %v6675 = vmul.f32 %v6580, %v6662
      %v6676 = vmul.f32 %v6583, %v6662
      %v6677 = vmul.f32 %v6588, %v6662
      %v6678 = vmul.f32 %v6591, %v6662
      %v6679 = vmul.f32 %v6596, %v6662
      %v6680 = vmul.f32 %v6599, %v6662
      %v6681 = vmul.f32 %v6604, %v6662
      %v6682 = vmul.f32 %v6607, %v6662
      %v6683 = vmul.f32 %v6612, %v6662
      %v6684 = vmul.f32 %v6615, %v6662
      %v6685 = vmul.f32 %v6620, %v6662
      %v6686 = vmul.f32 %v6623, %v6662
      %v6687 = vmul.f32 %v6628, %v6662
      %v6688 = vmul.f32 %v6631, %v6662
      %v6689 = vmul.f32 %v6636, %v6662
      %v6690 = vmul.f32 %v6639, %v6662
      %v6691 = vmul.f32 %v6644, %v6662
      %v6692 = vmul.f32 %v6647, %v6662
      %v6693 = vmul.f32 %v6652, %v6662
      %v6694 = vmul.f32 %v6655, %v6662
      %v6695 = vld [vmem:[%s4 + $0x1] sm:$0x1]
      %v6696 = vlaneseq
      %v6697 = vshrl.u32 %v6696, 7
      %v6698 = vsub.s32 0, %v6697
      %v6699 = vrot.slane %v6695, %v6698
      %v6700 = vadd.f32 %v6663, %v6699
      %v6701 = vadd.f32 %v6664, %v6699
      %v6702 = vadd.f32 %v6665, %v6699
      %v6703 = vadd.f32 %v6666, %v6699
      %v6704 = vadd.f32 %v6667, %v6699
      %v6705 = vadd.f32 %v6668, %v6699
      %v6706 = vadd.f32 %v6669, %v6699
      %v6707 = vadd.f32 %v6670, %v6699
      %v6708 = vadd.f32 %v6671, %v6699
      %v6709 = vadd.f32 %v6672, %v6699
      %v6710 = vadd.f32 %v6673, %v6699
      %v6711 = vadd.f32 %v6674, %v6699
      %v6712 = vadd.f32 %v6675, %v6699
      %v6713 = vadd.f32 %v6676, %v6699
      %v6714 = vadd.f32 %v6677, %v6699
      %v6715 = vadd.f32 %v6678, %v6699
      %v6716 = vadd.f32 %v6679, %v6699
      %v6717 = vadd.f32 %v6680, %v6699
      %v6718 = vadd.f32 %v6681, %v6699
      %v6719 = vadd.f32 %v6682, %v6699
      %v6720 = vadd.f32 %v6683, %v6699
      %v6721 = vadd.f32 %v6684, %v6699
      %v6722 = vadd.f32 %v6685, %v6699
      %v6723 = vadd.f32 %v6686, %v6699
      %v6724 = vadd.f32 %v6687, %v6699
      %v6725 = vadd.f32 %v6688, %v6699
      %v6726 = vadd.f32 %v6689, %v6699
      %v6727 = vadd.f32 %v6690, %v6699
      %v6728 = vadd.f32 %v6691, %v6699
      %v6729 = vadd.f32 %v6692, %v6699
      %v6730 = vadd.f32 %v6693, %v6699
      %v6731 = vadd.f32 %v6694, %v6699
      %v6732 = vmax.f32 %v6700, 0.0
      %v6733 = vmax.f32 %v6701, 0.0
      %v6734 = vmax.f32 %v6702, 0.0
      %v6735 = vmax.f32 %v6703, 0.0
      %v6736 = vmax.f32 %v6704, 0.0
      %v6737 = vmax.f32 %v6705, 0.0
      %v6738 = vmax.f32 %v6706, 0.0
      %v6739 = vmax.f32 %v6707, 0.0
      %v6740 = vmax.f32 %v6708, 0.0
      %v6741 = vmax.f32 %v6709, 0.0
      %v6742 = vmax.f32 %v6710, 0.0
      %v6743 = vmax.f32 %v6711, 0.0
      %v6744 = vmax.f32 %v6712, 0.0
      %v6745 = vmax.f32 %v6713, 0.0
      %v6746 = vmax.f32 %v6714, 0.0
      %v6747 = vmax.f32 %v6715, 0.0
      %v6748 = vmax.f32 %v6716, 0.0
      %v6749 = vmax.f32 %v6717, 0.0
      %v6750 = vmax.f32 %v6718, 0.0
      %v6751 = vmax.f32 %v6719, 0.0
      %v6752 = vmax.f32 %v6720, 0.0
      %v6753 = vmax.f32 %v6721, 0.0
      %v6754 = vmax.f32 %v6722, 0.0
      %v6755 = vmax.f32 %v6723, 0.0
      %v6756 = vmax.f32 %v6724, 0.0
      %v6757 = vmax.f32 %v6725, 0.0
      %v6758 = vmax.f32 %v6726, 0.0
      %v6759 = vmax.f32 %v6727, 0.0
      %v6760 = vmax.f32 %v6728, 0.0
      %v6761 = vmax.f32 %v6729, 0.0
      %v6762 = vmax.f32 %v6730, 0.0
      %v6763 = vmax.f32 %v6731, 0.0
      %s6764 = scalar_lea.vmem [#allocation4], 24
      %6765 = vst.msk [vmem:[%s6764 + $0x1] sm:$0xff] %vm297, %v6732
      %6766 = vst.msk [vmem:[%s6764 + $0x9] sm:$0xff] %vm297, %v6733
      %6767 = vst.msk [vmem:[%s6764 + $0x19] sm:$0xff] %vm297, %v6734
      %6768 = vst.msk [vmem:[%s6764 + $0x21] sm:$0xff] %vm297, %v6735
      %6769 = vst.msk [vmem:[%s6764 + $0x31] sm:$0xff] %vm297, %v6736
      %6770 = vst.msk [vmem:[%s6764 + $0x39] sm:$0xff] %vm297, %v6737
      %6771 = vst.msk [vmem:[%s6764 + $0x49] sm:$0xff] %vm297, %v6738
      %6772 = vst.msk [vmem:[%s6764 + $0x51] sm:$0xff] %vm297, %v6739
      %6773 = vst.msk [vmem:[%s6764 + $0x61] sm:$0xff] %vm297, %v6740
      %6774 = vst.msk [vmem:[%s6764 + $0x69] sm:$0xff] %vm297, %v6741
      %6775 = vst.msk [vmem:[%s6764 + $0x79] sm:$0xff] %vm297, %v6742
      %6776 = vst.msk [vmem:[%s6764 + $0x81] sm:$0xff] %vm297, %v6743
      %6777 = vst.msk [vmem:[%s6764 + $0x91] sm:$0xff] %vm297, %v6744
      %6778 = vst.msk [vmem:[%s6764 + $0x99] sm:$0xff] %vm297, %v6745
      %6779 = vst.msk [vmem:[%s6764 + $0xa9] sm:$0xff] %vm297, %v6746
      %6780 = vst.msk [vmem:[%s6764 + $0xb1] sm:$0xff] %vm297, %v6747
      %6781 = vst.msk [vmem:[%s6764 + $0xc1] sm:$0xff] %vm297, %v6748
      %6782 = vst.msk [vmem:[%s6764 + $0xc9] sm:$0xff] %vm297, %v6749
      %6783 = vst.msk [vmem:[%s6764 + $0xd9] sm:$0xff] %vm297, %v6750
      %6784 = vst.msk [vmem:[%s6764 + $0xe1] sm:$0xff] %vm297, %v6751
      %6785 = vst.msk [vmem:[%s6764 + $0xf1] sm:$0xff] %vm297, %v6752
      %6786 = vst.msk [vmem:[%s6764 + $0xf9] sm:$0xff] %vm297, %v6753
      %6787 = vst.msk [vmem:[%s6764 + $0x109] sm:$0xff] %vm297, %v6754
      %6788 = vst.msk [vmem:[%s6764 + $0x111] sm:$0xff] %vm297, %v6755
      %6789 = vst.msk [vmem:[%s6764 + $0x121] sm:$0xff] %vm297, %v6756
      %6790 = vst.msk [vmem:[%s6764 + $0x129] sm:$0xff] %vm297, %v6757
      %6791 = vst.msk [vmem:[%s6764 + $0x139] sm:$0xff] %vm297, %v6758
      %6792 = vst.msk [vmem:[%s6764 + $0x141] sm:$0xff] %vm297, %v6759
      %6793 = vst.msk [vmem:[%s6764 + $0x151] sm:$0xff] %vm297, %v6760
      %6794 = vst.msk [vmem:[%s6764 + $0x159] sm:$0xff] %vm297, %v6761
      %6795 = vst.msk [vmem:[%s6764 + $0x169] sm:$0xff] %vm297, %v6762
      %6796 = vst.msk [vmem:[%s6764 + $0x171] sm:$0xff] %vm297, %v6763
      %v6797 = vld [vmem:[#allocation4] sm:$0xff]
      %v6798 = vld [vmem:[#allocation4 + $0x8] sm:$0xff]
      %v6799 = vld [vmem:[#allocation4 + $0x18] sm:$0xff]
      %v6800 = vld [vmem:[#allocation4 + $0x20] sm:$0xff]
      %v6801 = vld [vmem:[#allocation4 + $0x30] sm:$0xff]
      %v6802 = vld [vmem:[#allocation4 + $0x38] sm:$0xff]
      %v6803 = vld [vmem:[#allocation4 + $0x48] sm:$0xff]
      %v6804 = vld [vmem:[#allocation4 + $0x50] sm:$0xff]
      %v6805 = vld [vmem:[#allocation4 + $0x60] sm:$0xff]
      %v6806 = vld [vmem:[#allocation4 + $0x68] sm:$0xff]
      %v6807 = vld [vmem:[#allocation4 + $0x78] sm:$0xff]
      %v6808 = vld [vmem:[#allocation4 + $0x80] sm:$0xff]
      %v6809 = vld [vmem:[#allocation4 + $0x90] sm:$0xff]
      %v6810 = vld [vmem:[#allocation4 + $0x98] sm:$0xff]
      %v6811 = vld [vmem:[#allocation4 + $0xa8] sm:$0xff]
      %v6812 = vld [vmem:[#allocation4 + $0xb0] sm:$0xff]
      %v6813 = vld [vmem:[#allocation4 + $0xc0] sm:$0xff]
      %v6814 = vld [vmem:[#allocation4 + $0xc8] sm:$0xff]
      %v6815 = vld [vmem:[#allocation4 + $0xd8] sm:$0xff]
      %v6816 = vld [vmem:[#allocation4 + $0xe0] sm:$0xff]
      %v6817 = vld [vmem:[#allocation4 + $0xf0] sm:$0xff]
      %v6818 = vld [vmem:[#allocation4 + $0xf8] sm:$0xff]
      %v6819 = vld [vmem:[#allocation4 + $0x108] sm:$0xff]
      %v6820 = vld [vmem:[#allocation4 + $0x110] sm:$0xff]
      %v6821 = vld [vmem:[#allocation4 + $0x120] sm:$0xff]
      %v6822 = vld [vmem:[#allocation4 + $0x128] sm:$0xff]
      %v6823 = vld [vmem:[#allocation4 + $0x138] sm:$0xff]
      %v6824 = vld [vmem:[#allocation4 + $0x140] sm:$0xff]
      %v6825 = vld [vmem:[#allocation4 + $0x150] sm:$0xff]
      %v6826 = vld [vmem:[#allocation4 + $0x158] sm:$0xff]
      %v6827 = vld [vmem:[#allocation4 + $0x168] sm:$0xff]
      %v6828 = vld [vmem:[#allocation4 + $0x170] sm:$0xff]
      %v6829 = vpack.c.bf16 %v6798, %v6797
      %v6830 = vpack.c.bf16 %v6800, %v6799
      %v6831 = vpack.c.bf16 %v6802, %v6801
      %v6832 = vpack.c.bf16 %v6804, %v6803
      %v6833 = vpack.c.bf16 %v6806, %v6805
      %v6834 = vpack.c.bf16 %v6808, %v6807
      %v6835 = vpack.c.bf16 %v6810, %v6809
      %v6836 = vpack.c.bf16 %v6812, %v6811
      %v6837 = vpack.c.bf16 %v6814, %v6813
      %v6838 = vpack.c.bf16 %v6816, %v6815
      %v6839 = vpack.c.bf16 %v6818, %v6817
      %v6840 = vpack.c.bf16 %v6820, %v6819
      %v6841 = vpack.c.bf16 %v6822, %v6821
      %v6842 = vpack.c.bf16 %v6824, %v6823
      %v6843 = vpack.c.bf16 %v6826, %v6825
      %v6844 = vpack.c.bf16 %v6828, %v6827
      %6845 = vst.msk [vmem:[#allocation6] sm:$0xff] %vm297, %v6829
      %6846 = vst.msk [vmem:[#allocation6 + $0x8] sm:$0xff] %vm297, %v6830
      %6847 = vst.msk [vmem:[#allocation6 + $0x10] sm:$0xff] %vm297, %v6831
      %6848 = vst.msk [vmem:[#allocation6 + $0x18] sm:$0xff] %vm297, %v6832
      %6849 = vst.msk [vmem:[#allocation6 + $0x20] sm:$0xff] %vm297, %v6833
      %6850 = vst.msk [vmem:[#allocation6 + $0x28] sm:$0xff] %vm297, %v6834
      %6851 = vst.msk [vmem:[#allocation6 + $0x30] sm:$0xff] %vm297, %v6835
      %6852 = vst.msk [vmem:[#allocation6 + $0x38] sm:$0xff] %vm297, %v6836
      %6853 = vst.msk [vmem:[#allocation6 + $0x40] sm:$0xff] %vm297, %v6837
      %6854 = vst.msk [vmem:[#allocation6 + $0x48] sm:$0xff] %vm297, %v6838
      %6855 = vst.msk [vmem:[#allocation6 + $0x50] sm:$0xff] %vm297, %v6839
      %6856 = vst.msk [vmem:[#allocation6 + $0x58] sm:$0xff] %vm297, %v6840
      %6857 = vst.msk [vmem:[#allocation6 + $0x60] sm:$0xff] %vm297, %v6841
      %6858 = vst.msk [vmem:[#allocation6 + $0x68] sm:$0xff] %vm297, %v6842
      %6859 = vst.msk [vmem:[#allocation6 + $0x70] sm:$0xff] %vm297, %v6843
      %6860 = vst.msk [vmem:[#allocation6 + $0x78] sm:$0xff] %vm297, %v6844
      %v6861 = vld [vmem:[#allocation4 + $0x1] sm:$0xff]
      %v6862 = vld [vmem:[#allocation4 + $0x9] sm:$0xff]
      %v6863 = vld [vmem:[#allocation4 + $0x19] sm:$0xff]
      %v6864 = vld [vmem:[#allocation4 + $0x21] sm:$0xff]
      %v6865 = vld [vmem:[#allocation4 + $0x31] sm:$0xff]
      %v6866 = vld [vmem:[#allocation4 + $0x39] sm:$0xff]
      %v6867 = vld [vmem:[#allocation4 + $0x49] sm:$0xff]
      %v6868 = vld [vmem:[#allocation4 + $0x51] sm:$0xff]
      %v6869 = vld [vmem:[#allocation4 + $0x61] sm:$0xff]
      %v6870 = vld [vmem:[#allocation4 + $0x69] sm:$0xff]
      %v6871 = vld [vmem:[#allocation4 + $0x79] sm:$0xff]
      %v6872 = vld [vmem:[#allocation4 + $0x81] sm:$0xff]
      %v6873 = vld [vmem:[#allocation4 + $0x91] sm:$0xff]
      %v6874 = vld [vmem:[#allocation4 + $0x99] sm:$0xff]
      %v6875 = vld [vmem:[#allocation4 + $0xa9] sm:$0xff]
      %v6876 = vld [vmem:[#allocation4 + $0xb1] sm:$0xff]
      %v6877 = vld [vmem:[#allocation4 + $0xc1] sm:$0xff]
      %v6878 = vld [vmem:[#allocation4 + $0xc9] sm:$0xff]
      %v6879 = vld [vmem:[#allocation4 + $0xd9] sm:$0xff]
      %v6880 = vld [vmem:[#allocation4 + $0xe1] sm:$0xff]
      %v6881 = vld [vmem:[#allocation4 + $0xf1] sm:$0xff]
      %v6882 = vld [vmem:[#allocation4 + $0xf9] sm:$0xff]
      %v6883 = vld [vmem:[#allocation4 + $0x109] sm:$0xff]
      %v6884 = vld [vmem:[#allocation4 + $0x111] sm:$0xff]
      %v6885 = vld [vmem:[#allocation4 + $0x121] sm:$0xff]
      %v6886 = vld [vmem:[#allocation4 + $0x129] sm:$0xff]
      %v6887 = vld [vmem:[#allocation4 + $0x139] sm:$0xff]
      %v6888 = vld [vmem:[#allocation4 + $0x141] sm:$0xff]
      %v6889 = vld [vmem:[#allocation4 + $0x151] sm:$0xff]
      %v6890 = vld [vmem:[#allocation4 + $0x159] sm:$0xff]
      %v6891 = vld [vmem:[#allocation4 + $0x169] sm:$0xff]
      %v6892 = vld [vmem:[#allocation4 + $0x171] sm:$0xff]
      %v6893 = vpack.c.bf16 %v6862, %v6861
      %v6894 = vpack.c.bf16 %v6864, %v6863
      %v6895 = vpack.c.bf16 %v6866, %v6865
      %v6896 = vpack.c.bf16 %v6868, %v6867
      %v6897 = vpack.c.bf16 %v6870, %v6869
      %v6898 = vpack.c.bf16 %v6872, %v6871
      %v6899 = vpack.c.bf16 %v6874, %v6873
      %v6900 = vpack.c.bf16 %v6876, %v6875
      %v6901 = vpack.c.bf16 %v6878, %v6877
      %v6902 = vpack.c.bf16 %v6880, %v6879
      %v6903 = vpack.c.bf16 %v6882, %v6881
      %v6904 = vpack.c.bf16 %v6884, %v6883
      %v6905 = vpack.c.bf16 %v6886, %v6885
      %v6906 = vpack.c.bf16 %v6888, %v6887
      %v6907 = vpack.c.bf16 %v6890, %v6889
      %v6908 = vpack.c.bf16 %v6892, %v6891
      %6925 = vrot.lane.b32.xlu0 %v6893, 4
      %v6926 = vpop.permute.xlu0 %6925
      %6927 = vrot.lane.b32.xlu0 %v6894, 4
      %v6928 = vpop.permute.xlu0 %6927
      %6929 = vrot.lane.b32.xlu0 %v6895, 4
      %v6930 = vpop.permute.xlu0 %6929
      %6931 = vrot.lane.b32.xlu0 %v6896, 4
      %v6932 = vpop.permute.xlu0 %6931
      %6933 = vrot.lane.b32.xlu0 %v6897, 4
      %v6934 = vpop.permute.xlu0 %6933
      %6935 = vrot.lane.b32.xlu0 %v6898, 4
      %v6936 = vpop.permute.xlu0 %6935
      %6937 = vrot.lane.b32.xlu0 %v6899, 4
      %v6938 = vpop.permute.xlu0 %6937
      %6939 = vrot.lane.b32.xlu0 %v6900, 4
      %v6940 = vpop.permute.xlu0 %6939
      %6941 = vrot.lane.b32.xlu0 %v6901, 4
      %v6942 = vpop.permute.xlu0 %6941
      %6943 = vrot.lane.b32.xlu0 %v6902, 4
      %v6944 = vpop.permute.xlu0 %6943
      %6945 = vrot.lane.b32.xlu0 %v6903, 4
      %v6946 = vpop.permute.xlu0 %6945
      %6947 = vrot.lane.b32.xlu0 %v6904, 4
      %v6948 = vpop.permute.xlu0 %6947
      %6949 = vrot.lane.b32.xlu0 %v6905, 4
      %v6950 = vpop.permute.xlu0 %6949
      %6951 = vrot.lane.b32.xlu0 %v6906, 4
      %v6952 = vpop.permute.xlu0 %6951
      %6953 = vrot.lane.b32.xlu0 %v6907, 4
      %v6954 = vpop.permute.xlu0 %6953
      %6955 = vrot.lane.b32.xlu0 %v6908, 4
      %v6956 = vpop.permute.xlu0 %6955
      %6973 = vst.msk [vmem:[#allocation6] sm:$0xff] %vm4310, %v6926
      %6974 = vst.msk [vmem:[#allocation6 + $0x8] sm:$0xff] %vm4310, %v6928
      %6975 = vst.msk [vmem:[#allocation6 + $0x10] sm:$0xff] %vm4310, %v6930
      %6976 = vst.msk [vmem:[#allocation6 + $0x18] sm:$0xff] %vm4310, %v6932
      %6977 = vst.msk [vmem:[#allocation6 + $0x20] sm:$0xff] %vm4310, %v6934
      %6978 = vst.msk [vmem:[#allocation6 + $0x28] sm:$0xff] %vm4310, %v6936
      %6979 = vst.msk [vmem:[#allocation6 + $0x30] sm:$0xff] %vm4310, %v6938
      %6980 = vst.msk [vmem:[#allocation6 + $0x38] sm:$0xff] %vm4310, %v6940
      %6981 = vst.msk [vmem:[#allocation6 + $0x40] sm:$0xff] %vm4310, %v6942
      %6982 = vst.msk [vmem:[#allocation6 + $0x48] sm:$0xff] %vm4310, %v6944
      %6983 = vst.msk [vmem:[#allocation6 + $0x50] sm:$0xff] %vm4310, %v6946
      %6984 = vst.msk [vmem:[#allocation6 + $0x58] sm:$0xff] %vm4310, %v6948
      %6985 = vst.msk [vmem:[#allocation6 + $0x60] sm:$0xff] %vm4310, %v6950
      %6986 = vst.msk [vmem:[#allocation6 + $0x68] sm:$0xff] %vm4310, %v6952
      %6987 = vst.msk [vmem:[#allocation6 + $0x70] sm:$0xff] %vm4310, %v6954
      %6988 = vst.msk [vmem:[#allocation6 + $0x78] sm:$0xff] %vm4310, %v6956
      %v6989 = vld [vmem:[#allocation4 + $0x2] sm:$0xff]
      %v6990 = vld [vmem:[#allocation4 + $0xa] sm:$0xff]
      %v6991 = vld [vmem:[#allocation4 + $0x1a] sm:$0xff]
      %v6992 = vld [vmem:[#allocation4 + $0x22] sm:$0xff]
      %v6993 = vld [vmem:[#allocation4 + $0x32] sm:$0xff]
      %v6994 = vld [vmem:[#allocation4 + $0x3a] sm:$0xff]
      %v6995 = vld [vmem:[#allocation4 + $0x4a] sm:$0xff]
      %v6996 = vld [vmem:[#allocation4 + $0x52] sm:$0xff]
      %v6997 = vld [vmem:[#allocation4 + $0x62] sm:$0xff]
      %v6998 = vld [vmem:[#allocation4 + $0x6a] sm:$0xff]
      %v6999 = vld [vmem:[#allocation4 + $0x7a] sm:$0xff]
      %v7000 = vld [vmem:[#allocation4 + $0x82] sm:$0xff]
      %v7001 = vld [vmem:[#allocation4 + $0x92] sm:$0xff]
      %v7002 = vld [vmem:[#allocation4 + $0x9a] sm:$0xff]
      %v7003 = vld [vmem:[#allocation4 + $0xaa] sm:$0xff]
      %v7004 = vld [vmem:[#allocation4 + $0xb2] sm:$0xff]
      %v7005 = vld [vmem:[#allocation4 + $0xc2] sm:$0xff]
      %v7006 = vld [vmem:[#allocation4 + $0xca] sm:$0xff]
      %v7007 = vld [vmem:[#allocation4 + $0xda] sm:$0xff]
      %v7008 = vld [vmem:[#allocation4 + $0xe2] sm:$0xff]
      %v7009 = vld [vmem:[#allocation4 + $0xf2] sm:$0xff]
      %v7010 = vld [vmem:[#allocation4 + $0xfa] sm:$0xff]
      %v7011 = vld [vmem:[#allocation4 + $0x10a] sm:$0xff]
      %v7012 = vld [vmem:[#allocation4 + $0x112] sm:$0xff]
      %v7013 = vld [vmem:[#allocation4 + $0x122] sm:$0xff]
      %v7014 = vld [vmem:[#allocation4 + $0x12a] sm:$0xff]
      %v7015 = vld [vmem:[#allocation4 + $0x13a] sm:$0xff]
      %v7016 = vld [vmem:[#allocation4 + $0x142] sm:$0xff]
      %v7017 = vld [vmem:[#allocation4 + $0x152] sm:$0xff]
      %v7018 = vld [vmem:[#allocation4 + $0x15a] sm:$0xff]
      %v7019 = vld [vmem:[#allocation4 + $0x16a] sm:$0xff]
      %v7020 = vld [vmem:[#allocation4 + $0x172] sm:$0xff]
      %v7021 = vpack.c.bf16 %v6990, %v6989
      %v7022 = vpack.c.bf16 %v6992, %v6991
      %v7023 = vpack.c.bf16 %v6994, %v6993
      %v7024 = vpack.c.bf16 %v6996, %v6995
      %v7025 = vpack.c.bf16 %v6998, %v6997
      %v7026 = vpack.c.bf16 %v7000, %v6999
      %v7027 = vpack.c.bf16 %v7002, %v7001
      %v7028 = vpack.c.bf16 %v7004, %v7003
      %v7029 = vpack.c.bf16 %v7006, %v7005
      %v7030 = vpack.c.bf16 %v7008, %v7007
      %v7031 = vpack.c.bf16 %v7010, %v7009
      %v7032 = vpack.c.bf16 %v7012, %v7011
      %v7033 = vpack.c.bf16 %v7014, %v7013
      %v7034 = vpack.c.bf16 %v7016, %v7015
      %v7035 = vpack.c.bf16 %v7018, %v7017
      %v7036 = vpack.c.bf16 %v7020, %v7019
      %7053 = vrot.lane.b32.xlu0 %v7021, 8
      %v7054 = vpop.permute.xlu0 %7053
      %7055 = vrot.lane.b32.xlu0 %v7022, 8
      %v7056 = vpop.permute.xlu0 %7055
      %7057 = vrot.lane.b32.xlu0 %v7023, 8
      %v7058 = vpop.permute.xlu0 %7057
      %7059 = vrot.lane.b32.xlu0 %v7024, 8
      %v7060 = vpop.permute.xlu0 %7059
      %7061 = vrot.lane.b32.xlu0 %v7025, 8
      %v7062 = vpop.permute.xlu0 %7061
      %7063 = vrot.lane.b32.xlu0 %v7026, 8
      %v7064 = vpop.permute.xlu0 %7063
      %7065 = vrot.lane.b32.xlu0 %v7027, 8
      %v7066 = vpop.permute.xlu0 %7065
      %7067 = vrot.lane.b32.xlu0 %v7028, 8
      %v7068 = vpop.permute.xlu0 %7067
      %7069 = vrot.lane.b32.xlu0 %v7029, 8
      %v7070 = vpop.permute.xlu0 %7069
      %7071 = vrot.lane.b32.xlu0 %v7030, 8
      %v7072 = vpop.permute.xlu0 %7071
      %7073 = vrot.lane.b32.xlu0 %v7031, 8
      %v7074 = vpop.permute.xlu0 %7073
      %7075 = vrot.lane.b32.xlu0 %v7032, 8
      %v7076 = vpop.permute.xlu0 %7075
      %7077 = vrot.lane.b32.xlu0 %v7033, 8
      %v7078 = vpop.permute.xlu0 %7077
      %7079 = vrot.lane.b32.xlu0 %v7034, 8
      %v7080 = vpop.permute.xlu0 %7079
      %7081 = vrot.lane.b32.xlu0 %v7035, 8
      %v7082 = vpop.permute.xlu0 %7081
      %7083 = vrot.lane.b32.xlu0 %v7036, 8
      %v7084 = vpop.permute.xlu0 %7083
      %7101 = vst.msk [vmem:[#allocation6] sm:$0xff] %vm4439, %v7054
      %7102 = vst.msk [vmem:[#allocation6 + $0x8] sm:$0xff] %vm4439, %v7056
      %7103 = vst.msk [vmem:[#allocation6 + $0x10] sm:$0xff] %vm4439, %v7058
      %7104 = vst.msk [vmem:[#allocation6 + $0x18] sm:$0xff] %vm4439, %v7060
      %7105 = vst.msk [vmem:[#allocation6 + $0x20] sm:$0xff] %vm4439, %v7062
      %7106 = vst.msk [vmem:[#allocation6 + $0x28] sm:$0xff] %vm4439, %v7064
      %7107 = vst.msk [vmem:[#allocation6 + $0x30] sm:$0xff] %vm4439, %v7066
      %7108 = vst.msk [vmem:[#allocation6 + $0x38] sm:$0xff] %vm4439, %v7068
      %7109 = vst.msk [vmem:[#allocation6 + $0x40] sm:$0xff] %vm4439, %v7070
      %7110 = vst.msk [vmem:[#allocation6 + $0x48] sm:$0xff] %vm4439, %v7072
      %7111 = vst.msk [vmem:[#allocation6 + $0x50] sm:$0xff] %vm4439, %v7074
      %7112 = vst.msk [vmem:[#allocation6 + $0x58] sm:$0xff] %vm4439, %v7076
      %7113 = vst.msk [vmem:[#allocation6 + $0x60] sm:$0xff] %vm4439, %v7078
      %7114 = vst.msk [vmem:[#allocation6 + $0x68] sm:$0xff] %vm4439, %v7080
      %7115 = vst.msk [vmem:[#allocation6 + $0x70] sm:$0xff] %vm4439, %v7082
      %7116 = vst.msk [vmem:[#allocation6 + $0x78] sm:$0xff] %vm4439, %v7084
      %v7117 = vld [vmem:[%s6764] sm:$0xff]
      %v7118 = vld [vmem:[%s6764 + $0x8] sm:$0xff]
      %v7119 = vld [vmem:[%s6764 + $0x18] sm:$0xff]
      %v7120 = vld [vmem:[%s6764 + $0x20] sm:$0xff]
      %v7121 = vld [vmem:[%s6764 + $0x30] sm:$0xff]
      %v7122 = vld [vmem:[%s6764 + $0x38] sm:$0xff]
      %v7123 = vld [vmem:[%s6764 + $0x48] sm:$0xff]
      %v7124 = vld [vmem:[%s6764 + $0x50] sm:$0xff]
      %v7125 = vld [vmem:[%s6764 + $0x60] sm:$0xff]
      %v7126 = vld [vmem:[%s6764 + $0x68] sm:$0xff]
      %v7127 = vld [vmem:[%s6764 + $0x78] sm:$0xff]
      %v7128 = vld [vmem:[%s6764 + $0x80] sm:$0xff]
      %v7129 = vld [vmem:[%s6764 + $0x90] sm:$0xff]
      %v7130 = vld [vmem:[%s6764 + $0x98] sm:$0xff]
      %v7131 = vld [vmem:[%s6764 + $0xa8] sm:$0xff]
      %v7132 = vld [vmem:[%s6764 + $0xb0] sm:$0xff]
      %v7133 = vld [vmem:[%s6764 + $0xc0] sm:$0xff]
      %v7134 = vld [vmem:[%s6764 + $0xc8] sm:$0xff]
      %v7135 = vld [vmem:[%s6764 + $0xd8] sm:$0xff]
      %v7136 = vld [vmem:[%s6764 + $0xe0] sm:$0xff]
      %v7137 = vld [vmem:[%s6764 + $0xf0] sm:$0xff]
      %v7138 = vld [vmem:[%s6764 + $0xf8] sm:$0xff]
      %v7139 = vld [vmem:[%s6764 + $0x108] sm:$0xff]
      %v7140 = vld [vmem:[%s6764 + $0x110] sm:$0xff]
      %v7141 = vld [vmem:[%s6764 + $0x120] sm:$0xff]
      %v7142 = vld [vmem:[%s6764 + $0x128] sm:$0xff]
      %v7143 = vld [vmem:[%s6764 + $0x138] sm:$0xff]
      %v7144 = vld [vmem:[%s6764 + $0x140] sm:$0xff]
      %v7145 = vld [vmem:[%s6764 + $0x150] sm:$0xff]
      %v7146 = vld [vmem:[%s6764 + $0x158] sm:$0xff]
      %v7147 = vld [vmem:[%s6764 + $0x168] sm:$0xff]
      %v7148 = vld [vmem:[%s6764 + $0x170] sm:$0xff]
      %v7149 = vpack.c.bf16 %v7118, %v7117
      %v7150 = vpack.c.bf16 %v7120, %v7119
      %v7151 = vpack.c.bf16 %v7122, %v7121
      %v7152 = vpack.c.bf16 %v7124, %v7123
      %v7153 = vpack.c.bf16 %v7126, %v7125
      %v7154 = vpack.c.bf16 %v7128, %v7127
      %v7155 = vpack.c.bf16 %v7130, %v7129
      %v7156 = vpack.c.bf16 %v7132, %v7131
      %v7157 = vpack.c.bf16 %v7134, %v7133
      %v7158 = vpack.c.bf16 %v7136, %v7135
      %v7159 = vpack.c.bf16 %v7138, %v7137
      %v7160 = vpack.c.bf16 %v7140, %v7139
      %v7161 = vpack.c.bf16 %v7142, %v7141
      %v7162 = vpack.c.bf16 %v7144, %v7143
      %v7163 = vpack.c.bf16 %v7146, %v7145
      %v7164 = vpack.c.bf16 %v7148, %v7147
      %7181 = vrot.lane.b32.xlu0 %v7149, 12
      %v7182 = vpop.permute.xlu0 %7181
      %7183 = vrot.lane.b32.xlu0 %v7150, 12
      %v7184 = vpop.permute.xlu0 %7183
      %7185 = vrot.lane.b32.xlu0 %v7151, 12
      %v7186 = vpop.permute.xlu0 %7185
      %7187 = vrot.lane.b32.xlu0 %v7152, 12
      %v7188 = vpop.permute.xlu0 %7187
      %7189 = vrot.lane.b32.xlu0 %v7153, 12
      %v7190 = vpop.permute.xlu0 %7189
      %7191 = vrot.lane.b32.xlu0 %v7154, 12
      %v7192 = vpop.permute.xlu0 %7191
      %7193 = vrot.lane.b32.xlu0 %v7155, 12
      %v7194 = vpop.permute.xlu0 %7193
      %7195 = vrot.lane.b32.xlu0 %v7156, 12
      %v7196 = vpop.permute.xlu0 %7195
      %7197 = vrot.lane.b32.xlu0 %v7157, 12
      %v7198 = vpop.permute.xlu0 %7197
      %7199 = vrot.lane.b32.xlu0 %v7158, 12
      %v7200 = vpop.permute.xlu0 %7199
      %7201 = vrot.lane.b32.xlu0 %v7159, 12
      %v7202 = vpop.permute.xlu0 %7201
      %7203 = vrot.lane.b32.xlu0 %v7160, 12
      %v7204 = vpop.permute.xlu0 %7203
      %7205 = vrot.lane.b32.xlu0 %v7161, 12
      %v7206 = vpop.permute.xlu0 %7205
      %7207 = vrot.lane.b32.xlu0 %v7162, 12
      %v7208 = vpop.permute.xlu0 %7207
      %7209 = vrot.lane.b32.xlu0 %v7163, 12
      %v7210 = vpop.permute.xlu0 %7209
      %7211 = vrot.lane.b32.xlu0 %v7164, 12
      %v7212 = vpop.permute.xlu0 %7211
      %7229 = vst.msk [vmem:[#allocation6] sm:$0xff] %vm4568, %v7182
      %7230 = vst.msk [vmem:[#allocation6 + $0x8] sm:$0xff] %vm4568, %v7184
      %7231 = vst.msk [vmem:[#allocation6 + $0x10] sm:$0xff] %vm4568, %v7186
      %7232 = vst.msk [vmem:[#allocation6 + $0x18] sm:$0xff] %vm4568, %v7188
      %7233 = vst.msk [vmem:[#allocation6 + $0x20] sm:$0xff] %vm4568, %v7190
      %7234 = vst.msk [vmem:[#allocation6 + $0x28] sm:$0xff] %vm4568, %v7192
      %7235 = vst.msk [vmem:[#allocation6 + $0x30] sm:$0xff] %vm4568, %v7194
      %7236 = vst.msk [vmem:[#allocation6 + $0x38] sm:$0xff] %vm4568, %v7196
      %7237 = vst.msk [vmem:[#allocation6 + $0x40] sm:$0xff] %vm4568, %v7198
      %7238 = vst.msk [vmem:[#allocation6 + $0x48] sm:$0xff] %vm4568, %v7200
      %7239 = vst.msk [vmem:[#allocation6 + $0x50] sm:$0xff] %vm4568, %v7202
      %7240 = vst.msk [vmem:[#allocation6 + $0x58] sm:$0xff] %vm4568, %v7204
      %7241 = vst.msk [vmem:[#allocation6 + $0x60] sm:$0xff] %vm4568, %v7206
      %7242 = vst.msk [vmem:[#allocation6 + $0x68] sm:$0xff] %vm4568, %v7208
      %7243 = vst.msk [vmem:[#allocation6 + $0x70] sm:$0xff] %vm4568, %v7210
      %7244 = vst.msk [vmem:[#allocation6 + $0x78] sm:$0xff] %vm4568, %v7212
      %v7245 = vld [vmem:[%s6764 + $0x1] sm:$0xff]
      %v7246 = vld [vmem:[%s6764 + $0x9] sm:$0xff]
      %v7247 = vld [vmem:[%s6764 + $0x19] sm:$0xff]
      %v7248 = vld [vmem:[%s6764 + $0x21] sm:$0xff]
      %v7249 = vld [vmem:[%s6764 + $0x31] sm:$0xff]
      %v7250 = vld [vmem:[%s6764 + $0x39] sm:$0xff]
      %v7251 = vld [vmem:[%s6764 + $0x49] sm:$0xff]
      %v7252 = vld [vmem:[%s6764 + $0x51] sm:$0xff]
      %v7253 = vld [vmem:[%s6764 + $0x61] sm:$0xff]
      %v7254 = vld [vmem:[%s6764 + $0x69] sm:$0xff]
      %v7255 = vld [vmem:[%s6764 + $0x79] sm:$0xff]
      %v7256 = vld [vmem:[%s6764 + $0x81] sm:$0xff]
      %v7257 = vld [vmem:[%s6764 + $0x91] sm:$0xff]
      %v7258 = vld [vmem:[%s6764 + $0x99] sm:$0xff]
      %v7259 = vld [vmem:[%s6764 + $0xa9] sm:$0xff]
      %v7260 = vld [vmem:[%s6764 + $0xb1] sm:$0xff]
      %v7261 = vld [vmem:[%s6764 + $0xc1] sm:$0xff]
      %v7262 = vld [vmem:[%s6764 + $0xc9] sm:$0xff]
      %v7263 = vld [vmem:[%s6764 + $0xd9] sm:$0xff]
      %v7264 = vld [vmem:[%s6764 + $0xe1] sm:$0xff]
      %v7265 = vld [vmem:[%s6764 + $0xf1] sm:$0xff]
      %v7266 = vld [vmem:[%s6764 + $0xf9] sm:$0xff]
      %v7267 = vld [vmem:[%s6764 + $0x109] sm:$0xff]
      %v7268 = vld [vmem:[%s6764 + $0x111] sm:$0xff]
      %v7269 = vld [vmem:[%s6764 + $0x121] sm:$0xff]
      %v7270 = vld [vmem:[%s6764 + $0x129] sm:$0xff]
      %v7271 = vld [vmem:[%s6764 + $0x139] sm:$0xff]
      %v7272 = vld [vmem:[%s6764 + $0x141] sm:$0xff]
      %v7273 = vld [vmem:[%s6764 + $0x151] sm:$0xff]
      %v7274 = vld [vmem:[%s6764 + $0x159] sm:$0xff]
      %v7275 = vld [vmem:[%s6764 + $0x169] sm:$0xff]
      %v7276 = vld [vmem:[%s6764 + $0x171] sm:$0xff]
      %v7277 = vpack.c.bf16 %v7246, %v7245
      %v7278 = vpack.c.bf16 %v7248, %v7247
      %v7279 = vpack.c.bf16 %v7250, %v7249
      %v7280 = vpack.c.bf16 %v7252, %v7251
      %v7281 = vpack.c.bf16 %v7254, %v7253
      %v7282 = vpack.c.bf16 %v7256, %v7255
      %v7283 = vpack.c.bf16 %v7258, %v7257
      %v7284 = vpack.c.bf16 %v7260, %v7259
      %v7285 = vpack.c.bf16 %v7262, %v7261
      %v7286 = vpack.c.bf16 %v7264, %v7263
      %v7287 = vpack.c.bf16 %v7266, %v7265
      %v7288 = vpack.c.bf16 %v7268, %v7267
      %v7289 = vpack.c.bf16 %v7270, %v7269
      %v7290 = vpack.c.bf16 %v7272, %v7271
      %v7291 = vpack.c.bf16 %v7274, %v7273
      %v7292 = vpack.c.bf16 %v7276, %v7275
      %7309 = vrot.lane.b32.xlu0 %v7277, 16
      %v7310 = vpop.permute.xlu0 %7309
      %7311 = vrot.lane.b32.xlu0 %v7278, 16
      %v7312 = vpop.permute.xlu0 %7311
      %7313 = vrot.lane.b32.xlu0 %v7279, 16
      %v7314 = vpop.permute.xlu0 %7313
      %7315 = vrot.lane.b32.xlu0 %v7280, 16
      %v7316 = vpop.permute.xlu0 %7315
      %7317 = vrot.lane.b32.xlu0 %v7281, 16
      %v7318 = vpop.permute.xlu0 %7317
      %7319 = vrot.lane.b32.xlu0 %v7282, 16
      %v7320 = vpop.permute.xlu0 %7319
      %7321 = vrot.lane.b32.xlu0 %v7283, 16
      %v7322 = vpop.permute.xlu0 %7321
      %7323 = vrot.lane.b32.xlu0 %v7284, 16
      %v7324 = vpop.permute.xlu0 %7323
      %7325 = vrot.lane.b32.xlu0 %v7285, 16
      %v7326 = vpop.permute.xlu0 %7325
      %7327 = vrot.lane.b32.xlu0 %v7286, 16
      %v7328 = vpop.permute.xlu0 %7327
      %7329 = vrot.lane.b32.xlu0 %v7287, 16
      %v7330 = vpop.permute.xlu0 %7329
      %7331 = vrot.lane.b32.xlu0 %v7288, 16
      %v7332 = vpop.permute.xlu0 %7331
      %7333 = vrot.lane.b32.xlu0 %v7289, 16
      %v7334 = vpop.permute.xlu0 %7333
      %7335 = vrot.lane.b32.xlu0 %v7290, 16
      %v7336 = vpop.permute.xlu0 %7335
      %7337 = vrot.lane.b32.xlu0 %v7291, 16
      %v7338 = vpop.permute.xlu0 %7337
      %7339 = vrot.lane.b32.xlu0 %v7292, 16
      %v7340 = vpop.permute.xlu0 %7339
      %7357 = vst.msk [vmem:[#allocation6] sm:$0xff] %vm4697, %v7310
      %7358 = vst.msk [vmem:[#allocation6 + $0x8] sm:$0xff] %vm4697, %v7312
      %7359 = vst.msk [vmem:[#allocation6 + $0x10] sm:$0xff] %vm4697, %v7314
      %7360 = vst.msk [vmem:[#allocation6 + $0x18] sm:$0xff] %vm4697, %v7316
      %7361 = vst.msk [vmem:[#allocation6 + $0x20] sm:$0xff] %vm4697, %v7318
      %7362 = vst.msk [vmem:[#allocation6 + $0x28] sm:$0xff] %vm4697, %v7320
      %7363 = vst.msk [vmem:[#allocation6 + $0x30] sm:$0xff] %vm4697, %v7322
      %7364 = vst.msk [vmem:[#allocation6 + $0x38] sm:$0xff] %vm4697, %v7324
      %7365 = vst.msk [vmem:[#allocation6 + $0x40] sm:$0xff] %vm4697, %v7326
      %7366 = vst.msk [vmem:[#allocation6 + $0x48] sm:$0xff] %vm4697, %v7328
      %7367 = vst.msk [vmem:[#allocation6 + $0x50] sm:$0xff] %vm4697, %v7330
      %7368 = vst.msk [vmem:[#allocation6 + $0x58] sm:$0xff] %vm4697, %v7332
      %7369 = vst.msk [vmem:[#allocation6 + $0x60] sm:$0xff] %vm4697, %v7334
      %7370 = vst.msk [vmem:[#allocation6 + $0x68] sm:$0xff] %vm4697, %v7336
      %7371 = vst.msk [vmem:[#allocation6 + $0x70] sm:$0xff] %vm4697, %v7338
      %7372 = vst.msk [vmem:[#allocation6 + $0x78] sm:$0xff] %vm4697, %v7340
      %v7373 = vld [vmem:[%s6764 + $0x2] sm:$0xff]
      %v7374 = vld [vmem:[%s6764 + $0xa] sm:$0xff]
      %v7375 = vld [vmem:[%s6764 + $0x1a] sm:$0xff]
      %v7376 = vld [vmem:[%s6764 + $0x22] sm:$0xff]
      %v7377 = vld [vmem:[%s6764 + $0x32] sm:$0xff]
      %v7378 = vld [vmem:[%s6764 + $0x3a] sm:$0xff]
      %v7379 = vld [vmem:[%s6764 + $0x4a] sm:$0xff]
      %v7380 = vld [vmem:[%s6764 + $0x52] sm:$0xff]
      %v7381 = vld [vmem:[%s6764 + $0x62] sm:$0xff]
      %v7382 = vld [vmem:[%s6764 + $0x6a] sm:$0xff]
      %v7383 = vld [vmem:[%s6764 + $0x7a] sm:$0xff]
      %v7384 = vld [vmem:[%s6764 + $0x82] sm:$0xff]
      %v7385 = vld [vmem:[%s6764 + $0x92] sm:$0xff]
      %v7386 = vld [vmem:[%s6764 + $0x9a] sm:$0xff]
      %v7387 = vld [vmem:[%s6764 + $0xaa] sm:$0xff]
      %v7388 = vld [vmem:[%s6764 + $0xb2] sm:$0xff]
      %v7389 = vld [vmem:[%s6764 + $0xc2] sm:$0xff]
      %v7390 = vld [vmem:[%s6764 + $0xca] sm:$0xff]
      %v7391 = vld [vmem:[%s6764 + $0xda] sm:$0xff]
      %v7392 = vld [vmem:[%s6764 + $0xe2] sm:$0xff]
      %v7393 = vld [vmem:[%s6764 + $0xf2] sm:$0xff]
      %v7394 = vld [vmem:[%s6764 + $0xfa] sm:$0xff]
      %v7395 = vld [vmem:[%s6764 + $0x10a] sm:$0xff]
      %v7396 = vld [vmem:[%s6764 + $0x112] sm:$0xff]
      %v7397 = vld [vmem:[%s6764 + $0x122] sm:$0xff]
      %v7398 = vld [vmem:[%s6764 + $0x12a] sm:$0xff]
      %v7399 = vld [vmem:[%s6764 + $0x13a] sm:$0xff]
      %v7400 = vld [vmem:[%s6764 + $0x142] sm:$0xff]
      %v7401 = vld [vmem:[%s6764 + $0x152] sm:$0xff]
      %v7402 = vld [vmem:[%s6764 + $0x15a] sm:$0xff]
      %v7403 = vld [vmem:[%s6764 + $0x16a] sm:$0xff]
      %v7404 = vld [vmem:[%s6764 + $0x172] sm:$0xff]
      %v7405 = vpack.c.bf16 %v7374, %v7373
      %v7406 = vpack.c.bf16 %v7376, %v7375
      %v7407 = vpack.c.bf16 %v7378, %v7377
      %v7408 = vpack.c.bf16 %v7380, %v7379
      %v7409 = vpack.c.bf16 %v7382, %v7381
      %v7410 = vpack.c.bf16 %v7384, %v7383
      %v7411 = vpack.c.bf16 %v7386, %v7385
      %v7412 = vpack.c.bf16 %v7388, %v7387
      %v7413 = vpack.c.bf16 %v7390, %v7389
      %v7414 = vpack.c.bf16 %v7392, %v7391
      %v7415 = vpack.c.bf16 %v7394, %v7393
      %v7416 = vpack.c.bf16 %v7396, %v7395
      %v7417 = vpack.c.bf16 %v7398, %v7397
      %v7418 = vpack.c.bf16 %v7400, %v7399
      %v7419 = vpack.c.bf16 %v7402, %v7401
      %v7420 = vpack.c.bf16 %v7404, %v7403
      %7437 = vrot.lane.b32.xlu0 %v7405, 20
      %v7438 = vpop.permute.xlu0 %7437
      %7439 = vrot.lane.b32.xlu0 %v7406, 20
      %v7440 = vpop.permute.xlu0 %7439
      %7441 = vrot.lane.b32.xlu0 %v7407, 20
      %v7442 = vpop.permute.xlu0 %7441
      %7443 = vrot.lane.b32.xlu0 %v7408, 20
      %v7444 = vpop.permute.xlu0 %7443
      %7445 = vrot.lane.b32.xlu0 %v7409, 20
      %v7446 = vpop.permute.xlu0 %7445
      %7447 = vrot.lane.b32.xlu0 %v7410, 20
      %v7448 = vpop.permute.xlu0 %7447
      %7449 = vrot.lane.b32.xlu0 %v7411, 20
      %v7450 = vpop.permute.xlu0 %7449
      %7451 = vrot.lane.b32.xlu0 %v7412, 20
      %v7452 = vpop.permute.xlu0 %7451
      %7453 = vrot.lane.b32.xlu0 %v7413, 20
      %v7454 = vpop.permute.xlu0 %7453
      %7455 = vrot.lane.b32.xlu0 %v7414, 20
      %v7456 = vpop.permute.xlu0 %7455
      %7457 = vrot.lane.b32.xlu0 %v7415, 20
      %v7458 = vpop.permute.xlu0 %7457
      %7459 = vrot.lane.b32.xlu0 %v7416, 20
      %v7460 = vpop.permute.xlu0 %7459
      %7461 = vrot.lane.b32.xlu0 %v7417, 20
      %v7462 = vpop.permute.xlu0 %7461
      %7463 = vrot.lane.b32.xlu0 %v7418, 20
      %v7464 = vpop.permute.xlu0 %7463
      %7465 = vrot.lane.b32.xlu0 %v7419, 20
      %v7466 = vpop.permute.xlu0 %7465
      %7467 = vrot.lane.b32.xlu0 %v7420, 20
      %v7468 = vpop.permute.xlu0 %7467
      %7485 = vst.msk [vmem:[#allocation6] sm:$0xff] %vm4826, %v7438
      %7486 = vst.msk [vmem:[#allocation6 + $0x8] sm:$0xff] %vm4826, %v7440
      %7487 = vst.msk [vmem:[#allocation6 + $0x10] sm:$0xff] %vm4826, %v7442
      %7488 = vst.msk [vmem:[#allocation6 + $0x18] sm:$0xff] %vm4826, %v7444
      %7489 = vst.msk [vmem:[#allocation6 + $0x20] sm:$0xff] %vm4826, %v7446
      %7490 = vst.msk [vmem:[#allocation6 + $0x28] sm:$0xff] %vm4826, %v7448
      %7491 = vst.msk [vmem:[#allocation6 + $0x30] sm:$0xff] %vm4826, %v7450
      %7492 = vst.msk [vmem:[#allocation6 + $0x38] sm:$0xff] %vm4826, %v7452
      %7493 = vst.msk [vmem:[#allocation6 + $0x40] sm:$0xff] %vm4826, %v7454
      %7494 = vst.msk [vmem:[#allocation6 + $0x48] sm:$0xff] %vm4826, %v7456
      %7495 = vst.msk [vmem:[#allocation6 + $0x50] sm:$0xff] %vm4826, %v7458
      %7496 = vst.msk [vmem:[#allocation6 + $0x58] sm:$0xff] %vm4826, %v7460
      %7497 = vst.msk [vmem:[#allocation6 + $0x60] sm:$0xff] %vm4826, %v7462
      %7498 = vst.msk [vmem:[#allocation6 + $0x68] sm:$0xff] %vm4826, %v7464
      %7499 = vst.msk [vmem:[#allocation6 + $0x70] sm:$0xff] %vm4826, %v7466
      %7500 = vst.msk [vmem:[#allocation6 + $0x78] sm:$0xff] %vm4826, %v7468
      %s7501 = scalar_lea.vmem [#allocation4], 48
      %v7502 = vld [vmem:[%s7501] sm:$0xff]
      %v7503 = vld [vmem:[%s7501 + $0x8] sm:$0xff]
      %v7504 = vld [vmem:[%s7501 + $0x18] sm:$0xff]
      %v7505 = vld [vmem:[%s7501 + $0x20] sm:$0xff]
      %v7506 = vld [vmem:[%s7501 + $0x30] sm:$0xff]
      %v7507 = vld [vmem:[%s7501 + $0x38] sm:$0xff]
      %v7508 = vld [vmem:[%s7501 + $0x48] sm:$0xff]
      %v7509 = vld [vmem:[%s7501 + $0x50] sm:$0xff]
      %v7510 = vld [vmem:[%s7501 + $0x60] sm:$0xff]
      %v7511 = vld [vmem:[%s7501 + $0x68] sm:$0xff]
      %v7512 = vld [vmem:[%s7501 + $0x78] sm:$0xff]
      %v7513 = vld [vmem:[%s7501 + $0x80] sm:$0xff]
      %v7514 = vld [vmem:[%s7501 + $0x90] sm:$0xff]
      %v7515 = vld [vmem:[%s7501 + $0x98] sm:$0xff]
      %v7516 = vld [vmem:[%s7501 + $0xa8] sm:$0xff]
      %v7517 = vld [vmem:[%s7501 + $0xb0] sm:$0xff]
      %v7518 = vld [vmem:[%s7501 + $0xc0] sm:$0xff]
      %v7519 = vld [vmem:[%s7501 + $0xc8] sm:$0xff]
      %v7520 = vld [vmem:[%s7501 + $0xd8] sm:$0xff]
      %v7521 = vld [vmem:[%s7501 + $0xe0] sm:$0xff]
      %v7522 = vld [vmem:[%s7501 + $0xf0] sm:$0xff]
      %v7523 = vld [vmem:[%s7501 + $0xf8] sm:$0xff]
      %v7524 = vld [vmem:[%s7501 + $0x108] sm:$0xff]
      %v7525 = vld [vmem:[%s7501 + $0x110] sm:$0xff]
      %v7526 = vld [vmem:[%s7501 + $0x120] sm:$0xff]
      %v7527 = vld [vmem:[%s7501 + $0x128] sm:$0xff]
      %v7528 = vld [vmem:[%s7501 + $0x138] sm:$0xff]
      %v7529 = vld [vmem:[%s7501 + $0x140] sm:$0xff]
      %v7530 = vld [vmem:[%s7501 + $0x150] sm:$0xff]
      %v7531 = vld [vmem:[%s7501 + $0x158] sm:$0xff]
      %v7532 = vld [vmem:[%s7501 + $0x168] sm:$0xff]
      %v7533 = vld [vmem:[%s7501 + $0x170] sm:$0xff]
      %v7534 = vpack.c.bf16 %v7503, %v7502
      %v7535 = vpack.c.bf16 %v7505, %v7504
      %v7536 = vpack.c.bf16 %v7507, %v7506
      %v7537 = vpack.c.bf16 %v7509, %v7508
      %v7538 = vpack.c.bf16 %v7511, %v7510
      %v7539 = vpack.c.bf16 %v7513, %v7512
      %v7540 = vpack.c.bf16 %v7515, %v7514
      %v7541 = vpack.c.bf16 %v7517, %v7516
      %v7542 = vpack.c.bf16 %v7519, %v7518
      %v7543 = vpack.c.bf16 %v7521, %v7520
      %v7544 = vpack.c.bf16 %v7523, %v7522
      %v7545 = vpack.c.bf16 %v7525, %v7524
      %v7546 = vpack.c.bf16 %v7527, %v7526
      %v7547 = vpack.c.bf16 %v7529, %v7528
      %v7548 = vpack.c.bf16 %v7531, %v7530
      %v7549 = vpack.c.bf16 %v7533, %v7532
      %7566 = vrot.lane.b32.xlu0 %v7534, 24
      %v7567 = vpop.permute.xlu0 %7566
      %7568 = vrot.lane.b32.xlu0 %v7535, 24
      %v7569 = vpop.permute.xlu0 %7568
      %7570 = vrot.lane.b32.xlu0 %v7536, 24
      %v7571 = vpop.permute.xlu0 %7570
      %7572 = vrot.lane.b32.xlu0 %v7537, 24
      %v7573 = vpop.permute.xlu0 %7572
      %7574 = vrot.lane.b32.xlu0 %v7538, 24
      %v7575 = vpop.permute.xlu0 %7574
      %7576 = vrot.lane.b32.xlu0 %v7539, 24
      %v7577 = vpop.permute.xlu0 %7576
      %7578 = vrot.lane.b32.xlu0 %v7540, 24
      %v7579 = vpop.permute.xlu0 %7578
      %7580 = vrot.lane.b32.xlu0 %v7541, 24
      %v7581 = vpop.permute.xlu0 %7580
      %7582 = vrot.lane.b32.xlu0 %v7542, 24
      %v7583 = vpop.permute.xlu0 %7582
      %7584 = vrot.lane.b32.xlu0 %v7543, 24
      %v7585 = vpop.permute.xlu0 %7584
      %7586 = vrot.lane.b32.xlu0 %v7544, 24
      %v7587 = vpop.permute.xlu0 %7586
      %7588 = vrot.lane.b32.xlu0 %v7545, 24
      %v7589 = vpop.permute.xlu0 %7588
      %7590 = vrot.lane.b32.xlu0 %v7546, 24
      %v7591 = vpop.permute.xlu0 %7590
      %7592 = vrot.lane.b32.xlu0 %v7547, 24
      %v7593 = vpop.permute.xlu0 %7592
      %7594 = vrot.lane.b32.xlu0 %v7548, 24
      %v7595 = vpop.permute.xlu0 %7594
      %7596 = vrot.lane.b32.xlu0 %v7549, 24
      %v7597 = vpop.permute.xlu0 %7596
      %7614 = vst.msk [vmem:[#allocation6] sm:$0xff] %vm4955, %v7567
      %7615 = vst.msk [vmem:[#allocation6 + $0x8] sm:$0xff] %vm4955, %v7569
      %7616 = vst.msk [vmem:[#allocation6 + $0x10] sm:$0xff] %vm4955, %v7571
      %7617 = vst.msk [vmem:[#allocation6 + $0x18] sm:$0xff] %vm4955, %v7573
      %7618 = vst.msk [vmem:[#allocation6 + $0x20] sm:$0xff] %vm4955, %v7575
      %7619 = vst.msk [vmem:[#allocation6 + $0x28] sm:$0xff] %vm4955, %v7577
      %7620 = vst.msk [vmem:[#allocation6 + $0x30] sm:$0xff] %vm4955, %v7579
      %7621 = vst.msk [vmem:[#allocation6 + $0x38] sm:$0xff] %vm4955, %v7581
      %7622 = vst.msk [vmem:[#allocation6 + $0x40] sm:$0xff] %vm4955, %v7583
      %7623 = vst.msk [vmem:[#allocation6 + $0x48] sm:$0xff] %vm4955, %v7585
      %7624 = vst.msk [vmem:[#allocation6 + $0x50] sm:$0xff] %vm4955, %v7587
      %7625 = vst.msk [vmem:[#allocation6 + $0x58] sm:$0xff] %vm4955, %v7589
      %7626 = vst.msk [vmem:[#allocation6 + $0x60] sm:$0xff] %vm4955, %v7591
      %7627 = vst.msk [vmem:[#allocation6 + $0x68] sm:$0xff] %vm4955, %v7593
      %7628 = vst.msk [vmem:[#allocation6 + $0x70] sm:$0xff] %vm4955, %v7595
      %7629 = vst.msk [vmem:[#allocation6 + $0x78] sm:$0xff] %vm4955, %v7597
      %v7630 = vld [vmem:[%s7501 + $0x1] sm:$0xff]
      %v7631 = vld [vmem:[%s7501 + $0x9] sm:$0xff]
      %v7632 = vld [vmem:[%s7501 + $0x19] sm:$0xff]
      %v7633 = vld [vmem:[%s7501 + $0x21] sm:$0xff]
      %v7634 = vld [vmem:[%s7501 + $0x31] sm:$0xff]
      %v7635 = vld [vmem:[%s7501 + $0x39] sm:$0xff]
      %v7636 = vld [vmem:[%s7501 + $0x49] sm:$0xff]
      %v7637 = vld [vmem:[%s7501 + $0x51] sm:$0xff]
      %v7638 = vld [vmem:[%s7501 + $0x61] sm:$0xff]
      %v7639 = vld [vmem:[%s7501 + $0x69] sm:$0xff]
      %v7640 = vld [vmem:[%s7501 + $0x79] sm:$0xff]
      %v7641 = vld [vmem:[%s7501 + $0x81] sm:$0xff]
      %v7642 = vld [vmem:[%s7501 + $0x91] sm:$0xff]
      %v7643 = vld [vmem:[%s7501 + $0x99] sm:$0xff]
      %v7644 = vld [vmem:[%s7501 + $0xa9] sm:$0xff]
      %v7645 = vld [vmem:[%s7501 + $0xb1] sm:$0xff]
      %v7646 = vld [vmem:[%s7501 + $0xc1] sm:$0xff]
      %v7647 = vld [vmem:[%s7501 + $0xc9] sm:$0xff]
      %v7648 = vld [vmem:[%s7501 + $0xd9] sm:$0xff]
      %v7649 = vld [vmem:[%s7501 + $0xe1] sm:$0xff]
      %v7650 = vld [vmem:[%s7501 + $0xf1] sm:$0xff]
      %v7651 = vld [vmem:[%s7501 + $0xf9] sm:$0xff]
      %v7652 = vld [vmem:[%s7501 + $0x109] sm:$0xff]
      %v7653 = vld [vmem:[%s7501 + $0x111] sm:$0xff]
      %v7654 = vld [vmem:[%s7501 + $0x121] sm:$0xff]
      %v7655 = vld [vmem:[%s7501 + $0x129] sm:$0xff]
      %v7656 = vld [vmem:[%s7501 + $0x139] sm:$0xff]
      %v7657 = vld [vmem:[%s7501 + $0x141] sm:$0xff]
      %v7658 = vld [vmem:[%s7501 + $0x151] sm:$0xff]
      %v7659 = vld [vmem:[%s7501 + $0x159] sm:$0xff]
      %v7660 = vld [vmem:[%s7501 + $0x169] sm:$0xff]
      %v7661 = vld [vmem:[%s7501 + $0x171] sm:$0xff]
      %v7662 = vpack.c.bf16 %v7631, %v7630
      %v7663 = vpack.c.bf16 %v7633, %v7632
      %v7664 = vpack.c.bf16 %v7635, %v7634
      %v7665 = vpack.c.bf16 %v7637, %v7636
      %v7666 = vpack.c.bf16 %v7639, %v7638
      %v7667 = vpack.c.bf16 %v7641, %v7640
      %v7668 = vpack.c.bf16 %v7643, %v7642
      %v7669 = vpack.c.bf16 %v7645, %v7644
      %v7670 = vpack.c.bf16 %v7647, %v7646
      %v7671 = vpack.c.bf16 %v7649, %v7648
      %v7672 = vpack.c.bf16 %v7651, %v7650
      %v7673 = vpack.c.bf16 %v7653, %v7652
      %v7674 = vpack.c.bf16 %v7655, %v7654
      %v7675 = vpack.c.bf16 %v7657, %v7656
      %v7676 = vpack.c.bf16 %v7659, %v7658
      %v7677 = vpack.c.bf16 %v7661, %v7660
      %7694 = vrot.lane.b32.xlu0 %v7662, 28
      %v7695 = vpop.permute.xlu0 %7694
      %7696 = vrot.lane.b32.xlu0 %v7663, 28
      %v7697 = vpop.permute.xlu0 %7696
      %7698 = vrot.lane.b32.xlu0 %v7664, 28
      %v7699 = vpop.permute.xlu0 %7698
      %7700 = vrot.lane.b32.xlu0 %v7665, 28
      %v7701 = vpop.permute.xlu0 %7700
      %7702 = vrot.lane.b32.xlu0 %v7666, 28
      %v7703 = vpop.permute.xlu0 %7702
      %7704 = vrot.lane.b32.xlu0 %v7667, 28
      %v7705 = vpop.permute.xlu0 %7704
      %7706 = vrot.lane.b32.xlu0 %v7668, 28
      %v7707 = vpop.permute.xlu0 %7706
      %7708 = vrot.lane.b32.xlu0 %v7669, 28
      %v7709 = vpop.permute.xlu0 %7708
      %7710 = vrot.lane.b32.xlu0 %v7670, 28
      %v7711 = vpop.permute.xlu0 %7710
      %7712 = vrot.lane.b32.xlu0 %v7671, 28
      %v7713 = vpop.permute.xlu0 %7712
      %7714 = vrot.lane.b32.xlu0 %v7672, 28
      %v7715 = vpop.permute.xlu0 %7714
      %7716 = vrot.lane.b32.xlu0 %v7673, 28
      %v7717 = vpop.permute.xlu0 %7716
      %7718 = vrot.lane.b32.xlu0 %v7674, 28
      %v7719 = vpop.permute.xlu0 %7718
      %7720 = vrot.lane.b32.xlu0 %v7675, 28
      %v7721 = vpop.permute.xlu0 %7720
      %7722 = vrot.lane.b32.xlu0 %v7676, 28
      %v7723 = vpop.permute.xlu0 %7722
      %7724 = vrot.lane.b32.xlu0 %v7677, 28
      %v7725 = vpop.permute.xlu0 %7724
      %7742 = vst.msk [vmem:[#allocation6] sm:$0xff] %vm5084, %v7695
      %7743 = vst.msk [vmem:[#allocation6 + $0x8] sm:$0xff] %vm5084, %v7697
      %7744 = vst.msk [vmem:[#allocation6 + $0x10] sm:$0xff] %vm5084, %v7699
      %7745 = vst.msk [vmem:[#allocation6 + $0x18] sm:$0xff] %vm5084, %v7701
      %7746 = vst.msk [vmem:[#allocation6 + $0x20] sm:$0xff] %vm5084, %v7703
      %7747 = vst.msk [vmem:[#allocation6 + $0x28] sm:$0xff] %vm5084, %v7705
      %7748 = vst.msk [vmem:[#allocation6 + $0x30] sm:$0xff] %vm5084, %v7707
      %7749 = vst.msk [vmem:[#allocation6 + $0x38] sm:$0xff] %vm5084, %v7709
      %7750 = vst.msk [vmem:[#allocation6 + $0x40] sm:$0xff] %vm5084, %v7711
      %7751 = vst.msk [vmem:[#allocation6 + $0x48] sm:$0xff] %vm5084, %v7713
      %7752 = vst.msk [vmem:[#allocation6 + $0x50] sm:$0xff] %vm5084, %v7715
      %7753 = vst.msk [vmem:[#allocation6 + $0x58] sm:$0xff] %vm5084, %v7717
      %7754 = vst.msk [vmem:[#allocation6 + $0x60] sm:$0xff] %vm5084, %v7719
      %7755 = vst.msk [vmem:[#allocation6 + $0x68] sm:$0xff] %vm5084, %v7721
      %7756 = vst.msk [vmem:[#allocation6 + $0x70] sm:$0xff] %vm5084, %v7723
      %7757 = vst.msk [vmem:[#allocation6 + $0x78] sm:$0xff] %vm5084, %v7725
      %v7758 = vld [vmem:[%s7501 + $0x2] sm:$0xff]
      %v7759 = vld [vmem:[%s7501 + $0xa] sm:$0xff]
      %v7760 = vld [vmem:[%s7501 + $0x1a] sm:$0xff]
      %v7761 = vld [vmem:[%s7501 + $0x22] sm:$0xff]
      %v7762 = vld [vmem:[%s7501 + $0x32] sm:$0xff]
      %v7763 = vld [vmem:[%s7501 + $0x3a] sm:$0xff]
      %v7764 = vld [vmem:[%s7501 + $0x4a] sm:$0xff]
      %v7765 = vld [vmem:[%s7501 + $0x52] sm:$0xff]
      %v7766 = vld [vmem:[%s7501 + $0x62] sm:$0xff]
      %v7767 = vld [vmem:[%s7501 + $0x6a] sm:$0xff]
      %v7768 = vld [vmem:[%s7501 + $0x7a] sm:$0xff]
      %v7769 = vld [vmem:[%s7501 + $0x82] sm:$0xff]
      %v7770 = vld [vmem:[%s7501 + $0x92] sm:$0xff]
      %v7771 = vld [vmem:[%s7501 + $0x9a] sm:$0xff]
      %v7772 = vld [vmem:[%s7501 + $0xaa] sm:$0xff]
      %v7773 = vld [vmem:[%s7501 + $0xb2] sm:$0xff]
      %v7774 = vld [vmem:[%s7501 + $0xc2] sm:$0xff]
      %v7775 = vld [vmem:[%s7501 + $0xca] sm:$0xff]
      %v7776 = vld [vmem:[%s7501 + $0xda] sm:$0xff]
      %v7777 = vld [vmem:[%s7501 + $0xe2] sm:$0xff]
      %v7778 = vld [vmem:[%s7501 + $0xf2] sm:$0xff]
      %v7779 = vld [vmem:[%s7501 + $0xfa] sm:$0xff]
      %v7780 = vld [vmem:[%s7501 + $0x10a] sm:$0xff]
      %v7781 = vld [vmem:[%s7501 + $0x112] sm:$0xff]
      %v7782 = vld [vmem:[%s7501 + $0x122] sm:$0xff]
      %v7783 = vld [vmem:[%s7501 + $0x12a] sm:$0xff]
      %v7784 = vld [vmem:[%s7501 + $0x13a] sm:$0xff]
      %v7785 = vld [vmem:[%s7501 + $0x142] sm:$0xff]
      %v7786 = vld [vmem:[%s7501 + $0x152] sm:$0xff]
      %v7787 = vld [vmem:[%s7501 + $0x15a] sm:$0xff]
      %v7788 = vld [vmem:[%s7501 + $0x16a] sm:$0xff]
      %v7789 = vld [vmem:[%s7501 + $0x172] sm:$0xff]
      %v7790 = vpack.c.bf16 %v7759, %v7758
      %v7791 = vpack.c.bf16 %v7761, %v7760
      %v7792 = vpack.c.bf16 %v7763, %v7762
      %v7793 = vpack.c.bf16 %v7765, %v7764
      %v7794 = vpack.c.bf16 %v7767, %v7766
      %v7795 = vpack.c.bf16 %v7769, %v7768
      %v7796 = vpack.c.bf16 %v7771, %v7770
      %v7797 = vpack.c.bf16 %v7773, %v7772
      %v7798 = vpack.c.bf16 %v7775, %v7774
      %v7799 = vpack.c.bf16 %v7777, %v7776
      %v7800 = vpack.c.bf16 %v7779, %v7778
      %v7801 = vpack.c.bf16 %v7781, %v7780
      %v7802 = vpack.c.bf16 %v7783, %v7782
      %v7803 = vpack.c.bf16 %v7785, %v7784
      %v7804 = vpack.c.bf16 %v7787, %v7786
      %v7805 = vpack.c.bf16 %v7789, %v7788
      %7822 = vrot.lane.b32.xlu0 %v7790, 32
      %v7823 = vpop.permute.xlu0 %7822
      %7824 = vrot.lane.b32.xlu0 %v7791, 32
      %v7825 = vpop.permute.xlu0 %7824
      %7826 = vrot.lane.b32.xlu0 %v7792, 32
      %v7827 = vpop.permute.xlu0 %7826
      %7828 = vrot.lane.b32.xlu0 %v7793, 32
      %v7829 = vpop.permute.xlu0 %7828
      %7830 = vrot.lane.b32.xlu0 %v7794, 32
      %v7831 = vpop.permute.xlu0 %7830
      %7832 = vrot.lane.b32.xlu0 %v7795, 32
      %v7833 = vpop.permute.xlu0 %7832
      %7834 = vrot.lane.b32.xlu0 %v7796, 32
      %v7835 = vpop.permute.xlu0 %7834
      %7836 = vrot.lane.b32.xlu0 %v7797, 32
      %v7837 = vpop.permute.xlu0 %7836
      %7838 = vrot.lane.b32.xlu0 %v7798, 32
      %v7839 = vpop.permute.xlu0 %7838
      %7840 = vrot.lane.b32.xlu0 %v7799, 32
      %v7841 = vpop.permute.xlu0 %7840
      %7842 = vrot.lane.b32.xlu0 %v7800, 32
      %v7843 = vpop.permute.xlu0 %7842
      %7844 = vrot.lane.b32.xlu0 %v7801, 32
      %v7845 = vpop.permute.xlu0 %7844
      %7846 = vrot.lane.b32.xlu0 %v7802, 32
      %v7847 = vpop.permute.xlu0 %7846
      %7848 = vrot.lane.b32.xlu0 %v7803, 32
      %v7849 = vpop.permute.xlu0 %7848
      %7850 = vrot.lane.b32.xlu0 %v7804, 32
      %v7851 = vpop.permute.xlu0 %7850
      %7852 = vrot.lane.b32.xlu0 %v7805, 32
      %v7853 = vpop.permute.xlu0 %7852
      %7870 = vst.msk [vmem:[#allocation6] sm:$0xff] %vm5213, %v7823
      %7871 = vst.msk [vmem:[#allocation6 + $0x8] sm:$0xff] %vm5213, %v7825
      %7872 = vst.msk [vmem:[#allocation6 + $0x10] sm:$0xff] %vm5213, %v7827
      %7873 = vst.msk [vmem:[#allocation6 + $0x18] sm:$0xff] %vm5213, %v7829
      %7874 = vst.msk [vmem:[#allocation6 + $0x20] sm:$0xff] %vm5213, %v7831
      %7875 = vst.msk [vmem:[#allocation6 + $0x28] sm:$0xff] %vm5213, %v7833
      %7876 = vst.msk [vmem:[#allocation6 + $0x30] sm:$0xff] %vm5213, %v7835
      %7877 = vst.msk [vmem:[#allocation6 + $0x38] sm:$0xff] %vm5213, %v7837
      %7878 = vst.msk [vmem:[#allocation6 + $0x40] sm:$0xff] %vm5213, %v7839
      %7879 = vst.msk [vmem:[#allocation6 + $0x48] sm:$0xff] %vm5213, %v7841
      %7880 = vst.msk [vmem:[#allocation6 + $0x50] sm:$0xff] %vm5213, %v7843
      %7881 = vst.msk [vmem:[#allocation6 + $0x58] sm:$0xff] %vm5213, %v7845
      %7882 = vst.msk [vmem:[#allocation6 + $0x60] sm:$0xff] %vm5213, %v7847
      %7883 = vst.msk [vmem:[#allocation6 + $0x68] sm:$0xff] %vm5213, %v7849
      %7884 = vst.msk [vmem:[#allocation6 + $0x70] sm:$0xff] %vm5213, %v7851
      %7885 = vst.msk [vmem:[#allocation6 + $0x78] sm:$0xff] %vm5213, %v7853
      %v7886 = vld [vmem:[#allocation6] sm:$0xff]
      %v7887 = vld [vmem:[#allocation6 + $0x8] sm:$0xff]
      %v7888 = vld [vmem:[#allocation6 + $0x10] sm:$0xff]
      %v7889 = vld [vmem:[#allocation6 + $0x18] sm:$0xff]
      %v7890 = vld [vmem:[#allocation6 + $0x20] sm:$0xff]
      %v7891 = vld [vmem:[#allocation6 + $0x28] sm:$0xff]
      %v7892 = vld [vmem:[#allocation6 + $0x30] sm:$0xff]
      %v7893 = vld [vmem:[#allocation6 + $0x38] sm:$0xff]
      %v7894 = vld [vmem:[#allocation6 + $0x40] sm:$0xff]
      %v7895 = vld [vmem:[#allocation6 + $0x48] sm:$0xff]
      %v7896 = vld [vmem:[#allocation6 + $0x50] sm:$0xff]
      %v7897 = vld [vmem:[#allocation6 + $0x58] sm:$0xff]
      %v7898 = vld [vmem:[#allocation6 + $0x60] sm:$0xff]
      %v7899 = vld [vmem:[#allocation6 + $0x68] sm:$0xff]
      %v7900 = vld [vmem:[#allocation6 + $0x70] sm:$0xff]
      %v7901 = vld [vmem:[#allocation6 + $0x78] sm:$0xff]
      %v7902 = vld [vmem:[%s5] sm:$0xf]
      %v7903 = vld [vmem:[%s5 + $0x4] sm:$0xf]
      %v7904 = vld [vmem:[%s5 + $0x8] sm:$0xf]
      %v7905 = vld [vmem:[%s5 + $0xc] sm:$0xf]
      %v7906 = vld [vmem:[%s5 + $0x10] sm:$0x3]
      %v7912 = vunpack.c.l.b16 %v7902
      %v7913 = vunpack.c.l.b16 %v7903
      %v7914 = vunpack.c.l.b16 %v7904
      %v7915 = vunpack.c.l.b16 %v7905
      %v7916 = vunpack.c.l.b16 %v7906
      %v7917 = vpack.c.b16 %v7913, %v7912
      %v7918 = vpack.c.b16 %v7915, %v7914
      %v7919 = vpack.c.b16 %v7916, %v7916
      %vm7922 = vcmask 293888
      %v7924 = vsel %vm7922, %v7886, 0
      %v7927 = vsel %vm7922, %v7887, 0
      %v7930 = vsel %vm7922, %v7888, 0
      %v7933 = vsel %vm7922, %v7889, 0
      %v7936 = vsel %vm7922, %v7890, 0
      %v7939 = vsel %vm7922, %v7891, 0
      %v7942 = vsel %vm7922, %v7892, 0
      %v7945 = vsel %vm7922, %v7893, 0
      %v7948 = vsel %vm7922, %v7894, 0
      %v7951 = vsel %vm7922, %v7895, 0
      %v7954 = vsel %vm7922, %v7896, 0
      %v7957 = vsel %vm7922, %v7897, 0
      %v7960 = vsel %vm7922, %v7898, 0
      %v7963 = vsel %vm7922, %v7899, 0
      %v7966 = vsel %vm7922, %v7900, 0
      %v7969 = vsel %vm7922, %v7901, 0
      %vm7971 = vcmask 1041408
      %v7973 = vsel %vm7971, %v7919, 0
      %7975 = vmatprep.subr.bf16.mxu0 0
      %7976 = vmatpush1.bf16.msra.mxu0 %v7917
      %7977 = vmatprep.subr.bf16.mxu0 0
      %7978 = vmatpush1.bf16.msra.mxu0 %v7918
      %7979 = vmatprep.subr.bf16.mxu0 0
      %7980 = vmatpush1.bf16.msra.mxu0 %v7973
      %7981 = vmatprep.subr.bf16.mxu0 0
      %7982 = vmatpush1.bf16.msra.mxu0 0
      %7983 = vmatprep.subr.bf16.mxu0 0
      %7984 = vmatpush1.bf16.msra.mxu0 0
      %7985 = vmatprep.subr.bf16.mxu0 0
      %7986 = vmatpush1.bf16.msra.mxu0 0
      %7987 = vmatprep.subr.bf16.mxu0 0
      %7988 = vmatpush1.bf16.msra.mxu0 0
      %7989 = vmatprep.subr.bf16.mxu0 0
      %7990 = vmatpush1.bf16.msra.mxu0 0
      %7991 = vmatprep.subr.bf16.mxu0 0
      %7992 = vmatpush1.bf16.msra.mxu0 0
      %7993 = vmatprep.subr.bf16.mxu0 0
      %7994 = vmatpush1.bf16.msra.mxu0 0
      %7995 = vmatprep.subr.bf16.mxu0 0
      %7996 = vmatpush1.bf16.msra.mxu0 0
      %7997 = vmatprep.subr.bf16.mxu0 0
      %7998 = vmatpush1.bf16.msra.mxu0 0
      %7999 = vmatprep.subr.bf16.mxu0 0
      %8000 = vmatpush1.bf16.msra.mxu0 0
      %8001 = vmatprep.subr.bf16.mxu0 0
      %8002 = vmatpush1.bf16.msra.mxu0 0
      %8003 = vmatprep.subr.bf16.mxu0 0
      %8004 = vmatpush1.bf16.msra.mxu0 0
      %8005 = vmatprep.subr.bf16.mxu0 0
      %8006 = vmatpush1.bf16.msra.mxu0 0
      %8007 = vmatprep.mubr.bf16.mxu0 0
      %8008 = vmatmul.mubr.bf16.gmra.mrb[0].mxu0 %v7924
      %v8009 = vpop.f32.mrb[0].mxu0
      %v8010 = vadd.f32 0.0, %v8009
      %v8011 = vpop.f32.mrb[0].mxu0
      %v8012 = vpop.f32.mrb[0].mxu0
      %v8013 = vadd.f32 0.0, %v8012
      %v8014 = vpop.f32.mrb[0].mxu0
      %8015 = vmatprep.mubr.bf16.mxu0 0
      %8016 = vmatmul.mubr.bf16.gmra.mrb[0].mxu0 %v7927
      %v8017 = vpop.f32.mrb[0].mxu0
      %v8018 = vadd.f32 0.0, %v8017
      %v8019 = vpop.f32.mrb[0].mxu0
      %v8020 = vpop.f32.mrb[0].mxu0
      %v8021 = vadd.f32 0.0, %v8020
      %v8022 = vpop.f32.mrb[0].mxu0
      %8023 = vmatprep.mubr.bf16.mxu0 0
      %8024 = vmatmul.mubr.bf16.gmra.mrb[0].mxu0 %v7930
      %v8025 = vpop.f32.mrb[0].mxu0
      %v8026 = vadd.f32 0.0, %v8025
      %v8027 = vpop.f32.mrb[0].mxu0
      %v8028 = vpop.f32.mrb[0].mxu0
      %v8029 = vadd.f32 0.0, %v8028
      %v8030 = vpop.f32.mrb[0].mxu0
      %8031 = vmatprep.mubr.bf16.mxu0 0
      %8032 = vmatmul.mubr.bf16.gmra.mrb[0].mxu0 %v7933
      %v8033 = vpop.f32.mrb[0].mxu0
      %v8034 = vadd.f32 0.0, %v8033
      %v8035 = vpop.f32.mrb[0].mxu0
      %v8036 = vpop.f32.mrb[0].mxu0
      %v8037 = vadd.f32 0.0, %v8036
      %v8038 = vpop.f32.mrb[0].mxu0
      %8039 = vmatprep.mubr.bf16.mxu0 0
      %8040 = vmatmul.mubr.bf16.gmra.mrb[0].mxu0 %v7936
      %v8041 = vpop.f32.mrb[0].mxu0
      %v8042 = vadd.f32 0.0, %v8041
      %v8043 = vpop.f32.mrb[0].mxu0
      %v8044 = vpop.f32.mrb[0].mxu0
      %v8045 = vadd.f32 0.0, %v8044
      %v8046 = vpop.f32.mrb[0].mxu0
      %8047 = vmatprep.mubr.bf16.mxu0 0
      %8048 = vmatmul.mubr.bf16.gmra.mrb[0].mxu0 %v7939
      %v8049 = vpop.f32.mrb[0].mxu0
      %v8050 = vadd.f32 0.0, %v8049
      %v8051 = vpop.f32.mrb[0].mxu0
      %v8052 = vpop.f32.mrb[0].mxu0
      %v8053 = vadd.f32 0.0, %v8052
      %v8054 = vpop.f32.mrb[0].mxu0
      %8055 = vmatprep.mubr.bf16.mxu0 0
      %8056 = vmatmul.mubr.bf16.gmra.mrb[0].mxu0 %v7942
      %v8057 = vpop.f32.mrb[0].mxu0
      %v8058 = vadd.f32 0.0, %v8057
      %v8059 = vpop.f32.mrb[0].mxu0
      %v8060 = vpop.f32.mrb[0].mxu0
      %v8061 = vadd.f32 0.0, %v8060
      %v8062 = vpop.f32.mrb[0].mxu0
      %8063 = vmatprep.mubr.bf16.mxu0 0
      %8064 = vmatmul.mubr.bf16.gmra.mrb[0].mxu0 %v7945
      %v8065 = vpop.f32.mrb[0].mxu0
      %v8066 = vadd.f32 0.0, %v8065
      %v8067 = vpop.f32.mrb[0].mxu0
      %v8068 = vpop.f32.mrb[0].mxu0
      %v8069 = vadd.f32 0.0, %v8068
      %v8070 = vpop.f32.mrb[0].mxu0
      %8071 = vmatprep.mubr.bf16.mxu0 0
      %8072 = vmatmul.mubr.bf16.gmra.mrb[0].mxu0 %v7948
      %v8073 = vpop.f32.mrb[0].mxu0
      %v8074 = vadd.f32 0.0, %v8073
      %v8075 = vpop.f32.mrb[0].mxu0
      %v8076 = vpop.f32.mrb[0].mxu0
      %v8077 = vadd.f32 0.0, %v8076
      %v8078 = vpop.f32.mrb[0].mxu0
      %8079 = vmatprep.mubr.bf16.mxu0 0
      %8080 = vmatmul.mubr.bf16.gmra.mrb[0].mxu0 %v7951
      %v8081 = vpop.f32.mrb[0].mxu0
      %v8082 = vadd.f32 0.0, %v8081
      %v8083 = vpop.f32.mrb[0].mxu0
      %v8084 = vpop.f32.mrb[0].mxu0
      %v8085 = vadd.f32 0.0, %v8084
      %v8086 = vpop.f32.mrb[0].mxu0
      %8087 = vmatprep.mubr.bf16.mxu0 0
      %8088 = vmatmul.mubr.bf16.gmra.mrb[0].mxu0 %v7954
      %v8089 = vpop.f32.mrb[0].mxu0
      %v8090 = vadd.f32 0.0, %v8089
      %v8091 = vpop.f32.mrb[0].mxu0
      %v8092 = vpop.f32.mrb[0].mxu0
      %v8093 = vadd.f32 0.0, %v8092
      %v8094 = vpop.f32.mrb[0].mxu0
      %8095 = vmatprep.mubr.bf16.mxu0 0
      %8096 = vmatmul.mubr.bf16.gmra.mrb[0].mxu0 %v7957
      %v8097 = vpop.f32.mrb[0].mxu0
      %v8098 = vadd.f32 0.0, %v8097
      %v8099 = vpop.f32.mrb[0].mxu0
      %v8100 = vpop.f32.mrb[0].mxu0
      %v8101 = vadd.f32 0.0, %v8100
      %v8102 = vpop.f32.mrb[0].mxu0
      %8103 = vmatprep.mubr.bf16.mxu0 0
      %8104 = vmatmul.mubr.bf16.gmra.mrb[0].mxu0 %v7960
      %v8105 = vpop.f32.mrb[0].mxu0
      %v8106 = vadd.f32 0.0, %v8105
      %v8107 = vpop.f32.mrb[0].mxu0
      %v8108 = vpop.f32.mrb[0].mxu0
      %v8109 = vadd.f32 0.0, %v8108
      %v8110 = vpop.f32.mrb[0].mxu0
      %8111 = vmatprep.mubr.bf16.mxu0 0
      %8112 = vmatmul.mubr.bf16.gmra.mrb[0].mxu0 %v7963
      %v8113 = vpop.f32.mrb[0].mxu0
      %v8114 = vadd.f32 0.0, %v8113
      %v8115 = vpop.f32.mrb[0].mxu0
      %v8116 = vpop.f32.mrb[0].mxu0
      %v8117 = vadd.f32 0.0, %v8116
      %v8118 = vpop.f32.mrb[0].mxu0
      %8119 = vmatprep.mubr.bf16.mxu0 0
      %8120 = vmatmul.mubr.bf16.gmra.mrb[0].mxu0 %v7966
      %v8121 = vpop.f32.mrb[0].mxu0
      %v8122 = vadd.f32 0.0, %v8121
      %v8123 = vpop.f32.mrb[0].mxu0
      %v8124 = vpop.f32.mrb[0].mxu0
      %v8125 = vadd.f32 0.0, %v8124
      %v8126 = vpop.f32.mrb[0].mxu0
      %8127 = vmatprep.mubr.bf16.mxu0 0
      %8128 = vmatmul.mubr.bf16.gmra.mrb[0].mxu0 %v7969
      %v8129 = vpop.f32.mrb[0].mxu0
      %v8130 = vadd.f32 0.0, %v8129
      %v8131 = vpop.f32.mrb[0].mxu0
      %v8132 = vpop.f32.mrb[0].mxu0
      %v8133 = vadd.f32 0.0, %v8132
      %v8134 = vpop.f32.mrb[0].mxu0
      %8135 = vdwg.mxu0
      %v8136 = vld [vmem:[%s6] sm:$0x1]
      %v8137 = vlaneseq
      %v8138 = vshrl.u32 %v8137, 7
      %v8139 = vsub.s32 0, %v8138
      %v8140 = vrot.slane %v8136, %v8139
      %v8141 = vmul.f32 %v8010, %v8140
      %v8142 = vmul.f32 %v8013, %v8140
      %v8143 = vmul.f32 %v8018, %v8140
      %v8144 = vmul.f32 %v8021, %v8140
      %v8145 = vmul.f32 %v8026, %v8140
      %v8146 = vmul.f32 %v8029, %v8140
      %v8147 = vmul.f32 %v8034, %v8140
      %v8148 = vmul.f32 %v8037, %v8140
      %v8149 = vmul.f32 %v8042, %v8140
      %v8150 = vmul.f32 %v8045, %v8140
      %v8151 = vmul.f32 %v8050, %v8140
      %v8152 = vmul.f32 %v8053, %v8140
      %v8153 = vmul.f32 %v8058, %v8140
      %v8154 = vmul.f32 %v8061, %v8140
      %v8155 = vmul.f32 %v8066, %v8140
      %v8156 = vmul.f32 %v8069, %v8140
      %v8157 = vmul.f32 %v8074, %v8140
      %v8158 = vmul.f32 %v8077, %v8140
      %v8159 = vmul.f32 %v8082, %v8140
      %v8160 = vmul.f32 %v8085, %v8140
      %v8161 = vmul.f32 %v8090, %v8140
      %v8162 = vmul.f32 %v8093, %v8140
      %v8163 = vmul.f32 %v8098, %v8140
      %v8164 = vmul.f32 %v8101, %v8140
      %v8165 = vmul.f32 %v8106, %v8140
      %v8166 = vmul.f32 %v8109, %v8140
      %v8167 = vmul.f32 %v8114, %v8140
      %v8168 = vmul.f32 %v8117, %v8140
      %v8169 = vmul.f32 %v8122, %v8140
      %v8170 = vmul.f32 %v8125, %v8140
      %v8171 = vmul.f32 %v8130, %v8140
      %v8172 = vmul.f32 %v8133, %v8140
      %v8173 = vld [vmem:[%s6 + $0x1] sm:$0x1]
      %v8174 = vlaneseq
      %v8175 = vshrl.u32 %v8174, 7
      %v8176 = vsub.s32 0, %v8175
      %v8177 = vrot.slane %v8173, %v8176
      %v8178 = vadd.f32 %v8141, %v8177
      %v8179 = vadd.f32 %v8142, %v8177
      %v8180 = vadd.f32 %v8143, %v8177
      %v8181 = vadd.f32 %v8144, %v8177
      %v8182 = vadd.f32 %v8145, %v8177
      %v8183 = vadd.f32 %v8146, %v8177
      %v8184 = vadd.f32 %v8147, %v8177
      %v8185 = vadd.f32 %v8148, %v8177
      %v8186 = vadd.f32 %v8149, %v8177
      %v8187 = vadd.f32 %v8150, %v8177
      %v8188 = vadd.f32 %v8151, %v8177
      %v8189 = vadd.f32 %v8152, %v8177
      %v8190 = vadd.f32 %v8153, %v8177
      %v8191 = vadd.f32 %v8154, %v8177
      %v8192 = vadd.f32 %v8155, %v8177
      %v8193 = vadd.f32 %v8156, %v8177
      %v8194 = vadd.f32 %v8157, %v8177
      %v8195 = vadd.f32 %v8158, %v8177
      %v8196 = vadd.f32 %v8159, %v8177
      %v8197 = vadd.f32 %v8160, %v8177
      %v8198 = vadd.f32 %v8161, %v8177
      %v8199 = vadd.f32 %v8162, %v8177
      %v8200 = vadd.f32 %v8163, %v8177
      %v8201 = vadd.f32 %v8164, %v8177
      %v8202 = vadd.f32 %v8165, %v8177
      %v8203 = vadd.f32 %v8166, %v8177
      %v8204 = vadd.f32 %v8167, %v8177
      %v8205 = vadd.f32 %v8168, %v8177
      %v8206 = vadd.f32 %v8169, %v8177
      %v8207 = vadd.f32 %v8170, %v8177
      %v8208 = vadd.f32 %v8171, %v8177
      %v8209 = vadd.f32 %v8172, %v8177
      %v8210 = vmax.f32 %v8178, 0.0
      %v8211 = vmax.f32 %v8179, 0.0
      %v8212 = vmax.f32 %v8180, 0.0
      %v8213 = vmax.f32 %v8181, 0.0
      %v8214 = vmax.f32 %v8182, 0.0
      %v8215 = vmax.f32 %v8183, 0.0
      %v8216 = vmax.f32 %v8184, 0.0
      %v8217 = vmax.f32 %v8185, 0.0
      %v8218 = vmax.f32 %v8186, 0.0
      %v8219 = vmax.f32 %v8187, 0.0
      %v8220 = vmax.f32 %v8188, 0.0
      %v8221 = vmax.f32 %v8189, 0.0
      %v8222 = vmax.f32 %v8190, 0.0
      %v8223 = vmax.f32 %v8191, 0.0
      %v8224 = vmax.f32 %v8192, 0.0
      %v8225 = vmax.f32 %v8193, 0.0
      %v8226 = vmax.f32 %v8194, 0.0
      %v8227 = vmax.f32 %v8195, 0.0
      %v8228 = vmax.f32 %v8196, 0.0
      %v8229 = vmax.f32 %v8197, 0.0
      %v8230 = vmax.f32 %v8198, 0.0
      %v8231 = vmax.f32 %v8199, 0.0
      %v8232 = vmax.f32 %v8200, 0.0
      %v8233 = vmax.f32 %v8201, 0.0
      %v8234 = vmax.f32 %v8202, 0.0
      %v8235 = vmax.f32 %v8203, 0.0
      %v8236 = vmax.f32 %v8204, 0.0
      %v8237 = vmax.f32 %v8205, 0.0
      %v8238 = vmax.f32 %v8206, 0.0
      %v8239 = vmax.f32 %v8207, 0.0
      %v8240 = vmax.f32 %v8208, 0.0
      %v8241 = vmax.f32 %v8209, 0.0
      %8242 = vst.msk [vmem:[%s295] sm:$0xff] %vm437, %v8210
      %8243 = vst.msk [vmem:[%s295 + $0x8] sm:$0xff] %vm437, %v8211
      %8244 = vst.msk [vmem:[%s295 + $0x10] sm:$0xff] %vm437, %v8212
      %8245 = vst.msk [vmem:[%s295 + $0x18] sm:$0xff] %vm437, %v8213
      %8246 = vst.msk [vmem:[%s295 + $0x20] sm:$0xff] %vm437, %v8214
      %8247 = vst.msk [vmem:[%s295 + $0x28] sm:$0xff] %vm437, %v8215
      %8248 = vst.msk [vmem:[%s295 + $0x30] sm:$0xff] %vm437, %v8216
      %8249 = vst.msk [vmem:[%s295 + $0x38] sm:$0xff] %vm437, %v8217
      %8250 = vst.msk [vmem:[%s295 + $0x40] sm:$0xff] %vm437, %v8218
      %8251 = vst.msk [vmem:[%s295 + $0x48] sm:$0xff] %vm437, %v8219
      %8252 = vst.msk [vmem:[%s295 + $0x50] sm:$0xff] %vm437, %v8220
      %8253 = vst.msk [vmem:[%s295 + $0x58] sm:$0xff] %vm437, %v8221
      %8254 = vst.msk [vmem:[%s295 + $0x60] sm:$0xff] %vm437, %v8222
      %8255 = vst.msk [vmem:[%s295 + $0x68] sm:$0xff] %vm437, %v8223
      %8256 = vst.msk [vmem:[%s295 + $0x70] sm:$0xff] %vm437, %v8224
      %8257 = vst.msk [vmem:[%s295 + $0x78] sm:$0xff] %vm437, %v8225
      %8258 = vst.msk [vmem:[%s295 + $0x80] sm:$0xff] %vm437, %v8226
      %8259 = vst.msk [vmem:[%s295 + $0x88] sm:$0xff] %vm437, %v8227
      %8260 = vst.msk [vmem:[%s295 + $0x90] sm:$0xff] %vm437, %v8228
      %8261 = vst.msk [vmem:[%s295 + $0x98] sm:$0xff] %vm437, %v8229
      %8262 = vst.msk [vmem:[%s295 + $0xa0] sm:$0xff] %vm437, %v8230
      %8263 = vst.msk [vmem:[%s295 + $0xa8] sm:$0xff] %vm437, %v8231
      %8264 = vst.msk [vmem:[%s295 + $0xb0] sm:$0xff] %vm437, %v8232
      %8265 = vst.msk [vmem:[%s295 + $0xb8] sm:$0xff] %vm437, %v8233
      %8266 = vst.msk [vmem:[%s295 + $0xc0] sm:$0xff] %vm437, %v8234
      %8267 = vst.msk [vmem:[%s295 + $0xc8] sm:$0xff] %vm437, %v8235
      %8268 = vst.msk [vmem:[%s295 + $0xd0] sm:$0xff] %vm437, %v8236
      %8269 = vst.msk [vmem:[%s295 + $0xd8] sm:$0xff] %vm437, %v8237
      %8270 = vst.msk [vmem:[%s295 + $0xe0] sm:$0xff] %vm437, %v8238
      %8271 = vst.msk [vmem:[%s295 + $0xe8] sm:$0xff] %vm437, %v8239
      %8272 = vst.msk [vmem:[%s295 + $0xf0] sm:$0xff] %vm437, %v8240
      %8273 = vst.msk [vmem:[%s295 + $0xf8] sm:$0xff] %vm437, %v8241
      %p8274 = scmp.lt.s32.totalorder %s18, 1
      %s8275 = scalar_select %p8274, %s18, 1
      %s8276 = smul.addr %s8275, 32
      %s8277 = smul.addr %s8276, 8
      %s8278 = scalar_lea.vmem %s7, %s8277
      // Predicated region
      $region49: #{tpu_custom_call.1} parent=47 // pred_check
        %p8279 = pneg %p193
      $region50: #{tpu_custom_call.1} parent=47 // pred_check_branch
        %8281 = sbr.rel (%p8279) target = $region52
      $region51: #{tpu_custom_call.1} parent=47 // pred_region
        _
      $region52: #{tpu_custom_call.1} parent=47 // pred_fallthru
        _
    $region48: #{tpu_custom_call.1} parent=5 // pred_fallthru
      _
    %p8282 = scmp.le.s32.totalorder 2, %s13
    // Predicated region
    $region53: #{tpu_custom_call.1} parent=5 // pred_check
      %p8283 = pneg %p8282
    $region54: #{tpu_custom_call.1} parent=5 // pred_check_branch
      %8285 = sbr.rel (%p8283) target = $region56
    $region55: #{tpu_custom_call.1} parent=5 // pred_region
      %s8286 = ssub.s32 %s13, 2
      // Predicated region
      $region57: #{tpu_custom_call.1} parent=55 // pred_check
        %p8287 = pneg %p199
      $region58: #{tpu_custom_call.1} parent=55 // pred_check_branch
        %8289 = sbr.rel (%p8287) target = $region60
      $region59: #{tpu_custom_call.1} parent=55 // pred_region
        %p8290 = scmp.lt.s32.totalorder %s19, 1
        %s8291 = scalar_select %p8290, %s19, 1
        %s8292 = smul.addr %s8291, 32
        %s8293 = smul.addr %s8292, 8
        %s8294 = scalar_lea.vmem %s7, %s8293
      $region60: #{tpu_custom_call.1} parent=55 // pred_fallthru
        _
    $region56: #{tpu_custom_call.1} parent=5 // pred_fallthru
      _
  $region6: #{tpu_custom_call.1} parent=0 // loop_footer
    %s17 = sadd.s32 1, %s13
  $region7: #{tpu_custom_call.1} parent=0 // loop_footer_branch
    %12 = sbr.rel target = $region3
  $region8: #{tpu_custom_call.1} parent=0 // loop_exit
    _

</llo_original>
